<compile_context>
chip_gen: v7x
topology: tpu7x:2x2x1
jax: 0.10.0
libtpu: 0.0.40
codegen_flags: <defaults>
</compile_context>

<pallas_src>
import numpy as np
import jax
import jax.numpy as jnp
from jax.experimental import pallas as pl
from jax.experimental.pallas import tpu as pltpu

# ---------------- model configuration (tiny, synthetic LLaMA-style) ----------
VOCAB = 64
VOCAB_PAD = 128                 # lane-dense logits slab (sliced back outside)
D_MODEL = 32
N_HEADS = 4
HEAD_DIM = D_MODEL // N_HEADS
D_FF = 64
N_LAYERS = 2
LORA_R = 4
LORA_ALPHA = 8.0
LORA_SCALE = LORA_ALPHA / LORA_R
RMS_EPS = 1e-6
ATTN_SCALE = 1.0 / (HEAD_DIM ** 0.5)
NEG_INF = -1e30

# Single grid step: all B*S rows folded onto sublanes (best on 1-TC v5e/v6e).
# TODO(synk): on v7x with larger batches set GRID_STEPS=2 so the "parallel"
# grid axis hands each TensorCore one folded batch tile.
GRID_STEPS = 1


# ---------------- in-kernel helpers (traced inside the fused kernel) ---------
def _wdot(x, w):
    """bf16 x bf16 -> f32 MXU matmul (weights stored bf16, f32 accumulation)."""
    return jnp.dot(x.astype(w.dtype), w, preferred_element_type=jnp.float32)


def _rmsnorm(x, w):                      # x [R, D] f32, w [1, D] f32
    var = jnp.mean(x * x, axis=-1, keepdims=True)
    return x * jax.lax.rsqrt(var + RMS_EPS) * w


def _decoder_layer(x, ln1, wqkv, wo_lanes, ln2, wgu, wd, cos2, sin2, rot2, bias):
    R = x.shape[0]
    h = _rmsnorm(x, ln1)
    qkv = _wdot(h, wqkv)                                   # fused q/k/v, LoRA merged
    # RoPE on q and k together: one rotate-half matmul on the [R, 2D] slab.
    qk = qkv[:, :2 * D_MODEL]
    qk = qk * cos2 + jnp.dot(qk, rot2, preferred_element_type=jnp.float32) * sin2
    q, k, v = qk[:, :D_MODEL], qk[:, D_MODEL:], qkv[:, 2 * D_MODEL:]

    # Per-head scores, sublane-stacked -> one softmax pass over [H*R, R].
    s = jnp.concatenate(
        [jax.lax.dot_general(q[:, hh * HEAD_DIM:(hh + 1) * HEAD_DIM],
                             k[:, hh * HEAD_DIM:(hh + 1) * HEAD_DIM],
                             (((1,), (1,)), ((), ())),
                             preferred_element_type=jnp.float32)
         for hh in range(N_HEADS)], axis=0) * ATTN_SCALE + bias
    m = jnp.max(s, axis=-1, keepdims=True)
    p = jnp.exp(s - m)
    p = p * pl.reciprocal(jnp.sum(p, axis=-1, keepdims=True), approx=True)

    # Output projection as per-head accumulation (no lane concat of head outs).
    acc = x                                                # residual folded in
    for hh in range(N_HEADS):
        ov = jnp.dot(p[hh * R:(hh + 1) * R, :],
                     v[:, hh * HEAD_DIM:(hh + 1) * HEAD_DIM],
                     preferred_element_type=jnp.float32)   # [R, Dh]
        acc = acc + jnp.dot(ov.astype(wo_lanes.dtype),
                            wo_lanes[:, hh * D_MODEL:(hh + 1) * D_MODEL],
                            preferred_element_type=jnp.float32)
    x = acc

    h = _rmsnorm(x, ln2)
    gu = _wdot(h, wgu)                                     # fused gate/up
    g, u = gu[:, :D_FF], gu[:, D_FF:]
    return x + _wdot(g * jax.nn.sigmoid(g) * u, wd)        # SwiGLU in f32


def _llama_stack(x, slab_ref, wo_ref, wd_ref, norms_ref, cos2, sin2, rot2, bias):
    norms = norms_ref[...]                                 # [2L+1, D] f32
    for li in range(N_LAYERS):                             # static unroll
        slab = slab_ref[li]                                # [D, 3D+2F] bf16
        x = _decoder_layer(
            x,
            norms[2 * li:2 * li + 1, :],                   # ln1
            slab[:, :3 * D_MODEL],                         # wqkv
            wo_ref[li],                                    # [Dh, H*D] per-head wo
            norms[2 * li + 1:2 * li + 2, :],               # ln2
            slab[:, 3 * D_MODEL:],                         # wgu
            wd_ref[li],                                    # [F, D]
            cos2, sin2, rot2, bias)
    return _rmsnorm(x, norms[2 * N_LAYERS:, :])            # final norm (pre-head)


# ---------------- the single fused Pallas kernel ------------------------------
def _code2code_kernel(x_ref, bias_ref, cos2_ref, sin2_ref, rot2_ref,
                      slab_a, wo_a, wd_a, norms_a,
                      slab_b, wo_b, wd_b, norms_b,
                      heads_ref,
                      sum_ref, gen_ref):
    bias = bias_ref[...]
    cos2, sin2, rot2 = cos2_ref[...], sin2_ref[...], rot2_ref[...]
    heads = heads_ref[...]                                 # [D, 128 | 32 | 128] bf16

    # model 1: code -> summary logits
    h1 = _llama_stack(x_ref[...], slab_a, wo_a, wd_a, norms_a,
                      cos2, sin2, rot2, bias)
    sum_ref[...] = _wdot(h1, heads[:, :VOCAB_PAD])         # lane-dense [R, 128] store

    # model 2: summary -> generated code logits.  The bridge column block is the
    # offline pre-fusion of model_1.lm_head @ model_2.in_proj  ([D, D]).
    x2 = _wdot(h1, heads[:, VOCAB_PAD:VOCAB_PAD + D_MODEL])
    h2 = _llama_stack(x2, slab_b, wo_b, wd_b, norms_b,
                      cos2, sin2, rot2, bias)
    gen_ref[...] = _wdot(h2, heads[:, VOCAB_PAD + D_MODEL:])


def _fused_forward(x_rows, bias, cos2, sin2, rot2,
                   slab_a, wo_a, wd_a, norms_a,
                   slab_b, wo_b, wd_b, norms_b, heads):
    R, Dm = x_rows.shape
    Rb = R // GRID_STEPS

    def const_spec(arr):                 # whole array resident, same block each step
        n = arr.ndim
        return pl.BlockSpec(arr.shape, lambda i, _n=n: (0,) * _n)

    consts = [bias, cos2, sin2, rot2, slab_a, wo_a, wd_a, norms_a,
              slab_b, wo_b, wd_b, norms_b, heads]
    in_specs = ([pl.BlockSpec((Rb, Dm), lambda i: (i, 0))]
                + [const_spec(a) for a in consts])
    out_specs = [pl.BlockSpec((Rb, VOCAB_PAD), lambda i: (i, 0)),
                 pl.BlockSpec((Rb, VOCAB_PAD), lambda i: (i, 0))]
    out_shape = (jax.ShapeDtypeStruct((R, VOCAB_PAD), jnp.float32),
                 jax.ShapeDtypeStruct((R, VOCAB_PAD), jnp.float32))

    return pl.pallas_call(
        _code2code_kernel,
        out_shape=out_shape,
        grid=(GRID_STEPS,),
        in_specs=in_specs,
        out_specs=out_specs,
        compiler_params=pltpu.CompilerParams(
            dimension_semantics=("parallel",)),
    )(x_rows, *consts)


# ---------------- host-side constants (numpy -> folded constants under jit) ---
def _rope_tables(S, BT):
    """cos/sin for the batch-folded rows, duplicated for the fused q|k slab."""
    half = HEAD_DIM // 2
    inv_freq = 1.0 / (10000.0 ** (np.arange(half, dtype=np.float32) / half))
    freqs = np.arange(S, dtype=np.float32)[:, None] * inv_freq[None, :]
    emb = np.concatenate([freqs, freqs], axis=-1)              # [S, Dh]
    cos = np.tile(np.cos(emb), (BT, N_HEADS))                  # [BT*S, D]
    sin = np.tile(np.sin(emb), (BT, N_HEADS))
    cos2 = jnp.asarray(np.concatenate([cos, cos], axis=-1), jnp.float32)
    sin2 = jnp.asarray(np.concatenate([sin, sin], axis=-1), jnp.float32)
    return cos2, sin2


def _rot2_matrix():
    """Block-diag P with (x @ P) == rotate_half(x); duplicated for q|k slab."""
    half = HEAD_DIM // 2
    p = np.zeros((D_MODEL, D_MODEL), np.float32)
    for h in range(N_HEADS):
        o = h * HEAD_DIM
        for j in range(half):
            p[o + j + half, o + j] = -1.0
            p[o + j, o + j + half] = 1.0
    rot2 = np.zeros((2 * D_MODEL, 2 * D_MODEL), np.float32)
    rot2[:D_MODEL, :D_MODEL] = p
    rot2[D_MODEL:, D_MODEL:] = p
    return jnp.asarray(rot2)


def _causal_bias(BT, S):
    """Block-diagonal causal additive bias for BT folded batch elements,
    pre-stacked for all heads: [N_HEADS*BT*S, BT*S]."""
    R = BT * S
    idx = np.arange(R)
    same_b = (idx[:, None] // S) == (idx[None, :] // S)
    causal = (idx[:, None] % S) >= (idx[None, :] % S)
    bias = np.where(same_b & causal, 0.0, NEG_INF).astype(np.float32)
    return jnp.asarray(np.tile(bias, (N_HEADS, 1)))


# ---------------- parameter init (deterministic, pre-fused for the kernel) ---
def _lin(key, out_f, in_f, scale=0.02):
    return scale * jax.random.normal(key, (out_f, in_f), jnp.float32)


def init_model_params(key, with_input_proj=False):
    """Synthetic LLaMA+LoRA weights, pre-fused for the kernel:
       LoRA merged into q/v, weights transposed to [in,out], q/k/v and gate/up
       concatenated into one lane slab per layer, wo pre-split per head into a
       lane-dense [Dh, H*D] slab, matmul weights stored bf16 (f32 accumulation
       happens in-kernel)."""
    keys = jax.random.split(key, 4 + N_LAYERS)
    slab_rows, wo_rows, wd_rows = [], [], []
    for li in range(N_LAYERS):
        lk = jax.random.split(keys[4 + li], 12)
        q_w, k_w = _lin(lk[0], D_MODEL, D_MODEL), _lin(lk[1], D_MODEL, D_MODEL)
        v_w, o_w = _lin(lk[2], D_MODEL, D_MODEL), _lin(lk[3], D_MODEL, D_MODEL)
        q_A, q_B = _lin(lk[4], LORA_R, D_MODEL), _lin(lk[5], D_MODEL, LORA_R)
        v_A, v_B = _lin(lk[6], LORA_R, D_MODEL), _lin(lk[7], D_MODEL, LORA_R)
        gate_w, up_w = _lin(lk[8], D_FF, D_MODEL), _lin(lk[9], D_FF, D_MODEL)
        down_w = _lin(lk[10], D_MODEL, D_FF)
        q_eff = q_w + LORA_SCALE * (q_B @ q_A)     # merge LoRA once (inference)
        v_eff = v_w + LORA_SCALE * (v_B @ v_A)
        wqkv = jnp.concatenate([q_eff.T, k_w.T, v_eff.T], axis=1)   # [D, 3D]
        wgu = jnp.concatenate([gate_w.T, up_w.T], axis=1)           # [D, 2F]
        slab_rows.append(jnp.concatenate([wqkv, wgu], axis=1))      # [D, 3D+2F]
        o_t = o_w.T                                                 # [D, D]
        wo_rows.append(jnp.concatenate(
            [o_t[h * HEAD_DIM:(h + 1) * HEAD_DIM, :] for h in range(N_HEADS)],
            axis=1))                                                # [Dh, H*D]
        wd_rows.append(down_w.T)                                    # [F, D]
    p = dict(
        embed=0.02 * jax.random.normal(keys[0], (VOCAB, D_MODEL), jnp.float32),
        slab=jnp.stack(slab_rows).astype(jnp.bfloat16),             # [L, D, 224]
        wo=jnp.stack(wo_rows).astype(jnp.bfloat16),                 # [L, Dh, 128]
        wd=jnp.stack(wd_rows).astype(jnp.bfloat16),                 # [L, F, D]
        norms=jnp.ones((2 * N_LAYERS + 1, D_MODEL), jnp.float32),   # ln1/ln2/.../final
        head=_lin(keys[2], VOCAB, D_MODEL).T,                       # [D, V] f32
    )
    if with_input_proj:
        # TODO(synk): the original feeds float logits as input_ids to model_2,
        # which has no embedding-lookup equivalent; replaced with a linear
        # projection VOCAB -> D_MODEL (fused with model_1's lm_head offline).
        p["in_proj"] = _lin(keys[1], D_MODEL, VOCAB).T              # [V, D] f32
    return p


# ---------------- forward (glue around the single fused kernel) --------------
@jax.jit
def code2code_forward(params_1, params_2, input_code):
    # Mirrors Code2CodeTranslationModel.forward
    B, S = input_code.shape
    BT = B // GRID_STEPS
    x = jnp.take(params_1["embed"], input_code, axis=0).reshape(B * S, D_MODEL)

    cos2, sin2 = _rope_tables(S, BT)
    rot2 = _rot2_matrix()
    bias = _causal_bias(BT, S)

    # heads slab: [ model_1 lm_head (padded) | bridge = head_a @ in_proj | model_2 lm_head (padded) ]
    head_a, head_b = params_1["head"], params_2["head"]        # [D, V] f32
    bridge = head_a @ params_2["in_proj"]                      # [D, D] f32 (offline fusion)
    pad = lambda h: jnp.pad(h, ((0, 0), (0, VOCAB_PAD - VOCAB)))
    heads = jnp.concatenate([pad(head_a), bridge, pad(head_b)],
                            axis=1).astype(jnp.bfloat16)       # [D, 288]

    sum_p, gen_p = _fused_forward(
        x, bias, cos2, sin2, rot2,
        params_1["slab"], params_1["wo"], params_1["wd"], params_1["norms"],
        params_2["slab"], params_2["wo"], params_2["wd"], params_2["norms"],
        heads)
    sum_p = sum_p[:, :VOCAB].reshape(B, S, VOCAB)              # strip lane padding
    gen_p = gen_p[:, :VOCAB].reshape(B, S, VOCAB)
    return sum_p, gen_p


# ---------------- main --------------------------------------------------------
if __name__ == "__main__":
    key = jax.random.PRNGKey(0)
    k_p1, k_p2, k_in = jax.random.split(key, 3)

    params_1 = init_model_params(k_p1, with_input_proj=False)   # code -> summary
    params_2 = init_model_params(k_p2, with_input_proj=True)    # summary -> code

    B, S = 2, 8
    input_code = jax.random.randint(k_in, (B, S), 0, VOCAB, dtype=jnp.int32)

    summary_logits, generated_code_logits = code2code_forward(
        params_1, params_2, input_code)
    jax.block_until_ready((summary_logits, generated_code_logits))

    assert summary_logits.shape == (B, S, VOCAB)
    assert generated_code_logits.shape == (B, S, VOCAB)
    assert bool(jnp.all(jnp.isfinite(summary_logits)))
    assert bool(jnp.all(jnp.isfinite(generated_code_logits)))
    print("KERNEL_OK")
</pallas_src>

<mosaic_0001>
module attributes {stable_mosaic.version = 11 : i64} {
  func.func @_code2code_kernel(%arg0: i32, %arg1: memref<16x32xf32, #tpu.memory_space<vmem>>, %arg2: memref<64x16xf32, #tpu.memory_space<vmem>>, %arg3: memref<16x64xf32, #tpu.memory_space<vmem>>, %arg4: memref<16x64xf32, #tpu.memory_space<vmem>>, %arg5: memref<64x64xf32, #tpu.memory_space<vmem>>, %arg6: memref<2x32x224xbf16, #tpu.memory_space<vmem>>, %arg7: memref<2x8x128xbf16, #tpu.memory_space<vmem>>, %arg8: memref<2x64x32xbf16, #tpu.memory_space<vmem>>, %arg9: memref<5x32xf32, #tpu.memory_space<vmem>>, %arg10: memref<2x32x224xbf16, #tpu.memory_space<vmem>>, %arg11: memref<2x8x128xbf16, #tpu.memory_space<vmem>>, %arg12: memref<2x64x32xbf16, #tpu.memory_space<vmem>>, %arg13: memref<5x32xf32, #tpu.memory_space<vmem>>, %arg14: memref<32x288xbf16, #tpu.memory_space<vmem>>, %arg15: memref<16x128xf32, #tpu.memory_space<vmem>>, %arg16: memref<16x128xf32, #tpu.memory_space<vmem>>) attributes {dimension_semantics = [#tpu.dimension_semantics<parallel>], iteration_bounds = array<i64: 1>, scalar_prefetch = 0 : i64, scratch_operands = 0 : i64, tpu.core_type = #tpu.core_type<tc>, window_params = [{transform_indices = @transform_0, window_bounds = array<i64: 16, 32>}, {pipeline_mode = #tpu.pipeline_mode<synchronous>, transform_indices = @transform_1, window_bounds = array<i64: 64, 16>}, {pipeline_mode = #tpu.pipeline_mode<synchronous>, transform_indices = @transform_2, window_bounds = array<i64: 16, 64>}, {pipeline_mode = #tpu.pipeline_mode<synchronous>, transform_indices = @transform_3, window_bounds = array<i64: 16, 64>}, {pipeline_mode = #tpu.pipeline_mode<synchronous>, transform_indices = @transform_4, window_bounds = array<i64: 64, 64>}, {pipeline_mode = #tpu.pipeline_mode<synchronous>, transform_indices = @transform_5, window_bounds = array<i64: 2, 32, 224>}, {pipeline_mode = #tpu.pipeline_mode<synchronous>, transform_indices = @transform_6, window_bounds = array<i64: 2, 8, 128>}, {pipeline_mode = #tpu.pipeline_mode<synchronous>, transform_indices = @transform_7, window_bounds = array<i64: 2, 64, 32>}, {pipeline_mode = #tpu.pipeline_mode<synchronous>, transform_indices = @transform_8, window_bounds = array<i64: 5, 32>}, {pipeline_mode = #tpu.pipeline_mode<synchronous>, transform_indices = @transform_9, window_bounds = array<i64: 2, 32, 224>}, {pipeline_mode = #tpu.pipeline_mode<synchronous>, transform_indices = @transform_10, window_bounds = array<i64: 2, 8, 128>}, {pipeline_mode = #tpu.pipeline_mode<synchronous>, transform_indices = @transform_11, window_bounds = array<i64: 2, 64, 32>}, {pipeline_mode = #tpu.pipeline_mode<synchronous>, transform_indices = @transform_12, window_bounds = array<i64: 5, 32>}, {pipeline_mode = #tpu.pipeline_mode<synchronous>, transform_indices = @transform_13, window_bounds = array<i64: 32, 288>}, {transform_indices = @transform_14, window_bounds = array<i64: 16, 128>}, {transform_indices = @transform_15, window_bounds = array<i64: 16, 128>}]} {
    %c0 = arith.constant 0 : index
    %c0_0 = arith.constant 0 : index
    %0 = vector.load %arg2[%c0, %c0_0] : memref<64x16xf32, #tpu.memory_space<vmem>>, vector<64x16xf32>
    %c0_1 = arith.constant 0 : index
    %c0_2 = arith.constant 0 : index
    %1 = vector.load %arg3[%c0_1, %c0_2] : memref<16x64xf32, #tpu.memory_space<vmem>>, vector<16x64xf32>
    %c0_3 = arith.constant 0 : index
    %c0_4 = arith.constant 0 : index
    %2 = vector.load %arg4[%c0_3, %c0_4] : memref<16x64xf32, #tpu.memory_space<vmem>>, vector<16x64xf32>
    %c0_5 = arith.constant 0 : index
    %c0_6 = arith.constant 0 : index
    %3 = vector.load %arg5[%c0_5, %c0_6] : memref<64x64xf32, #tpu.memory_space<vmem>>, vector<64x64xf32>
    %c0_7 = arith.constant 0 : index
    %c0_8 = arith.constant 0 : index
    %4 = vector.load %arg14[%c0_7, %c0_8] : memref<32x288xbf16, #tpu.memory_space<vmem>>, vector<32x288xbf16>
    %c0_9 = arith.constant 0 : index
    %c0_10 = arith.constant 0 : index
    %5 = vector.load %arg1[%c0_9, %c0_10] : memref<16x32xf32, #tpu.memory_space<vmem>>, vector<16x32xf32>
    %c0_11 = arith.constant 0 : index
    %c0_12 = arith.constant 0 : index
    %6 = vector.load %arg9[%c0_11, %c0_12] : memref<5x32xf32, #tpu.memory_space<vmem>>, vector<5x32xf32>
    %c0_13 = arith.constant 0 : index
    %c0_14 = arith.constant 0 : index
    %c0_15 = arith.constant 0 : index
    %7 = vector.load %arg6[%c0_13, %c0_14, %c0_15] : memref<2x32x224xbf16, #tpu.memory_space<vmem>>, vector<1x32x224xbf16>
    %8 = vector.shape_cast %7 : vector<1x32x224xbf16> to vector<32x224xbf16>
    %9 = vector.extract_strided_slice %6 {offsets = [0, 0], sizes = [1, 32], strides = [1, 1]} : vector<5x32xf32> to vector<1x32xf32>
    %10 = vector.extract_strided_slice %8 {offsets = [0, 0], sizes = [32, 96], strides = [1, 1]} : vector<32x224xbf16> to vector<32x96xbf16>
    %c0_16 = arith.constant 0 : index
    %c0_17 = arith.constant 0 : index
    %c0_18 = arith.constant 0 : index
    %11 = vector.load %arg7[%c0_16, %c0_17, %c0_18] : memref<2x8x128xbf16, #tpu.memory_space<vmem>>, vector<1x8x128xbf16>
    %12 = vector.shape_cast %11 : vector<1x8x128xbf16> to vector<8x128xbf16>
    %13 = vector.extract_strided_slice %6 {offsets = [1, 0], sizes = [1, 32], strides = [1, 1]} : vector<5x32xf32> to vector<1x32xf32>
    %14 = vector.extract_strided_slice %8 {offsets = [0, 96], sizes = [32, 128], strides = [1, 1]} : vector<32x224xbf16> to vector<32x128xbf16>
    %c0_19 = arith.constant 0 : index
    %c0_20 = arith.constant 0 : index
    %c0_21 = arith.constant 0 : index
    %15 = vector.load %arg8[%c0_19, %c0_20, %c0_21] : memref<2x64x32xbf16, #tpu.memory_space<vmem>>, vector<1x64x32xbf16>
    %16 = vector.shape_cast %15 : vector<1x64x32xbf16> to vector<64x32xbf16>
    %17 = arith.mulf %5, %5 : vector<16x32xf32>
    %cst = arith.constant dense<0.000000e+00> : vector<16xf32>
    %18 = vector.multi_reduction <add>, %17, %cst [1] : vector<16x32xf32> to vector<16xf32>
    %19 = vector.shape_cast %18 : vector<16xf32> to vector<16x1xf32>
    %cst_22 = arith.constant 3.200000e+01 : f32
    %20 = vector.broadcast %cst_22 : f32 to vector<16x1xf32>
    %21 = arith.divf %19, %20 : vector<16x1xf32>
    %cst_23 = arith.constant 9.99999997E-7 : f32
    %22 = vector.broadcast %cst_23 : f32 to vector<16x1xf32>
    %23 = arith.addf %21, %22 : vector<16x1xf32>
    %24 = math.rsqrt %23 : vector<16x1xf32>
    %25 = vector.broadcast %24 : vector<16x1xf32> to vector<16x32xf32>
    %26 = arith.mulf %5, %25 : vector<16x32xf32>
    %27 = vector.broadcast %9 : vector<1x32xf32> to vector<16x32xf32>
    %28 = arith.mulf %26, %27 : vector<16x32xf32>
    %29 = arith.truncf %28 : vector<16x32xf32> to vector<16x32xbf16>
    %cst_24 = arith.constant dense<0.000000e+00> : vector<16x96xf32>
    %30 = tpu.matmul %29, %10, %cst_24 {dimension_numbers = #tpu.dot_dimension_numbers<[1], [0], [0], [1], [0, 0, 1, 1], [], []>} : vector<16x32xbf16>, vector<32x96xbf16>, vector<16x96xf32> -> vector<16x96xf32>
    %31 = vector.extract_strided_slice %30 {offsets = [0, 0], sizes = [16, 64], strides = [1, 1]} : vector<16x96xf32> to vector<16x64xf32>
    %32 = arith.mulf %31, %1 : vector<16x64xf32>
    %cst_25 = arith.constant dense<0.000000e+00> : vector<16x64xf32>
    %33 = tpu.matmul %31, %3, %cst_25 {dimension_numbers = #tpu.dot_dimension_numbers<[1], [0], [0], [1], [0, 0, 1, 1], [], []>} : vector<16x64xf32>, vector<64x64xf32>, vector<16x64xf32> -> vector<16x64xf32>
    %34 = arith.mulf %33, %2 : vector<16x64xf32>
    %35 = arith.addf %32, %34 : vector<16x64xf32>
    %36 = vector.extract_strided_slice %35 {offsets = [0, 0], sizes = [16, 32], strides = [1, 1]} : vector<16x64xf32> to vector<16x32xf32>
    %37 = vector.extract_strided_slice %35 {offsets = [0, 32], sizes = [16, 32], strides = [1, 1]} : vector<16x64xf32> to vector<16x32xf32>
    %38 = vector.extract_strided_slice %30 {offsets = [0, 64], sizes = [16, 32], strides = [1, 1]} : vector<16x96xf32> to vector<16x32xf32>
    %39 = vector.extract_strided_slice %36 {offsets = [0, 0], sizes = [16, 8], strides = [1, 1]} : vector<16x32xf32> to vector<16x8xf32>
    %40 = vector.extract_strided_slice %37 {offsets = [0, 0], sizes = [16, 8], strides = [1, 1]} : vector<16x32xf32> to vector<16x8xf32>
    %cst_26 = arith.constant dense<0.000000e+00> : vector<16x16xf32>
    %41 = tpu.matmul %39, %40, %cst_26 {dimension_numbers = #tpu.dot_dimension_numbers<[1], [1], [0], [0], [0, 0, 1, 0], [], []>} : vector<16x8xf32>, vector<16x8xf32>, vector<16x16xf32> -> vector<16x16xf32>
    %42 = vector.extract_strided_slice %36 {offsets = [0, 8], sizes = [16, 8], strides = [1, 1]} : vector<16x32xf32> to vector<16x8xf32>
    %43 = vector.extract_strided_slice %37 {offsets = [0, 8], sizes = [16, 8], strides = [1, 1]} : vector<16x32xf32> to vector<16x8xf32>
    %cst_27 = arith.constant dense<0.000000e+00> : vector<16x16xf32>
    %44 = tpu.matmul %42, %43, %cst_27 {dimension_numbers = #tpu.dot_dimension_numbers<[1], [1], [0], [0], [0, 0, 1, 0], [], []>} : vector<16x8xf32>, vector<16x8xf32>, vector<16x16xf32> -> vector<16x16xf32>
    %45 = vector.extract_strided_slice %36 {offsets = [0, 16], sizes = [16, 8], strides = [1, 1]} : vector<16x32xf32> to vector<16x8xf32>
    %46 = vector.extract_strided_slice %37 {offsets = [0, 16], sizes = [16, 8], strides = [1, 1]} : vector<16x32xf32> to vector<16x8xf32>
    %cst_28 = arith.constant dense<0.000000e+00> : vector<16x16xf32>
    %47 = tpu.matmul %45, %46, %cst_28 {dimension_numbers = #tpu.dot_dimension_numbers<[1], [1], [0], [0], [0, 0, 1, 0], [], []>} : vector<16x8xf32>, vector<16x8xf32>, vector<16x16xf32> -> vector<16x16xf32>
    %48 = vector.extract_strided_slice %36 {offsets = [0, 24], sizes = [16, 8], strides = [1, 1]} : vector<16x32xf32> to vector<16x8xf32>
    %49 = vector.extract_strided_slice %37 {offsets = [0, 24], sizes = [16, 8], strides = [1, 1]} : vector<16x32xf32> to vector<16x8xf32>
    %cst_29 = arith.constant dense<0.000000e+00> : vector<16x16xf32>
    %50 = tpu.matmul %48, %49, %cst_29 {dimension_numbers = #tpu.dot_dimension_numbers<[1], [1], [0], [0], [0, 0, 1, 0], [], []>} : vector<16x8xf32>, vector<16x8xf32>, vector<16x16xf32> -> vector<16x16xf32>
    %51 = tpu.concatenate %41, %44, %47, %50 in 0 : vector<16x16xf32>, vector<16x16xf32>, vector<16x16xf32>, vector<16x16xf32> -> vector<64x16xf32>
    %cst_30 = arith.constant 0.353553385 : f32
    %52 = vector.broadcast %cst_30 : f32 to vector<64x16xf32>
    %53 = arith.mulf %51, %52 : vector<64x16xf32>
    %54 = arith.addf %53, %0 : vector<64x16xf32>
    %cst_31 = arith.constant dense<0xFF800000> : vector<64xf32>
    %55 = vector.multi_reduction <maximumf>, %54, %cst_31 [1] : vector<64x16xf32> to vector<64xf32>
    %56 = vector.shape_cast %55 : vector<64xf32> to vector<64x1xf32>
    %57 = vector.broadcast %56 : vector<64x1xf32> to vector<64x16xf32>
    %58 = arith.subf %54, %57 : vector<64x16xf32>
    %59 = math.exp %58 : vector<64x16xf32>
    %cst_32 = arith.constant dense<0.000000e+00> : vector<64xf32>
    %60 = vector.multi_reduction <add>, %59, %cst_32 [1] : vector<64x16xf32> to vector<64xf32>
    %61 = vector.shape_cast %60 : vector<64xf32> to vector<64x1xf32>
    %62 = tpu.reciprocal %61 {approx = true} : vector<64x1xf32> -> vector<64x1xf32>
    %63 = vector.broadcast %62 : vector<64x1xf32> to vector<64x16xf32>
    %64 = arith.mulf %59, %63 : vector<64x16xf32>
    %65 = vector.extract_strided_slice %64 {offsets = [0, 0], sizes = [16, 16], strides = [1, 1]} : vector<64x16xf32> to vector<16x16xf32>
    %66 = vector.extract_strided_slice %38 {offsets = [0, 0], sizes = [16, 8], strides = [1, 1]} : vector<16x32xf32> to vector<16x8xf32>
    %cst_33 = arith.constant dense<0.000000e+00> : vector<16x8xf32>
    %67 = tpu.matmul %65, %66, %cst_33 {dimension_numbers = #tpu.dot_dimension_numbers<[1], [0], [0], [1], [0, 0, 1, 1], [], []>} : vector<16x16xf32>, vector<16x8xf32>, vector<16x8xf32> -> vector<16x8xf32>
    %68 = arith.truncf %67 : vector<16x8xf32> to vector<16x8xbf16>
    %69 = vector.extract_strided_slice %12 {offsets = [0, 0], sizes = [8, 32], strides = [1, 1]} : vector<8x128xbf16> to vector<8x32xbf16>
    %cst_34 = arith.constant dense<0.000000e+00> : vector<16x32xf32>
    %70 = tpu.matmul %68, %69, %cst_34 {dimension_numbers = #tpu.dot_dimension_numbers<[1], [0], [0], [1], [0, 0, 1, 1], [], []>} : vector<16x8xbf16>, vector<8x32xbf16>, vector<16x32xf32> -> vector<16x32xf32>
    %71 = arith.addf %5, %70 : vector<16x32xf32>
    %72 = vector.extract_strided_slice %64 {offsets = [16, 0], sizes = [16, 16], strides = [1, 1]} : vector<64x16xf32> to vector<16x16xf32>
    %73 = vector.extract_strided_slice %38 {offsets = [0, 8], sizes = [16, 8], strides = [1, 1]} : vector<16x32xf32> to vector<16x8xf32>
    %cst_35 = arith.constant dense<0.000000e+00> : vector<16x8xf32>
    %74 = tpu.matmul %72, %73, %cst_35 {dimension_numbers = #tpu.dot_dimension_numbers<[1], [0], [0], [1], [0, 0, 1, 1], [], []>} : vector<16x16xf32>, vector<16x8xf32>, vector<16x8xf32> -> vector<16x8xf32>
    %75 = arith.truncf %74 : vector<16x8xf32> to vector<16x8xbf16>
    %76 = vector.extract_strided_slice %12 {offsets = [0, 32], sizes = [8, 32], strides = [1, 1]} : vector<8x128xbf16> to vector<8x32xbf16>
    %cst_36 = arith.constant dense<0.000000e+00> : vector<16x32xf32>
    %77 = tpu.matmul %75, %76, %cst_36 {dimension_numbers = #tpu.dot_dimension_numbers<[1], [0], [0], [1], [0, 0, 1, 1], [], []>} : vector<16x8xbf16>, vector<8x32xbf16>, vector<16x32xf32> -> vector<16x32xf32>
    %78 = arith.addf %71, %77 : vector<16x32xf32>
    %79 = vector.extract_strided_slice %64 {offsets = [32, 0], sizes = [16, 16], strides = [1, 1]} : vector<64x16xf32> to vector<16x16xf32>
    %80 = vector.extract_strided_slice %38 {offsets = [0, 16], sizes = [16, 8], strides = [1, 1]} : vector<16x32xf32> to vector<16x8xf32>
    %cst_37 = arith.constant dense<0.000000e+00> : vector<16x8xf32>
    %81 = tpu.matmul %79, %80, %cst_37 {dimension_numbers = #tpu.dot_dimension_numbers<[1], [0], [0], [1], [0, 0, 1, 1], [], []>} : vector<16x16xf32>, vector<16x8xf32>, vector<16x8xf32> -> vector<16x8xf32>
    %82 = arith.truncf %81 : vector<16x8xf32> to vector<16x8xbf16>
    %83 = vector.extract_strided_slice %12 {offsets = [0, 64], sizes = [8, 32], strides = [1, 1]} : vector<8x128xbf16> to vector<8x32xbf16>
    %cst_38 = arith.constant dense<0.000000e+00> : vector<16x32xf32>
    %84 = tpu.matmul %82, %83, %cst_38 {dimension_numbers = #tpu.dot_dimension_numbers<[1], [0], [0], [1], [0, 0, 1, 1], [], []>} : vector<16x8xbf16>, vector<8x32xbf16>, vector<16x32xf32> -> vector<16x32xf32>
    %85 = arith.addf %78, %84 : vector<16x32xf32>
    %86 = vector.extract_strided_slice %64 {offsets = [48, 0], sizes = [16, 16], strides = [1, 1]} : vector<64x16xf32> to vector<16x16xf32>
    %87 = vector.extract_strided_slice %38 {offsets = [0, 24], sizes = [16, 8], strides = [1, 1]} : vector<16x32xf32> to vector<16x8xf32>
    %cst_39 = arith.constant dense<0.000000e+00> : vector<16x8xf32>
    %88 = tpu.matmul %86, %87, %cst_39 {dimension_numbers = #tpu.dot_dimension_numbers<[1], [0], [0], [1], [0, 0, 1, 1], [], []>} : vector<16x16xf32>, vector<16x8xf32>, vector<16x8xf32> -> vector<16x8xf32>
    %89 = arith.truncf %88 : vector<16x8xf32> to vector<16x8xbf16>
    %90 = vector.extract_strided_slice %12 {offsets = [0, 96], sizes = [8, 32], strides = [1, 1]} : vector<8x128xbf16> to vector<8x32xbf16>
    %cst_40 = arith.constant dense<0.000000e+00> : vector<16x32xf32>
    %91 = tpu.matmul %89, %90, %cst_40 {dimension_numbers = #tpu.dot_dimension_numbers<[1], [0], [0], [1], [0, 0, 1, 1], [], []>} : vector<16x8xbf16>, vector<8x32xbf16>, vector<16x32xf32> -> vector<16x32xf32>
    %92 = arith.addf %85, %91 : vector<16x32xf32>
    %93 = arith.mulf %92, %92 : vector<16x32xf32>
    %cst_41 = arith.constant dense<0.000000e+00> : vector<16xf32>
    %94 = vector.multi_reduction <add>, %93, %cst_41 [1] : vector<16x32xf32> to vector<16xf32>
    %95 = vector.shape_cast %94 : vector<16xf32> to vector<16x1xf32>
    %cst_42 = arith.constant 3.200000e+01 : f32
    %96 = vector.broadcast %cst_42 : f32 to vector<16x1xf32>
    %97 = arith.divf %95, %96 : vector<16x1xf32>
    %cst_43 = arith.constant 9.99999997E-7 : f32
    %98 = vector.broadcast %cst_43 : f32 to vector<16x1xf32>
    %99 = arith.addf %97, %98 : vector<16x1xf32>
    %100 = math.rsqrt %99 : vector<16x1xf32>
    %101 = vector.broadcast %100 : vector<16x1xf32> to vector<16x32xf32>
    %102 = arith.mulf %92, %101 : vector<16x32xf32>
    %103 = vector.broadcast %13 : vector<1x32xf32> to vector<16x32xf32>
    %104 = arith.mulf %102, %103 : vector<16x32xf32>
    %105 = arith.truncf %104 : vector<16x32xf32> to vector<16x32xbf16>
    %cst_44 = arith.constant dense<0.000000e+00> : vector<16x128xf32>
    %106 = tpu.matmul %105, %14, %cst_44 {dimension_numbers = #tpu.dot_dimension_numbers<[1], [0], [0], [1], [0, 0, 1, 1], [], []>} : vector<16x32xbf16>, vector<32x128xbf16>, vector<16x128xf32> -> vector<16x128xf32>
    %107 = vector.extract_strided_slice %106 {offsets = [0, 0], sizes = [16, 64], strides = [1, 1]} : vector<16x128xf32> to vector<16x64xf32>
    %108 = vector.extract_strided_slice %106 {offsets = [0, 64], sizes = [16, 64], strides = [1, 1]} : vector<16x128xf32> to vector<16x64xf32>
    %109 = arith.negf %107 : vector<16x64xf32>
    %110 = math.exp %109 : vector<16x64xf32>
    %cst_45 = arith.constant 1.000000e+00 : f32
    %111 = vector.broadcast %cst_45 : f32 to vector<16x64xf32>
    %112 = arith.addf %111, %110 : vector<16x64xf32>
    %113 = arith.divf %111, %112 : vector<16x64xf32>
    %114 = arith.mulf %107, %113 : vector<16x64xf32>
    %115 = arith.mulf %114, %108 : vector<16x64xf32>
    %116 = arith.truncf %115 : vector<16x64xf32> to vector<16x64xbf16>
    %cst_46 = arith.constant dense<0.000000e+00> : vector<16x32xf32>
    %117 = tpu.matmul %116, %16, %cst_46 {dimension_numbers = #tpu.dot_dimension_numbers<[1], [0], [0], [1], [0, 0, 1, 1], [], []>} : vector<16x64xbf16>, vector<64x32xbf16>, vector<16x32xf32> -> vector<16x32xf32>
    %118 = arith.addf %92, %117 : vector<16x32xf32>
    %c1 = arith.constant 1 : index
    %c0_47 = arith.constant 0 : index
    %c0_48 = arith.constant 0 : index
    %119 = vector.load %arg6[%c1, %c0_47, %c0_48] : memref<2x32x224xbf16, #tpu.memory_space<vmem>>, vector<1x32x224xbf16>
    %120 = vector.shape_cast %119 : vector<1x32x224xbf16> to vector<32x224xbf16>
    %121 = vector.extract_strided_slice %6 {offsets = [2, 0], sizes = [1, 32], strides = [1, 1]} : vector<5x32xf32> to vector<1x32xf32>
    %122 = vector.extract_strided_slice %120 {offsets = [0, 0], sizes = [32, 96], strides = [1, 1]} : vector<32x224xbf16> to vector<32x96xbf16>
    %c1_49 = arith.constant 1 : index
    %c0_50 = arith.constant 0 : index
    %c0_51 = arith.constant 0 : index
    %123 = vector.load %arg7[%c1_49, %c0_50, %c0_51] : memref<2x8x128xbf16, #tpu.memory_space<vmem>>, vector<1x8x128xbf16>
    %124 = vector.shape_cast %123 : vector<1x8x128xbf16> to vector<8x128xbf16>
    %125 = vector.extract_strided_slice %6 {offsets = [3, 0], sizes = [1, 32], strides = [1, 1]} : vector<5x32xf32> to vector<1x32xf32>
    %126 = vector.extract_strided_slice %120 {offsets = [0, 96], sizes = [32, 128], strides = [1, 1]} : vector<32x224xbf16> to vector<32x128xbf16>
    %c1_52 = arith.constant 1 : index
    %c0_53 = arith.constant 0 : index
    %c0_54 = arith.constant 0 : index
    %127 = vector.load %arg8[%c1_52, %c0_53, %c0_54] : memref<2x64x32xbf16, #tpu.memory_space<vmem>>, vector<1x64x32xbf16>
    %128 = vector.shape_cast %127 : vector<1x64x32xbf16> to vector<64x32xbf16>
    %129 = arith.mulf %118, %118 : vector<16x32xf32>
    %cst_55 = arith.constant dense<0.000000e+00> : vector<16xf32>
    %130 = vector.multi_reduction <add>, %129, %cst_55 [1] : vector<16x32xf32> to vector<16xf32>
    %131 = vector.shape_cast %130 : vector<16xf32> to vector<16x1xf32>
    %cst_56 = arith.constant 3.200000e+01 : f32
    %132 = vector.broadcast %cst_56 : f32 to vector<16x1xf32>
    %133 = arith.divf %131, %132 : vector<16x1xf32>
    %cst_57 = arith.constant 9.99999997E-7 : f32
    %134 = vector.broadcast %cst_57 : f32 to vector<16x1xf32>
    %135 = arith.addf %133, %134 : vector<16x1xf32>
    %136 = math.rsqrt %135 : vector<16x1xf32>
    %137 = vector.broadcast %136 : vector<16x1xf32> to vector<16x32xf32>
    %138 = arith.mulf %118, %137 : vector<16x32xf32>
    %139 = vector.broadcast %121 : vector<1x32xf32> to vector<16x32xf32>
    %140 = arith.mulf %138, %139 : vector<16x32xf32>
    %141 = arith.truncf %140 : vector<16x32xf32> to vector<16x32xbf16>
    %cst_58 = arith.constant dense<0.000000e+00> : vector<16x96xf32>
    %142 = tpu.matmul %141, %122, %cst_58 {dimension_numbers = #tpu.dot_dimension_numbers<[1], [0], [0], [1], [0, 0, 1, 1], [], []>} : vector<16x32xbf16>, vector<32x96xbf16>, vector<16x96xf32> -> vector<16x96xf32>
    %143 = vector.extract_strided_slice %142 {offsets = [0, 0], sizes = [16, 64], strides = [1, 1]} : vector<16x96xf32> to vector<16x64xf32>
    %144 = arith.mulf %143, %1 : vector<16x64xf32>
    %cst_59 = arith.constant dense<0.000000e+00> : vector<16x64xf32>
    %145 = tpu.matmul %143, %3, %cst_59 {dimension_numbers = #tpu.dot_dimension_numbers<[1], [0], [0], [1], [0, 0, 1, 1], [], []>} : vector<16x64xf32>, vector<64x64xf32>, vector<16x64xf32> -> vector<16x64xf32>
    %146 = arith.mulf %145, %2 : vector<16x64xf32>
    %147 = arith.addf %144, %146 : vector<16x64xf32>
    %148 = vector.extract_strided_slice %147 {offsets = [0, 0], sizes = [16, 32], strides = [1, 1]} : vector<16x64xf32> to vector<16x32xf32>
    %149 = vector.extract_strided_slice %147 {offsets = [0, 32], sizes = [16, 32], strides = [1, 1]} : vector<16x64xf32> to vector<16x32xf32>
    %150 = vector.extract_strided_slice %142 {offsets = [0, 64], sizes = [16, 32], strides = [1, 1]} : vector<16x96xf32> to vector<16x32xf32>
    %151 = vector.extract_strided_slice %148 {offsets = [0, 0], sizes = [16, 8], strides = [1, 1]} : vector<16x32xf32> to vector<16x8xf32>
    %152 = vector.extract_strided_slice %149 {offsets = [0, 0], sizes = [16, 8], strides = [1, 1]} : vector<16x32xf32> to vector<16x8xf32>
    %cst_60 = arith.constant dense<0.000000e+00> : vector<16x16xf32>
    %153 = tpu.matmul %151, %152, %cst_60 {dimension_numbers = #tpu.dot_dimension_numbers<[1], [1], [0], [0], [0, 0, 1, 0], [], []>} : vector<16x8xf32>, vector<16x8xf32>, vector<16x16xf32> -> vector<16x16xf32>
    %154 = vector.extract_strided_slice %148 {offsets = [0, 8], sizes = [16, 8], strides = [1, 1]} : vector<16x32xf32> to vector<16x8xf32>
    %155 = vector.extract_strided_slice %149 {offsets = [0, 8], sizes = [16, 8], strides = [1, 1]} : vector<16x32xf32> to vector<16x8xf32>
    %cst_61 = arith.constant dense<0.000000e+00> : vector<16x16xf32>
    %156 = tpu.matmul %154, %155, %cst_61 {dimension_numbers = #tpu.dot_dimension_numbers<[1], [1], [0], [0], [0, 0, 1, 0], [], []>} : vector<16x8xf32>, vector<16x8xf32>, vector<16x16xf32> -> vector<16x16xf32>
    %157 = vector.extract_strided_slice %148 {offsets = [0, 16], sizes = [16, 8], strides = [1, 1]} : vector<16x32xf32> to vector<16x8xf32>
    %158 = vector.extract_strided_slice %149 {offsets = [0, 16], sizes = [16, 8], strides = [1, 1]} : vector<16x32xf32> to vector<16x8xf32>
    %cst_62 = arith.constant dense<0.000000e+00> : vector<16x16xf32>
    %159 = tpu.matmul %157, %158, %cst_62 {dimension_numbers = #tpu.dot_dimension_numbers<[1], [1], [0], [0], [0, 0, 1, 0], [], []>} : vector<16x8xf32>, vector<16x8xf32>, vector<16x16xf32> -> vector<16x16xf32>
    %160 = vector.extract_strided_slice %148 {offsets = [0, 24], sizes = [16, 8], strides = [1, 1]} : vector<16x32xf32> to vector<16x8xf32>
    %161 = vector.extract_strided_slice %149 {offsets = [0, 24], sizes = [16, 8], strides = [1, 1]} : vector<16x32xf32> to vector<16x8xf32>
    %cst_63 = arith.constant dense<0.000000e+00> : vector<16x16xf32>
    %162 = tpu.matmul %160, %161, %cst_63 {dimension_numbers = #tpu.dot_dimension_numbers<[1], [1], [0], [0], [0, 0, 1, 0], [], []>} : vector<16x8xf32>, vector<16x8xf32>, vector<16x16xf32> -> vector<16x16xf32>
    %163 = tpu.concatenate %153, %156, %159, %162 in 0 : vector<16x16xf32>, vector<16x16xf32>, vector<16x16xf32>, vector<16x16xf32> -> vector<64x16xf32>
    %cst_64 = arith.constant 0.353553385 : f32
    %164 = vector.broadcast %cst_64 : f32 to vector<64x16xf32>
    %165 = arith.mulf %163, %164 : vector<64x16xf32>
    %166 = arith.addf %165, %0 : vector<64x16xf32>
    %cst_65 = arith.constant dense<0xFF800000> : vector<64xf32>
    %167 = vector.multi_reduction <maximumf>, %166, %cst_65 [1] : vector<64x16xf32> to vector<64xf32>
    %168 = vector.shape_cast %167 : vector<64xf32> to vector<64x1xf32>
    %169 = vector.broadcast %168 : vector<64x1xf32> to vector<64x16xf32>
    %170 = arith.subf %166, %169 : vector<64x16xf32>
    %171 = math.exp %170 : vector<64x16xf32>
    %cst_66 = arith.constant dense<0.000000e+00> : vector<64xf32>
    %172 = vector.multi_reduction <add>, %171, %cst_66 [1] : vector<64x16xf32> to vector<64xf32>
    %173 = vector.shape_cast %172 : vector<64xf32> to vector<64x1xf32>
    %174 = tpu.reciprocal %173 {approx = true} : vector<64x1xf32> -> vector<64x1xf32>
    %175 = vector.broadcast %174 : vector<64x1xf32> to vector<64x16xf32>
    %176 = arith.mulf %171, %175 : vector<64x16xf32>
    %177 = vector.extract_strided_slice %176 {offsets = [0, 0], sizes = [16, 16], strides = [1, 1]} : vector<64x16xf32> to vector<16x16xf32>
    %178 = vector.extract_strided_slice %150 {offsets = [0, 0], sizes = [16, 8], strides = [1, 1]} : vector<16x32xf32> to vector<16x8xf32>
    %cst_67 = arith.constant dense<0.000000e+00> : vector<16x8xf32>
    %179 = tpu.matmul %177, %178, %cst_67 {dimension_numbers = #tpu.dot_dimension_numbers<[1], [0], [0], [1], [0, 0, 1, 1], [], []>} : vector<16x16xf32>, vector<16x8xf32>, vector<16x8xf32> -> vector<16x8xf32>
    %180 = arith.truncf %179 : vector<16x8xf32> to vector<16x8xbf16>
    %181 = vector.extract_strided_slice %124 {offsets = [0, 0], sizes = [8, 32], strides = [1, 1]} : vector<8x128xbf16> to vector<8x32xbf16>
    %cst_68 = arith.constant dense<0.000000e+00> : vector<16x32xf32>
    %182 = tpu.matmul %180, %181, %cst_68 {dimension_numbers = #tpu.dot_dimension_numbers<[1], [0], [0], [1], [0, 0, 1, 1], [], []>} : vector<16x8xbf16>, vector<8x32xbf16>, vector<16x32xf32> -> vector<16x32xf32>
    %183 = arith.addf %118, %182 : vector<16x32xf32>
    %184 = vector.extract_strided_slice %176 {offsets = [16, 0], sizes = [16, 16], strides = [1, 1]} : vector<64x16xf32> to vector<16x16xf32>
    %185 = vector.extract_strided_slice %150 {offsets = [0, 8], sizes = [16, 8], strides = [1, 1]} : vector<16x32xf32> to vector<16x8xf32>
    %cst_69 = arith.constant dense<0.000000e+00> : vector<16x8xf32>
    %186 = tpu.matmul %184, %185, %cst_69 {dimension_numbers = #tpu.dot_dimension_numbers<[1], [0], [0], [1], [0, 0, 1, 1], [], []>} : vector<16x16xf32>, vector<16x8xf32>, vector<16x8xf32> -> vector<16x8xf32>
    %187 = arith.truncf %186 : vector<16x8xf32> to vector<16x8xbf16>
    %188 = vector.extract_strided_slice %124 {offsets = [0, 32], sizes = [8, 32], strides = [1, 1]} : vector<8x128xbf16> to vector<8x32xbf16>
    %cst_70 = arith.constant dense<0.000000e+00> : vector<16x32xf32>
    %189 = tpu.matmul %187, %188, %cst_70 {dimension_numbers = #tpu.dot_dimension_numbers<[1], [0], [0], [1], [0, 0, 1, 1], [], []>} : vector<16x8xbf16>, vector<8x32xbf16>, vector<16x32xf32> -> vector<16x32xf32>
    %190 = arith.addf %183, %189 : vector<16x32xf32>
    %191 = vector.extract_strided_slice %176 {offsets = [32, 0], sizes = [16, 16], strides = [1, 1]} : vector<64x16xf32> to vector<16x16xf32>
    %192 = vector.extract_strided_slice %150 {offsets = [0, 16], sizes = [16, 8], strides = [1, 1]} : vector<16x32xf32> to vector<16x8xf32>
    %cst_71 = arith.constant dense<0.000000e+00> : vector<16x8xf32>
    %193 = tpu.matmul %191, %192, %cst_71 {dimension_numbers = #tpu.dot_dimension_numbers<[1], [0], [0], [1], [0, 0, 1, 1], [], []>} : vector<16x16xf32>, vector<16x8xf32>, vector<16x8xf32> -> vector<16x8xf32>
    %194 = arith.truncf %193 : vector<16x8xf32> to vector<16x8xbf16>
    %195 = vector.extract_strided_slice %124 {offsets = [0, 64], sizes = [8, 32], strides = [1, 1]} : vector<8x128xbf16> to vector<8x32xbf16>
    %cst_72 = arith.constant dense<0.000000e+00> : vector<16x32xf32>
    %196 = tpu.matmul %194, %195, %cst_72 {dimension_numbers = #tpu.dot_dimension_numbers<[1], [0], [0], [1], [0, 0, 1, 1], [], []>} : vector<16x8xbf16>, vector<8x32xbf16>, vector<16x32xf32> -> vector<16x32xf32>
    %197 = arith.addf %190, %196 : vector<16x32xf32>
    %198 = vector.extract_strided_slice %176 {offsets = [48, 0], sizes = [16, 16], strides = [1, 1]} : vector<64x16xf32> to vector<16x16xf32>
    %199 = vector.extract_strided_slice %150 {offsets = [0, 24], sizes = [16, 8], strides = [1, 1]} : vector<16x32xf32> to vector<16x8xf32>
    %cst_73 = arith.constant dense<0.000000e+00> : vector<16x8xf32>
    %200 = tpu.matmul %198, %199, %cst_73 {dimension_numbers = #tpu.dot_dimension_numbers<[1], [0], [0], [1], [0, 0, 1, 1], [], []>} : vector<16x16xf32>, vector<16x8xf32>, vector<16x8xf32> -> vector<16x8xf32>
    %201 = arith.truncf %200 : vector<16x8xf32> to vector<16x8xbf16>
    %202 = vector.extract_strided_slice %124 {offsets = [0, 96], sizes = [8, 32], strides = [1, 1]} : vector<8x128xbf16> to vector<8x32xbf16>
    %cst_74 = arith.constant dense<0.000000e+00> : vector<16x32xf32>
    %203 = tpu.matmul %201, %202, %cst_74 {dimension_numbers = #tpu.dot_dimension_numbers<[1], [0], [0], [1], [0, 0, 1, 1], [], []>} : vector<16x8xbf16>, vector<8x32xbf16>, vector<16x32xf32> -> vector<16x32xf32>
    %204 = arith.addf %197, %203 : vector<16x32xf32>
    %205 = arith.mulf %204, %204 : vector<16x32xf32>
    %cst_75 = arith.constant dense<0.000000e+00> : vector<16xf32>
    %206 = vector.multi_reduction <add>, %205, %cst_75 [1] : vector<16x32xf32> to vector<16xf32>
    %207 = vector.shape_cast %206 : vector<16xf32> to vector<16x1xf32>
    %cst_76 = arith.constant 3.200000e+01 : f32
    %208 = vector.broadcast %cst_76 : f32 to vector<16x1xf32>
    %209 = arith.divf %207, %208 : vector<16x1xf32>
    %cst_77 = arith.constant 9.99999997E-7 : f32
    %210 = vector.broadcast %cst_77 : f32 to vector<16x1xf32>
    %211 = arith.addf %209, %210 : vector<16x1xf32>
    %212 = math.rsqrt %211 : vector<16x1xf32>
    %213 = vector.broadcast %212 : vector<16x1xf32> to vector<16x32xf32>
    %214 = arith.mulf %204, %213 : vector<16x32xf32>
    %215 = vector.broadcast %125 : vector<1x32xf32> to vector<16x32xf32>
    %216 = arith.mulf %214, %215 : vector<16x32xf32>
    %217 = arith.truncf %216 : vector<16x32xf32> to vector<16x32xbf16>
    %cst_78 = arith.constant dense<0.000000e+00> : vector<16x128xf32>
    %218 = tpu.matmul %217, %126, %cst_78 {dimension_numbers = #tpu.dot_dimension_numbers<[1], [0], [0], [1], [0, 0, 1, 1], [], []>} : vector<16x32xbf16>, vector<32x128xbf16>, vector<16x128xf32> -> vector<16x128xf32>
    %219 = vector.extract_strided_slice %218 {offsets = [0, 0], sizes = [16, 64], strides = [1, 1]} : vector<16x128xf32> to vector<16x64xf32>
    %220 = vector.extract_strided_slice %218 {offsets = [0, 64], sizes = [16, 64], strides = [1, 1]} : vector<16x128xf32> to vector<16x64xf32>
    %221 = arith.negf %219 : vector<16x64xf32>
    %222 = math.exp %221 : vector<16x64xf32>
    %cst_79 = arith.constant 1.000000e+00 : f32
    %223 = vector.broadcast %cst_79 : f32 to vector<16x64xf32>
    %224 = arith.addf %223, %222 : vector<16x64xf32>
    %225 = arith.divf %223, %224 : vector<16x64xf32>
    %226 = arith.mulf %219, %225 : vector<16x64xf32>
    %227 = arith.mulf %226, %220 : vector<16x64xf32>
    %228 = arith.truncf %227 : vector<16x64xf32> to vector<16x64xbf16>
    %cst_80 = arith.constant dense<0.000000e+00> : vector<16x32xf32>
    %229 = tpu.matmul %228, %128, %cst_80 {dimension_numbers = #tpu.dot_dimension_numbers<[1], [0], [0], [1], [0, 0, 1, 1], [], []>} : vector<16x64xbf16>, vector<64x32xbf16>, vector<16x32xf32> -> vector<16x32xf32>
    %230 = arith.addf %204, %229 : vector<16x32xf32>
    %231 = vector.extract_strided_slice %6 {offsets = [4, 0], sizes = [1, 32], strides = [1, 1]} : vector<5x32xf32> to vector<1x32xf32>
    %232 = arith.mulf %230, %230 : vector<16x32xf32>
    %cst_81 = arith.constant dense<0.000000e+00> : vector<16xf32>
    %233 = vector.multi_reduction <add>, %232, %cst_81 [1] : vector<16x32xf32> to vector<16xf32>
    %234 = vector.shape_cast %233 : vector<16xf32> to vector<16x1xf32>
    %cst_82 = arith.constant 3.200000e+01 : f32
    %235 = vector.broadcast %cst_82 : f32 to vector<16x1xf32>
    %236 = arith.divf %234, %235 : vector<16x1xf32>
    %cst_83 = arith.constant 9.99999997E-7 : f32
    %237 = vector.broadcast %cst_83 : f32 to vector<16x1xf32>
    %238 = arith.addf %236, %237 : vector<16x1xf32>
    %239 = math.rsqrt %238 : vector<16x1xf32>
    %240 = vector.broadcast %239 : vector<16x1xf32> to vector<16x32xf32>
    %241 = arith.mulf %230, %240 : vector<16x32xf32>
    %242 = vector.broadcast %231 : vector<1x32xf32> to vector<16x32xf32>
    %243 = arith.mulf %241, %242 : vector<16x32xf32>
    %244 = vector.extract_strided_slice %4 {offsets = [0, 0], sizes = [32, 128], strides = [1, 1]} : vector<32x288xbf16> to vector<32x128xbf16>
    %245 = arith.truncf %243 : vector<16x32xf32> to vector<16x32xbf16>
    %cst_84 = arith.constant dense<0.000000e+00> : vector<16x128xf32>
    %246 = tpu.matmul %245, %244, %cst_84 {dimension_numbers = #tpu.dot_dimension_numbers<[1], [0], [0], [1], [0, 0, 1, 1], [], []>} : vector<16x32xbf16>, vector<32x128xbf16>, vector<16x128xf32> -> vector<16x128xf32>
    %c0_85 = arith.constant 0 : index
    %c0_86 = arith.constant 0 : index
    %247 = vector.load %arg15[%c0_85, %c0_86] : memref<16x128xf32, #tpu.memory_space<vmem>>, vector<16x128xf32>
    tpu.vector_store %arg15[%c0_85, %c0_86], %246 {strides = array<i32>} : memref<16x128xf32, #tpu.memory_space<vmem>>, vector<16x128xf32>,
    %248 = vector.extract_strided_slice %4 {offsets = [0, 128], sizes = [32, 32], strides = [1, 1]} : vector<32x288xbf16> to vector<32x32xbf16>
    %249 = arith.truncf %243 : vector<16x32xf32> to vector<16x32xbf16>
    %cst_87 = arith.constant dense<0.000000e+00> : vector<16x32xf32>
    %250 = tpu.matmul %249, %248, %cst_87 {dimension_numbers = #tpu.dot_dimension_numbers<[1], [0], [0], [1], [0, 0, 1, 1], [], []>} : vector<16x32xbf16>, vector<32x32xbf16>, vector<16x32xf32> -> vector<16x32xf32>
    %c0_88 = arith.constant 0 : index
    %c0_89 = arith.constant 0 : index
    %251 = vector.load %arg13[%c0_88, %c0_89] : memref<5x32xf32, #tpu.memory_space<vmem>>, vector<5x32xf32>
    %c0_90 = arith.constant 0 : index
    %c0_91 = arith.constant 0 : index
    %c0_92 = arith.constant 0 : index
    %252 = vector.load %arg10[%c0_90, %c0_91, %c0_92] : memref<2x32x224xbf16, #tpu.memory_space<vmem>>, vector<1x32x224xbf16>
    %253 = vector.shape_cast %252 : vector<1x32x224xbf16> to vector<32x224xbf16>
    %254 = vector.extract_strided_slice %251 {offsets = [0, 0], sizes = [1, 32], strides = [1, 1]} : vector<5x32xf32> to vector<1x32xf32>
    %255 = vector.extract_strided_slice %253 {offsets = [0, 0], sizes = [32, 96], strides = [1, 1]} : vector<32x224xbf16> to vector<32x96xbf16>
    %c0_93 = arith.constant 0 : index
    %c0_94 = arith.constant 0 : index
    %c0_95 = arith.constant 0 : index
    %256 = vector.load %arg11[%c0_93, %c0_94, %c0_95] : memref<2x8x128xbf16, #tpu.memory_space<vmem>>, vector<1x8x128xbf16>
    %257 = vector.shape_cast %256 : vector<1x8x128xbf16> to vector<8x128xbf16>
    %258 = vector.extract_strided_slice %251 {offsets = [1, 0], sizes = [1, 32], strides = [1, 1]} : vector<5x32xf32> to vector<1x32xf32>
    %259 = vector.extract_strided_slice %253 {offsets = [0, 96], sizes = [32, 128], strides = [1, 1]} : vector<32x224xbf16> to vector<32x128xbf16>
    %c0_96 = arith.constant 0 : index
    %c0_97 = arith.constant 0 : index
    %c0_98 = arith.constant 0 : index
    %260 = vector.load %arg12[%c0_96, %c0_97, %c0_98] : memref<2x64x32xbf16, #tpu.memory_space<vmem>>, vector<1x64x32xbf16>
    %261 = vector.shape_cast %260 : vector<1x64x32xbf16> to vector<64x32xbf16>
    %262 = arith.mulf %250, %250 : vector<16x32xf32>
    %cst_99 = arith.constant dense<0.000000e+00> : vector<16xf32>
    %263 = vector.multi_reduction <add>, %262, %cst_99 [1] : vector<16x32xf32> to vector<16xf32>
    %264 = vector.shape_cast %263 : vector<16xf32> to vector<16x1xf32>
    %cst_100 = arith.constant 3.200000e+01 : f32
    %265 = vector.broadcast %cst_100 : f32 to vector<16x1xf32>
    %266 = arith.divf %264, %265 : vector<16x1xf32>
    %cst_101 = arith.constant 9.99999997E-7 : f32
    %267 = vector.broadcast %cst_101 : f32 to vector<16x1xf32>
    %268 = arith.addf %266, %267 : vector<16x1xf32>
    %269 = math.rsqrt %268 : vector<16x1xf32>
    %270 = vector.broadcast %269 : vector<16x1xf32> to vector<16x32xf32>
    %271 = arith.mulf %250, %270 : vector<16x32xf32>
    %272 = vector.broadcast %254 : vector<1x32xf32> to vector<16x32xf32>
    %273 = arith.mulf %271, %272 : vector<16x32xf32>
    %274 = arith.truncf %273 : vector<16x32xf32> to vector<16x32xbf16>
    %cst_102 = arith.constant dense<0.000000e+00> : vector<16x96xf32>
    %275 = tpu.matmul %274, %255, %cst_102 {dimension_numbers = #tpu.dot_dimension_numbers<[1], [0], [0], [1], [0, 0, 1, 1], [], []>} : vector<16x32xbf16>, vector<32x96xbf16>, vector<16x96xf32> -> vector<16x96xf32>
    %276 = vector.extract_strided_slice %275 {offsets = [0, 0], sizes = [16, 64], strides = [1, 1]} : vector<16x96xf32> to vector<16x64xf32>
    %277 = arith.mulf %276, %1 : vector<16x64xf32>
    %cst_103 = arith.constant dense<0.000000e+00> : vector<16x64xf32>
    %278 = tpu.matmul %276, %3, %cst_103 {dimension_numbers = #tpu.dot_dimension_numbers<[1], [0], [0], [1], [0, 0, 1, 1], [], []>} : vector<16x64xf32>, vector<64x64xf32>, vector<16x64xf32> -> vector<16x64xf32>
    %279 = arith.mulf %278, %2 : vector<16x64xf32>
    %280 = arith.addf %277, %279 : vector<16x64xf32>
    %281 = vector.extract_strided_slice %280 {offsets = [0, 0], sizes = [16, 32], strides = [1, 1]} : vector<16x64xf32> to vector<16x32xf32>
    %282 = vector.extract_strided_slice %280 {offsets = [0, 32], sizes = [16, 32], strides = [1, 1]} : vector<16x64xf32> to vector<16x32xf32>
    %283 = vector.extract_strided_slice %275 {offsets = [0, 64], sizes = [16, 32], strides = [1, 1]} : vector<16x96xf32> to vector<16x32xf32>
    %284 = vector.extract_strided_slice %281 {offsets = [0, 0], sizes = [16, 8], strides = [1, 1]} : vector<16x32xf32> to vector<16x8xf32>
    %285 = vector.extract_strided_slice %282 {offsets = [0, 0], sizes = [16, 8], strides = [1, 1]} : vector<16x32xf32> to vector<16x8xf32>
    %cst_104 = arith.constant dense<0.000000e+00> : vector<16x16xf32>
    %286 = tpu.matmul %284, %285, %cst_104 {dimension_numbers = #tpu.dot_dimension_numbers<[1], [1], [0], [0], [0, 0, 1, 0], [], []>} : vector<16x8xf32>, vector<16x8xf32>, vector<16x16xf32> -> vector<16x16xf32>
    %287 = vector.extract_strided_slice %281 {offsets = [0, 8], sizes = [16, 8], strides = [1, 1]} : vector<16x32xf32> to vector<16x8xf32>
    %288 = vector.extract_strided_slice %282 {offsets = [0, 8], sizes = [16, 8], strides = [1, 1]} : vector<16x32xf32> to vector<16x8xf32>
    %cst_105 = arith.constant dense<0.000000e+00> : vector<16x16xf32>
    %289 = tpu.matmul %287, %288, %cst_105 {dimension_numbers = #tpu.dot_dimension_numbers<[1], [1], [0], [0], [0, 0, 1, 0], [], []>} : vector<16x8xf32>, vector<16x8xf32>, vector<16x16xf32> -> vector<16x16xf32>
    %290 = vector.extract_strided_slice %281 {offsets = [0, 16], sizes = [16, 8], strides = [1, 1]} : vector<16x32xf32> to vector<16x8xf32>
    %291 = vector.extract_strided_slice %282 {offsets = [0, 16], sizes = [16, 8], strides = [1, 1]} : vector<16x32xf32> to vector<16x8xf32>
    %cst_106 = arith.constant dense<0.000000e+00> : vector<16x16xf32>
    %292 = tpu.matmul %290, %291, %cst_106 {dimension_numbers = #tpu.dot_dimension_numbers<[1], [1], [0], [0], [0, 0, 1, 0], [], []>} : vector<16x8xf32>, vector<16x8xf32>, vector<16x16xf32> -> vector<16x16xf32>
    %293 = vector.extract_strided_slice %281 {offsets = [0, 24], sizes = [16, 8], strides = [1, 1]} : vector<16x32xf32> to vector<16x8xf32>
    %294 = vector.extract_strided_slice %282 {offsets = [0, 24], sizes = [16, 8], strides = [1, 1]} : vector<16x32xf32> to vector<16x8xf32>
    %cst_107 = arith.constant dense<0.000000e+00> : vector<16x16xf32>
    %295 = tpu.matmul %293, %294, %cst_107 {dimension_numbers = #tpu.dot_dimension_numbers<[1], [1], [0], [0], [0, 0, 1, 0], [], []>} : vector<16x8xf32>, vector<16x8xf32>, vector<16x16xf32> -> vector<16x16xf32>
    %296 = tpu.concatenate %286, %289, %292, %295 in 0 : vector<16x16xf32>, vector<16x16xf32>, vector<16x16xf32>, vector<16x16xf32> -> vector<64x16xf32>
    %cst_108 = arith.constant 0.353553385 : f32
    %297 = vector.broadcast %cst_108 : f32 to vector<64x16xf32>
    %298 = arith.mulf %296, %297 : vector<64x16xf32>
    %299 = arith.addf %298, %0 : vector<64x16xf32>
    %cst_109 = arith.constant dense<0xFF800000> : vector<64xf32>
    %300 = vector.multi_reduction <maximumf>, %299, %cst_109 [1] : vector<64x16xf32> to vector<64xf32>
    %301 = vector.shape_cast %300 : vector<64xf32> to vector<64x1xf32>
    %302 = vector.broadcast %301 : vector<64x1xf32> to vector<64x16xf32>
    %303 = arith.subf %299, %302 : vector<64x16xf32>
    %304 = math.exp %303 : vector<64x16xf32>
    %cst_110 = arith.constant dense<0.000000e+00> : vector<64xf32>
    %305 = vector.multi_reduction <add>, %304, %cst_110 [1] : vector<64x16xf32> to vector<64xf32>
    %306 = vector.shape_cast %305 : vector<64xf32> to vector<64x1xf32>
    %307 = tpu.reciprocal %306 {approx = true} : vector<64x1xf32> -> vector<64x1xf32>
    %308 = vector.broadcast %307 : vector<64x1xf32> to vector<64x16xf32>
    %309 = arith.mulf %304, %308 : vector<64x16xf32>
    %310 = vector.extract_strided_slice %309 {offsets = [0, 0], sizes = [16, 16], strides = [1, 1]} : vector<64x16xf32> to vector<16x16xf32>
    %311 = vector.extract_strided_slice %283 {offsets = [0, 0], sizes = [16, 8], strides = [1, 1]} : vector<16x32xf32> to vector<16x8xf32>
    %cst_111 = arith.constant dense<0.000000e+00> : vector<16x8xf32>
    %312 = tpu.matmul %310, %311, %cst_111 {dimension_numbers = #tpu.dot_dimension_numbers<[1], [0], [0], [1], [0, 0, 1, 1], [], []>} : vector<16x16xf32>, vector<16x8xf32>, vector<16x8xf32> -> vector<16x8xf32>
    %313 = arith.truncf %312 : vector<16x8xf32> to vector<16x8xbf16>
    %314 = vector.extract_strided_slice %257 {offsets = [0, 0], sizes = [8, 32], strides = [1, 1]} : vector<8x128xbf16> to vector<8x32xbf16>
    %cst_112 = arith.constant dense<0.000000e+00> : vector<16x32xf32>
    %315 = tpu.matmul %313, %314, %cst_112 {dimension_numbers = #tpu.dot_dimension_numbers<[1], [0], [0], [1], [0, 0, 1, 1], [], []>} : vector<16x8xbf16>, vector<8x32xbf16>, vector<16x32xf32> -> vector<16x32xf32>
    %316 = arith.addf %250, %315 : vector<16x32xf32>
    %317 = vector.extract_strided_slice %309 {offsets = [16, 0], sizes = [16, 16], strides = [1, 1]} : vector<64x16xf32> to vector<16x16xf32>
    %318 = vector.extract_strided_slice %283 {offsets = [0, 8], sizes = [16, 8], strides = [1, 1]} : vector<16x32xf32> to vector<16x8xf32>
    %cst_113 = arith.constant dense<0.000000e+00> : vector<16x8xf32>
    %319 = tpu.matmul %317, %318, %cst_113 {dimension_numbers = #tpu.dot_dimension_numbers<[1], [0], [0], [1], [0, 0, 1, 1], [], []>} : vector<16x16xf32>, vector<16x8xf32>, vector<16x8xf32> -> vector<16x8xf32>
    %320 = arith.truncf %319 : vector<16x8xf32> to vector<16x8xbf16>
    %321 = vector.extract_strided_slice %257 {offsets = [0, 32], sizes = [8, 32], strides = [1, 1]} : vector<8x128xbf16> to vector<8x32xbf16>
    %cst_114 = arith.constant dense<0.000000e+00> : vector<16x32xf32>
    %322 = tpu.matmul %320, %321, %cst_114 {dimension_numbers = #tpu.dot_dimension_numbers<[1], [0], [0], [1], [0, 0, 1, 1], [], []>} : vector<16x8xbf16>, vector<8x32xbf16>, vector<16x32xf32> -> vector<16x32xf32>
    %323 = arith.addf %316, %322 : vector<16x32xf32>
    %324 = vector.extract_strided_slice %309 {offsets = [32, 0], sizes = [16, 16], strides = [1, 1]} : vector<64x16xf32> to vector<16x16xf32>
    %325 = vector.extract_strided_slice %283 {offsets = [0, 16], sizes = [16, 8], strides = [1, 1]} : vector<16x32xf32> to vector<16x8xf32>
    %cst_115 = arith.constant dense<0.000000e+00> : vector<16x8xf32>
    %326 = tpu.matmul %324, %325, %cst_115 {dimension_numbers = #tpu.dot_dimension_numbers<[1], [0], [0], [1], [0, 0, 1, 1], [], []>} : vector<16x16xf32>, vector<16x8xf32>, vector<16x8xf32> -> vector<16x8xf32>
    %327 = arith.truncf %326 : vector<16x8xf32> to vector<16x8xbf16>
    %328 = vector.extract_strided_slice %257 {offsets = [0, 64], sizes = [8, 32], strides = [1, 1]} : vector<8x128xbf16> to vector<8x32xbf16>
    %cst_116 = arith.constant dense<0.000000e+00> : vector<16x32xf32>
    %329 = tpu.matmul %327, %328, %cst_116 {dimension_numbers = #tpu.dot_dimension_numbers<[1], [0], [0], [1], [0, 0, 1, 1], [], []>} : vector<16x8xbf16>, vector<8x32xbf16>, vector<16x32xf32> -> vector<16x32xf32>
    %330 = arith.addf %323, %329 : vector<16x32xf32>
    %331 = vector.extract_strided_slice %309 {offsets = [48, 0], sizes = [16, 16], strides = [1, 1]} : vector<64x16xf32> to vector<16x16xf32>
    %332 = vector.extract_strided_slice %283 {offsets = [0, 24], sizes = [16, 8], strides = [1, 1]} : vector<16x32xf32> to vector<16x8xf32>
    %cst_117 = arith.constant dense<0.000000e+00> : vector<16x8xf32>
    %333 = tpu.matmul %331, %332, %cst_117 {dimension_numbers = #tpu.dot_dimension_numbers<[1], [0], [0], [1], [0, 0, 1, 1], [], []>} : vector<16x16xf32>, vector<16x8xf32>, vector<16x8xf32> -> vector<16x8xf32>
    %334 = arith.truncf %333 : vector<16x8xf32> to vector<16x8xbf16>
    %335 = vector.extract_strided_slice %257 {offsets = [0, 96], sizes = [8, 32], strides = [1, 1]} : vector<8x128xbf16> to vector<8x32xbf16>
    %cst_118 = arith.constant dense<0.000000e+00> : vector<16x32xf32>
    %336 = tpu.matmul %334, %335, %cst_118 {dimension_numbers = #tpu.dot_dimension_numbers<[1], [0], [0], [1], [0, 0, 1, 1], [], []>} : vector<16x8xbf16>, vector<8x32xbf16>, vector<16x32xf32> -> vector<16x32xf32>
    %337 = arith.addf %330, %336 : vector<16x32xf32>
    %338 = arith.mulf %337, %337 : vector<16x32xf32>
    %cst_119 = arith.constant dense<0.000000e+00> : vector<16xf32>
    %339 = vector.multi_reduction <add>, %338, %cst_119 [1] : vector<16x32xf32> to vector<16xf32>
    %340 = vector.shape_cast %339 : vector<16xf32> to vector<16x1xf32>
    %cst_120 = arith.constant 3.200000e+01 : f32
    %341 = vector.broadcast %cst_120 : f32 to vector<16x1xf32>
    %342 = arith.divf %340, %341 : vector<16x1xf32>
    %cst_121 = arith.constant 9.99999997E-7 : f32
    %343 = vector.broadcast %cst_121 : f32 to vector<16x1xf32>
    %344 = arith.addf %342, %343 : vector<16x1xf32>
    %345 = math.rsqrt %344 : vector<16x1xf32>
    %346 = vector.broadcast %345 : vector<16x1xf32> to vector<16x32xf32>
    %347 = arith.mulf %337, %346 : vector<16x32xf32>
    %348 = vector.broadcast %258 : vector<1x32xf32> to vector<16x32xf32>
    %349 = arith.mulf %347, %348 : vector<16x32xf32>
    %350 = arith.truncf %349 : vector<16x32xf32> to vector<16x32xbf16>
    %cst_122 = arith.constant dense<0.000000e+00> : vector<16x128xf32>
    %351 = tpu.matmul %350, %259, %cst_122 {dimension_numbers = #tpu.dot_dimension_numbers<[1], [0], [0], [1], [0, 0, 1, 1], [], []>} : vector<16x32xbf16>, vector<32x128xbf16>, vector<16x128xf32> -> vector<16x128xf32>
    %352 = vector.extract_strided_slice %351 {offsets = [0, 0], sizes = [16, 64], strides = [1, 1]} : vector<16x128xf32> to vector<16x64xf32>
    %353 = vector.extract_strided_slice %351 {offsets = [0, 64], sizes = [16, 64], strides = [1, 1]} : vector<16x128xf32> to vector<16x64xf32>
    %354 = arith.negf %352 : vector<16x64xf32>
    %355 = math.exp %354 : vector<16x64xf32>
    %cst_123 = arith.constant 1.000000e+00 : f32
    %356 = vector.broadcast %cst_123 : f32 to vector<16x64xf32>
    %357 = arith.addf %356, %355 : vector<16x64xf32>
    %358 = arith.divf %356, %357 : vector<16x64xf32>
    %359 = arith.mulf %352, %358 : vector<16x64xf32>
    %360 = arith.mulf %359, %353 : vector<16x64xf32>
    %361 = arith.truncf %360 : vector<16x64xf32> to vector<16x64xbf16>
    %cst_124 = arith.constant dense<0.000000e+00> : vector<16x32xf32>
    %362 = tpu.matmul %361, %261, %cst_124 {dimension_numbers = #tpu.dot_dimension_numbers<[1], [0], [0], [1], [0, 0, 1, 1], [], []>} : vector<16x64xbf16>, vector<64x32xbf16>, vector<16x32xf32> -> vector<16x32xf32>
    %363 = arith.addf %337, %362 : vector<16x32xf32>
    %c1_125 = arith.constant 1 : index
    %c0_126 = arith.constant 0 : index
    %c0_127 = arith.constant 0 : index
    %364 = vector.load %arg10[%c1_125, %c0_126, %c0_127] : memref<2x32x224xbf16, #tpu.memory_space<vmem>>, vector<1x32x224xbf16>
    %365 = vector.shape_cast %364 : vector<1x32x224xbf16> to vector<32x224xbf16>
    %366 = vector.extract_strided_slice %251 {offsets = [2, 0], sizes = [1, 32], strides = [1, 1]} : vector<5x32xf32> to vector<1x32xf32>
    %367 = vector.extract_strided_slice %365 {offsets = [0, 0], sizes = [32, 96], strides = [1, 1]} : vector<32x224xbf16> to vector<32x96xbf16>
    %c1_128 = arith.constant 1 : index
    %c0_129 = arith.constant 0 : index
    %c0_130 = arith.constant 0 : index
    %368 = vector.load %arg11[%c1_128, %c0_129, %c0_130] : memref<2x8x128xbf16, #tpu.memory_space<vmem>>, vector<1x8x128xbf16>
    %369 = vector.shape_cast %368 : vector<1x8x128xbf16> to vector<8x128xbf16>
    %370 = vector.extract_strided_slice %251 {offsets = [3, 0], sizes = [1, 32], strides = [1, 1]} : vector<5x32xf32> to vector<1x32xf32>
    %371 = vector.extract_strided_slice %365 {offsets = [0, 96], sizes = [32, 128], strides = [1, 1]} : vector<32x224xbf16> to vector<32x128xbf16>
    %c1_131 = arith.constant 1 : index
    %c0_132 = arith.constant 0 : index
    %c0_133 = arith.constant 0 : index
    %372 = vector.load %arg12[%c1_131, %c0_132, %c0_133] : memref<2x64x32xbf16, #tpu.memory_space<vmem>>, vector<1x64x32xbf16>
    %373 = vector.shape_cast %372 : vector<1x64x32xbf16> to vector<64x32xbf16>
    %374 = arith.mulf %363, %363 : vector<16x32xf32>
    %cst_134 = arith.constant dense<0.000000e+00> : vector<16xf32>
    %375 = vector.multi_reduction <add>, %374, %cst_134 [1] : vector<16x32xf32> to vector<16xf32>
    %376 = vector.shape_cast %375 : vector<16xf32> to vector<16x1xf32>
    %cst_135 = arith.constant 3.200000e+01 : f32
    %377 = vector.broadcast %cst_135 : f32 to vector<16x1xf32>
    %378 = arith.divf %376, %377 : vector<16x1xf32>
    %cst_136 = arith.constant 9.99999997E-7 : f32
    %379 = vector.broadcast %cst_136 : f32 to vector<16x1xf32>
    %380 = arith.addf %378, %379 : vector<16x1xf32>
    %381 = math.rsqrt %380 : vector<16x1xf32>
    %382 = vector.broadcast %381 : vector<16x1xf32> to vector<16x32xf32>
    %383 = arith.mulf %363, %382 : vector<16x32xf32>
    %384 = vector.broadcast %366 : vector<1x32xf32> to vector<16x32xf32>
    %385 = arith.mulf %383, %384 : vector<16x32xf32>
    %386 = arith.truncf %385 : vector<16x32xf32> to vector<16x32xbf16>
    %cst_137 = arith.constant dense<0.000000e+00> : vector<16x96xf32>
    %387 = tpu.matmul %386, %367, %cst_137 {dimension_numbers = #tpu.dot_dimension_numbers<[1], [0], [0], [1], [0, 0, 1, 1], [], []>} : vector<16x32xbf16>, vector<32x96xbf16>, vector<16x96xf32> -> vector<16x96xf32>
    %388 = vector.extract_strided_slice %387 {offsets = [0, 0], sizes = [16, 64], strides = [1, 1]} : vector<16x96xf32> to vector<16x64xf32>
    %389 = arith.mulf %388, %1 : vector<16x64xf32>
    %cst_138 = arith.constant dense<0.000000e+00> : vector<16x64xf32>
    %390 = tpu.matmul %388, %3, %cst_138 {dimension_numbers = #tpu.dot_dimension_numbers<[1], [0], [0], [1], [0, 0, 1, 1], [], []>} : vector<16x64xf32>, vector<64x64xf32>, vector<16x64xf32> -> vector<16x64xf32>
    %391 = arith.mulf %390, %2 : vector<16x64xf32>
    %392 = arith.addf %389, %391 : vector<16x64xf32>
    %393 = vector.extract_strided_slice %392 {offsets = [0, 0], sizes = [16, 32], strides = [1, 1]} : vector<16x64xf32> to vector<16x32xf32>
    %394 = vector.extract_strided_slice %392 {offsets = [0, 32], sizes = [16, 32], strides = [1, 1]} : vector<16x64xf32> to vector<16x32xf32>
    %395 = vector.extract_strided_slice %387 {offsets = [0, 64], sizes = [16, 32], strides = [1, 1]} : vector<16x96xf32> to vector<16x32xf32>
    %396 = vector.extract_strided_slice %393 {offsets = [0, 0], sizes = [16, 8], strides = [1, 1]} : vector<16x32xf32> to vector<16x8xf32>
    %397 = vector.extract_strided_slice %394 {offsets = [0, 0], sizes = [16, 8], strides = [1, 1]} : vector<16x32xf32> to vector<16x8xf32>
    %cst_139 = arith.constant dense<0.000000e+00> : vector<16x16xf32>
    %398 = tpu.matmul %396, %397, %cst_139 {dimension_numbers = #tpu.dot_dimension_numbers<[1], [1], [0], [0], [0, 0, 1, 0], [], []>} : vector<16x8xf32>, vector<16x8xf32>, vector<16x16xf32> -> vector<16x16xf32>
    %399 = vector.extract_strided_slice %393 {offsets = [0, 8], sizes = [16, 8], strides = [1, 1]} : vector<16x32xf32> to vector<16x8xf32>
    %400 = vector.extract_strided_slice %394 {offsets = [0, 8], sizes = [16, 8], strides = [1, 1]} : vector<16x32xf32> to vector<16x8xf32>
    %cst_140 = arith.constant dense<0.000000e+00> : vector<16x16xf32>
    %401 = tpu.matmul %399, %400, %cst_140 {dimension_numbers = #tpu.dot_dimension_numbers<[1], [1], [0], [0], [0, 0, 1, 0], [], []>} : vector<16x8xf32>, vector<16x8xf32>, vector<16x16xf32> -> vector<16x16xf32>
    %402 = vector.extract_strided_slice %393 {offsets = [0, 16], sizes = [16, 8], strides = [1, 1]} : vector<16x32xf32> to vector<16x8xf32>
    %403 = vector.extract_strided_slice %394 {offsets = [0, 16], sizes = [16, 8], strides = [1, 1]} : vector<16x32xf32> to vector<16x8xf32>
    %cst_141 = arith.constant dense<0.000000e+00> : vector<16x16xf32>
    %404 = tpu.matmul %402, %403, %cst_141 {dimension_numbers = #tpu.dot_dimension_numbers<[1], [1], [0], [0], [0, 0, 1, 0], [], []>} : vector<16x8xf32>, vector<16x8xf32>, vector<16x16xf32> -> vector<16x16xf32>
    %405 = vector.extract_strided_slice %393 {offsets = [0, 24], sizes = [16, 8], strides = [1, 1]} : vector<16x32xf32> to vector<16x8xf32>
    %406 = vector.extract_strided_slice %394 {offsets = [0, 24], sizes = [16, 8], strides = [1, 1]} : vector<16x32xf32> to vector<16x8xf32>
    %cst_142 = arith.constant dense<0.000000e+00> : vector<16x16xf32>
    %407 = tpu.matmul %405, %406, %cst_142 {dimension_numbers = #tpu.dot_dimension_numbers<[1], [1], [0], [0], [0, 0, 1, 0], [], []>} : vector<16x8xf32>, vector<16x8xf32>, vector<16x16xf32> -> vector<16x16xf32>
    %408 = tpu.concatenate %398, %401, %404, %407 in 0 : vector<16x16xf32>, vector<16x16xf32>, vector<16x16xf32>, vector<16x16xf32> -> vector<64x16xf32>
    %cst_143 = arith.constant 0.353553385 : f32
    %409 = vector.broadcast %cst_143 : f32 to vector<64x16xf32>
    %410 = arith.mulf %408, %409 : vector<64x16xf32>
    %411 = arith.addf %410, %0 : vector<64x16xf32>
    %cst_144 = arith.constant dense<0xFF800000> : vector<64xf32>
    %412 = vector.multi_reduction <maximumf>, %411, %cst_144 [1] : vector<64x16xf32> to vector<64xf32>
    %413 = vector.shape_cast %412 : vector<64xf32> to vector<64x1xf32>
    %414 = vector.broadcast %413 : vector<64x1xf32> to vector<64x16xf32>
    %415 = arith.subf %411, %414 : vector<64x16xf32>
    %416 = math.exp %415 : vector<64x16xf32>
    %cst_145 = arith.constant dense<0.000000e+00> : vector<64xf32>
    %417 = vector.multi_reduction <add>, %416, %cst_145 [1] : vector<64x16xf32> to vector<64xf32>
    %418 = vector.shape_cast %417 : vector<64xf32> to vector<64x1xf32>
    %419 = tpu.reciprocal %418 {approx = true} : vector<64x1xf32> -> vector<64x1xf32>
    %420 = vector.broadcast %419 : vector<64x1xf32> to vector<64x16xf32>
    %421 = arith.mulf %416, %420 : vector<64x16xf32>
    %422 = vector.extract_strided_slice %421 {offsets = [0, 0], sizes = [16, 16], strides = [1, 1]} : vector<64x16xf32> to vector<16x16xf32>
    %423 = vector.extract_strided_slice %395 {offsets = [0, 0], sizes = [16, 8], strides = [1, 1]} : vector<16x32xf32> to vector<16x8xf32>
    %cst_146 = arith.constant dense<0.000000e+00> : vector<16x8xf32>
    %424 = tpu.matmul %422, %423, %cst_146 {dimension_numbers = #tpu.dot_dimension_numbers<[1], [0], [0], [1], [0, 0, 1, 1], [], []>} : vector<16x16xf32>, vector<16x8xf32>, vector<16x8xf32> -> vector<16x8xf32>
    %425 = arith.truncf %424 : vector<16x8xf32> to vector<16x8xbf16>
    %426 = vector.extract_strided_slice %369 {offsets = [0, 0], sizes = [8, 32], strides = [1, 1]} : vector<8x128xbf16> to vector<8x32xbf16>
    %cst_147 = arith.constant dense<0.000000e+00> : vector<16x32xf32>
    %427 = tpu.matmul %425, %426, %cst_147 {dimension_numbers = #tpu.dot_dimension_numbers<[1], [0], [0], [1], [0, 0, 1, 1], [], []>} : vector<16x8xbf16>, vector<8x32xbf16>, vector<16x32xf32> -> vector<16x32xf32>
    %428 = arith.addf %363, %427 : vector<16x32xf32>
    %429 = vector.extract_strided_slice %421 {offsets = [16, 0], sizes = [16, 16], strides = [1, 1]} : vector<64x16xf32> to vector<16x16xf32>
    %430 = vector.extract_strided_slice %395 {offsets = [0, 8], sizes = [16, 8], strides = [1, 1]} : vector<16x32xf32> to vector<16x8xf32>
    %cst_148 = arith.constant dense<0.000000e+00> : vector<16x8xf32>
    %431 = tpu.matmul %429, %430, %cst_148 {dimension_numbers = #tpu.dot_dimension_numbers<[1], [0], [0], [1], [0, 0, 1, 1], [], []>} : vector<16x16xf32>, vector<16x8xf32>, vector<16x8xf32> -> vector<16x8xf32>
    %432 = arith.truncf %431 : vector<16x8xf32> to vector<16x8xbf16>
    %433 = vector.extract_strided_slice %369 {offsets = [0, 32], sizes = [8, 32], strides = [1, 1]} : vector<8x128xbf16> to vector<8x32xbf16>
    %cst_149 = arith.constant dense<0.000000e+00> : vector<16x32xf32>
    %434 = tpu.matmul %432, %433, %cst_149 {dimension_numbers = #tpu.dot_dimension_numbers<[1], [0], [0], [1], [0, 0, 1, 1], [], []>} : vector<16x8xbf16>, vector<8x32xbf16>, vector<16x32xf32> -> vector<16x32xf32>
    %435 = arith.addf %428, %434 : vector<16x32xf32>
    %436 = vector.extract_strided_slice %421 {offsets = [32, 0], sizes = [16, 16], strides = [1, 1]} : vector<64x16xf32> to vector<16x16xf32>
    %437 = vector.extract_strided_slice %395 {offsets = [0, 16], sizes = [16, 8], strides = [1, 1]} : vector<16x32xf32> to vector<16x8xf32>
    %cst_150 = arith.constant dense<0.000000e+00> : vector<16x8xf32>
    %438 = tpu.matmul %436, %437, %cst_150 {dimension_numbers = #tpu.dot_dimension_numbers<[1], [0], [0], [1], [0, 0, 1, 1], [], []>} : vector<16x16xf32>, vector<16x8xf32>, vector<16x8xf32> -> vector<16x8xf32>
    %439 = arith.truncf %438 : vector<16x8xf32> to vector<16x8xbf16>
    %440 = vector.extract_strided_slice %369 {offsets = [0, 64], sizes = [8, 32], strides = [1, 1]} : vector<8x128xbf16> to vector<8x32xbf16>
    %cst_151 = arith.constant dense<0.000000e+00> : vector<16x32xf32>
    %441 = tpu.matmul %439, %440, %cst_151 {dimension_numbers = #tpu.dot_dimension_numbers<[1], [0], [0], [1], [0, 0, 1, 1], [], []>} : vector<16x8xbf16>, vector<8x32xbf16>, vector<16x32xf32> -> vector<16x32xf32>
    %442 = arith.addf %435, %441 : vector<16x32xf32>
    %443 = vector.extract_strided_slice %421 {offsets = [48, 0], sizes = [16, 16], strides = [1, 1]} : vector<64x16xf32> to vector<16x16xf32>
    %444 = vector.extract_strided_slice %395 {offsets = [0, 24], sizes = [16, 8], strides = [1, 1]} : vector<16x32xf32> to vector<16x8xf32>
    %cst_152 = arith.constant dense<0.000000e+00> : vector<16x8xf32>
    %445 = tpu.matmul %443, %444, %cst_152 {dimension_numbers = #tpu.dot_dimension_numbers<[1], [0], [0], [1], [0, 0, 1, 1], [], []>} : vector<16x16xf32>, vector<16x8xf32>, vector<16x8xf32> -> vector<16x8xf32>
    %446 = arith.truncf %445 : vector<16x8xf32> to vector<16x8xbf16>
    %447 = vector.extract_strided_slice %369 {offsets = [0, 96], sizes = [8, 32], strides = [1, 1]} : vector<8x128xbf16> to vector<8x32xbf16>
    %cst_153 = arith.constant dense<0.000000e+00> : vector<16x32xf32>
    %448 = tpu.matmul %446, %447, %cst_153 {dimension_numbers = #tpu.dot_dimension_numbers<[1], [0], [0], [1], [0, 0, 1, 1], [], []>} : vector<16x8xbf16>, vector<8x32xbf16>, vector<16x32xf32> -> vector<16x32xf32>
    %449 = arith.addf %442, %448 : vector<16x32xf32>
    %450 = arith.mulf %449, %449 : vector<16x32xf32>
    %cst_154 = arith.constant dense<0.000000e+00> : vector<16xf32>
    %451 = vector.multi_reduction <add>, %450, %cst_154 [1] : vector<16x32xf32> to vector<16xf32>
    %452 = vector.shape_cast %451 : vector<16xf32> to vector<16x1xf32>
    %cst_155 = arith.constant 3.200000e+01 : f32
    %453 = vector.broadcast %cst_155 : f32 to vector<16x1xf32>
    %454 = arith.divf %452, %453 : vector<16x1xf32>
    %cst_156 = arith.constant 9.99999997E-7 : f32
    %455 = vector.broadcast %cst_156 : f32 to vector<16x1xf32>
    %456 = arith.addf %454, %455 : vector<16x1xf32>
    %457 = math.rsqrt %456 : vector<16x1xf32>
    %458 = vector.broadcast %457 : vector<16x1xf32> to vector<16x32xf32>
    %459 = arith.mulf %449, %458 : vector<16x32xf32>
    %460 = vector.broadcast %370 : vector<1x32xf32> to vector<16x32xf32>
    %461 = arith.mulf %459, %460 : vector<16x32xf32>
    %462 = arith.truncf %461 : vector<16x32xf32> to vector<16x32xbf16>
    %cst_157 = arith.constant dense<0.000000e+00> : vector<16x128xf32>
    %463 = tpu.matmul %462, %371, %cst_157 {dimension_numbers = #tpu.dot_dimension_numbers<[1], [0], [0], [1], [0, 0, 1, 1], [], []>} : vector<16x32xbf16>, vector<32x128xbf16>, vector<16x128xf32> -> vector<16x128xf32>
    %464 = vector.extract_strided_slice %463 {offsets = [0, 0], sizes = [16, 64], strides = [1, 1]} : vector<16x128xf32> to vector<16x64xf32>
    %465 = vector.extract_strided_slice %463 {offsets = [0, 64], sizes = [16, 64], strides = [1, 1]} : vector<16x128xf32> to vector<16x64xf32>
    %466 = arith.negf %464 : vector<16x64xf32>
    %467 = math.exp %466 : vector<16x64xf32>
    %cst_158 = arith.constant 1.000000e+00 : f32
    %468 = vector.broadcast %cst_158 : f32 to vector<16x64xf32>
    %469 = arith.addf %468, %467 : vector<16x64xf32>
    %470 = arith.divf %468, %469 : vector<16x64xf32>
    %471 = arith.mulf %464, %470 : vector<16x64xf32>
    %472 = arith.mulf %471, %465 : vector<16x64xf32>
    %473 = arith.truncf %472 : vector<16x64xf32> to vector<16x64xbf16>
    %cst_159 = arith.constant dense<0.000000e+00> : vector<16x32xf32>
    %474 = tpu.matmul %473, %373, %cst_159 {dimension_numbers = #tpu.dot_dimension_numbers<[1], [0], [0], [1], [0, 0, 1, 1], [], []>} : vector<16x64xbf16>, vector<64x32xbf16>, vector<16x32xf32> -> vector<16x32xf32>
    %475 = arith.addf %449, %474 : vector<16x32xf32>
    %476 = vector.extract_strided_slice %251 {offsets = [4, 0], sizes = [1, 32], strides = [1, 1]} : vector<5x32xf32> to vector<1x32xf32>
    %477 = arith.mulf %475, %475 : vector<16x32xf32>
    %cst_160 = arith.constant dense<0.000000e+00> : vector<16xf32>
    %478 = vector.multi_reduction <add>, %477, %cst_160 [1] : vector<16x32xf32> to vector<16xf32>
    %479 = vector.shape_cast %478 : vector<16xf32> to vector<16x1xf32>
    %cst_161 = arith.constant 3.200000e+01 : f32
    %480 = vector.broadcast %cst_161 : f32 to vector<16x1xf32>
    %481 = arith.divf %479, %480 : vector<16x1xf32>
    %cst_162 = arith.constant 9.99999997E-7 : f32
    %482 = vector.broadcast %cst_162 : f32 to vector<16x1xf32>
    %483 = arith.addf %481, %482 : vector<16x1xf32>
    %484 = math.rsqrt %483 : vector<16x1xf32>
    %485 = vector.broadcast %484 : vector<16x1xf32> to vector<16x32xf32>
    %486 = arith.mulf %475, %485 : vector<16x32xf32>
    %487 = vector.broadcast %476 : vector<1x32xf32> to vector<16x32xf32>
    %488 = arith.mulf %486, %487 : vector<16x32xf32>
    %489 = vector.extract_strided_slice %4 {offsets = [0, 160], sizes = [32, 128], strides = [1, 1]} : vector<32x288xbf16> to vector<32x128xbf16>
    %490 = arith.truncf %488 : vector<16x32xf32> to vector<16x32xbf16>
    %cst_163 = arith.constant dense<0.000000e+00> : vector<16x128xf32>
    %491 = tpu.matmul %490, %489, %cst_163 {dimension_numbers = #tpu.dot_dimension_numbers<[1], [0], [0], [1], [0, 0, 1, 1], [], []>} : vector<16x32xbf16>, vector<32x128xbf16>, vector<16x128xf32> -> vector<16x128xf32>
    %c0_164 = arith.constant 0 : index
    %c0_165 = arith.constant 0 : index
    %492 = vector.load %arg16[%c0_164, %c0_165] : memref<16x128xf32, #tpu.memory_space<vmem>>, vector<16x128xf32>
    tpu.vector_store %arg16[%c0_164, %c0_165], %491 {strides = array<i32>} : memref<16x128xf32, #tpu.memory_space<vmem>>, vector<16x128xf32>,
    return
  }
  func.func @transform_0(%arg0: i32) -> (i32, i32) {
    %c0_i32 = arith.constant 0 : i32
    %c0_i32_0 = arith.constant 0 : i32
    return %arg0, %c0_i32 : i32, i32
  }
  func.func @transform_1(%arg0: i32) -> (i32, i32) {
    %c0_i32 = arith.constant 0 : i32
    %c0_i32_0 = arith.constant 0 : i32
    %c0_i32_1 = arith.constant 0 : i32
    return %c0_i32, %c0_i32_0 : i32, i32
  }
  func.func @transform_2(%arg0: i32) -> (i32, i32) {
    %c0_i32 = arith.constant 0 : i32
    %c0_i32_0 = arith.constant 0 : i32
    %c0_i32_1 = arith.constant 0 : i32
    return %c0_i32, %c0_i32_0 : i32, i32
  }
  func.func @transform_3(%arg0: i32) -> (i32, i32) {
    %c0_i32 = arith.constant 0 : i32
    %c0_i32_0 = arith.constant 0 : i32
    %c0_i32_1 = arith.constant 0 : i32
    return %c0_i32, %c0_i32_0 : i32, i32
  }
  func.func @transform_4(%arg0: i32) -> (i32, i32) {
    %c0_i32 = arith.constant 0 : i32
    %c0_i32_0 = arith.constant 0 : i32
    %c0_i32_1 = arith.constant 0 : i32
    return %c0_i32, %c0_i32_0 : i32, i32
  }
  func.func @transform_5(%arg0: i32) -> (i32, i32, i32) {
    %c0_i32 = arith.constant 0 : i32
    %c0_i32_0 = arith.constant 0 : i32
    %c0_i32_1 = arith.constant 0 : i32
    %c0_i32_2 = arith.constant 0 : i32
    return %c0_i32, %c0_i32_0, %c0_i32_1 : i32, i32, i32
  }
  func.func @transform_6(%arg0: i32) -> (i32, i32, i32) {
    %c0_i32 = arith.constant 0 : i32
    %c0_i32_0 = arith.constant 0 : i32
    %c0_i32_1 = arith.constant 0 : i32
    %c0_i32_2 = arith.constant 0 : i32
    return %c0_i32, %c0_i32_0, %c0_i32_1 : i32, i32, i32
  }
  func.func @transform_7(%arg0: i32) -> (i32, i32, i32) {
    %c0_i32 = arith.constant 0 : i32
    %c0_i32_0 = arith.constant 0 : i32
    %c0_i32_1 = arith.constant 0 : i32
    %c0_i32_2 = arith.constant 0 : i32
    return %c0_i32, %c0_i32_0, %c0_i32_1 : i32, i32, i32
  }
  func.func @transform_8(%arg0: i32) -> (i32, i32) {
    %c0_i32 = arith.constant 0 : i32
    %c0_i32_0 = arith.constant 0 : i32
    %c0_i32_1 = arith.constant 0 : i32
    return %c0_i32, %c0_i32_0 : i32, i32
  }
  func.func @transform_9(%arg0: i32) -> (i32, i32, i32) {
    %c0_i32 = arith.constant 0 : i32
    %c0_i32_0 = arith.constant 0 : i32
    %c0_i32_1 = arith.constant 0 : i32
    %c0_i32_2 = arith.constant 0 : i32
    return %c0_i32, %c0_i32_0, %c0_i32_1 : i32, i32, i32
  }
  func.func @transform_10(%arg0: i32) -> (i32, i32, i32) {
    %c0_i32 = arith.constant 0 : i32
    %c0_i32_0 = arith.constant 0 : i32
    %c0_i32_1 = arith.constant 0 : i32
    %c0_i32_2 = arith.constant 0 : i32
    return %c0_i32, %c0_i32_0, %c0_i32_1 : i32, i32, i32
  }
  func.func @transform_11(%arg0: i32) -> (i32, i32, i32) {
    %c0_i32 = arith.constant 0 : i32
    %c0_i32_0 = arith.constant 0 : i32
    %c0_i32_1 = arith.constant 0 : i32
    %c0_i32_2 = arith.constant 0 : i32
    return %c0_i32, %c0_i32_0, %c0_i32_1 : i32, i32, i32
  }
  func.func @transform_12(%arg0: i32) -> (i32, i32) {
    %c0_i32 = arith.constant 0 : i32
    %c0_i32_0 = arith.constant 0 : i32
    %c0_i32_1 = arith.constant 0 : i32
    return %c0_i32, %c0_i32_0 : i32, i32
  }
  func.func @transform_13(%arg0: i32) -> (i32, i32) {
    %c0_i32 = arith.constant 0 : i32
    %c0_i32_0 = arith.constant 0 : i32
    %c0_i32_1 = arith.constant 0 : i32
    return %c0_i32, %c0_i32_0 : i32, i32
  }
  func.func @transform_14(%arg0: i32) -> (i32, i32) {
    %c0_i32 = arith.constant 0 : i32
    %c0_i32_0 = arith.constant 0 : i32
    return %arg0, %c0_i32 : i32, i32
  }
  func.func @transform_15(%arg0: i32) -> (i32, i32) {
    %c0_i32 = arith.constant 0 : i32
    %c0_i32_0 = arith.constant 0 : i32
    return %arg0, %c0_i32 : i32, i32
  }
}

</mosaic_0001>

<llo_original>
// kernel: code2code_forward.1
$region0: #{code2code_forward.1}
  #allocation0 [shape = 'u32[]', space=smem, size = 0x4, offset = 0x4, fixed_abs, tag = 'smem constant byte address 0x4 - core index']
  #allocation1 [shape = 'u32[144,128]{1,0:T(1,128)}', space=vmem, size = 0x12000, scoped, tag = 'internal scratch']
  %s0 = inlined_call_operand.vmem [shape: f32[16,32], index: 0, kind: input, shape index: {}]
  %s1 = inlined_call_operand.vmem [shape: f32[64,16], index: 1, kind: input, shape index: {}]
  %s2 = inlined_call_operand.vmem [shape: f32[16,64], index: 2, kind: input, shape index: {}]
  %s3 = inlined_call_operand.vmem [shape: f32[16,64], index: 3, kind: input, shape index: {}]
  %s4 = inlined_call_operand.vmem [shape: f32[64,64], index: 4, kind: input, shape index: {}]
  %s5 = inlined_call_operand.vmem [shape: bf16[2,32,224], index: 5, kind: input, shape index: {}]
  %s6 = inlined_call_operand.vmem [shape: bf16[2,8,128], index: 6, kind: input, shape index: {}]
  %s7 = inlined_call_operand.vmem [shape: bf16[2,64,32], index: 7, kind: input, shape index: {}]
  %s8 = inlined_call_operand.vmem [shape: f32[5,32], index: 8, kind: input, shape index: {}]
  %s9 = inlined_call_operand.vmem [shape: bf16[2,32,224], index: 9, kind: input, shape index: {}]
  %s10 = inlined_call_operand.vmem [shape: bf16[2,8,128], index: 10, kind: input, shape index: {}]
  %s11 = inlined_call_operand.vmem [shape: bf16[2,64,32], index: 11, kind: input, shape index: {}]
  %s12 = inlined_call_operand.vmem [shape: f32[5,32], index: 12, kind: input, shape index: {}]
  %s13 = inlined_call_operand.vmem [shape: bf16[32,288], index: 13, kind: input, shape index: {}]
  %s14 = inlined_call_operand.vmem [shape: f32[16,128], index: 14, kind: output, shape index: {0}]
  %s15 = inlined_call_operand.vmem [shape: f32[16,128], index: 15, kind: output, shape index: {1}]
  %16 = xla_tuple %s14, %s15
  %s17 = sld [smem:[#allocation0]]
  $region74: #{code2code_forward.1} parent=0
    _
  %s19 = ssub.s32 1, %s17
  %s20 = scalar_select 0, %s19, %s17
  // Predicated region
  $region2: #{code2code_forward.1} parent=0 // pred_check
    _
  $region3: #{code2code_forward.1} parent=0 // pred_check_branch
    %22 = sbr.rel (0) target = $region5
  $region4: #{code2code_forward.1} parent=0 // pred_region
    _
  $region5: #{code2code_forward.1} parent=0 // pred_fallthru
    _
  // Predicated region
  $region6: #{code2code_forward.1} parent=0 // pred_check
    _
  $region7: #{code2code_forward.1} parent=0 // pred_check_branch
    %24 = sbr.rel (0) target = $region9
  $region8: #{code2code_forward.1} parent=0 // pred_region
    _
  $region9: #{code2code_forward.1} parent=0 // pred_fallthru
    _
  // Predicated region
  $region10: #{code2code_forward.1} parent=0 // pred_check
    _
  $region11: #{code2code_forward.1} parent=0 // pred_check_branch
    %26 = sbr.rel (0) target = $region13
  $region12: #{code2code_forward.1} parent=0 // pred_region
    _
  $region13: #{code2code_forward.1} parent=0 // pred_fallthru
    _
  // Predicated region
  $region14: #{code2code_forward.1} parent=0 // pred_check
    _
  $region15: #{code2code_forward.1} parent=0 // pred_check_branch
    %28 = sbr.rel (0) target = $region17
  $region16: #{code2code_forward.1} parent=0 // pred_region
    _
  $region17: #{code2code_forward.1} parent=0 // pred_fallthru
    _
  // Predicated region
  $region18: #{code2code_forward.1} parent=0 // pred_check
    _
  $region19: #{code2code_forward.1} parent=0 // pred_check_branch
    %30 = sbr.rel (0) target = $region21
  $region20: #{code2code_forward.1} parent=0 // pred_region
    _
  $region21: #{code2code_forward.1} parent=0 // pred_fallthru
    _
  // Predicated region
  $region22: #{code2code_forward.1} parent=0 // pred_check
    _
  $region23: #{code2code_forward.1} parent=0 // pred_check_branch
    %32 = sbr.rel (0) target = $region25
  $region24: #{code2code_forward.1} parent=0 // pred_region
    _
  $region25: #{code2code_forward.1} parent=0 // pred_fallthru
    _
  // Predicated region
  $region26: #{code2code_forward.1} parent=0 // pred_check
    _
  $region27: #{code2code_forward.1} parent=0 // pred_check_branch
    %34 = sbr.rel (0) target = $region29
  $region28: #{code2code_forward.1} parent=0 // pred_region
    _
  $region29: #{code2code_forward.1} parent=0 // pred_fallthru
    _
  // Predicated region
  $region30: #{code2code_forward.1} parent=0 // pred_check
    _
  $region31: #{code2code_forward.1} parent=0 // pred_check_branch
    %36 = sbr.rel (0) target = $region33
  $region32: #{code2code_forward.1} parent=0 // pred_region
    _
  $region33: #{code2code_forward.1} parent=0 // pred_fallthru
    _
  // Predicated region
  $region34: #{code2code_forward.1} parent=0 // pred_check
    _
  $region35: #{code2code_forward.1} parent=0 // pred_check_branch
    %38 = sbr.rel (0) target = $region37
  $region36: #{code2code_forward.1} parent=0 // pred_region
    _
  $region37: #{code2code_forward.1} parent=0 // pred_fallthru
    _
  // Predicated region
  $region38: #{code2code_forward.1} parent=0 // pred_check
    _
  $region39: #{code2code_forward.1} parent=0 // pred_check_branch
    %40 = sbr.rel (0) target = $region41
  $region40: #{code2code_forward.1} parent=0 // pred_region
    _
  $region41: #{code2code_forward.1} parent=0 // pred_fallthru
    _
  // Predicated region
  $region42: #{code2code_forward.1} parent=0 // pred_check
    _
  $region43: #{code2code_forward.1} parent=0 // pred_check_branch
    %42 = sbr.rel (0) target = $region45
  $region44: #{code2code_forward.1} parent=0 // pred_region
    _
  $region45: #{code2code_forward.1} parent=0 // pred_fallthru
    _
  // Predicated region
  $region46: #{code2code_forward.1} parent=0 // pred_check
    _
  $region47: #{code2code_forward.1} parent=0 // pred_check_branch
    %44 = sbr.rel (0) target = $region49
  $region48: #{code2code_forward.1} parent=0 // pred_region
    _
  $region49: #{code2code_forward.1} parent=0 // pred_fallthru
    _
  // Predicated region
  $region50: #{code2code_forward.1} parent=0 // pred_check
    _
  $region51: #{code2code_forward.1} parent=0 // pred_check_branch
    %46 = sbr.rel (0) target = $region53
  $region52: #{code2code_forward.1} parent=0 // pred_region
    _
  $region53: #{code2code_forward.1} parent=0 // pred_fallthru
    _
  // Predicated region
  $region54: #{code2code_forward.1} parent=0 // pred_check
    _
  $region55: #{code2code_forward.1} parent=0 // pred_check_branch
    %48 = sbr.rel (0) target = $region57
  $region56: #{code2code_forward.1} parent=0 // pred_region
    _
  $region57: #{code2code_forward.1} parent=0 // pred_fallthru
    _
  %v50 = vld [vmem:[%s1] sm:$0xff]
  %v51 = vld [vmem:[%s1 + $0x8] sm:$0xff]
  %v52 = vld [vmem:[%s1 + $0x10] sm:$0xff]
  %v53 = vld [vmem:[%s1 + $0x18] sm:$0xff]
  %v54 = vld [vmem:[%s1 + $0x20] sm:$0xff]
  %v55 = vld [vmem:[%s1 + $0x28] sm:$0xff]
  %v56 = vld [vmem:[%s1 + $0x30] sm:$0xff]
  %v57 = vld [vmem:[%s1 + $0x38] sm:$0xff]
  %v58 = vld [vmem:[%s2] sm:$0xff]
  %v59 = vld [vmem:[%s2 + $0x8] sm:$0xff]
  %v60 = vld [vmem:[%s3] sm:$0xff]
  %v61 = vld [vmem:[%s3 + $0x8] sm:$0xff]
  %v62 = vld [vmem:[%s4] sm:$0xff]
  %v63 = vld [vmem:[%s4 + $0x8] sm:$0xff]
  %v64 = vld [vmem:[%s4 + $0x10] sm:$0xff]
  %v65 = vld [vmem:[%s4 + $0x18] sm:$0xff]
  %v66 = vld [vmem:[%s4 + $0x20] sm:$0xff]
  %v67 = vld [vmem:[%s4 + $0x28] sm:$0xff]
  %v68 = vld [vmem:[%s4 + $0x30] sm:$0xff]
  %v69 = vld [vmem:[%s4 + $0x38] sm:$0xff]
  %v70 = vld [vmem:[%s13] sm:$0xff]
  %v71 = vld [vmem:[%s13 + $0x8] sm:$0xf]
  %v72 = vld [vmem:[%s13 + $0xc] sm:$0xff]
  %v73 = vld [vmem:[%s13 + $0x14] sm:$0xf]
  %v74 = vld [vmem:[%s13 + $0x18] sm:$0xff]
  %v75 = vld [vmem:[%s13 + $0x20] sm:$0xf]
  %v76 = vld [vmem:[%s13 + $0x24] sm:$0xff]
  %v77 = vld [vmem:[%s13 + $0x2c] sm:$0xf]
  %v78 = vld [vmem:[%s0] sm:$0xff]
  %v79 = vld [vmem:[%s0 + $0x8] sm:$0xff]
  %v80 = vld [vmem:[%s8] sm:$0x1f]
  %v81 = vld [vmem:[%s5] sm:$0xff]
  %v82 = vld [vmem:[%s5 + $0x8] sm:$0xff]
  %v83 = vld [vmem:[%s5 + $0x10] sm:$0xff]
  %v84 = vld [vmem:[%s5 + $0x18] sm:$0xff]
  %v85 = vld [vmem:[%s6] sm:$0xf]
  %v86 = vld [vmem:[%s7] sm:$0xf]
  %v87 = vld [vmem:[%s7 + $0x4] sm:$0xf]
  %v88 = vld [vmem:[%s7 + $0x8] sm:$0xf]
  %v89 = vld [vmem:[%s7 + $0xc] sm:$0xf]
  %v90 = vld [vmem:[%s7 + $0x10] sm:$0xf]
  %v91 = vld [vmem:[%s7 + $0x14] sm:$0xf]
  %v92 = vld [vmem:[%s7 + $0x18] sm:$0xf]
  %v93 = vld [vmem:[%s7 + $0x1c] sm:$0xf]
  %v94 = vmul.f32 %v78, %v78
  %v95 = vmul.f32 %v79, %v79
  %vm96 = vcmask 261120
  %v97 = vsel %vm96, %v94, 0.0
  %98 = vadd.xlane.f32.xlu0 %v97
  %v99 = vpop.xlane.xlu0 %98
  %v100 = vsel %vm96, %v95, 0.0
  %101 = vadd.xlane.f32.xlu0 %v100
  %v102 = vpop.xlane.xlu0 %101
  %v103 = vrcp.pop 32.0
  %v104 = vmul.f32 %v99, %v103
  %v105 = vmul.f32 %v102, %v103
  %v106 = vadd.f32 %v104, 1e-06
  %v107 = vadd.f32 %v105, 1e-06
  %v108 = vrsqrt.pop %v106
  %v109 = vrsqrt.pop %v107
  %v110 = vmul.f32 %v78, %v108
  %v111 = vmul.f32 %v79, %v109
  %v112 = vlaneseq
  %v113 = vshrl.u32 %v112, 7
  %v114 = vsub.s32 0, %v113
  %v115 = vrot.slane %v80, %v114
  %v116 = vmul.f32 %v110, %v115
  %v117 = vmul.f32 %v111, %v115
  %v118 = vpack.c.bf16 %v117, %v116
  %v123 = vunpack.c.l.b16 %v81
  %v124 = vunpack.c.l.b16 %v82
  %v125 = vunpack.c.l.b16 %v83
  %v126 = vunpack.c.l.b16 %v84
  %v127 = vpack.c.b16 %v124, %v123
  %v128 = vpack.c.b16 %v126, %v125
  %v132 = vsel %vm96, %v118, 0
  %134 = vmatprep.subr.bf16.mxu0 0
  %135 = vmatpush1.bf16.msra.mxu0 %v127
  %136 = vmatprep.subr.bf16.mxu0 0
  %137 = vmatpush1.bf16.msra.mxu0 %v128
  %138 = vmatprep.subr.bf16.mxu0 0
  %139 = vmatpush1.bf16.msra.mxu0 0
  %140 = vmatprep.subr.bf16.mxu0 0
  %141 = vmatpush1.bf16.msra.mxu0 0
  %142 = vmatprep.subr.bf16.mxu0 0
  %143 = vmatpush1.bf16.msra.mxu0 0
  %144 = vmatprep.subr.bf16.mxu0 0
  %145 = vmatpush1.bf16.msra.mxu0 0
  %146 = vmatprep.subr.bf16.mxu0 0
  %147 = vmatpush1.bf16.msra.mxu0 0
  %148 = vmatprep.subr.bf16.mxu0 0
  %149 = vmatpush1.bf16.msra.mxu0 0
  %150 = vmatprep.subr.bf16.mxu0 0
  %151 = vmatpush1.bf16.msra.mxu0 0
  %152 = vmatprep.subr.bf16.mxu0 0
  %153 = vmatpush1.bf16.msra.mxu0 0
  %154 = vmatprep.subr.bf16.mxu0 0
  %155 = vmatpush1.bf16.msra.mxu0 0
  %156 = vmatprep.subr.bf16.mxu0 0
  %157 = vmatpush1.bf16.msra.mxu0 0
  %158 = vmatprep.subr.bf16.mxu0 0
  %159 = vmatpush1.bf16.msra.mxu0 0
  %160 = vmatprep.subr.bf16.mxu0 0
  %161 = vmatpush1.bf16.msra.mxu0 0
  %162 = vmatprep.subr.bf16.mxu0 0
  %163 = vmatpush1.bf16.msra.mxu0 0
  %164 = vmatprep.subr.bf16.mxu0 0
  %165 = vmatpush1.bf16.msra.mxu0 0
  %166 = vmatprep.mubr.bf16.mxu0 0
  %167 = vmatmul.mubr.bf16.gmra.mrb[0].mxu0 %v132
  %v168 = vpop.f32.mrb[0].mxu0
  %v169 = vadd.f32 0.0, %v168
  %v170 = vpop.f32.mrb[0].mxu0
  %v171 = vpop.f32.mrb[0].mxu0
  %v172 = vadd.f32 0.0, %v171
  %v173 = vpop.f32.mrb[0].mxu0
  %174 = vdwg.mxu0
  %v175 = vmul.f32 %v169, %v58
  %v176 = vmul.f32 %v172, %v59
  %vm177 = vcmask 523264
  %v179 = vsel %vm177, %v169, 0
  %v182 = vsel %vm177, %v172, 0
  %184 = vmatprep.subr.mxu0 0.0
  %185 = vmatpush1.msra.mxu0 %v62
  %186 = vmatprep.subr.mxu0 0.0
  %187 = vmatpush1.msra.mxu0 %v63
  %188 = vmatprep.subr.mxu0 0.0
  %189 = vmatpush1.msra.mxu0 %v64
  %190 = vmatprep.subr.mxu0 0.0
  %191 = vmatpush1.msra.mxu0 %v65
  %192 = vmatprep.subr.mxu0 0.0
  %193 = vmatpush1.msra.mxu0 %v66
  %194 = vmatprep.subr.mxu0 0.0
  %195 = vmatpush1.msra.mxu0 %v67
  %196 = vmatprep.subr.mxu0 0.0
  %197 = vmatpush1.msra.mxu0 %v68
  %198 = vmatprep.subr.mxu0 0.0
  %199 = vmatpush1.msra.mxu0 %v69
  %200 = vmatprep.subr.mxu0 0.0
  %201 = vmatpush1.msra.mxu0 0.0
  %202 = vmatprep.subr.mxu0 0.0
  %203 = vmatpush1.msra.mxu0 0.0
  %204 = vmatprep.subr.mxu0 0.0
  %205 = vmatpush1.msra.mxu0 0.0
  %206 = vmatprep.subr.mxu0 0.0
  %207 = vmatpush1.msra.mxu0 0.0
  %208 = vmatprep.subr.mxu0 0.0
  %209 = vmatpush1.msra.mxu0 0.0
  %210 = vmatprep.subr.mxu0 0.0
  %211 = vmatpush1.msra.mxu0 0.0
  %212 = vmatprep.subr.mxu0 0.0
  %213 = vmatpush1.msra.mxu0 0.0
  %214 = vmatprep.subr.mxu0 0.0
  %215 = vmatpush1.msra.mxu0 0.0
  %216 = vmatprep.subr.mxu0 0.0
  %217 = vmatpush1.msra.mxu0 0.0
  %218 = vmatprep.subr.mxu0 0.0
  %219 = vmatpush1.msra.mxu0 0.0
  %220 = vmatprep.subr.mxu0 0.0
  %221 = vmatpush1.msra.mxu0 0.0
  %222 = vmatprep.subr.mxu0 0.0
  %223 = vmatpush1.msra.mxu0 0.0
  %224 = vmatprep.subr.mxu0 0.0
  %225 = vmatpush1.msra.mxu0 0.0
  %226 = vmatprep.subr.mxu0 0.0
  %227 = vmatpush1.msra.mxu0 0.0
  %228 = vmatprep.subr.mxu0 0.0
  %229 = vmatpush1.msra.mxu0 0.0
  %230 = vmatprep.subr.mxu0 0.0
  %231 = vmatpush1.msra.mxu0 0.0
  %232 = vmatprep.subr.mxu0 0.0
  %233 = vmatpush1.msra.mxu0 0.0
  %234 = vmatprep.subr.mxu0 0.0
  %235 = vmatpush1.msra.mxu0 0.0
  %236 = vmatprep.subr.mxu0 0.0
  %237 = vmatpush1.msra.mxu0 0.0
  %238 = vmatprep.subr.mxu0 0.0
  %239 = vmatpush1.msra.mxu0 0.0
  %240 = vmatprep.subr.mxu0 0.0
  %241 = vmatpush1.msra.mxu0 0.0
  %242 = vmatprep.subr.mxu0 0.0
  %243 = vmatpush1.msra.mxu0 0.0
  %244 = vmatprep.subr.mxu0 0.0
  %245 = vmatpush1.msra.mxu0 0.0
  %246 = vmatprep.subr.mxu0 0.0
  %247 = vmatpush1.msra.mxu0 0.0
  %248 = vmatprep.mubr.f32.mxu0 0.0
  %249 = vmatmul.mubr.f32.gmra.mrb[0].mxu0 %v179
  %v250 = vpop.f32.mrb[0].mxu0
  %v251 = vadd.f32 0.0, %v250
  %v252 = vpop.f32.mrb[0].mxu0
  %253 = vmatprep.mubr.f32.mxu0 0.0
  %254 = vmatmul.mubr.f32.gmra.mrb[0].mxu0 %v182
  %v255 = vpop.f32.mrb[0].mxu0
  %v256 = vadd.f32 0.0, %v255
  %v257 = vpop.f32.mrb[0].mxu0
  %258 = vdwg.mxu0
  %v259 = vmul.f32 %v251, %v60
  %v260 = vmul.f32 %v256, %v61
  %v261 = vadd.f32 %v175, %v259
  %v262 = vadd.f32 %v176, %v260
  %265 = vrot.lane.b32.xlu0 %v261, 96
  %v266 = vpop.permute.xlu0 %265
  %267 = vrot.lane.b32.xlu0 %v262, 96
  %v268 = vpop.permute.xlu0 %267
  %vm269 = vcmask 64512
  %v270 = vsel %vm269, %v261, 0
  %v272 = vsel %vm269, %v262, 0
  %v274 = vsel %vm269, %v266, 0
  %v276 = vsel %vm269, %v268, 0
  %278 = vmatprep.subr.mxu0 0.0
  %279 = vmatpush1.xpose.msra.mxu0 %v274
  %280 = vmatprep.subr.mxu0 0.0
  %281 = vmatpush1.xpose.msra.mxu0 %v276
  %282 = vmatprep.subr.mxu0 0.0
  %283 = vmatpush1.xpose.msra.mxu0 0.0
  %284 = vmatprep.subr.mxu0 0.0
  %285 = vmatpush1.xpose.msra.mxu0 0.0
  %286 = vmatprep.subr.mxu0 0.0
  %287 = vmatpush1.xpose.msra.mxu0 0.0
  %288 = vmatprep.subr.mxu0 0.0
  %289 = vmatpush1.xpose.msra.mxu0 0.0
  %290 = vmatprep.subr.mxu0 0.0
  %291 = vmatpush1.xpose.msra.mxu0 0.0
  %292 = vmatprep.subr.mxu0 0.0
  %293 = vmatpush1.xpose.msra.mxu0 0.0
  %294 = vmatprep.subr.mxu0 0.0
  %295 = vmatpush1.xpose.msra.mxu0 0.0
  %296 = vmatprep.subr.mxu0 0.0
  %297 = vmatpush1.xpose.msra.mxu0 0.0
  %298 = vmatprep.subr.mxu0 0.0
  %299 = vmatpush1.xpose.msra.mxu0 0.0
  %300 = vmatprep.subr.mxu0 0.0
  %301 = vmatpush1.xpose.msra.mxu0 0.0
  %302 = vmatprep.subr.mxu0 0.0
  %303 = vmatpush1.xpose.msra.mxu0 0.0
  %304 = vmatprep.subr.mxu0 0.0
  %305 = vmatpush1.xpose.msra.mxu0 0.0
  %306 = vmatprep.subr.mxu0 0.0
  %307 = vmatpush1.xpose.msra.mxu0 0.0
  %308 = vmatprep.subr.mxu0 0.0
  %309 = vmatpush1.xpose.msra.mxu0 0.0
  %310 = vmatprep.subr.mxu0 0.0
  %311 = vmatpush1.xpose.msra.mxu0 0.0
  %312 = vmatprep.subr.mxu0 0.0
  %313 = vmatpush1.xpose.msra.mxu0 0.0
  %314 = vmatprep.subr.mxu0 0.0
  %315 = vmatpush1.xpose.msra.mxu0 0.0
  %316 = vmatprep.subr.mxu0 0.0
  %317 = vmatpush1.xpose.msra.mxu0 0.0
  %318 = vmatprep.subr.mxu0 0.0
  %319 = vmatpush1.xpose.msra.mxu0 0.0
  %320 = vmatprep.subr.mxu0 0.0
  %321 = vmatpush1.xpose.msra.mxu0 0.0
  %322 = vmatprep.subr.mxu0 0.0
  %323 = vmatpush1.xpose.msra.mxu0 0.0
  %324 = vmatprep.subr.mxu0 0.0
  %325 = vmatpush1.xpose.msra.mxu0 0.0
  %326 = vmatprep.subr.mxu0 0.0
  %327 = vmatpush1.xpose.msra.mxu0 0.0
  %328 = vmatprep.subr.mxu0 0.0
  %329 = vmatpush1.xpose.msra.mxu0 0.0
  %330 = vmatprep.subr.mxu0 0.0
  %331 = vmatpush1.xpose.msra.mxu0 0.0
  %332 = vmatprep.subr.mxu0 0.0
  %333 = vmatpush1.xpose.msra.mxu0 0.0
  %334 = vmatprep.subr.mxu0 0.0
  %335 = vmatpush1.xpose.msra.mxu0 0.0
  %336 = vmatprep.subr.mxu0 0.0
  %337 = vmatpush1.xpose.msra.mxu0 0.0
  %338 = vmatprep.subr.mxu0 0.0
  %339 = vmatpush1.xpose.msra.mxu0 0.0
  %340 = vmatprep.subr.mxu0 0.0
  %341 = vmatpush1.xpose.msra.mxu0 0.0
  %342 = vmatprep.mubr.f32.mxu0 0.0
  %343 = vmatmul.mubr.f32.gmra.mrb[0].mxu0 %v270
  %v344 = vpop.f32.mrb[0].mxu0
  %v345 = vadd.f32 0.0, %v344
  %v346 = vpop.f32.mrb[0].mxu0
  %347 = vmatprep.mubr.f32.mxu0 0.0
  %348 = vmatmul.mubr.f32.gmra.mrb[0].mxu0 %v272
  %v349 = vpop.f32.mrb[0].mxu0
  %v350 = vadd.f32 0.0, %v349
  %v351 = vpop.f32.mrb[0].mxu0
  %352 = vdwg.mxu0
  %353 = vrot.lane.b32.xlu0 %v261, 120
  %v354 = vpop.permute.xlu0 %353
  %355 = vrot.lane.b32.xlu0 %v262, 120
  %v356 = vpop.permute.xlu0 %355
  %357 = vrot.lane.b32.xlu0 %v261, 88
  %v358 = vpop.permute.xlu0 %357
  %359 = vrot.lane.b32.xlu0 %v262, 88
  %v360 = vpop.permute.xlu0 %359
  %v361 = vsel %vm269, %v354, 0
  %v363 = vsel %vm269, %v356, 0
  %v365 = vsel %vm269, %v358, 0
  %v367 = vsel %vm269, %v360, 0
  %369 = vmatprep.subr.mxu0 0.0
  %370 = vmatpush1.xpose.msra.mxu0 %v365
  %371 = vmatprep.subr.mxu0 0.0
  %372 = vmatpush1.xpose.msra.mxu0 %v367
  %373 = vmatprep.subr.mxu0 0.0
  %374 = vmatpush1.xpose.msra.mxu0 0.0
  %375 = vmatprep.subr.mxu0 0.0
  %376 = vmatpush1.xpose.msra.mxu0 0.0
  %377 = vmatprep.subr.mxu0 0.0
  %378 = vmatpush1.xpose.msra.mxu0 0.0
  %379 = vmatprep.subr.mxu0 0.0
  %380 = vmatpush1.xpose.msra.mxu0 0.0
  %381 = vmatprep.subr.mxu0 0.0
  %382 = vmatpush1.xpose.msra.mxu0 0.0
  %383 = vmatprep.subr.mxu0 0.0
  %384 = vmatpush1.xpose.msra.mxu0 0.0
  %385 = vmatprep.subr.mxu0 0.0
  %386 = vmatpush1.xpose.msra.mxu0 0.0
  %387 = vmatprep.subr.mxu0 0.0
  %388 = vmatpush1.xpose.msra.mxu0 0.0
  %389 = vmatprep.subr.mxu0 0.0
  %390 = vmatpush1.xpose.msra.mxu0 0.0
  %391 = vmatprep.subr.mxu0 0.0
  %392 = vmatpush1.xpose.msra.mxu0 0.0
  %393 = vmatprep.subr.mxu0 0.0
  %394 = vmatpush1.xpose.msra.mxu0 0.0
  %395 = vmatprep.subr.mxu0 0.0
  %396 = vmatpush1.xpose.msra.mxu0 0.0
  %397 = vmatprep.subr.mxu0 0.0
  %398 = vmatpush1.xpose.msra.mxu0 0.0
  %399 = vmatprep.subr.mxu0 0.0
  %400 = vmatpush1.xpose.msra.mxu0 0.0
  %401 = vmatprep.subr.mxu0 0.0
  %402 = vmatpush1.xpose.msra.mxu0 0.0
  %403 = vmatprep.subr.mxu0 0.0
  %404 = vmatpush1.xpose.msra.mxu0 0.0
  %405 = vmatprep.subr.mxu0 0.0
  %406 = vmatpush1.xpose.msra.mxu0 0.0
  %407 = vmatprep.subr.mxu0 0.0
  %408 = vmatpush1.xpose.msra.mxu0 0.0
  %409 = vmatprep.subr.mxu0 0.0
  %410 = vmatpush1.xpose.msra.mxu0 0.0
  %411 = vmatprep.subr.mxu0 0.0
  %412 = vmatpush1.xpose.msra.mxu0 0.0
  %413 = vmatprep.subr.mxu0 0.0
  %414 = vmatpush1.xpose.msra.mxu0 0.0
  %415 = vmatprep.subr.mxu0 0.0
  %416 = vmatpush1.xpose.msra.mxu0 0.0
  %417 = vmatprep.subr.mxu0 0.0
  %418 = vmatpush1.xpose.msra.mxu0 0.0
  %419 = vmatprep.subr.mxu0 0.0
  %420 = vmatpush1.xpose.msra.mxu0 0.0
  %421 = vmatprep.subr.mxu0 0.0
  %422 = vmatpush1.xpose.msra.mxu0 0.0
  %423 = vmatprep.subr.mxu0 0.0
  %424 = vmatpush1.xpose.msra.mxu0 0.0
  %425 = vmatprep.subr.mxu0 0.0
  %426 = vmatpush1.xpose.msra.mxu0 0.0
  %427 = vmatprep.subr.mxu0 0.0
  %428 = vmatpush1.xpose.msra.mxu0 0.0
  %429 = vmatprep.subr.mxu0 0.0
  %430 = vmatpush1.xpose.msra.mxu0 0.0
  %431 = vmatprep.subr.mxu0 0.0
  %432 = vmatpush1.xpose.msra.mxu0 0.0
  %433 = vmatprep.mubr.f32.mxu0 0.0
  %434 = vmatmul.mubr.f32.gmra.mrb[0].mxu0 %v361
  %v435 = vpop.f32.mrb[0].mxu0
  %v436 = vadd.f32 0.0, %v435
  %v437 = vpop.f32.mrb[0].mxu0
  %438 = vmatprep.mubr.f32.mxu0 0.0
  %439 = vmatmul.mubr.f32.gmra.mrb[0].mxu0 %v363
  %v440 = vpop.f32.mrb[0].mxu0
  %v441 = vadd.f32 0.0, %v440
  %v442 = vpop.f32.mrb[0].mxu0
  %443 = vdwg.mxu0
  %444 = vrot.lane.b32.xlu0 %v261, 112
  %v445 = vpop.permute.xlu0 %444
  %446 = vrot.lane.b32.xlu0 %v262, 112
  %v447 = vpop.permute.xlu0 %446
  %448 = vrot.lane.b32.xlu0 %v261, 80
  %v449 = vpop.permute.xlu0 %448
  %450 = vrot.lane.b32.xlu0 %v262, 80
  %v451 = vpop.permute.xlu0 %450
  %v452 = vsel %vm269, %v445, 0
  %v454 = vsel %vm269, %v447, 0
  %v456 = vsel %vm269, %v449, 0
  %v458 = vsel %vm269, %v451, 0
  %460 = vmatprep.subr.mxu0 0.0
  %461 = vmatpush1.xpose.msra.mxu0 %v456
  %462 = vmatprep.subr.mxu0 0.0
  %463 = vmatpush1.xpose.msra.mxu0 %v458
  %464 = vmatprep.subr.mxu0 0.0
  %465 = vmatpush1.xpose.msra.mxu0 0.0
  %466 = vmatprep.subr.mxu0 0.0
  %467 = vmatpush1.xpose.msra.mxu0 0.0
  %468 = vmatprep.subr.mxu0 0.0
  %469 = vmatpush1.xpose.msra.mxu0 0.0
  %470 = vmatprep.subr.mxu0 0.0
  %471 = vmatpush1.xpose.msra.mxu0 0.0
  %472 = vmatprep.subr.mxu0 0.0
  %473 = vmatpush1.xpose.msra.mxu0 0.0
  %474 = vmatprep.subr.mxu0 0.0
  %475 = vmatpush1.xpose.msra.mxu0 0.0
  %476 = vmatprep.subr.mxu0 0.0
  %477 = vmatpush1.xpose.msra.mxu0 0.0
  %478 = vmatprep.subr.mxu0 0.0
  %479 = vmatpush1.xpose.msra.mxu0 0.0
  %480 = vmatprep.subr.mxu0 0.0
  %481 = vmatpush1.xpose.msra.mxu0 0.0
  %482 = vmatprep.subr.mxu0 0.0
  %483 = vmatpush1.xpose.msra.mxu0 0.0
  %484 = vmatprep.subr.mxu0 0.0
  %485 = vmatpush1.xpose.msra.mxu0 0.0
  %486 = vmatprep.subr.mxu0 0.0
  %487 = vmatpush1.xpose.msra.mxu0 0.0
  %488 = vmatprep.subr.mxu0 0.0
  %489 = vmatpush1.xpose.msra.mxu0 0.0
  %490 = vmatprep.subr.mxu0 0.0
  %491 = vmatpush1.xpose.msra.mxu0 0.0
  %492 = vmatprep.subr.mxu0 0.0
  %493 = vmatpush1.xpose.msra.mxu0 0.0
  %494 = vmatprep.subr.mxu0 0.0
  %495 = vmatpush1.xpose.msra.mxu0 0.0
  %496 = vmatprep.subr.mxu0 0.0
  %497 = vmatpush1.xpose.msra.mxu0 0.0
  %498 = vmatprep.subr.mxu0 0.0
  %499 = vmatpush1.xpose.msra.mxu0 0.0
  %500 = vmatprep.subr.mxu0 0.0
  %501 = vmatpush1.xpose.msra.mxu0 0.0
  %502 = vmatprep.subr.mxu0 0.0
  %503 = vmatpush1.xpose.msra.mxu0 0.0
  %504 = vmatprep.subr.mxu0 0.0
  %505 = vmatpush1.xpose.msra.mxu0 0.0
  %506 = vmatprep.subr.mxu0 0.0
  %507 = vmatpush1.xpose.msra.mxu0 0.0
  %508 = vmatprep.subr.mxu0 0.0
  %509 = vmatpush1.xpose.msra.mxu0 0.0
  %510 = vmatprep.subr.mxu0 0.0
  %511 = vmatpush1.xpose.msra.mxu0 0.0
  %512 = vmatprep.subr.mxu0 0.0
  %513 = vmatpush1.xpose.msra.mxu0 0.0
  %514 = vmatprep.subr.mxu0 0.0
  %515 = vmatpush1.xpose.msra.mxu0 0.0
  %516 = vmatprep.subr.mxu0 0.0
  %517 = vmatpush1.xpose.msra.mxu0 0.0
  %518 = vmatprep.subr.mxu0 0.0
  %519 = vmatpush1.xpose.msra.mxu0 0.0
  %520 = vmatprep.subr.mxu0 0.0
  %521 = vmatpush1.xpose.msra.mxu0 0.0
  %522 = vmatprep.subr.mxu0 0.0
  %523 = vmatpush1.xpose.msra.mxu0 0.0
  %524 = vmatprep.mubr.f32.mxu0 0.0
  %525 = vmatmul.mubr.f32.gmra.mrb[0].mxu0 %v452
  %v526 = vpop.f32.mrb[0].mxu0
  %v527 = vadd.f32 0.0, %v526
  %v528 = vpop.f32.mrb[0].mxu0
  %529 = vmatprep.mubr.f32.mxu0 0.0
  %530 = vmatmul.mubr.f32.gmra.mrb[0].mxu0 %v454
  %v531 = vpop.f32.mrb[0].mxu0
  %v532 = vadd.f32 0.0, %v531
  %v533 = vpop.f32.mrb[0].mxu0
  %534 = vdwg.mxu0
  %535 = vrot.lane.b32.xlu0 %v261, 104
  %v536 = vpop.permute.xlu0 %535
  %537 = vrot.lane.b32.xlu0 %v262, 104
  %v538 = vpop.permute.xlu0 %537
  %539 = vrot.lane.b32.xlu0 %v261, 72
  %v540 = vpop.permute.xlu0 %539
  %541 = vrot.lane.b32.xlu0 %v262, 72
  %v542 = vpop.permute.xlu0 %541
  %v543 = vsel %vm269, %v536, 0
  %v545 = vsel %vm269, %v538, 0
  %v547 = vsel %vm269, %v540, 0
  %v549 = vsel %vm269, %v542, 0
  %551 = vmatprep.subr.mxu0 0.0
  %552 = vmatpush1.xpose.msra.mxu0 %v547
  %553 = vmatprep.subr.mxu0 0.0
  %554 = vmatpush1.xpose.msra.mxu0 %v549
  %555 = vmatprep.subr.mxu0 0.0
  %556 = vmatpush1.xpose.msra.mxu0 0.0
  %557 = vmatprep.subr.mxu0 0.0
  %558 = vmatpush1.xpose.msra.mxu0 0.0
  %559 = vmatprep.subr.mxu0 0.0
  %560 = vmatpush1.xpose.msra.mxu0 0.0
  %561 = vmatprep.subr.mxu0 0.0
  %562 = vmatpush1.xpose.msra.mxu0 0.0
  %563 = vmatprep.subr.mxu0 0.0
  %564 = vmatpush1.xpose.msra.mxu0 0.0
  %565 = vmatprep.subr.mxu0 0.0
  %566 = vmatpush1.xpose.msra.mxu0 0.0
  %567 = vmatprep.subr.mxu0 0.0
  %568 = vmatpush1.xpose.msra.mxu0 0.0
  %569 = vmatprep.subr.mxu0 0.0
  %570 = vmatpush1.xpose.msra.mxu0 0.0
  %571 = vmatprep.subr.mxu0 0.0
  %572 = vmatpush1.xpose.msra.mxu0 0.0
  %573 = vmatprep.subr.mxu0 0.0
  %574 = vmatpush1.xpose.msra.mxu0 0.0
  %575 = vmatprep.subr.mxu0 0.0
  %576 = vmatpush1.xpose.msra.mxu0 0.0
  %577 = vmatprep.subr.mxu0 0.0
  %578 = vmatpush1.xpose.msra.mxu0 0.0
  %579 = vmatprep.subr.mxu0 0.0
  %580 = vmatpush1.xpose.msra.mxu0 0.0
  %581 = vmatprep.subr.mxu0 0.0
  %582 = vmatpush1.xpose.msra.mxu0 0.0
  %583 = vmatprep.subr.mxu0 0.0
  %584 = vmatpush1.xpose.msra.mxu0 0.0
  %585 = vmatprep.subr.mxu0 0.0
  %586 = vmatpush1.xpose.msra.mxu0 0.0
  %587 = vmatprep.subr.mxu0 0.0
  %588 = vmatpush1.xpose.msra.mxu0 0.0
  %589 = vmatprep.subr.mxu0 0.0
  %590 = vmatpush1.xpose.msra.mxu0 0.0
  %591 = vmatprep.subr.mxu0 0.0
  %592 = vmatpush1.xpose.msra.mxu0 0.0
  %593 = vmatprep.subr.mxu0 0.0
  %594 = vmatpush1.xpose.msra.mxu0 0.0
  %595 = vmatprep.subr.mxu0 0.0
  %596 = vmatpush1.xpose.msra.mxu0 0.0
  %597 = vmatprep.subr.mxu0 0.0
  %598 = vmatpush1.xpose.msra.mxu0 0.0
  %599 = vmatprep.subr.mxu0 0.0
  %600 = vmatpush1.xpose.msra.mxu0 0.0
  %601 = vmatprep.subr.mxu0 0.0
  %602 = vmatpush1.xpose.msra.mxu0 0.0
  %603 = vmatprep.subr.mxu0 0.0
  %604 = vmatpush1.xpose.msra.mxu0 0.0
  %605 = vmatprep.subr.mxu0 0.0
  %606 = vmatpush1.xpose.msra.mxu0 0.0
  %607 = vmatprep.subr.mxu0 0.0
  %608 = vmatpush1.xpose.msra.mxu0 0.0
  %609 = vmatprep.subr.mxu0 0.0
  %610 = vmatpush1.xpose.msra.mxu0 0.0
  %611 = vmatprep.subr.mxu0 0.0
  %612 = vmatpush1.xpose.msra.mxu0 0.0
  %613 = vmatprep.subr.mxu0 0.0
  %614 = vmatpush1.xpose.msra.mxu0 0.0
  %615 = vmatprep.mubr.f32.mxu0 0.0
  %616 = vmatmul.mubr.f32.gmra.mrb[0].mxu0 %v543
  %v617 = vpop.f32.mrb[0].mxu0
  %v618 = vadd.f32 0.0, %v617
  %v619 = vpop.f32.mrb[0].mxu0
  %620 = vmatprep.mubr.f32.mxu0 0.0
  %621 = vmatmul.mubr.f32.gmra.mrb[0].mxu0 %v545
  %v622 = vpop.f32.mrb[0].mxu0
  %v623 = vadd.f32 0.0, %v622
  %v624 = vpop.f32.mrb[0].mxu0
  %625 = vdwg.mxu0
  %v626 = vmul.f32 %v345, 0.35355338
  %v627 = vmul.f32 %v350, 0.35355338
  %v628 = vmul.f32 %v436, 0.35355338
  %v629 = vmul.f32 %v441, 0.35355338
  %v630 = vmul.f32 %v527, 0.35355338
  %v631 = vmul.f32 %v532, 0.35355338
  %v632 = vmul.f32 %v618, 0.35355338
  %v633 = vmul.f32 %v623, 0.35355338
  %v634 = vadd.f32 %v626, %v50
  %v635 = vadd.f32 %v627, %v51
  %v636 = vadd.f32 %v628, %v52
  %v637 = vadd.f32 %v629, %v53
  %v638 = vadd.f32 %v630, %v54
  %v639 = vadd.f32 %v631, %v55
  %v640 = vadd.f32 %v632, %v56
  %v641 = vadd.f32 %v633, %v57
  %vm642 = vcmask 130048
  %v643 = vsel %vm642, %v634, -inf
  %644 = vmax.xlane.f32.xlu0 %v643
  %v645 = vpop.xlane.xlu0 %644
  %v646 = vsel %vm642, %v635, -inf
  %647 = vmax.xlane.f32.xlu0 %v646
  %v648 = vpop.xlane.xlu0 %647
  %v649 = vsel %vm642, %v636, -inf
  %650 = vmax.xlane.f32.xlu0 %v649
  %v651 = vpop.xlane.xlu0 %650
  %v652 = vsel %vm642, %v637, -inf
  %653 = vmax.xlane.f32.xlu0 %v652
  %v654 = vpop.xlane.xlu0 %653
  %v655 = vsel %vm642, %v638, -inf
  %656 = vmax.xlane.f32.xlu0 %v655
  %v657 = vpop.xlane.xlu0 %656
  %v658 = vsel %vm642, %v639, -inf
  %659 = vmax.xlane.f32.xlu0 %v658
  %v660 = vpop.xlane.xlu0 %659
  %v661 = vsel %vm642, %v640, -inf
  %662 = vmax.xlane.f32.xlu0 %v661
  %v663 = vpop.xlane.xlu0 %662
  %v664 = vsel %vm642, %v641, -inf
  %665 = vmax.xlane.f32.xlu0 %v664
  %v666 = vpop.xlane.xlu0 %665
  %v667 = vsub.f32 %v634, %v645
  %v668 = vsub.f32 %v635, %v648
  %v669 = vsub.f32 %v636, %v651
  %v670 = vsub.f32 %v637, %v654
  %v671 = vsub.f32 %v638, %v657
  %v672 = vsub.f32 %v639, %v660
  %v673 = vsub.f32 %v640, %v663
  %v674 = vsub.f32 %v641, %v666
  %v675 = vmul.f32 %v667, 1.442695
  %v676 = vpow.pop %v675
  %v677 = vmul.f32 %v668, 1.442695
  %v678 = vpow.pop %v677
  %v679 = vmul.f32 %v669, 1.442695
  %v680 = vpow.pop %v679
  %v681 = vmul.f32 %v670, 1.442695
  %v682 = vpow.pop %v681
  %v683 = vmul.f32 %v671, 1.442695
  %v684 = vpow.pop %v683
  %v685 = vmul.f32 %v672, 1.442695
  %v686 = vpow.pop %v685
  %v687 = vmul.f32 %v673, 1.442695
  %v688 = vpow.pop %v687
  %v689 = vmul.f32 %v674, 1.442695
  %v690 = vpow.pop %v689
  %v691 = vsel %vm642, %v676, 0.0
  %692 = vadd.xlane.f32.xlu0 %v691
  %v693 = vpop.xlane.xlu0 %692
  %v694 = vsel %vm642, %v678, 0.0
  %695 = vadd.xlane.f32.xlu0 %v694
  %v696 = vpop.xlane.xlu0 %695
  %v697 = vsel %vm642, %v680, 0.0
  %698 = vadd.xlane.f32.xlu0 %v697
  %v699 = vpop.xlane.xlu0 %698
  %v700 = vsel %vm642, %v682, 0.0
  %701 = vadd.xlane.f32.xlu0 %v700
  %v702 = vpop.xlane.xlu0 %701
  %v703 = vsel %vm642, %v684, 0.0
  %704 = vadd.xlane.f32.xlu0 %v703
  %v705 = vpop.xlane.xlu0 %704
  %v706 = vsel %vm642, %v686, 0.0
  %707 = vadd.xlane.f32.xlu0 %v706
  %v708 = vpop.xlane.xlu0 %707
  %v709 = vsel %vm642, %v688, 0.0
  %710 = vadd.xlane.f32.xlu0 %v709
  %v711 = vpop.xlane.xlu0 %710
  %v712 = vsel %vm642, %v690, 0.0
  %713 = vadd.xlane.f32.xlu0 %v712
  %v714 = vpop.xlane.xlu0 %713
  %v715 = vrcp.pop %v693
  %v716 = vrcp.pop %v696
  %v717 = vrcp.pop %v699
  %v718 = vrcp.pop %v702
  %v719 = vrcp.pop %v705
  %v720 = vrcp.pop %v708
  %v721 = vrcp.pop %v711
  %v722 = vrcp.pop %v714
  %v723 = vmul.f32 %v676, %v715
  %v724 = vmul.f32 %v678, %v716
  %v725 = vmul.f32 %v680, %v717
  %v726 = vmul.f32 %v682, %v718
  %v727 = vmul.f32 %v684, %v719
  %v728 = vmul.f32 %v686, %v720
  %v729 = vmul.f32 %v688, %v721
  %v730 = vmul.f32 %v690, %v722
  %731 = vrot.lane.b32.xlu0 %v169, 64
  %v732 = vpop.permute.xlu0 %731
  %733 = vrot.lane.b32.xlu0 %v172, 64
  %v734 = vpop.permute.xlu0 %733
  %v738 = vsel %vm642, %v723, 0
  %v741 = vsel %vm642, %v724, 0
  %743 = vmatprep.subr.mxu0 0.0
  %744 = vmatpush1.msra.mxu0 %v732
  %745 = vmatprep.subr.mxu0 0.0
  %746 = vmatpush1.msra.mxu0 %v734
  %747 = vmatprep.subr.mxu0 0.0
  %748 = vmatpush1.msra.mxu0 0.0
  %749 = vmatprep.subr.mxu0 0.0
  %750 = vmatpush1.msra.mxu0 0.0
  %751 = vmatprep.subr.mxu0 0.0
  %752 = vmatpush1.msra.mxu0 0.0
  %753 = vmatprep.subr.mxu0 0.0
  %754 = vmatpush1.msra.mxu0 0.0
  %755 = vmatprep.subr.mxu0 0.0
  %756 = vmatpush1.msra.mxu0 0.0
  %757 = vmatprep.subr.mxu0 0.0
  %758 = vmatpush1.msra.mxu0 0.0
  %759 = vmatprep.subr.mxu0 0.0
  %760 = vmatpush1.msra.mxu0 0.0
  %761 = vmatprep.subr.mxu0 0.0
  %762 = vmatpush1.msra.mxu0 0.0
  %763 = vmatprep.subr.mxu0 0.0
  %764 = vmatpush1.msra.mxu0 0.0
  %765 = vmatprep.subr.mxu0 0.0
  %766 = vmatpush1.msra.mxu0 0.0
  %767 = vmatprep.subr.mxu0 0.0
  %768 = vmatpush1.msra.mxu0 0.0
  %769 = vmatprep.subr.mxu0 0.0
  %770 = vmatpush1.msra.mxu0 0.0
  %771 = vmatprep.subr.mxu0 0.0
  %772 = vmatpush1.msra.mxu0 0.0
  %773 = vmatprep.subr.mxu0 0.0
  %774 = vmatpush1.msra.mxu0 0.0
  %775 = vmatprep.subr.mxu0 0.0
  %776 = vmatpush1.msra.mxu0 0.0
  %777 = vmatprep.subr.mxu0 0.0
  %778 = vmatpush1.msra.mxu0 0.0
  %779 = vmatprep.subr.mxu0 0.0
  %780 = vmatpush1.msra.mxu0 0.0
  %781 = vmatprep.subr.mxu0 0.0
  %782 = vmatpush1.msra.mxu0 0.0
  %783 = vmatprep.subr.mxu0 0.0
  %784 = vmatpush1.msra.mxu0 0.0
  %785 = vmatprep.subr.mxu0 0.0
  %786 = vmatpush1.msra.mxu0 0.0
  %787 = vmatprep.subr.mxu0 0.0
  %788 = vmatpush1.msra.mxu0 0.0
  %789 = vmatprep.subr.mxu0 0.0
  %790 = vmatpush1.msra.mxu0 0.0
  %791 = vmatprep.subr.mxu0 0.0
  %792 = vmatpush1.msra.mxu0 0.0
  %793 = vmatprep.subr.mxu0 0.0
  %794 = vmatpush1.msra.mxu0 0.0
  %795 = vmatprep.subr.mxu0 0.0
  %796 = vmatpush1.msra.mxu0 0.0
  %797 = vmatprep.subr.mxu0 0.0
  %798 = vmatpush1.msra.mxu0 0.0
  %799 = vmatprep.subr.mxu0 0.0
  %800 = vmatpush1.msra.mxu0 0.0
  %801 = vmatprep.subr.mxu0 0.0
  %802 = vmatpush1.msra.mxu0 0.0
  %803 = vmatprep.subr.mxu0 0.0
  %804 = vmatpush1.msra.mxu0 0.0
  %805 = vmatprep.subr.mxu0 0.0
  %806 = vmatpush1.msra.mxu0 0.0
  %807 = vmatprep.mubr.f32.mxu0 0.0
  %808 = vmatmul.mubr.f32.gmra.mrb[0].mxu0 %v738
  %v809 = vpop.f32.mrb[0].mxu0
  %v810 = vadd.f32 0.0, %v809
  %v811 = vpop.f32.mrb[0].mxu0
  %812 = vmatprep.mubr.f32.mxu0 0.0
  %813 = vmatmul.mubr.f32.gmra.mrb[0].mxu0 %v741
  %v814 = vpop.f32.mrb[0].mxu0
  %v815 = vadd.f32 0.0, %v814
  %v816 = vpop.f32.mrb[0].mxu0
  %817 = vdwg.mxu0
  %v818 = vpack.c.bf16 %v815, %v810
  %v820 = vsel %vm269, %v818, 0
  %vm822 = vcmask 1043456
  %v824 = vsel %vm822, %v85, 0
  %826 = vmatprep.subr.bf16.mxu0 0
  %827 = vmatpush1.bf16.msra.mxu0 %v824
  %828 = vmatprep.subr.bf16.mxu0 0
  %829 = vmatpush1.bf16.msra.mxu0 0
  %830 = vmatprep.subr.bf16.mxu0 0
  %831 = vmatpush1.bf16.msra.mxu0 0
  %832 = vmatprep.subr.bf16.mxu0 0
  %833 = vmatpush1.bf16.msra.mxu0 0
  %834 = vmatprep.subr.bf16.mxu0 0
  %835 = vmatpush1.bf16.msra.mxu0 0
  %836 = vmatprep.subr.bf16.mxu0 0
  %837 = vmatpush1.bf16.msra.mxu0 0
  %838 = vmatprep.subr.bf16.mxu0 0
  %839 = vmatpush1.bf16.msra.mxu0 0
  %840 = vmatprep.subr.bf16.mxu0 0
  %841 = vmatpush1.bf16.msra.mxu0 0
  %842 = vmatprep.subr.bf16.mxu0 0
  %843 = vmatpush1.bf16.msra.mxu0 0
  %844 = vmatprep.subr.bf16.mxu0 0
  %845 = vmatpush1.bf16.msra.mxu0 0
  %846 = vmatprep.subr.bf16.mxu0 0
  %847 = vmatpush1.bf16.msra.mxu0 0
  %848 = vmatprep.subr.bf16.mxu0 0
  %849 = vmatpush1.bf16.msra.mxu0 0
  %850 = vmatprep.subr.bf16.mxu0 0
  %851 = vmatpush1.bf16.msra.mxu0 0
  %852 = vmatprep.subr.bf16.mxu0 0
  %853 = vmatpush1.bf16.msra.mxu0 0
  %854 = vmatprep.subr.bf16.mxu0 0
  %855 = vmatpush1.bf16.msra.mxu0 0
  %856 = vmatprep.subr.bf16.mxu0 0
  %857 = vmatpush1.bf16.msra.mxu0 0
  %858 = vmatprep.mubr.bf16.mxu0 0
  %859 = vmatmul.mubr.bf16.gmra.mrb[0].mxu0 %v820
  %v860 = vpop.f32.mrb[0].mxu0
  %v861 = vadd.f32 0.0, %v860
  %v862 = vpop.f32.mrb[0].mxu0
  %v863 = vpop.f32.mrb[0].mxu0
  %v864 = vadd.f32 0.0, %v863
  %v865 = vpop.f32.mrb[0].mxu0
  %866 = vdwg.mxu0
  %v867 = vadd.f32 %v78, %v861
  %v868 = vadd.f32 %v79, %v864
  %869 = vrot.lane.b32.xlu0 %v169, 56
  %v870 = vpop.permute.xlu0 %869
  %871 = vrot.lane.b32.xlu0 %v172, 56
  %v872 = vpop.permute.xlu0 %871
  %v876 = vsel %vm642, %v725, 0
  %v879 = vsel %vm642, %v726, 0
  %881 = vmatprep.subr.mxu0 0.0
  %882 = vmatpush1.msra.mxu0 %v870
  %883 = vmatprep.subr.mxu0 0.0
  %884 = vmatpush1.msra.mxu0 %v872
  %885 = vmatprep.subr.mxu0 0.0
  %886 = vmatpush1.msra.mxu0 0.0
  %887 = vmatprep.subr.mxu0 0.0
  %888 = vmatpush1.msra.mxu0 0.0
  %889 = vmatprep.subr.mxu0 0.0
  %890 = vmatpush1.msra.mxu0 0.0
  %891 = vmatprep.subr.mxu0 0.0
  %892 = vmatpush1.msra.mxu0 0.0
  %893 = vmatprep.subr.mxu0 0.0
  %894 = vmatpush1.msra.mxu0 0.0
  %895 = vmatprep.subr.mxu0 0.0
  %896 = vmatpush1.msra.mxu0 0.0
  %897 = vmatprep.subr.mxu0 0.0
  %898 = vmatpush1.msra.mxu0 0.0
  %899 = vmatprep.subr.mxu0 0.0
  %900 = vmatpush1.msra.mxu0 0.0
  %901 = vmatprep.subr.mxu0 0.0
  %902 = vmatpush1.msra.mxu0 0.0
  %903 = vmatprep.subr.mxu0 0.0
  %904 = vmatpush1.msra.mxu0 0.0
  %905 = vmatprep.subr.mxu0 0.0
  %906 = vmatpush1.msra.mxu0 0.0
  %907 = vmatprep.subr.mxu0 0.0
  %908 = vmatpush1.msra.mxu0 0.0
  %909 = vmatprep.subr.mxu0 0.0
  %910 = vmatpush1.msra.mxu0 0.0
  %911 = vmatprep.subr.mxu0 0.0
  %912 = vmatpush1.msra.mxu0 0.0
  %913 = vmatprep.subr.mxu0 0.0
  %914 = vmatpush1.msra.mxu0 0.0
  %915 = vmatprep.subr.mxu0 0.0
  %916 = vmatpush1.msra.mxu0 0.0
  %917 = vmatprep.subr.mxu0 0.0
  %918 = vmatpush1.msra.mxu0 0.0
  %919 = vmatprep.subr.mxu0 0.0
  %920 = vmatpush1.msra.mxu0 0.0
  %921 = vmatprep.subr.mxu0 0.0
  %922 = vmatpush1.msra.mxu0 0.0
  %923 = vmatprep.subr.mxu0 0.0
  %924 = vmatpush1.msra.mxu0 0.0
  %925 = vmatprep.subr.mxu0 0.0
  %926 = vmatpush1.msra.mxu0 0.0
  %927 = vmatprep.subr.mxu0 0.0
  %928 = vmatpush1.msra.mxu0 0.0
  %929 = vmatprep.subr.mxu0 0.0
  %930 = vmatpush1.msra.mxu0 0.0
  %931 = vmatprep.subr.mxu0 0.0
  %932 = vmatpush1.msra.mxu0 0.0
  %933 = vmatprep.subr.mxu0 0.0
  %934 = vmatpush1.msra.mxu0 0.0
  %935 = vmatprep.subr.mxu0 0.0
  %936 = vmatpush1.msra.mxu0 0.0
  %937 = vmatprep.subr.mxu0 0.0
  %938 = vmatpush1.msra.mxu0 0.0
  %939 = vmatprep.subr.mxu0 0.0
  %940 = vmatpush1.msra.mxu0 0.0
  %941 = vmatprep.subr.mxu0 0.0
  %942 = vmatpush1.msra.mxu0 0.0
  %943 = vmatprep.subr.mxu0 0.0
  %944 = vmatpush1.msra.mxu0 0.0
  %945 = vmatprep.mubr.f32.mxu0 0.0
  %946 = vmatmul.mubr.f32.gmra.mrb[0].mxu0 %v876
  %v947 = vpop.f32.mrb[0].mxu0
  %v948 = vadd.f32 0.0, %v947
  %v949 = vpop.f32.mrb[0].mxu0
  %950 = vmatprep.mubr.f32.mxu0 0.0
  %951 = vmatmul.mubr.f32.gmra.mrb[0].mxu0 %v879
  %v952 = vpop.f32.mrb[0].mxu0
  %v953 = vadd.f32 0.0, %v952
  %v954 = vpop.f32.mrb[0].mxu0
  %955 = vdwg.mxu0
  %v956 = vpack.c.bf16 %v953, %v948
  %v958 = vunpack.c.l.b16 %v85
  %v959 = vpack.c.b16 %v958, %v958
  %960 = vrot.lane.b32.xlu0 %v959, 96
  %v961 = vpop.permute.xlu0 %960
  %v963 = vsel %vm269, %v956, 0
  %v966 = vsel %vm822, %v961, 0
  %968 = vmatprep.subr.bf16.mxu0 0
  %969 = vmatpush1.bf16.msra.mxu0 %v966
  %970 = vmatprep.subr.bf16.mxu0 0
  %971 = vmatpush1.bf16.msra.mxu0 0
  %972 = vmatprep.subr.bf16.mxu0 0
  %973 = vmatpush1.bf16.msra.mxu0 0
  %974 = vmatprep.subr.bf16.mxu0 0
  %975 = vmatpush1.bf16.msra.mxu0 0
  %976 = vmatprep.subr.bf16.mxu0 0
  %977 = vmatpush1.bf16.msra.mxu0 0
  %978 = vmatprep.subr.bf16.mxu0 0
  %979 = vmatpush1.bf16.msra.mxu0 0
  %980 = vmatprep.subr.bf16.mxu0 0
  %981 = vmatpush1.bf16.msra.mxu0 0
  %982 = vmatprep.subr.bf16.mxu0 0
  %983 = vmatpush1.bf16.msra.mxu0 0
  %984 = vmatprep.subr.bf16.mxu0 0
  %985 = vmatpush1.bf16.msra.mxu0 0
  %986 = vmatprep.subr.bf16.mxu0 0
  %987 = vmatpush1.bf16.msra.mxu0 0
  %988 = vmatprep.subr.bf16.mxu0 0
  %989 = vmatpush1.bf16.msra.mxu0 0
  %990 = vmatprep.subr.bf16.mxu0 0
  %991 = vmatpush1.bf16.msra.mxu0 0
  %992 = vmatprep.subr.bf16.mxu0 0
  %993 = vmatpush1.bf16.msra.mxu0 0
  %994 = vmatprep.subr.bf16.mxu0 0
  %995 = vmatpush1.bf16.msra.mxu0 0
  %996 = vmatprep.subr.bf16.mxu0 0
  %997 = vmatpush1.bf16.msra.mxu0 0
  %998 = vmatprep.subr.bf16.mxu0 0
  %999 = vmatpush1.bf16.msra.mxu0 0
  %1000 = vmatprep.mubr.bf16.mxu0 0
  %1001 = vmatmul.mubr.bf16.gmra.mrb[0].mxu0 %v963
  %v1002 = vpop.f32.mrb[0].mxu0
  %v1003 = vadd.f32 0.0, %v1002
  %v1004 = vpop.f32.mrb[0].mxu0
  %v1005 = vpop.f32.mrb[0].mxu0
  %v1006 = vadd.f32 0.0, %v1005
  %v1007 = vpop.f32.mrb[0].mxu0
  %1008 = vdwg.mxu0
  %v1009 = vadd.f32 %v867, %v1003
  %v1010 = vadd.f32 %v868, %v1006
  %1011 = vrot.lane.b32.xlu0 %v169, 48
  %v1012 = vpop.permute.xlu0 %1011
  %1013 = vrot.lane.b32.xlu0 %v172, 48
  %v1014 = vpop.permute.xlu0 %1013
  %v1018 = vsel %vm642, %v727, 0
  %v1021 = vsel %vm642, %v728, 0
  %1023 = vmatprep.subr.mxu0 0.0
  %1024 = vmatpush1.msra.mxu0 %v1012
  %1025 = vmatprep.subr.mxu0 0.0
  %1026 = vmatpush1.msra.mxu0 %v1014
  %1027 = vmatprep.subr.mxu0 0.0
  %1028 = vmatpush1.msra.mxu0 0.0
  %1029 = vmatprep.subr.mxu0 0.0
  %1030 = vmatpush1.msra.mxu0 0.0
  %1031 = vmatprep.subr.mxu0 0.0
  %1032 = vmatpush1.msra.mxu0 0.0
  %1033 = vmatprep.subr.mxu0 0.0
  %1034 = vmatpush1.msra.mxu0 0.0
  %1035 = vmatprep.subr.mxu0 0.0
  %1036 = vmatpush1.msra.mxu0 0.0
  %1037 = vmatprep.subr.mxu0 0.0
  %1038 = vmatpush1.msra.mxu0 0.0
  %1039 = vmatprep.subr.mxu0 0.0
  %1040 = vmatpush1.msra.mxu0 0.0
  %1041 = vmatprep.subr.mxu0 0.0
  %1042 = vmatpush1.msra.mxu0 0.0
  %1043 = vmatprep.subr.mxu0 0.0
  %1044 = vmatpush1.msra.mxu0 0.0
  %1045 = vmatprep.subr.mxu0 0.0
  %1046 = vmatpush1.msra.mxu0 0.0
  %1047 = vmatprep.subr.mxu0 0.0
  %1048 = vmatpush1.msra.mxu0 0.0
  %1049 = vmatprep.subr.mxu0 0.0
  %1050 = vmatpush1.msra.mxu0 0.0
  %1051 = vmatprep.subr.mxu0 0.0
  %1052 = vmatpush1.msra.mxu0 0.0
  %1053 = vmatprep.subr.mxu0 0.0
  %1054 = vmatpush1.msra.mxu0 0.0
  %1055 = vmatprep.subr.mxu0 0.0
  %1056 = vmatpush1.msra.mxu0 0.0
  %1057 = vmatprep.subr.mxu0 0.0
  %1058 = vmatpush1.msra.mxu0 0.0
  %1059 = vmatprep.subr.mxu0 0.0
  %1060 = vmatpush1.msra.mxu0 0.0
  %1061 = vmatprep.subr.mxu0 0.0
  %1062 = vmatpush1.msra.mxu0 0.0
  %1063 = vmatprep.subr.mxu0 0.0
  %1064 = vmatpush1.msra.mxu0 0.0
  %1065 = vmatprep.subr.mxu0 0.0
  %1066 = vmatpush1.msra.mxu0 0.0
  %1067 = vmatprep.subr.mxu0 0.0
  %1068 = vmatpush1.msra.mxu0 0.0
  %1069 = vmatprep.subr.mxu0 0.0
  %1070 = vmatpush1.msra.mxu0 0.0
  %1071 = vmatprep.subr.mxu0 0.0
  %1072 = vmatpush1.msra.mxu0 0.0
  %1073 = vmatprep.subr.mxu0 0.0
  %1074 = vmatpush1.msra.mxu0 0.0
  %1075 = vmatprep.subr.mxu0 0.0
  %1076 = vmatpush1.msra.mxu0 0.0
  %1077 = vmatprep.subr.mxu0 0.0
  %1078 = vmatpush1.msra.mxu0 0.0
  %1079 = vmatprep.subr.mxu0 0.0
  %1080 = vmatpush1.msra.mxu0 0.0
  %1081 = vmatprep.subr.mxu0 0.0
  %1082 = vmatpush1.msra.mxu0 0.0
  %1083 = vmatprep.subr.mxu0 0.0
  %1084 = vmatpush1.msra.mxu0 0.0
  %1085 = vmatprep.subr.mxu0 0.0
  %1086 = vmatpush1.msra.mxu0 0.0
  %1087 = vmatprep.mubr.f32.mxu0 0.0
  %1088 = vmatmul.mubr.f32.gmra.mrb[0].mxu0 %v1018
  %v1089 = vpop.f32.mrb[0].mxu0
  %v1090 = vadd.f32 0.0, %v1089
  %v1091 = vpop.f32.mrb[0].mxu0
  %1092 = vmatprep.mubr.f32.mxu0 0.0
  %1093 = vmatmul.mubr.f32.gmra.mrb[0].mxu0 %v1021
  %v1094 = vpop.f32.mrb[0].mxu0
  %v1095 = vadd.f32 0.0, %v1094
  %v1096 = vpop.f32.mrb[0].mxu0
  %1097 = vdwg.mxu0
  %v1098 = vpack.c.bf16 %v1095, %v1090
  %1099 = vrot.lane.b32.xlu0 %v959, 64
  %v1100 = vpop.permute.xlu0 %1099
  %v1102 = vsel %vm269, %v1098, 0
  %v1105 = vsel %vm822, %v1100, 0
  %1107 = vmatprep.subr.bf16.mxu0 0
  %1108 = vmatpush1.bf16.msra.mxu0 %v1105
  %1109 = vmatprep.subr.bf16.mxu0 0
  %1110 = vmatpush1.bf16.msra.mxu0 0
  %1111 = vmatprep.subr.bf16.mxu0 0
  %1112 = vmatpush1.bf16.msra.mxu0 0
  %1113 = vmatprep.subr.bf16.mxu0 0
  %1114 = vmatpush1.bf16.msra.mxu0 0
  %1115 = vmatprep.subr.bf16.mxu0 0
  %1116 = vmatpush1.bf16.msra.mxu0 0
  %1117 = vmatprep.subr.bf16.mxu0 0
  %1118 = vmatpush1.bf16.msra.mxu0 0
  %1119 = vmatprep.subr.bf16.mxu0 0
  %1120 = vmatpush1.bf16.msra.mxu0 0
  %1121 = vmatprep.subr.bf16.mxu0 0
  %1122 = vmatpush1.bf16.msra.mxu0 0
  %1123 = vmatprep.subr.bf16.mxu0 0
  %1124 = vmatpush1.bf16.msra.mxu0 0
  %1125 = vmatprep.subr.bf16.mxu0 0
  %1126 = vmatpush1.bf16.msra.mxu0 0
  %1127 = vmatprep.subr.bf16.mxu0 0
  %1128 = vmatpush1.bf16.msra.mxu0 0
  %1129 = vmatprep.subr.bf16.mxu0 0
  %1130 = vmatpush1.bf16.msra.mxu0 0
  %1131 = vmatprep.subr.bf16.mxu0 0
  %1132 = vmatpush1.bf16.msra.mxu0 0
  %1133 = vmatprep.subr.bf16.mxu0 0
  %1134 = vmatpush1.bf16.msra.mxu0 0
  %1135 = vmatprep.subr.bf16.mxu0 0
  %1136 = vmatpush1.bf16.msra.mxu0 0
  %1137 = vmatprep.subr.bf16.mxu0 0
  %1138 = vmatpush1.bf16.msra.mxu0 0
  %1139 = vmatprep.mubr.bf16.mxu0 0
  %1140 = vmatmul.mubr.bf16.gmra.mrb[0].mxu0 %v1102
  %v1141 = vpop.f32.mrb[0].mxu0
  %v1142 = vadd.f32 0.0, %v1141
  %v1143 = vpop.f32.mrb[0].mxu0
  %v1144 = vpop.f32.mrb[0].mxu0
  %v1145 = vadd.f32 0.0, %v1144
  %v1146 = vpop.f32.mrb[0].mxu0
  %1147 = vdwg.mxu0
  %v1148 = vadd.f32 %v1009, %v1142
  %v1149 = vadd.f32 %v1010, %v1145
  %1150 = vrot.lane.b32.xlu0 %v169, 40
  %v1151 = vpop.permute.xlu0 %1150
  %1152 = vrot.lane.b32.xlu0 %v172, 40
  %v1153 = vpop.permute.xlu0 %1152
  %v1157 = vsel %vm642, %v729, 0
  %v1160 = vsel %vm642, %v730, 0
  %1162 = vmatprep.subr.mxu0 0.0
  %1163 = vmatpush1.msra.mxu0 %v1151
  %1164 = vmatprep.subr.mxu0 0.0
  %1165 = vmatpush1.msra.mxu0 %v1153
  %1166 = vmatprep.subr.mxu0 0.0
  %1167 = vmatpush1.msra.mxu0 0.0
  %1168 = vmatprep.subr.mxu0 0.0
  %1169 = vmatpush1.msra.mxu0 0.0
  %1170 = vmatprep.subr.mxu0 0.0
  %1171 = vmatpush1.msra.mxu0 0.0
  %1172 = vmatprep.subr.mxu0 0.0
  %1173 = vmatpush1.msra.mxu0 0.0
  %1174 = vmatprep.subr.mxu0 0.0
  %1175 = vmatpush1.msra.mxu0 0.0
  %1176 = vmatprep.subr.mxu0 0.0
  %1177 = vmatpush1.msra.mxu0 0.0
  %1178 = vmatprep.subr.mxu0 0.0
  %1179 = vmatpush1.msra.mxu0 0.0
  %1180 = vmatprep.subr.mxu0 0.0
  %1181 = vmatpush1.msra.mxu0 0.0
  %1182 = vmatprep.subr.mxu0 0.0
  %1183 = vmatpush1.msra.mxu0 0.0
  %1184 = vmatprep.subr.mxu0 0.0
  %1185 = vmatpush1.msra.mxu0 0.0
  %1186 = vmatprep.subr.mxu0 0.0
  %1187 = vmatpush1.msra.mxu0 0.0
  %1188 = vmatprep.subr.mxu0 0.0
  %1189 = vmatpush1.msra.mxu0 0.0
  %1190 = vmatprep.subr.mxu0 0.0
  %1191 = vmatpush1.msra.mxu0 0.0
  %1192 = vmatprep.subr.mxu0 0.0
  %1193 = vmatpush1.msra.mxu0 0.0
  %1194 = vmatprep.subr.mxu0 0.0
  %1195 = vmatpush1.msra.mxu0 0.0
  %1196 = vmatprep.subr.mxu0 0.0
  %1197 = vmatpush1.msra.mxu0 0.0
  %1198 = vmatprep.subr.mxu0 0.0
  %1199 = vmatpush1.msra.mxu0 0.0
  %1200 = vmatprep.subr.mxu0 0.0
  %1201 = vmatpush1.msra.mxu0 0.0
  %1202 = vmatprep.subr.mxu0 0.0
  %1203 = vmatpush1.msra.mxu0 0.0
  %1204 = vmatprep.subr.mxu0 0.0
  %1205 = vmatpush1.msra.mxu0 0.0
  %1206 = vmatprep.subr.mxu0 0.0
  %1207 = vmatpush1.msra.mxu0 0.0
  %1208 = vmatprep.subr.mxu0 0.0
  %1209 = vmatpush1.msra.mxu0 0.0
  %1210 = vmatprep.subr.mxu0 0.0
  %1211 = vmatpush1.msra.mxu0 0.0
  %1212 = vmatprep.subr.mxu0 0.0
  %1213 = vmatpush1.msra.mxu0 0.0
  %1214 = vmatprep.subr.mxu0 0.0
  %1215 = vmatpush1.msra.mxu0 0.0
  %1216 = vmatprep.subr.mxu0 0.0
  %1217 = vmatpush1.msra.mxu0 0.0
  %1218 = vmatprep.subr.mxu0 0.0
  %1219 = vmatpush1.msra.mxu0 0.0
  %1220 = vmatprep.subr.mxu0 0.0
  %1221 = vmatpush1.msra.mxu0 0.0
  %1222 = vmatprep.subr.mxu0 0.0
  %1223 = vmatpush1.msra.mxu0 0.0
  %1224 = vmatprep.subr.mxu0 0.0
  %1225 = vmatpush1.msra.mxu0 0.0
  %1226 = vmatprep.mubr.f32.mxu0 0.0
  %1227 = vmatmul.mubr.f32.gmra.mrb[0].mxu0 %v1157
  %v1228 = vpop.f32.mrb[0].mxu0
  %v1229 = vadd.f32 0.0, %v1228
  %v1230 = vpop.f32.mrb[0].mxu0
  %1231 = vmatprep.mubr.f32.mxu0 0.0
  %1232 = vmatmul.mubr.f32.gmra.mrb[0].mxu0 %v1160
  %v1233 = vpop.f32.mrb[0].mxu0
  %v1234 = vadd.f32 0.0, %v1233
  %v1235 = vpop.f32.mrb[0].mxu0
  %1236 = vdwg.mxu0
  %v1237 = vpack.c.bf16 %v1234, %v1229
  %1238 = vrot.lane.b32.xlu0 %v959, 32
  %v1239 = vpop.permute.xlu0 %1238
  %v1241 = vsel %vm269, %v1237, 0
  %v1244 = vsel %vm822, %v1239, 0
  %1246 = vmatprep.subr.bf16.mxu0 0
  %1247 = vmatpush1.bf16.msra.mxu0 %v1244
  %1248 = vmatprep.subr.bf16.mxu0 0
  %1249 = vmatpush1.bf16.msra.mxu0 0
  %1250 = vmatprep.subr.bf16.mxu0 0
  %1251 = vmatpush1.bf16.msra.mxu0 0
  %1252 = vmatprep.subr.bf16.mxu0 0
  %1253 = vmatpush1.bf16.msra.mxu0 0
  %1254 = vmatprep.subr.bf16.mxu0 0
  %1255 = vmatpush1.bf16.msra.mxu0 0
  %1256 = vmatprep.subr.bf16.mxu0 0
  %1257 = vmatpush1.bf16.msra.mxu0 0
  %1258 = vmatprep.subr.bf16.mxu0 0
  %1259 = vmatpush1.bf16.msra.mxu0 0
  %1260 = vmatprep.subr.bf16.mxu0 0
  %1261 = vmatpush1.bf16.msra.mxu0 0
  %1262 = vmatprep.subr.bf16.mxu0 0
  %1263 = vmatpush1.bf16.msra.mxu0 0
  %1264 = vmatprep.subr.bf16.mxu0 0
  %1265 = vmatpush1.bf16.msra.mxu0 0
  %1266 = vmatprep.subr.bf16.mxu0 0
  %1267 = vmatpush1.bf16.msra.mxu0 0
  %1268 = vmatprep.subr.bf16.mxu0 0
  %1269 = vmatpush1.bf16.msra.mxu0 0
  %1270 = vmatprep.subr.bf16.mxu0 0
  %1271 = vmatpush1.bf16.msra.mxu0 0
  %1272 = vmatprep.subr.bf16.mxu0 0
  %1273 = vmatpush1.bf16.msra.mxu0 0
  %1274 = vmatprep.subr.bf16.mxu0 0
  %1275 = vmatpush1.bf16.msra.mxu0 0
  %1276 = vmatprep.subr.bf16.mxu0 0
  %1277 = vmatpush1.bf16.msra.mxu0 0
  %1278 = vmatprep.mubr.bf16.mxu0 0
  %1279 = vmatmul.mubr.bf16.gmra.mrb[0].mxu0 %v1241
  %v1280 = vpop.f32.mrb[0].mxu0
  %v1281 = vadd.f32 0.0, %v1280
  %v1282 = vpop.f32.mrb[0].mxu0
  %v1283 = vpop.f32.mrb[0].mxu0
  %v1284 = vadd.f32 0.0, %v1283
  %v1285 = vpop.f32.mrb[0].mxu0
  %1286 = vdwg.mxu0
  %v1287 = vadd.f32 %v1148, %v1281
  %v1288 = vadd.f32 %v1149, %v1284
  %v1289 = vmul.f32 %v1287, %v1287
  %v1290 = vmul.f32 %v1288, %v1288
  %v1291 = vsel %vm96, %v1289, 0.0
  %1292 = vadd.xlane.f32.xlu0 %v1291
  %v1293 = vpop.xlane.xlu0 %1292
  %v1294 = vsel %vm96, %v1290, 0.0
  %1295 = vadd.xlane.f32.xlu0 %v1294
  %v1296 = vpop.xlane.xlu0 %1295
  %v1297 = vmul.f32 %v1293, %v103
  %v1298 = vmul.f32 %v1296, %v103
  %v1299 = vadd.f32 %v1297, 1e-06
  %v1300 = vadd.f32 %v1298, 1e-06
  %v1301 = vrsqrt.pop %v1299
  %v1302 = vrsqrt.pop %v1300
  %v1303 = vmul.f32 %v1287, %v1301
  %v1304 = vmul.f32 %v1288, %v1302
  %v1305 = vlaneseq
  %v1306 = vshrl.u32 %v1305, 7
  %v1307 = vsub.s32 1, %v1306
  %v1308 = vrot.slane %v80, %v1307
  %v1309 = vmul.f32 %v1303, %v1308
  %v1310 = vmul.f32 %v1304, %v1308
  %v1311 = vpack.c.bf16 %v1310, %v1309
  %v1312 = vunpack.c.h.b16 %v81
  %v1313 = vunpack.c.h.b16 %v82
  %v1314 = vunpack.c.h.b16 %v83
  %v1315 = vunpack.c.h.b16 %v84
  %v1316 = vpack.c.b16 %v1313, %v1312
  %v1317 = vpack.c.b16 %v1315, %v1314
  %1318 = vrot.lane.b32.xlu0 %v127, 32
  %v1319 = vpop.permute.xlu0 %1318
  %1320 = vrot.lane.b32.xlu0 %v1316, 32
  %v1321 = vpop.permute.xlu0 %1320
  %1322 = vrot.lane.b32.xlu0 %v128, 32
  %v1323 = vpop.permute.xlu0 %1322
  %1324 = vrot.lane.b32.xlu0 %v1317, 32
  %v1325 = vpop.permute.xlu0 %1324
  %vm1326 = vcmask 261120
  %v1327 = vsel %vm1326, %v1319, %v1321
  %v1328 = vsel %vm1326, %v1323, %v1325
  %v1332 = vsel %vm96, %v1311, 0
  %1334 = vmatprep.subr.bf16.mxu0 0
  %1335 = vmatpush1.bf16.msra.mxu0 %v1327
  %1336 = vmatprep.subr.bf16.mxu0 0
  %1337 = vmatpush1.bf16.msra.mxu0 %v1328
  %1338 = vmatprep.subr.bf16.mxu0 0
  %1339 = vmatpush1.bf16.msra.mxu0 0
  %1340 = vmatprep.subr.bf16.mxu0 0
  %1341 = vmatpush1.bf16.msra.mxu0 0
  %1342 = vmatprep.subr.bf16.mxu0 0
  %1343 = vmatpush1.bf16.msra.mxu0 0
  %1344 = vmatprep.subr.bf16.mxu0 0
  %1345 = vmatpush1.bf16.msra.mxu0 0
  %1346 = vmatprep.subr.bf16.mxu0 0
  %1347 = vmatpush1.bf16.msra.mxu0 0
  %1348 = vmatprep.subr.bf16.mxu0 0
  %1349 = vmatpush1.bf16.msra.mxu0 0
  %1350 = vmatprep.subr.bf16.mxu0 0
  %1351 = vmatpush1.bf16.msra.mxu0 0
  %1352 = vmatprep.subr.bf16.mxu0 0
  %1353 = vmatpush1.bf16.msra.mxu0 0
  %1354 = vmatprep.subr.bf16.mxu0 0
  %1355 = vmatpush1.bf16.msra.mxu0 0
  %1356 = vmatprep.subr.bf16.mxu0 0
  %1357 = vmatpush1.bf16.msra.mxu0 0
  %1358 = vmatprep.subr.bf16.mxu0 0
  %1359 = vmatpush1.bf16.msra.mxu0 0
  %1360 = vmatprep.subr.bf16.mxu0 0
  %1361 = vmatpush1.bf16.msra.mxu0 0
  %1362 = vmatprep.subr.bf16.mxu0 0
  %1363 = vmatpush1.bf16.msra.mxu0 0
  %1364 = vmatprep.subr.bf16.mxu0 0
  %1365 = vmatpush1.bf16.msra.mxu0 0
  %1366 = vmatprep.mubr.bf16.mxu0 0
  %1367 = vmatmul.mubr.bf16.gmra.mrb[0].mxu0 %v1332
  %v1368 = vpop.f32.mrb[0].mxu0
  %v1369 = vadd.f32 0.0, %v1368
  %v1370 = vpop.f32.mrb[0].mxu0
  %v1371 = vpop.f32.mrb[0].mxu0
  %v1372 = vadd.f32 0.0, %v1371
  %v1373 = vpop.f32.mrb[0].mxu0
  %1374 = vdwg.mxu0
  %v1375 = vxor.u32 %v1369, 2147483648
  %v1376 = vxor.u32 %v1372, 2147483648
  %v1377 = vmul.f32 %v1375, 1.442695
  %v1378 = vpow.pop %v1377
  %v1379 = vmul.f32 %v1376, 1.442695
  %v1380 = vpow.pop %v1379
  %v1381 = vadd.f32 %v1378, 1.0
  %v1382 = vadd.f32 %v1380, 1.0
  %v1383 = vrcp.pop %v1381
  %v1384 = vmul.f32 1.0, %v1383
  %v1385 = vrcp.pop %v1382
  %v1386 = vmul.f32 1.0, %v1385
  %v1387 = vmul.f32 %v1369, %v1384
  %v1388 = vmul.f32 %v1372, %v1386
  %1391 = vrot.lane.b32.xlu0 %v1369, 64
  %v1392 = vpop.permute.xlu0 %1391
  %1393 = vrot.lane.b32.xlu0 %v1372, 64
  %v1394 = vpop.permute.xlu0 %1393
  %v1397 = vmul.f32 %v1387, %v1392
  %v1398 = vmul.f32 %v1388, %v1394
  %v1399 = vpack.c.bf16 %v1398, %v1397
  %v1408 = vunpack.c.l.b16 %v86
  %v1409 = vunpack.c.l.b16 %v87
  %v1410 = vunpack.c.l.b16 %v88
  %v1411 = vunpack.c.l.b16 %v89
  %v1412 = vunpack.c.l.b16 %v90
  %v1413 = vunpack.c.l.b16 %v91
  %v1414 = vunpack.c.l.b16 %v92
  %v1415 = vunpack.c.l.b16 %v93
  %v1416 = vpack.c.b16 %v1409, %v1408
  %v1417 = vpack.c.b16 %v1411, %v1410
  %v1418 = vpack.c.b16 %v1413, %v1412
  %v1419 = vpack.c.b16 %v1415, %v1414
  %v1425 = vsel %vm177, %v1399, 0
  %1427 = vmatprep.subr.bf16.mxu0 0
  %1428 = vmatpush1.bf16.msra.mxu0 %v1416
  %1429 = vmatprep.subr.bf16.mxu0 0
  %1430 = vmatpush1.bf16.msra.mxu0 %v1417
  %1431 = vmatprep.subr.bf16.mxu0 0
  %1432 = vmatpush1.bf16.msra.mxu0 %v1418
  %1433 = vmatprep.subr.bf16.mxu0 0
  %1434 = vmatpush1.bf16.msra.mxu0 %v1419
  %1435 = vmatprep.subr.bf16.mxu0 0
  %1436 = vmatpush1.bf16.msra.mxu0 0
  %1437 = vmatprep.subr.bf16.mxu0 0
  %1438 = vmatpush1.bf16.msra.mxu0 0
  %1439 = vmatprep.subr.bf16.mxu0 0
  %1440 = vmatpush1.bf16.msra.mxu0 0
  %1441 = vmatprep.subr.bf16.mxu0 0
  %1442 = vmatpush1.bf16.msra.mxu0 0
  %1443 = vmatprep.subr.bf16.mxu0 0
  %1444 = vmatpush1.bf16.msra.mxu0 0
  %1445 = vmatprep.subr.bf16.mxu0 0
  %1446 = vmatpush1.bf16.msra.mxu0 0
  %1447 = vmatprep.subr.bf16.mxu0 0
  %1448 = vmatpush1.bf16.msra.mxu0 0
  %1449 = vmatprep.subr.bf16.mxu0 0
  %1450 = vmatpush1.bf16.msra.mxu0 0
  %1451 = vmatprep.subr.bf16.mxu0 0
  %1452 = vmatpush1.bf16.msra.mxu0 0
  %1453 = vmatprep.subr.bf16.mxu0 0
  %1454 = vmatpush1.bf16.msra.mxu0 0
  %1455 = vmatprep.subr.bf16.mxu0 0
  %1456 = vmatpush1.bf16.msra.mxu0 0
  %1457 = vmatprep.subr.bf16.mxu0 0
  %1458 = vmatpush1.bf16.msra.mxu0 0
  %1459 = vmatprep.mubr.bf16.mxu0 0
  %1460 = vmatmul.mubr.bf16.gmra.mrb[0].mxu0 %v1425
  %v1461 = vpop.f32.mrb[0].mxu0
  %v1462 = vadd.f32 0.0, %v1461
  %v1463 = vpop.f32.mrb[0].mxu0
  %v1464 = vpop.f32.mrb[0].mxu0
  %v1465 = vadd.f32 0.0, %v1464
  %v1466 = vpop.f32.mrb[0].mxu0
  %1467 = vdwg.mxu0
  %v1468 = vadd.f32 %v1287, %v1462
  %v1469 = vadd.f32 %v1288, %v1465
  %s1470 = scalar_lea.vmem %s5, 32
  %v1471 = vld [vmem:[%s1470] sm:$0xff]
  %v1472 = vld [vmem:[%s1470 + $0x8] sm:$0xff]
  %v1473 = vld [vmem:[%s1470 + $0x10] sm:$0xff]
  %v1474 = vld [vmem:[%s1470 + $0x18] sm:$0xff]
  %s1475 = scalar_lea.vmem %s6, 4
  %v1476 = vld [vmem:[%s1475] sm:$0xf]
  %s1477 = scalar_lea.vmem %s7, 32
  %v1478 = vld [vmem:[%s1477] sm:$0xf]
  %v1479 = vld [vmem:[%s1477 + $0x4] sm:$0xf]
  %v1480 = vld [vmem:[%s1477 + $0x8] sm:$0xf]
  %v1481 = vld [vmem:[%s1477 + $0xc] sm:$0xf]
  %v1482 = vld [vmem:[%s1477 + $0x10] sm:$0xf]
  %v1483 = vld [vmem:[%s1477 + $0x14] sm:$0xf]
  %v1484 = vld [vmem:[%s1477 + $0x18] sm:$0xf]
  %v1485 = vld [vmem:[%s1477 + $0x1c] sm:$0xf]
  %v1486 = vmul.f32 %v1468, %v1468
  %v1487 = vmul.f32 %v1469, %v1469
  %v1488 = vsel %vm96, %v1486, 0.0
  %1489 = vadd.xlane.f32.xlu0 %v1488
  %v1490 = vpop.xlane.xlu0 %1489
  %v1491 = vsel %vm96, %v1487, 0.0
  %1492 = vadd.xlane.f32.xlu0 %v1491
  %v1493 = vpop.xlane.xlu0 %1492
  %v1494 = vmul.f32 %v1490, %v103
  %v1495 = vmul.f32 %v1493, %v103
  %v1496 = vadd.f32 %v1494, 1e-06
  %v1497 = vadd.f32 %v1495, 1e-06
  %v1498 = vrsqrt.pop %v1496
  %v1499 = vrsqrt.pop %v1497
  %v1500 = vmul.f32 %v1468, %v1498
  %v1501 = vmul.f32 %v1469, %v1499
  %v1502 = vlaneseq
  %v1503 = vshrl.u32 %v1502, 7
  %v1504 = vsub.s32 2, %v1503
  %v1505 = vrot.slane %v80, %v1504
  %v1506 = vmul.f32 %v1500, %v1505
  %v1507 = vmul.f32 %v1501, %v1505
  %v1508 = vpack.c.bf16 %v1507, %v1506
  %v1513 = vunpack.c.l.b16 %v1471
  %v1514 = vunpack.c.l.b16 %v1472
  %v1515 = vunpack.c.l.b16 %v1473
  %v1516 = vunpack.c.l.b16 %v1474
  %v1517 = vpack.c.b16 %v1514, %v1513
  %v1518 = vpack.c.b16 %v1516, %v1515
  %v1522 = vsel %vm96, %v1508, 0
  %1524 = vmatprep.subr.bf16.mxu0 0
  %1525 = vmatpush1.bf16.msra.mxu0 %v1517
  %1526 = vmatprep.subr.bf16.mxu0 0
  %1527 = vmatpush1.bf16.msra.mxu0 %v1518
  %1528 = vmatprep.subr.bf16.mxu0 0
  %1529 = vmatpush1.bf16.msra.mxu0 0
  %1530 = vmatprep.subr.bf16.mxu0 0
  %1531 = vmatpush1.bf16.msra.mxu0 0
  %1532 = vmatprep.subr.bf16.mxu0 0
  %1533 = vmatpush1.bf16.msra.mxu0 0
  %1534 = vmatprep.subr.bf16.mxu0 0
  %1535 = vmatpush1.bf16.msra.mxu0 0
  %1536 = vmatprep.subr.bf16.mxu0 0
  %1537 = vmatpush1.bf16.msra.mxu0 0
  %1538 = vmatprep.subr.bf16.mxu0 0
  %1539 = vmatpush1.bf16.msra.mxu0 0
  %1540 = vmatprep.subr.bf16.mxu0 0
  %1541 = vmatpush1.bf16.msra.mxu0 0
  %1542 = vmatprep.subr.bf16.mxu0 0
  %1543 = vmatpush1.bf16.msra.mxu0 0
  %1544 = vmatprep.subr.bf16.mxu0 0
  %1545 = vmatpush1.bf16.msra.mxu0 0
  %1546 = vmatprep.subr.bf16.mxu0 0
  %1547 = vmatpush1.bf16.msra.mxu0 0
  %1548 = vmatprep.subr.bf16.mxu0 0
  %1549 = vmatpush1.bf16.msra.mxu0 0
  %1550 = vmatprep.subr.bf16.mxu0 0
  %1551 = vmatpush1.bf16.msra.mxu0 0
  %1552 = vmatprep.subr.bf16.mxu0 0
  %1553 = vmatpush1.bf16.msra.mxu0 0
  %1554 = vmatprep.subr.bf16.mxu0 0
  %1555 = vmatpush1.bf16.msra.mxu0 0
  %1556 = vmatprep.mubr.bf16.mxu0 0
  %1557 = vmatmul.mubr.bf16.gmra.mrb[0].mxu0 %v1522
  %v1558 = vpop.f32.mrb[0].mxu0
  %v1559 = vadd.f32 0.0, %v1558
  %v1560 = vpop.f32.mrb[0].mxu0
  %v1561 = vpop.f32.mrb[0].mxu0
  %v1562 = vadd.f32 0.0, %v1561
  %v1563 = vpop.f32.mrb[0].mxu0
  %1564 = vdwg.mxu0
  %v1565 = vmul.f32 %v1559, %v58
  %v1566 = vmul.f32 %v1562, %v59
  %v1568 = vsel %vm177, %v1559, 0
  %v1571 = vsel %vm177, %v1562, 0
  %1573 = vmatprep.subr.mxu0 0.0
  %1574 = vmatpush1.msra.mxu0 %v62
  %1575 = vmatprep.subr.mxu0 0.0
  %1576 = vmatpush1.msra.mxu0 %v63
  %1577 = vmatprep.subr.mxu0 0.0
  %1578 = vmatpush1.msra.mxu0 %v64
  %1579 = vmatprep.subr.mxu0 0.0
  %1580 = vmatpush1.msra.mxu0 %v65
  %1581 = vmatprep.subr.mxu0 0.0
  %1582 = vmatpush1.msra.mxu0 %v66
  %1583 = vmatprep.subr.mxu0 0.0
  %1584 = vmatpush1.msra.mxu0 %v67
  %1585 = vmatprep.subr.mxu0 0.0
  %1586 = vmatpush1.msra.mxu0 %v68
  %1587 = vmatprep.subr.mxu0 0.0
  %1588 = vmatpush1.msra.mxu0 %v69
  %1589 = vmatprep.subr.mxu0 0.0
  %1590 = vmatpush1.msra.mxu0 0.0
  %1591 = vmatprep.subr.mxu0 0.0
  %1592 = vmatpush1.msra.mxu0 0.0
  %1593 = vmatprep.subr.mxu0 0.0
  %1594 = vmatpush1.msra.mxu0 0.0
  %1595 = vmatprep.subr.mxu0 0.0
  %1596 = vmatpush1.msra.mxu0 0.0
  %1597 = vmatprep.subr.mxu0 0.0
  %1598 = vmatpush1.msra.mxu0 0.0
  %1599 = vmatprep.subr.mxu0 0.0
  %1600 = vmatpush1.msra.mxu0 0.0
  %1601 = vmatprep.subr.mxu0 0.0
  %1602 = vmatpush1.msra.mxu0 0.0
  %1603 = vmatprep.subr.mxu0 0.0
  %1604 = vmatpush1.msra.mxu0 0.0
  %1605 = vmatprep.subr.mxu0 0.0
  %1606 = vmatpush1.msra.mxu0 0.0
  %1607 = vmatprep.subr.mxu0 0.0
  %1608 = vmatpush1.msra.mxu0 0.0
  %1609 = vmatprep.subr.mxu0 0.0
  %1610 = vmatpush1.msra.mxu0 0.0
  %1611 = vmatprep.subr.mxu0 0.0
  %1612 = vmatpush1.msra.mxu0 0.0
  %1613 = vmatprep.subr.mxu0 0.0
  %1614 = vmatpush1.msra.mxu0 0.0
  %1615 = vmatprep.subr.mxu0 0.0
  %1616 = vmatpush1.msra.mxu0 0.0
  %1617 = vmatprep.subr.mxu0 0.0
  %1618 = vmatpush1.msra.mxu0 0.0
  %1619 = vmatprep.subr.mxu0 0.0
  %1620 = vmatpush1.msra.mxu0 0.0
  %1621 = vmatprep.subr.mxu0 0.0
  %1622 = vmatpush1.msra.mxu0 0.0
  %1623 = vmatprep.subr.mxu0 0.0
  %1624 = vmatpush1.msra.mxu0 0.0
  %1625 = vmatprep.subr.mxu0 0.0
  %1626 = vmatpush1.msra.mxu0 0.0
  %1627 = vmatprep.subr.mxu0 0.0
  %1628 = vmatpush1.msra.mxu0 0.0
  %1629 = vmatprep.subr.mxu0 0.0
  %1630 = vmatpush1.msra.mxu0 0.0
  %1631 = vmatprep.subr.mxu0 0.0
  %1632 = vmatpush1.msra.mxu0 0.0
  %1633 = vmatprep.subr.mxu0 0.0
  %1634 = vmatpush1.msra.mxu0 0.0
  %1635 = vmatprep.subr.mxu0 0.0
  %1636 = vmatpush1.msra.mxu0 0.0
  %1637 = vmatprep.mubr.f32.mxu0 0.0
  %1638 = vmatmul.mubr.f32.gmra.mrb[0].mxu0 %v1568
  %v1639 = vpop.f32.mrb[0].mxu0
  %v1640 = vadd.f32 0.0, %v1639
  %v1641 = vpop.f32.mrb[0].mxu0
  %1642 = vmatprep.mubr.f32.mxu0 0.0
  %1643 = vmatmul.mubr.f32.gmra.mrb[0].mxu0 %v1571
  %v1644 = vpop.f32.mrb[0].mxu0
  %v1645 = vadd.f32 0.0, %v1644
  %v1646 = vpop.f32.mrb[0].mxu0
  %1647 = vdwg.mxu0
  %v1648 = vmul.f32 %v1640, %v60
  %v1649 = vmul.f32 %v1645, %v61
  %v1650 = vadd.f32 %v1565, %v1648
  %v1651 = vadd.f32 %v1566, %v1649
  %1654 = vrot.lane.b32.xlu0 %v1650, 96
  %v1655 = vpop.permute.xlu0 %1654
  %1656 = vrot.lane.b32.xlu0 %v1651, 96
  %v1657 = vpop.permute.xlu0 %1656
  %v1658 = vsel %vm269, %v1650, 0
  %v1660 = vsel %vm269, %v1651, 0
  %v1662 = vsel %vm269, %v1655, 0
  %v1664 = vsel %vm269, %v1657, 0
  %1666 = vmatprep.subr.mxu0 0.0
  %1667 = vmatpush1.xpose.msra.mxu0 %v1662
  %1668 = vmatprep.subr.mxu0 0.0
  %1669 = vmatpush1.xpose.msra.mxu0 %v1664
  %1670 = vmatprep.subr.mxu0 0.0
  %1671 = vmatpush1.xpose.msra.mxu0 0.0
  %1672 = vmatprep.subr.mxu0 0.0
  %1673 = vmatpush1.xpose.msra.mxu0 0.0
  %1674 = vmatprep.subr.mxu0 0.0
  %1675 = vmatpush1.xpose.msra.mxu0 0.0
  %1676 = vmatprep.subr.mxu0 0.0
  %1677 = vmatpush1.xpose.msra.mxu0 0.0
  %1678 = vmatprep.subr.mxu0 0.0
  %1679 = vmatpush1.xpose.msra.mxu0 0.0
  %1680 = vmatprep.subr.mxu0 0.0
  %1681 = vmatpush1.xpose.msra.mxu0 0.0
  %1682 = vmatprep.subr.mxu0 0.0
  %1683 = vmatpush1.xpose.msra.mxu0 0.0
  %1684 = vmatprep.subr.mxu0 0.0
  %1685 = vmatpush1.xpose.msra.mxu0 0.0
  %1686 = vmatprep.subr.mxu0 0.0
  %1687 = vmatpush1.xpose.msra.mxu0 0.0
  %1688 = vmatprep.subr.mxu0 0.0
  %1689 = vmatpush1.xpose.msra.mxu0 0.0
  %1690 = vmatprep.subr.mxu0 0.0
  %1691 = vmatpush1.xpose.msra.mxu0 0.0
  %1692 = vmatprep.subr.mxu0 0.0
  %1693 = vmatpush1.xpose.msra.mxu0 0.0
  %1694 = vmatprep.subr.mxu0 0.0
  %1695 = vmatpush1.xpose.msra.mxu0 0.0
  %1696 = vmatprep.subr.mxu0 0.0
  %1697 = vmatpush1.xpose.msra.mxu0 0.0
  %1698 = vmatprep.subr.mxu0 0.0
  %1699 = vmatpush1.xpose.msra.mxu0 0.0
  %1700 = vmatprep.subr.mxu0 0.0
  %1701 = vmatpush1.xpose.msra.mxu0 0.0
  %1702 = vmatprep.subr.mxu0 0.0
  %1703 = vmatpush1.xpose.msra.mxu0 0.0
  %1704 = vmatprep.subr.mxu0 0.0
  %1705 = vmatpush1.xpose.msra.mxu0 0.0
  %1706 = vmatprep.subr.mxu0 0.0
  %1707 = vmatpush1.xpose.msra.mxu0 0.0
  %1708 = vmatprep.subr.mxu0 0.0
  %1709 = vmatpush1.xpose.msra.mxu0 0.0
  %1710 = vmatprep.subr.mxu0 0.0
  %1711 = vmatpush1.xpose.msra.mxu0 0.0
  %1712 = vmatprep.subr.mxu0 0.0
  %1713 = vmatpush1.xpose.msra.mxu0 0.0
  %1714 = vmatprep.subr.mxu0 0.0
  %1715 = vmatpush1.xpose.msra.mxu0 0.0
  %1716 = vmatprep.subr.mxu0 0.0
  %1717 = vmatpush1.xpose.msra.mxu0 0.0
  %1718 = vmatprep.subr.mxu0 0.0
  %1719 = vmatpush1.xpose.msra.mxu0 0.0
  %1720 = vmatprep.subr.mxu0 0.0
  %1721 = vmatpush1.xpose.msra.mxu0 0.0
  %1722 = vmatprep.subr.mxu0 0.0
  %1723 = vmatpush1.xpose.msra.mxu0 0.0
  %1724 = vmatprep.subr.mxu0 0.0
  %1725 = vmatpush1.xpose.msra.mxu0 0.0
  %1726 = vmatprep.subr.mxu0 0.0
  %1727 = vmatpush1.xpose.msra.mxu0 0.0
  %1728 = vmatprep.subr.mxu0 0.0
  %1729 = vmatpush1.xpose.msra.mxu0 0.0
  %1730 = vmatprep.mubr.f32.mxu0 0.0
  %1731 = vmatmul.mubr.f32.gmra.mrb[0].mxu0 %v1658
  %v1732 = vpop.f32.mrb[0].mxu0
  %v1733 = vadd.f32 0.0, %v1732
  %v1734 = vpop.f32.mrb[0].mxu0
  %1735 = vmatprep.mubr.f32.mxu0 0.0
  %1736 = vmatmul.mubr.f32.gmra.mrb[0].mxu0 %v1660
  %v1737 = vpop.f32.mrb[0].mxu0
  %v1738 = vadd.f32 0.0, %v1737
  %v1739 = vpop.f32.mrb[0].mxu0
  %1740 = vdwg.mxu0
  %1741 = vrot.lane.b32.xlu0 %v1650, 120
  %v1742 = vpop.permute.xlu0 %1741
  %1743 = vrot.lane.b32.xlu0 %v1651, 120
  %v1744 = vpop.permute.xlu0 %1743
  %1745 = vrot.lane.b32.xlu0 %v1650, 88
  %v1746 = vpop.permute.xlu0 %1745
  %1747 = vrot.lane.b32.xlu0 %v1651, 88
  %v1748 = vpop.permute.xlu0 %1747
  %v1749 = vsel %vm269, %v1742, 0
  %v1751 = vsel %vm269, %v1744, 0
  %v1753 = vsel %vm269, %v1746, 0
  %v1755 = vsel %vm269, %v1748, 0
  %1757 = vmatprep.subr.mxu0 0.0
  %1758 = vmatpush1.xpose.msra.mxu0 %v1753
  %1759 = vmatprep.subr.mxu0 0.0
  %1760 = vmatpush1.xpose.msra.mxu0 %v1755
  %1761 = vmatprep.subr.mxu0 0.0
  %1762 = vmatpush1.xpose.msra.mxu0 0.0
  %1763 = vmatprep.subr.mxu0 0.0
  %1764 = vmatpush1.xpose.msra.mxu0 0.0
  %1765 = vmatprep.subr.mxu0 0.0
  %1766 = vmatpush1.xpose.msra.mxu0 0.0
  %1767 = vmatprep.subr.mxu0 0.0
  %1768 = vmatpush1.xpose.msra.mxu0 0.0
  %1769 = vmatprep.subr.mxu0 0.0
  %1770 = vmatpush1.xpose.msra.mxu0 0.0
  %1771 = vmatprep.subr.mxu0 0.0
  %1772 = vmatpush1.xpose.msra.mxu0 0.0
  %1773 = vmatprep.subr.mxu0 0.0
  %1774 = vmatpush1.xpose.msra.mxu0 0.0
  %1775 = vmatprep.subr.mxu0 0.0
  %1776 = vmatpush1.xpose.msra.mxu0 0.0
  %1777 = vmatprep.subr.mxu0 0.0
  %1778 = vmatpush1.xpose.msra.mxu0 0.0
  %1779 = vmatprep.subr.mxu0 0.0
  %1780 = vmatpush1.xpose.msra.mxu0 0.0
  %1781 = vmatprep.subr.mxu0 0.0
  %1782 = vmatpush1.xpose.msra.mxu0 0.0
  %1783 = vmatprep.subr.mxu0 0.0
  %1784 = vmatpush1.xpose.msra.mxu0 0.0
  %1785 = vmatprep.subr.mxu0 0.0
  %1786 = vmatpush1.xpose.msra.mxu0 0.0
  %1787 = vmatprep.subr.mxu0 0.0
  %1788 = vmatpush1.xpose.msra.mxu0 0.0
  %1789 = vmatprep.subr.mxu0 0.0
  %1790 = vmatpush1.xpose.msra.mxu0 0.0
  %1791 = vmatprep.subr.mxu0 0.0
  %1792 = vmatpush1.xpose.msra.mxu0 0.0
  %1793 = vmatprep.subr.mxu0 0.0
  %1794 = vmatpush1.xpose.msra.mxu0 0.0
  %1795 = vmatprep.subr.mxu0 0.0
  %1796 = vmatpush1.xpose.msra.mxu0 0.0
  %1797 = vmatprep.subr.mxu0 0.0
  %1798 = vmatpush1.xpose.msra.mxu0 0.0
  %1799 = vmatprep.subr.mxu0 0.0
  %1800 = vmatpush1.xpose.msra.mxu0 0.0
  %1801 = vmatprep.subr.mxu0 0.0
  %1802 = vmatpush1.xpose.msra.mxu0 0.0
  %1803 = vmatprep.subr.mxu0 0.0
  %1804 = vmatpush1.xpose.msra.mxu0 0.0
  %1805 = vmatprep.subr.mxu0 0.0
  %1806 = vmatpush1.xpose.msra.mxu0 0.0
  %1807 = vmatprep.subr.mxu0 0.0
  %1808 = vmatpush1.xpose.msra.mxu0 0.0
  %1809 = vmatprep.subr.mxu0 0.0
  %1810 = vmatpush1.xpose.msra.mxu0 0.0
  %1811 = vmatprep.subr.mxu0 0.0
  %1812 = vmatpush1.xpose.msra.mxu0 0.0
  %1813 = vmatprep.subr.mxu0 0.0
  %1814 = vmatpush1.xpose.msra.mxu0 0.0
  %1815 = vmatprep.subr.mxu0 0.0
  %1816 = vmatpush1.xpose.msra.mxu0 0.0
  %1817 = vmatprep.subr.mxu0 0.0
  %1818 = vmatpush1.xpose.msra.mxu0 0.0
  %1819 = vmatprep.subr.mxu0 0.0
  %1820 = vmatpush1.xpose.msra.mxu0 0.0
  %1821 = vmatprep.mubr.f32.mxu0 0.0
  %1822 = vmatmul.mubr.f32.gmra.mrb[0].mxu0 %v1749
  %v1823 = vpop.f32.mrb[0].mxu0
  %v1824 = vadd.f32 0.0, %v1823
  %v1825 = vpop.f32.mrb[0].mxu0
  %1826 = vmatprep.mubr.f32.mxu0 0.0
  %1827 = vmatmul.mubr.f32.gmra.mrb[0].mxu0 %v1751
  %v1828 = vpop.f32.mrb[0].mxu0
  %v1829 = vadd.f32 0.0, %v1828
  %v1830 = vpop.f32.mrb[0].mxu0
  %1831 = vdwg.mxu0
  %1832 = vrot.lane.b32.xlu0 %v1650, 112
  %v1833 = vpop.permute.xlu0 %1832
  %1834 = vrot.lane.b32.xlu0 %v1651, 112
  %v1835 = vpop.permute.xlu0 %1834
  %1836 = vrot.lane.b32.xlu0 %v1650, 80
  %v1837 = vpop.permute.xlu0 %1836
  %1838 = vrot.lane.b32.xlu0 %v1651, 80
  %v1839 = vpop.permute.xlu0 %1838
  %v1840 = vsel %vm269, %v1833, 0
  %v1842 = vsel %vm269, %v1835, 0
  %v1844 = vsel %vm269, %v1837, 0
  %v1846 = vsel %vm269, %v1839, 0
  %1848 = vmatprep.subr.mxu0 0.0
  %1849 = vmatpush1.xpose.msra.mxu0 %v1844
  %1850 = vmatprep.subr.mxu0 0.0
  %1851 = vmatpush1.xpose.msra.mxu0 %v1846
  %1852 = vmatprep.subr.mxu0 0.0
  %1853 = vmatpush1.xpose.msra.mxu0 0.0
  %1854 = vmatprep.subr.mxu0 0.0
  %1855 = vmatpush1.xpose.msra.mxu0 0.0
  %1856 = vmatprep.subr.mxu0 0.0
  %1857 = vmatpush1.xpose.msra.mxu0 0.0
  %1858 = vmatprep.subr.mxu0 0.0
  %1859 = vmatpush1.xpose.msra.mxu0 0.0
  %1860 = vmatprep.subr.mxu0 0.0
  %1861 = vmatpush1.xpose.msra.mxu0 0.0
  %1862 = vmatprep.subr.mxu0 0.0
  %1863 = vmatpush1.xpose.msra.mxu0 0.0
  %1864 = vmatprep.subr.mxu0 0.0
  %1865 = vmatpush1.xpose.msra.mxu0 0.0
  %1866 = vmatprep.subr.mxu0 0.0
  %1867 = vmatpush1.xpose.msra.mxu0 0.0
  %1868 = vmatprep.subr.mxu0 0.0
  %1869 = vmatpush1.xpose.msra.mxu0 0.0
  %1870 = vmatprep.subr.mxu0 0.0
  %1871 = vmatpush1.xpose.msra.mxu0 0.0
  %1872 = vmatprep.subr.mxu0 0.0
  %1873 = vmatpush1.xpose.msra.mxu0 0.0
  %1874 = vmatprep.subr.mxu0 0.0
  %1875 = vmatpush1.xpose.msra.mxu0 0.0
  %1876 = vmatprep.subr.mxu0 0.0
  %1877 = vmatpush1.xpose.msra.mxu0 0.0
  %1878 = vmatprep.subr.mxu0 0.0
  %1879 = vmatpush1.xpose.msra.mxu0 0.0
  %1880 = vmatprep.subr.mxu0 0.0
  %1881 = vmatpush1.xpose.msra.mxu0 0.0
  %1882 = vmatprep.subr.mxu0 0.0
  %1883 = vmatpush1.xpose.msra.mxu0 0.0
  %1884 = vmatprep.subr.mxu0 0.0
  %1885 = vmatpush1.xpose.msra.mxu0 0.0
  %1886 = vmatprep.subr.mxu0 0.0
  %1887 = vmatpush1.xpose.msra.mxu0 0.0
  %1888 = vmatprep.subr.mxu0 0.0
  %1889 = vmatpush1.xpose.msra.mxu0 0.0
  %1890 = vmatprep.subr.mxu0 0.0
  %1891 = vmatpush1.xpose.msra.mxu0 0.0
  %1892 = vmatprep.subr.mxu0 0.0
  %1893 = vmatpush1.xpose.msra.mxu0 0.0
  %1894 = vmatprep.subr.mxu0 0.0
  %1895 = vmatpush1.xpose.msra.mxu0 0.0
  %1896 = vmatprep.subr.mxu0 0.0
  %1897 = vmatpush1.xpose.msra.mxu0 0.0
  %1898 = vmatprep.subr.mxu0 0.0
  %1899 = vmatpush1.xpose.msra.mxu0 0.0
  %1900 = vmatprep.subr.mxu0 0.0
  %1901 = vmatpush1.xpose.msra.mxu0 0.0
  %1902 = vmatprep.subr.mxu0 0.0
  %1903 = vmatpush1.xpose.msra.mxu0 0.0
  %1904 = vmatprep.subr.mxu0 0.0
  %1905 = vmatpush1.xpose.msra.mxu0 0.0
  %1906 = vmatprep.subr.mxu0 0.0
  %1907 = vmatpush1.xpose.msra.mxu0 0.0
  %1908 = vmatprep.subr.mxu0 0.0
  %1909 = vmatpush1.xpose.msra.mxu0 0.0
  %1910 = vmatprep.subr.mxu0 0.0
  %1911 = vmatpush1.xpose.msra.mxu0 0.0
  %1912 = vmatprep.mubr.f32.mxu0 0.0
  %1913 = vmatmul.mubr.f32.gmra.mrb[0].mxu0 %v1840
  %v1914 = vpop.f32.mrb[0].mxu0
  %v1915 = vadd.f32 0.0, %v1914
  %v1916 = vpop.f32.mrb[0].mxu0
  %1917 = vmatprep.mubr.f32.mxu0 0.0
  %1918 = vmatmul.mubr.f32.gmra.mrb[0].mxu0 %v1842
  %v1919 = vpop.f32.mrb[0].mxu0
  %v1920 = vadd.f32 0.0, %v1919
  %v1921 = vpop.f32.mrb[0].mxu0
  %1922 = vdwg.mxu0
  %1923 = vrot.lane.b32.xlu0 %v1650, 104
  %v1924 = vpop.permute.xlu0 %1923
  %1925 = vrot.lane.b32.xlu0 %v1651, 104
  %v1926 = vpop.permute.xlu0 %1925
  %1927 = vrot.lane.b32.xlu0 %v1650, 72
  %v1928 = vpop.permute.xlu0 %1927
  %1929 = vrot.lane.b32.xlu0 %v1651, 72
  %v1930 = vpop.permute.xlu0 %1929
  %v1931 = vsel %vm269, %v1924, 0
  %v1933 = vsel %vm269, %v1926, 0
  %v1935 = vsel %vm269, %v1928, 0
  %v1937 = vsel %vm269, %v1930, 0
  %1939 = vmatprep.subr.mxu0 0.0
  %1940 = vmatpush1.xpose.msra.mxu0 %v1935
  %1941 = vmatprep.subr.mxu0 0.0
  %1942 = vmatpush1.xpose.msra.mxu0 %v1937
  %1943 = vmatprep.subr.mxu0 0.0
  %1944 = vmatpush1.xpose.msra.mxu0 0.0
  %1945 = vmatprep.subr.mxu0 0.0
  %1946 = vmatpush1.xpose.msra.mxu0 0.0
  %1947 = vmatprep.subr.mxu0 0.0
  %1948 = vmatpush1.xpose.msra.mxu0 0.0
  %1949 = vmatprep.subr.mxu0 0.0
  %1950 = vmatpush1.xpose.msra.mxu0 0.0
  %1951 = vmatprep.subr.mxu0 0.0
  %1952 = vmatpush1.xpose.msra.mxu0 0.0
  %1953 = vmatprep.subr.mxu0 0.0
  %1954 = vmatpush1.xpose.msra.mxu0 0.0
  %1955 = vmatprep.subr.mxu0 0.0
  %1956 = vmatpush1.xpose.msra.mxu0 0.0
  %1957 = vmatprep.subr.mxu0 0.0
  %1958 = vmatpush1.xpose.msra.mxu0 0.0
  %1959 = vmatprep.subr.mxu0 0.0
  %1960 = vmatpush1.xpose.msra.mxu0 0.0
  %1961 = vmatprep.subr.mxu0 0.0
  %1962 = vmatpush1.xpose.msra.mxu0 0.0
  %1963 = vmatprep.subr.mxu0 0.0
  %1964 = vmatpush1.xpose.msra.mxu0 0.0
  %1965 = vmatprep.subr.mxu0 0.0
  %1966 = vmatpush1.xpose.msra.mxu0 0.0
  %1967 = vmatprep.subr.mxu0 0.0
  %1968 = vmatpush1.xpose.msra.mxu0 0.0
  %1969 = vmatprep.subr.mxu0 0.0
  %1970 = vmatpush1.xpose.msra.mxu0 0.0
  %1971 = vmatprep.subr.mxu0 0.0
  %1972 = vmatpush1.xpose.msra.mxu0 0.0
  %1973 = vmatprep.subr.mxu0 0.0
  %1974 = vmatpush1.xpose.msra.mxu0 0.0
  %1975 = vmatprep.subr.mxu0 0.0
  %1976 = vmatpush1.xpose.msra.mxu0 0.0
  %1977 = vmatprep.subr.mxu0 0.0
  %1978 = vmatpush1.xpose.msra.mxu0 0.0
  %1979 = vmatprep.subr.mxu0 0.0
  %1980 = vmatpush1.xpose.msra.mxu0 0.0
  %1981 = vmatprep.subr.mxu0 0.0
  %1982 = vmatpush1.xpose.msra.mxu0 0.0
  %1983 = vmatprep.subr.mxu0 0.0
  %1984 = vmatpush1.xpose.msra.mxu0 0.0
  %1985 = vmatprep.subr.mxu0 0.0
  %1986 = vmatpush1.xpose.msra.mxu0 0.0
  %1987 = vmatprep.subr.mxu0 0.0
  %1988 = vmatpush1.xpose.msra.mxu0 0.0
  %1989 = vmatprep.subr.mxu0 0.0
  %1990 = vmatpush1.xpose.msra.mxu0 0.0
  %1991 = vmatprep.subr.mxu0 0.0
  %1992 = vmatpush1.xpose.msra.mxu0 0.0
  %1993 = vmatprep.subr.mxu0 0.0
  %1994 = vmatpush1.xpose.msra.mxu0 0.0
  %1995 = vmatprep.subr.mxu0 0.0
  %1996 = vmatpush1.xpose.msra.mxu0 0.0
  %1997 = vmatprep.subr.mxu0 0.0
  %1998 = vmatpush1.xpose.msra.mxu0 0.0
  %1999 = vmatprep.subr.mxu0 0.0
  %2000 = vmatpush1.xpose.msra.mxu0 0.0
  %2001 = vmatprep.subr.mxu0 0.0
  %2002 = vmatpush1.xpose.msra.mxu0 0.0
  %2003 = vmatprep.mubr.f32.mxu0 0.0
  %2004 = vmatmul.mubr.f32.gmra.mrb[0].mxu0 %v1931
  %v2005 = vpop.f32.mrb[0].mxu0
  %v2006 = vadd.f32 0.0, %v2005
  %v2007 = vpop.f32.mrb[0].mxu0
  %2008 = vmatprep.mubr.f32.mxu0 0.0
  %2009 = vmatmul.mubr.f32.gmra.mrb[0].mxu0 %v1933
  %v2010 = vpop.f32.mrb[0].mxu0
  %v2011 = vadd.f32 0.0, %v2010
  %v2012 = vpop.f32.mrb[0].mxu0
  %2013 = vdwg.mxu0
  %v2014 = vmul.f32 %v1733, 0.35355338
  %v2015 = vmul.f32 %v1738, 0.35355338
  %v2016 = vmul.f32 %v1824, 0.35355338
  %v2017 = vmul.f32 %v1829, 0.35355338
  %v2018 = vmul.f32 %v1915, 0.35355338
  %v2019 = vmul.f32 %v1920, 0.35355338
  %v2020 = vmul.f32 %v2006, 0.35355338
  %v2021 = vmul.f32 %v2011, 0.35355338
  %v2022 = vadd.f32 %v2014, %v50
  %v2023 = vadd.f32 %v2015, %v51
  %v2024 = vadd.f32 %v2016, %v52
  %v2025 = vadd.f32 %v2017, %v53
  %v2026 = vadd.f32 %v2018, %v54
  %v2027 = vadd.f32 %v2019, %v55
  %v2028 = vadd.f32 %v2020, %v56
  %v2029 = vadd.f32 %v2021, %v57
  %v2030 = vsel %vm642, %v2022, -inf
  %2031 = vmax.xlane.f32.xlu0 %v2030
  %v2032 = vpop.xlane.xlu0 %2031
  %v2033 = vsel %vm642, %v2023, -inf
  %2034 = vmax.xlane.f32.xlu0 %v2033
  %v2035 = vpop.xlane.xlu0 %2034
  %v2036 = vsel %vm642, %v2024, -inf
  %2037 = vmax.xlane.f32.xlu0 %v2036
  %v2038 = vpop.xlane.xlu0 %2037
  %v2039 = vsel %vm642, %v2025, -inf
  %2040 = vmax.xlane.f32.xlu0 %v2039
  %v2041 = vpop.xlane.xlu0 %2040
  %v2042 = vsel %vm642, %v2026, -inf
  %2043 = vmax.xlane.f32.xlu0 %v2042
  %v2044 = vpop.xlane.xlu0 %2043
  %v2045 = vsel %vm642, %v2027, -inf
  %2046 = vmax.xlane.f32.xlu0 %v2045
  %v2047 = vpop.xlane.xlu0 %2046
  %v2048 = vsel %vm642, %v2028, -inf
  %2049 = vmax.xlane.f32.xlu0 %v2048
  %v2050 = vpop.xlane.xlu0 %2049
  %v2051 = vsel %vm642, %v2029, -inf
  %2052 = vmax.xlane.f32.xlu0 %v2051
  %v2053 = vpop.xlane.xlu0 %2052
  %v2054 = vsub.f32 %v2022, %v2032
  %v2055 = vsub.f32 %v2023, %v2035
  %v2056 = vsub.f32 %v2024, %v2038
  %v2057 = vsub.f32 %v2025, %v2041
  %v2058 = vsub.f32 %v2026, %v2044
  %v2059 = vsub.f32 %v2027, %v2047
  %v2060 = vsub.f32 %v2028, %v2050
  %v2061 = vsub.f32 %v2029, %v2053
  %v2062 = vmul.f32 %v2054, 1.442695
  %v2063 = vpow.pop %v2062
  %v2064 = vmul.f32 %v2055, 1.442695
  %v2065 = vpow.pop %v2064
  %v2066 = vmul.f32 %v2056, 1.442695
  %v2067 = vpow.pop %v2066
  %v2068 = vmul.f32 %v2057, 1.442695
  %v2069 = vpow.pop %v2068
  %v2070 = vmul.f32 %v2058, 1.442695
  %v2071 = vpow.pop %v2070
  %v2072 = vmul.f32 %v2059, 1.442695
  %v2073 = vpow.pop %v2072
  %v2074 = vmul.f32 %v2060, 1.442695
  %v2075 = vpow.pop %v2074
  %v2076 = vmul.f32 %v2061, 1.442695
  %v2077 = vpow.pop %v2076
  %v2078 = vsel %vm642, %v2063, 0.0
  %2079 = vadd.xlane.f32.xlu0 %v2078
  %v2080 = vpop.xlane.xlu0 %2079
  %v2081 = vsel %vm642, %v2065, 0.0
  %2082 = vadd.xlane.f32.xlu0 %v2081
  %v2083 = vpop.xlane.xlu0 %2082
  %v2084 = vsel %vm642, %v2067, 0.0
  %2085 = vadd.xlane.f32.xlu0 %v2084
  %v2086 = vpop.xlane.xlu0 %2085
  %v2087 = vsel %vm642, %v2069, 0.0
  %2088 = vadd.xlane.f32.xlu0 %v2087
  %v2089 = vpop.xlane.xlu0 %2088
  %v2090 = vsel %vm642, %v2071, 0.0
  %2091 = vadd.xlane.f32.xlu0 %v2090
  %v2092 = vpop.xlane.xlu0 %2091
  %v2093 = vsel %vm642, %v2073, 0.0
  %2094 = vadd.xlane.f32.xlu0 %v2093
  %v2095 = vpop.xlane.xlu0 %2094
  %v2096 = vsel %vm642, %v2075, 0.0
  %2097 = vadd.xlane.f32.xlu0 %v2096
  %v2098 = vpop.xlane.xlu0 %2097
  %v2099 = vsel %vm642, %v2077, 0.0
  %2100 = vadd.xlane.f32.xlu0 %v2099
  %v2101 = vpop.xlane.xlu0 %2100
  %v2102 = vrcp.pop %v2080
  %v2103 = vrcp.pop %v2083
  %v2104 = vrcp.pop %v2086
  %v2105 = vrcp.pop %v2089
  %v2106 = vrcp.pop %v2092
  %v2107 = vrcp.pop %v2095
  %v2108 = vrcp.pop %v2098
  %v2109 = vrcp.pop %v2101
  %v2110 = vmul.f32 %v2063, %v2102
  %v2111 = vmul.f32 %v2065, %v2103
  %v2112 = vmul.f32 %v2067, %v2104
  %v2113 = vmul.f32 %v2069, %v2105
  %v2114 = vmul.f32 %v2071, %v2106
  %v2115 = vmul.f32 %v2073, %v2107
  %v2116 = vmul.f32 %v2075, %v2108
  %v2117 = vmul.f32 %v2077, %v2109
  %2118 = vrot.lane.b32.xlu0 %v1559, 64
  %v2119 = vpop.permute.xlu0 %2118
  %2120 = vrot.lane.b32.xlu0 %v1562, 64
  %v2121 = vpop.permute.xlu0 %2120
  %v2125 = vsel %vm642, %v2110, 0
  %v2128 = vsel %vm642, %v2111, 0
  %2130 = vmatprep.subr.mxu0 0.0
  %2131 = vmatpush1.msra.mxu0 %v2119
  %2132 = vmatprep.subr.mxu0 0.0
  %2133 = vmatpush1.msra.mxu0 %v2121
  %2134 = vmatprep.subr.mxu0 0.0
  %2135 = vmatpush1.msra.mxu0 0.0
  %2136 = vmatprep.subr.mxu0 0.0
  %2137 = vmatpush1.msra.mxu0 0.0
  %2138 = vmatprep.subr.mxu0 0.0
  %2139 = vmatpush1.msra.mxu0 0.0
  %2140 = vmatprep.subr.mxu0 0.0
  %2141 = vmatpush1.msra.mxu0 0.0
  %2142 = vmatprep.subr.mxu0 0.0
  %2143 = vmatpush1.msra.mxu0 0.0
  %2144 = vmatprep.subr.mxu0 0.0
  %2145 = vmatpush1.msra.mxu0 0.0
  %2146 = vmatprep.subr.mxu0 0.0
  %2147 = vmatpush1.msra.mxu0 0.0
  %2148 = vmatprep.subr.mxu0 0.0
  %2149 = vmatpush1.msra.mxu0 0.0
  %2150 = vmatprep.subr.mxu0 0.0
  %2151 = vmatpush1.msra.mxu0 0.0
  %2152 = vmatprep.subr.mxu0 0.0
  %2153 = vmatpush1.msra.mxu0 0.0
  %2154 = vmatprep.subr.mxu0 0.0
  %2155 = vmatpush1.msra.mxu0 0.0
  %2156 = vmatprep.subr.mxu0 0.0
  %2157 = vmatpush1.msra.mxu0 0.0
  %2158 = vmatprep.subr.mxu0 0.0
  %2159 = vmatpush1.msra.mxu0 0.0
  %2160 = vmatprep.subr.mxu0 0.0
  %2161 = vmatpush1.msra.mxu0 0.0
  %2162 = vmatprep.subr.mxu0 0.0
  %2163 = vmatpush1.msra.mxu0 0.0
  %2164 = vmatprep.subr.mxu0 0.0
  %2165 = vmatpush1.msra.mxu0 0.0
  %2166 = vmatprep.subr.mxu0 0.0
  %2167 = vmatpush1.msra.mxu0 0.0
  %2168 = vmatprep.subr.mxu0 0.0
  %2169 = vmatpush1.msra.mxu0 0.0
  %2170 = vmatprep.subr.mxu0 0.0
  %2171 = vmatpush1.msra.mxu0 0.0
  %2172 = vmatprep.subr.mxu0 0.0
  %2173 = vmatpush1.msra.mxu0 0.0
  %2174 = vmatprep.subr.mxu0 0.0
  %2175 = vmatpush1.msra.mxu0 0.0
  %2176 = vmatprep.subr.mxu0 0.0
  %2177 = vmatpush1.msra.mxu0 0.0
  %2178 = vmatprep.subr.mxu0 0.0
  %2179 = vmatpush1.msra.mxu0 0.0
  %2180 = vmatprep.subr.mxu0 0.0
  %2181 = vmatpush1.msra.mxu0 0.0
  %2182 = vmatprep.subr.mxu0 0.0
  %2183 = vmatpush1.msra.mxu0 0.0
  %2184 = vmatprep.subr.mxu0 0.0
  %2185 = vmatpush1.msra.mxu0 0.0
  %2186 = vmatprep.subr.mxu0 0.0
  %2187 = vmatpush1.msra.mxu0 0.0
  %2188 = vmatprep.subr.mxu0 0.0
  %2189 = vmatpush1.msra.mxu0 0.0
  %2190 = vmatprep.subr.mxu0 0.0
  %2191 = vmatpush1.msra.mxu0 0.0
  %2192 = vmatprep.subr.mxu0 0.0
  %2193 = vmatpush1.msra.mxu0 0.0
  %2194 = vmatprep.mubr.f32.mxu0 0.0
  %2195 = vmatmul.mubr.f32.gmra.mrb[0].mxu0 %v2125
  %v2196 = vpop.f32.mrb[0].mxu0
  %v2197 = vadd.f32 0.0, %v2196
  %v2198 = vpop.f32.mrb[0].mxu0
  %2199 = vmatprep.mubr.f32.mxu0 0.0
  %2200 = vmatmul.mubr.f32.gmra.mrb[0].mxu0 %v2128
  %v2201 = vpop.f32.mrb[0].mxu0
  %v2202 = vadd.f32 0.0, %v2201
  %v2203 = vpop.f32.mrb[0].mxu0
  %2204 = vdwg.mxu0
  %v2205 = vpack.c.bf16 %v2202, %v2197
  %v2207 = vsel %vm269, %v2205, 0
  %v2210 = vsel %vm822, %v1476, 0
  %2212 = vmatprep.subr.bf16.mxu0 0
  %2213 = vmatpush1.bf16.msra.mxu0 %v2210
  %2214 = vmatprep.subr.bf16.mxu0 0
  %2215 = vmatpush1.bf16.msra.mxu0 0
  %2216 = vmatprep.subr.bf16.mxu0 0
  %2217 = vmatpush1.bf16.msra.mxu0 0
  %2218 = vmatprep.subr.bf16.mxu0 0
  %2219 = vmatpush1.bf16.msra.mxu0 0
  %2220 = vmatprep.subr.bf16.mxu0 0
  %2221 = vmatpush1.bf16.msra.mxu0 0
  %2222 = vmatprep.subr.bf16.mxu0 0
  %2223 = vmatpush1.bf16.msra.mxu0 0
  %2224 = vmatprep.subr.bf16.mxu0 0
  %2225 = vmatpush1.bf16.msra.mxu0 0
  %2226 = vmatprep.subr.bf16.mxu0 0
  %2227 = vmatpush1.bf16.msra.mxu0 0
  %2228 = vmatprep.subr.bf16.mxu0 0
  %2229 = vmatpush1.bf16.msra.mxu0 0
  %2230 = vmatprep.subr.bf16.mxu0 0
  %2231 = vmatpush1.bf16.msra.mxu0 0
  %2232 = vmatprep.subr.bf16.mxu0 0
  %2233 = vmatpush1.bf16.msra.mxu0 0
  %2234 = vmatprep.subr.bf16.mxu0 0
  %2235 = vmatpush1.bf16.msra.mxu0 0
  %2236 = vmatprep.subr.bf16.mxu0 0
  %2237 = vmatpush1.bf16.msra.mxu0 0
  %2238 = vmatprep.subr.bf16.mxu0 0
  %2239 = vmatpush1.bf16.msra.mxu0 0
  %2240 = vmatprep.subr.bf16.mxu0 0
  %2241 = vmatpush1.bf16.msra.mxu0 0
  %2242 = vmatprep.subr.bf16.mxu0 0
  %2243 = vmatpush1.bf16.msra.mxu0 0
  %2244 = vmatprep.mubr.bf16.mxu0 0
  %2245 = vmatmul.mubr.bf16.gmra.mrb[0].mxu0 %v2207
  %v2246 = vpop.f32.mrb[0].mxu0
  %v2247 = vadd.f32 0.0, %v2246
  %v2248 = vpop.f32.mrb[0].mxu0
  %v2249 = vpop.f32.mrb[0].mxu0
  %v2250 = vadd.f32 0.0, %v2249
  %v2251 = vpop.f32.mrb[0].mxu0
  %2252 = vdwg.mxu0
  %v2253 = vadd.f32 %v1468, %v2247
  %v2254 = vadd.f32 %v1469, %v2250
  %2255 = vrot.lane.b32.xlu0 %v1559, 56
  %v2256 = vpop.permute.xlu0 %2255
  %2257 = vrot.lane.b32.xlu0 %v1562, 56
  %v2258 = vpop.permute.xlu0 %2257
  %v2262 = vsel %vm642, %v2112, 0
  %v2265 = vsel %vm642, %v2113, 0
  %2267 = vmatprep.subr.mxu0 0.0
  %2268 = vmatpush1.msra.mxu0 %v2256
  %2269 = vmatprep.subr.mxu0 0.0
  %2270 = vmatpush1.msra.mxu0 %v2258
  %2271 = vmatprep.subr.mxu0 0.0
  %2272 = vmatpush1.msra.mxu0 0.0
  %2273 = vmatprep.subr.mxu0 0.0
  %2274 = vmatpush1.msra.mxu0 0.0
  %2275 = vmatprep.subr.mxu0 0.0
  %2276 = vmatpush1.msra.mxu0 0.0
  %2277 = vmatprep.subr.mxu0 0.0
  %2278 = vmatpush1.msra.mxu0 0.0
  %2279 = vmatprep.subr.mxu0 0.0
  %2280 = vmatpush1.msra.mxu0 0.0
  %2281 = vmatprep.subr.mxu0 0.0
  %2282 = vmatpush1.msra.mxu0 0.0
  %2283 = vmatprep.subr.mxu0 0.0
  %2284 = vmatpush1.msra.mxu0 0.0
  %2285 = vmatprep.subr.mxu0 0.0
  %2286 = vmatpush1.msra.mxu0 0.0
  %2287 = vmatprep.subr.mxu0 0.0
  %2288 = vmatpush1.msra.mxu0 0.0
  %2289 = vmatprep.subr.mxu0 0.0
  %2290 = vmatpush1.msra.mxu0 0.0
  %2291 = vmatprep.subr.mxu0 0.0
  %2292 = vmatpush1.msra.mxu0 0.0
  %2293 = vmatprep.subr.mxu0 0.0
  %2294 = vmatpush1.msra.mxu0 0.0
  %2295 = vmatprep.subr.mxu0 0.0
  %2296 = vmatpush1.msra.mxu0 0.0
  %2297 = vmatprep.subr.mxu0 0.0
  %2298 = vmatpush1.msra.mxu0 0.0
  %2299 = vmatprep.subr.mxu0 0.0
  %2300 = vmatpush1.msra.mxu0 0.0
  %2301 = vmatprep.subr.mxu0 0.0
  %2302 = vmatpush1.msra.mxu0 0.0
  %2303 = vmatprep.subr.mxu0 0.0
  %2304 = vmatpush1.msra.mxu0 0.0
  %2305 = vmatprep.subr.mxu0 0.0
  %2306 = vmatpush1.msra.mxu0 0.0
  %2307 = vmatprep.subr.mxu0 0.0
  %2308 = vmatpush1.msra.mxu0 0.0
  %2309 = vmatprep.subr.mxu0 0.0
  %2310 = vmatpush1.msra.mxu0 0.0
  %2311 = vmatprep.subr.mxu0 0.0
  %2312 = vmatpush1.msra.mxu0 0.0
  %2313 = vmatprep.subr.mxu0 0.0
  %2314 = vmatpush1.msra.mxu0 0.0
  %2315 = vmatprep.subr.mxu0 0.0
  %2316 = vmatpush1.msra.mxu0 0.0
  %2317 = vmatprep.subr.mxu0 0.0
  %2318 = vmatpush1.msra.mxu0 0.0
  %2319 = vmatprep.subr.mxu0 0.0
  %2320 = vmatpush1.msra.mxu0 0.0
  %2321 = vmatprep.subr.mxu0 0.0
  %2322 = vmatpush1.msra.mxu0 0.0
  %2323 = vmatprep.subr.mxu0 0.0
  %2324 = vmatpush1.msra.mxu0 0.0
  %2325 = vmatprep.subr.mxu0 0.0
  %2326 = vmatpush1.msra.mxu0 0.0
  %2327 = vmatprep.subr.mxu0 0.0
  %2328 = vmatpush1.msra.mxu0 0.0
  %2329 = vmatprep.subr.mxu0 0.0
  %2330 = vmatpush1.msra.mxu0 0.0
  %2331 = vmatprep.mubr.f32.mxu0 0.0
  %2332 = vmatmul.mubr.f32.gmra.mrb[0].mxu0 %v2262
  %v2333 = vpop.f32.mrb[0].mxu0
  %v2334 = vadd.f32 0.0, %v2333
  %v2335 = vpop.f32.mrb[0].mxu0
  %2336 = vmatprep.mubr.f32.mxu0 0.0
  %2337 = vmatmul.mubr.f32.gmra.mrb[0].mxu0 %v2265
  %v2338 = vpop.f32.mrb[0].mxu0
  %v2339 = vadd.f32 0.0, %v2338
  %v2340 = vpop.f32.mrb[0].mxu0
  %2341 = vdwg.mxu0
  %v2342 = vpack.c.bf16 %v2339, %v2334
  %v2344 = vunpack.c.l.b16 %v1476
  %v2345 = vpack.c.b16 %v2344, %v2344
  %2346 = vrot.lane.b32.xlu0 %v2345, 96
  %v2347 = vpop.permute.xlu0 %2346
  %v2349 = vsel %vm269, %v2342, 0
  %v2352 = vsel %vm822, %v2347, 0
  %2354 = vmatprep.subr.bf16.mxu0 0
  %2355 = vmatpush1.bf16.msra.mxu0 %v2352
  %2356 = vmatprep.subr.bf16.mxu0 0
  %2357 = vmatpush1.bf16.msra.mxu0 0
  %2358 = vmatprep.subr.bf16.mxu0 0
  %2359 = vmatpush1.bf16.msra.mxu0 0
  %2360 = vmatprep.subr.bf16.mxu0 0
  %2361 = vmatpush1.bf16.msra.mxu0 0
  %2362 = vmatprep.subr.bf16.mxu0 0
  %2363 = vmatpush1.bf16.msra.mxu0 0
  %2364 = vmatprep.subr.bf16.mxu0 0
  %2365 = vmatpush1.bf16.msra.mxu0 0
  %2366 = vmatprep.subr.bf16.mxu0 0
  %2367 = vmatpush1.bf16.msra.mxu0 0
  %2368 = vmatprep.subr.bf16.mxu0 0
  %2369 = vmatpush1.bf16.msra.mxu0 0
  %2370 = vmatprep.subr.bf16.mxu0 0
  %2371 = vmatpush1.bf16.msra.mxu0 0
  %2372 = vmatprep.subr.bf16.mxu0 0
  %2373 = vmatpush1.bf16.msra.mxu0 0
  %2374 = vmatprep.subr.bf16.mxu0 0
  %2375 = vmatpush1.bf16.msra.mxu0 0
  %2376 = vmatprep.subr.bf16.mxu0 0
  %2377 = vmatpush1.bf16.msra.mxu0 0
  %2378 = vmatprep.subr.bf16.mxu0 0
  %2379 = vmatpush1.bf16.msra.mxu0 0
  %2380 = vmatprep.subr.bf16.mxu0 0
  %2381 = vmatpush1.bf16.msra.mxu0 0
  %2382 = vmatprep.subr.bf16.mxu0 0
  %2383 = vmatpush1.bf16.msra.mxu0 0
  %2384 = vmatprep.subr.bf16.mxu0 0
  %2385 = vmatpush1.bf16.msra.mxu0 0
  %2386 = vmatprep.mubr.bf16.mxu0 0
  %2387 = vmatmul.mubr.bf16.gmra.mrb[0].mxu0 %v2349
  %v2388 = vpop.f32.mrb[0].mxu0
  %v2389 = vadd.f32 0.0, %v2388
  %v2390 = vpop.f32.mrb[0].mxu0
  %v2391 = vpop.f32.mrb[0].mxu0
  %v2392 = vadd.f32 0.0, %v2391
  %v2393 = vpop.f32.mrb[0].mxu0
  %2394 = vdwg.mxu0
  %v2395 = vadd.f32 %v2253, %v2389
  %v2396 = vadd.f32 %v2254, %v2392
  %2397 = vrot.lane.b32.xlu0 %v1559, 48
  %v2398 = vpop.permute.xlu0 %2397
  %2399 = vrot.lane.b32.xlu0 %v1562, 48
  %v2400 = vpop.permute.xlu0 %2399
  %v2404 = vsel %vm642, %v2114, 0
  %v2407 = vsel %vm642, %v2115, 0
  %2409 = vmatprep.subr.mxu0 0.0
  %2410 = vmatpush1.msra.mxu0 %v2398
  %2411 = vmatprep.subr.mxu0 0.0
  %2412 = vmatpush1.msra.mxu0 %v2400
  %2413 = vmatprep.subr.mxu0 0.0
  %2414 = vmatpush1.msra.mxu0 0.0
  %2415 = vmatprep.subr.mxu0 0.0
  %2416 = vmatpush1.msra.mxu0 0.0
  %2417 = vmatprep.subr.mxu0 0.0
  %2418 = vmatpush1.msra.mxu0 0.0
  %2419 = vmatprep.subr.mxu0 0.0
  %2420 = vmatpush1.msra.mxu0 0.0
  %2421 = vmatprep.subr.mxu0 0.0
  %2422 = vmatpush1.msra.mxu0 0.0
  %2423 = vmatprep.subr.mxu0 0.0
  %2424 = vmatpush1.msra.mxu0 0.0
  %2425 = vmatprep.subr.mxu0 0.0
  %2426 = vmatpush1.msra.mxu0 0.0
  %2427 = vmatprep.subr.mxu0 0.0
  %2428 = vmatpush1.msra.mxu0 0.0
  %2429 = vmatprep.subr.mxu0 0.0
  %2430 = vmatpush1.msra.mxu0 0.0
  %2431 = vmatprep.subr.mxu0 0.0
  %2432 = vmatpush1.msra.mxu0 0.0
  %2433 = vmatprep.subr.mxu0 0.0
  %2434 = vmatpush1.msra.mxu0 0.0
  %2435 = vmatprep.subr.mxu0 0.0
  %2436 = vmatpush1.msra.mxu0 0.0
  %2437 = vmatprep.subr.mxu0 0.0
  %2438 = vmatpush1.msra.mxu0 0.0
  %2439 = vmatprep.subr.mxu0 0.0
  %2440 = vmatpush1.msra.mxu0 0.0
  %2441 = vmatprep.subr.mxu0 0.0
  %2442 = vmatpush1.msra.mxu0 0.0
  %2443 = vmatprep.subr.mxu0 0.0
  %2444 = vmatpush1.msra.mxu0 0.0
  %2445 = vmatprep.subr.mxu0 0.0
  %2446 = vmatpush1.msra.mxu0 0.0
  %2447 = vmatprep.subr.mxu0 0.0
  %2448 = vmatpush1.msra.mxu0 0.0
  %2449 = vmatprep.subr.mxu0 0.0
  %2450 = vmatpush1.msra.mxu0 0.0
  %2451 = vmatprep.subr.mxu0 0.0
  %2452 = vmatpush1.msra.mxu0 0.0
  %2453 = vmatprep.subr.mxu0 0.0
  %2454 = vmatpush1.msra.mxu0 0.0
  %2455 = vmatprep.subr.mxu0 0.0
  %2456 = vmatpush1.msra.mxu0 0.0
  %2457 = vmatprep.subr.mxu0 0.0
  %2458 = vmatpush1.msra.mxu0 0.0
  %2459 = vmatprep.subr.mxu0 0.0
  %2460 = vmatpush1.msra.mxu0 0.0
  %2461 = vmatprep.subr.mxu0 0.0
  %2462 = vmatpush1.msra.mxu0 0.0
  %2463 = vmatprep.subr.mxu0 0.0
  %2464 = vmatpush1.msra.mxu0 0.0
  %2465 = vmatprep.subr.mxu0 0.0
  %2466 = vmatpush1.msra.mxu0 0.0
  %2467 = vmatprep.subr.mxu0 0.0
  %2468 = vmatpush1.msra.mxu0 0.0
  %2469 = vmatprep.subr.mxu0 0.0
  %2470 = vmatpush1.msra.mxu0 0.0
  %2471 = vmatprep.subr.mxu0 0.0
  %2472 = vmatpush1.msra.mxu0 0.0
  %2473 = vmatprep.mubr.f32.mxu0 0.0
  %2474 = vmatmul.mubr.f32.gmra.mrb[0].mxu0 %v2404
  %v2475 = vpop.f32.mrb[0].mxu0
  %v2476 = vadd.f32 0.0, %v2475
  %v2477 = vpop.f32.mrb[0].mxu0
  %2478 = vmatprep.mubr.f32.mxu0 0.0
  %2479 = vmatmul.mubr.f32.gmra.mrb[0].mxu0 %v2407
  %v2480 = vpop.f32.mrb[0].mxu0
  %v2481 = vadd.f32 0.0, %v2480
  %v2482 = vpop.f32.mrb[0].mxu0
  %2483 = vdwg.mxu0
  %v2484 = vpack.c.bf16 %v2481, %v2476
  %2485 = vrot.lane.b32.xlu0 %v2345, 64
  %v2486 = vpop.permute.xlu0 %2485
  %v2488 = vsel %vm269, %v2484, 0
  %v2491 = vsel %vm822, %v2486, 0
  %2493 = vmatprep.subr.bf16.mxu0 0
  %2494 = vmatpush1.bf16.msra.mxu0 %v2491
  %2495 = vmatprep.subr.bf16.mxu0 0
  %2496 = vmatpush1.bf16.msra.mxu0 0
  %2497 = vmatprep.subr.bf16.mxu0 0
  %2498 = vmatpush1.bf16.msra.mxu0 0
  %2499 = vmatprep.subr.bf16.mxu0 0
  %2500 = vmatpush1.bf16.msra.mxu0 0
  %2501 = vmatprep.subr.bf16.mxu0 0
  %2502 = vmatpush1.bf16.msra.mxu0 0
  %2503 = vmatprep.subr.bf16.mxu0 0
  %2504 = vmatpush1.bf16.msra.mxu0 0
  %2505 = vmatprep.subr.bf16.mxu0 0
  %2506 = vmatpush1.bf16.msra.mxu0 0
  %2507 = vmatprep.subr.bf16.mxu0 0
  %2508 = vmatpush1.bf16.msra.mxu0 0
  %2509 = vmatprep.subr.bf16.mxu0 0
  %2510 = vmatpush1.bf16.msra.mxu0 0
  %2511 = vmatprep.subr.bf16.mxu0 0
  %2512 = vmatpush1.bf16.msra.mxu0 0
  %2513 = vmatprep.subr.bf16.mxu0 0
  %2514 = vmatpush1.bf16.msra.mxu0 0
  %2515 = vmatprep.subr.bf16.mxu0 0
  %2516 = vmatpush1.bf16.msra.mxu0 0
  %2517 = vmatprep.subr.bf16.mxu0 0
  %2518 = vmatpush1.bf16.msra.mxu0 0
  %2519 = vmatprep.subr.bf16.mxu0 0
  %2520 = vmatpush1.bf16.msra.mxu0 0
  %2521 = vmatprep.subr.bf16.mxu0 0
  %2522 = vmatpush1.bf16.msra.mxu0 0
  %2523 = vmatprep.subr.bf16.mxu0 0
  %2524 = vmatpush1.bf16.msra.mxu0 0
  %2525 = vmatprep.mubr.bf16.mxu0 0
  %2526 = vmatmul.mubr.bf16.gmra.mrb[0].mxu0 %v2488
  %v2527 = vpop.f32.mrb[0].mxu0
  %v2528 = vadd.f32 0.0, %v2527
  %v2529 = vpop.f32.mrb[0].mxu0
  %v2530 = vpop.f32.mrb[0].mxu0
  %v2531 = vadd.f32 0.0, %v2530
  %v2532 = vpop.f32.mrb[0].mxu0
  %2533 = vdwg.mxu0
  %v2534 = vadd.f32 %v2395, %v2528
  %v2535 = vadd.f32 %v2396, %v2531
  %2536 = vrot.lane.b32.xlu0 %v1559, 40
  %v2537 = vpop.permute.xlu0 %2536
  %2538 = vrot.lane.b32.xlu0 %v1562, 40
  %v2539 = vpop.permute.xlu0 %2538
  %v2543 = vsel %vm642, %v2116, 0
  %v2546 = vsel %vm642, %v2117, 0
  %2548 = vmatprep.subr.mxu0 0.0
  %2549 = vmatpush1.msra.mxu0 %v2537
  %2550 = vmatprep.subr.mxu0 0.0
  %2551 = vmatpush1.msra.mxu0 %v2539
  %2552 = vmatprep.subr.mxu0 0.0
  %2553 = vmatpush1.msra.mxu0 0.0
  %2554 = vmatprep.subr.mxu0 0.0
  %2555 = vmatpush1.msra.mxu0 0.0
  %2556 = vmatprep.subr.mxu0 0.0
  %2557 = vmatpush1.msra.mxu0 0.0
  %2558 = vmatprep.subr.mxu0 0.0
  %2559 = vmatpush1.msra.mxu0 0.0
  %2560 = vmatprep.subr.mxu0 0.0
  %2561 = vmatpush1.msra.mxu0 0.0
  %2562 = vmatprep.subr.mxu0 0.0
  %2563 = vmatpush1.msra.mxu0 0.0
  %2564 = vmatprep.subr.mxu0 0.0
  %2565 = vmatpush1.msra.mxu0 0.0
  %2566 = vmatprep.subr.mxu0 0.0
  %2567 = vmatpush1.msra.mxu0 0.0
  %2568 = vmatprep.subr.mxu0 0.0
  %2569 = vmatpush1.msra.mxu0 0.0
  %2570 = vmatprep.subr.mxu0 0.0
  %2571 = vmatpush1.msra.mxu0 0.0
  %2572 = vmatprep.subr.mxu0 0.0
  %2573 = vmatpush1.msra.mxu0 0.0
  %2574 = vmatprep.subr.mxu0 0.0
  %2575 = vmatpush1.msra.mxu0 0.0
  %2576 = vmatprep.subr.mxu0 0.0
  %2577 = vmatpush1.msra.mxu0 0.0
  %2578 = vmatprep.subr.mxu0 0.0
  %2579 = vmatpush1.msra.mxu0 0.0
  %2580 = vmatprep.subr.mxu0 0.0
  %2581 = vmatpush1.msra.mxu0 0.0
  %2582 = vmatprep.subr.mxu0 0.0
  %2583 = vmatpush1.msra.mxu0 0.0
  %2584 = vmatprep.subr.mxu0 0.0
  %2585 = vmatpush1.msra.mxu0 0.0
  %2586 = vmatprep.subr.mxu0 0.0
  %2587 = vmatpush1.msra.mxu0 0.0
  %2588 = vmatprep.subr.mxu0 0.0
  %2589 = vmatpush1.msra.mxu0 0.0
  %2590 = vmatprep.subr.mxu0 0.0
  %2591 = vmatpush1.msra.mxu0 0.0
  %2592 = vmatprep.subr.mxu0 0.0
  %2593 = vmatpush1.msra.mxu0 0.0
  %2594 = vmatprep.subr.mxu0 0.0
  %2595 = vmatpush1.msra.mxu0 0.0
  %2596 = vmatprep.subr.mxu0 0.0
  %2597 = vmatpush1.msra.mxu0 0.0
  %2598 = vmatprep.subr.mxu0 0.0
  %2599 = vmatpush1.msra.mxu0 0.0
  %2600 = vmatprep.subr.mxu0 0.0
  %2601 = vmatpush1.msra.mxu0 0.0
  %2602 = vmatprep.subr.mxu0 0.0
  %2603 = vmatpush1.msra.mxu0 0.0
  %2604 = vmatprep.subr.mxu0 0.0
  %2605 = vmatpush1.msra.mxu0 0.0
  %2606 = vmatprep.subr.mxu0 0.0
  %2607 = vmatpush1.msra.mxu0 0.0
  %2608 = vmatprep.subr.mxu0 0.0
  %2609 = vmatpush1.msra.mxu0 0.0
  %2610 = vmatprep.subr.mxu0 0.0
  %2611 = vmatpush1.msra.mxu0 0.0
  %2612 = vmatprep.mubr.f32.mxu0 0.0
  %2613 = vmatmul.mubr.f32.gmra.mrb[0].mxu0 %v2543
  %v2614 = vpop.f32.mrb[0].mxu0
  %v2615 = vadd.f32 0.0, %v2614
  %v2616 = vpop.f32.mrb[0].mxu0
  %2617 = vmatprep.mubr.f32.mxu0 0.0
  %2618 = vmatmul.mubr.f32.gmra.mrb[0].mxu0 %v2546
  %v2619 = vpop.f32.mrb[0].mxu0
  %v2620 = vadd.f32 0.0, %v2619
  %v2621 = vpop.f32.mrb[0].mxu0
  %2622 = vdwg.mxu0
  %v2623 = vpack.c.bf16 %v2620, %v2615
  %2624 = vrot.lane.b32.xlu0 %v2345, 32
  %v2625 = vpop.permute.xlu0 %2624
  %v2627 = vsel %vm269, %v2623, 0
  %v2630 = vsel %vm822, %v2625, 0
  %2632 = vmatprep.subr.bf16.mxu0 0
  %2633 = vmatpush1.bf16.msra.mxu0 %v2630
  %2634 = vmatprep.subr.bf16.mxu0 0
  %2635 = vmatpush1.bf16.msra.mxu0 0
  %2636 = vmatprep.subr.bf16.mxu0 0
  %2637 = vmatpush1.bf16.msra.mxu0 0
  %2638 = vmatprep.subr.bf16.mxu0 0
  %2639 = vmatpush1.bf16.msra.mxu0 0
  %2640 = vmatprep.subr.bf16.mxu0 0
  %2641 = vmatpush1.bf16.msra.mxu0 0
  %2642 = vmatprep.subr.bf16.mxu0 0
  %2643 = vmatpush1.bf16.msra.mxu0 0
  %2644 = vmatprep.subr.bf16.mxu0 0
  %2645 = vmatpush1.bf16.msra.mxu0 0
  %2646 = vmatprep.subr.bf16.mxu0 0
  %2647 = vmatpush1.bf16.msra.mxu0 0
  %2648 = vmatprep.subr.bf16.mxu0 0
  %2649 = vmatpush1.bf16.msra.mxu0 0
  %2650 = vmatprep.subr.bf16.mxu0 0
  %2651 = vmatpush1.bf16.msra.mxu0 0
  %2652 = vmatprep.subr.bf16.mxu0 0
  %2653 = vmatpush1.bf16.msra.mxu0 0
  %2654 = vmatprep.subr.bf16.mxu0 0
  %2655 = vmatpush1.bf16.msra.mxu0 0
  %2656 = vmatprep.subr.bf16.mxu0 0
  %2657 = vmatpush1.bf16.msra.mxu0 0
  %2658 = vmatprep.subr.bf16.mxu0 0
  %2659 = vmatpush1.bf16.msra.mxu0 0
  %2660 = vmatprep.subr.bf16.mxu0 0
  %2661 = vmatpush1.bf16.msra.mxu0 0
  %2662 = vmatprep.subr.bf16.mxu0 0
  %2663 = vmatpush1.bf16.msra.mxu0 0
  %2664 = vmatprep.mubr.bf16.mxu0 0
  %2665 = vmatmul.mubr.bf16.gmra.mrb[0].mxu0 %v2627
  %v2666 = vpop.f32.mrb[0].mxu0
  %v2667 = vadd.f32 0.0, %v2666
  %v2668 = vpop.f32.mrb[0].mxu0
  %v2669 = vpop.f32.mrb[0].mxu0
  %v2670 = vadd.f32 0.0, %v2669
  %v2671 = vpop.f32.mrb[0].mxu0
  %2672 = vdwg.mxu0
  %v2673 = vadd.f32 %v2534, %v2667
  %v2674 = vadd.f32 %v2535, %v2670
  %v2675 = vmul.f32 %v2673, %v2673
  %v2676 = vmul.f32 %v2674, %v2674
  %v2677 = vsel %vm96, %v2675, 0.0
  %2678 = vadd.xlane.f32.xlu0 %v2677
  %v2679 = vpop.xlane.xlu0 %2678
  %v2680 = vsel %vm96, %v2676, 0.0
  %2681 = vadd.xlane.f32.xlu0 %v2680
  %v2682 = vpop.xlane.xlu0 %2681
  %v2683 = vmul.f32 %v2679, %v103
  %v2684 = vmul.f32 %v2682, %v103
  %v2685 = vadd.f32 %v2683, 1e-06
  %v2686 = vadd.f32 %v2684, 1e-06
  %v2687 = vrsqrt.pop %v2685
  %v2688 = vrsqrt.pop %v2686
  %v2689 = vmul.f32 %v2673, %v2687
  %v2690 = vmul.f32 %v2674, %v2688
  %v2691 = vlaneseq
  %v2692 = vshrl.u32 %v2691, 7
  %v2693 = vsub.s32 3, %v2692
  %v2694 = vrot.slane %v80, %v2693
  %v2695 = vmul.f32 %v2689, %v2694
  %v2696 = vmul.f32 %v2690, %v2694
  %v2697 = vpack.c.bf16 %v2696, %v2695
  %v2698 = vunpack.c.h.b16 %v1471
  %v2699 = vunpack.c.h.b16 %v1472
  %v2700 = vunpack.c.h.b16 %v1473
  %v2701 = vunpack.c.h.b16 %v1474
  %v2702 = vpack.c.b16 %v2699, %v2698
  %v2703 = vpack.c.b16 %v2701, %v2700
  %2704 = vrot.lane.b32.xlu0 %v1517, 32
  %v2705 = vpop.permute.xlu0 %2704
  %2706 = vrot.lane.b32.xlu0 %v2702, 32
  %v2707 = vpop.permute.xlu0 %2706
  %2708 = vrot.lane.b32.xlu0 %v1518, 32
  %v2709 = vpop.permute.xlu0 %2708
  %2710 = vrot.lane.b32.xlu0 %v2703, 32
  %v2711 = vpop.permute.xlu0 %2710
  %v2712 = vsel %vm1326, %v2705, %v2707
  %v2713 = vsel %vm1326, %v2709, %v2711
  %v2717 = vsel %vm96, %v2697, 0
  %2719 = vmatprep.subr.bf16.mxu0 0
  %2720 = vmatpush1.bf16.msra.mxu0 %v2712
  %2721 = vmatprep.subr.bf16.mxu0 0
  %2722 = vmatpush1.bf16.msra.mxu0 %v2713
  %2723 = vmatprep.subr.bf16.mxu0 0
  %2724 = vmatpush1.bf16.msra.mxu0 0
  %2725 = vmatprep.subr.bf16.mxu0 0
  %2726 = vmatpush1.bf16.msra.mxu0 0
  %2727 = vmatprep.subr.bf16.mxu0 0
  %2728 = vmatpush1.bf16.msra.mxu0 0
  %2729 = vmatprep.subr.bf16.mxu0 0
  %2730 = vmatpush1.bf16.msra.mxu0 0
  %2731 = vmatprep.subr.bf16.mxu0 0
  %2732 = vmatpush1.bf16.msra.mxu0 0
  %2733 = vmatprep.subr.bf16.mxu0 0
  %2734 = vmatpush1.bf16.msra.mxu0 0
  %2735 = vmatprep.subr.bf16.mxu0 0
  %2736 = vmatpush1.bf16.msra.mxu0 0
  %2737 = vmatprep.subr.bf16.mxu0 0
  %2738 = vmatpush1.bf16.msra.mxu0 0
  %2739 = vmatprep.subr.bf16.mxu0 0
  %2740 = vmatpush1.bf16.msra.mxu0 0
  %2741 = vmatprep.subr.bf16.mxu0 0
  %2742 = vmatpush1.bf16.msra.mxu0 0
  %2743 = vmatprep.subr.bf16.mxu0 0
  %2744 = vmatpush1.bf16.msra.mxu0 0
  %2745 = vmatprep.subr.bf16.mxu0 0
  %2746 = vmatpush1.bf16.msra.mxu0 0
  %2747 = vmatprep.subr.bf16.mxu0 0
  %2748 = vmatpush1.bf16.msra.mxu0 0
  %2749 = vmatprep.subr.bf16.mxu0 0
  %2750 = vmatpush1.bf16.msra.mxu0 0
  %2751 = vmatprep.mubr.bf16.mxu0 0
  %2752 = vmatmul.mubr.bf16.gmra.mrb[0].mxu0 %v2717
  %v2753 = vpop.f32.mrb[0].mxu0
  %v2754 = vadd.f32 0.0, %v2753
  %v2755 = vpop.f32.mrb[0].mxu0
  %v2756 = vpop.f32.mrb[0].mxu0
  %v2757 = vadd.f32 0.0, %v2756
  %v2758 = vpop.f32.mrb[0].mxu0
  %2759 = vdwg.mxu0
  %v2760 = vxor.u32 %v2754, 2147483648
  %v2761 = vxor.u32 %v2757, 2147483648
  %v2762 = vmul.f32 %v2760, 1.442695
  %v2763 = vpow.pop %v2762
  %v2764 = vmul.f32 %v2761, 1.442695
  %v2765 = vpow.pop %v2764
  %v2766 = vadd.f32 %v2763, 1.0
  %v2767 = vadd.f32 %v2765, 1.0
  %v2768 = vrcp.pop %v2766
  %v2769 = vmul.f32 1.0, %v2768
  %v2770 = vrcp.pop %v2767
  %v2771 = vmul.f32 1.0, %v2770
  %v2772 = vmul.f32 %v2754, %v2769
  %v2773 = vmul.f32 %v2757, %v2771
  %2776 = vrot.lane.b32.xlu0 %v2754, 64
  %v2777 = vpop.permute.xlu0 %2776
  %2778 = vrot.lane.b32.xlu0 %v2757, 64
  %v2779 = vpop.permute.xlu0 %2778
  %v2782 = vmul.f32 %v2772, %v2777
  %v2783 = vmul.f32 %v2773, %v2779
  %v2784 = vpack.c.bf16 %v2783, %v2782
  %v2793 = vunpack.c.l.b16 %v1478
  %v2794 = vunpack.c.l.b16 %v1479
  %v2795 = vunpack.c.l.b16 %v1480
  %v2796 = vunpack.c.l.b16 %v1481
  %v2797 = vunpack.c.l.b16 %v1482
  %v2798 = vunpack.c.l.b16 %v1483
  %v2799 = vunpack.c.l.b16 %v1484
  %v2800 = vunpack.c.l.b16 %v1485
  %v2801 = vpack.c.b16 %v2794, %v2793
  %v2802 = vpack.c.b16 %v2796, %v2795
  %v2803 = vpack.c.b16 %v2798, %v2797
  %v2804 = vpack.c.b16 %v2800, %v2799
  %v2810 = vsel %vm177, %v2784, 0
  %2812 = vmatprep.subr.bf16.mxu0 0
  %2813 = vmatpush1.bf16.msra.mxu0 %v2801
  %2814 = vmatprep.subr.bf16.mxu0 0
  %2815 = vmatpush1.bf16.msra.mxu0 %v2802
  %2816 = vmatprep.subr.bf16.mxu0 0
  %2817 = vmatpush1.bf16.msra.mxu0 %v2803
  %2818 = vmatprep.subr.bf16.mxu0 0
  %2819 = vmatpush1.bf16.msra.mxu0 %v2804
  %2820 = vmatprep.subr.bf16.mxu0 0
  %2821 = vmatpush1.bf16.msra.mxu0 0
  %2822 = vmatprep.subr.bf16.mxu0 0
  %2823 = vmatpush1.bf16.msra.mxu0 0
  %2824 = vmatprep.subr.bf16.mxu0 0
  %2825 = vmatpush1.bf16.msra.mxu0 0
  %2826 = vmatprep.subr.bf16.mxu0 0
  %2827 = vmatpush1.bf16.msra.mxu0 0
  %2828 = vmatprep.subr.bf16.mxu0 0
  %2829 = vmatpush1.bf16.msra.mxu0 0
  %2830 = vmatprep.subr.bf16.mxu0 0
  %2831 = vmatpush1.bf16.msra.mxu0 0
  %2832 = vmatprep.subr.bf16.mxu0 0
  %2833 = vmatpush1.bf16.msra.mxu0 0
  %2834 = vmatprep.subr.bf16.mxu0 0
  %2835 = vmatpush1.bf16.msra.mxu0 0
  %2836 = vmatprep.subr.bf16.mxu0 0
  %2837 = vmatpush1.bf16.msra.mxu0 0
  %2838 = vmatprep.subr.bf16.mxu0 0
  %2839 = vmatpush1.bf16.msra.mxu0 0
  %2840 = vmatprep.subr.bf16.mxu0 0
  %2841 = vmatpush1.bf16.msra.mxu0 0
  %2842 = vmatprep.subr.bf16.mxu0 0
  %2843 = vmatpush1.bf16.msra.mxu0 0
  %2844 = vmatprep.mubr.bf16.mxu0 0
  %2845 = vmatmul.mubr.bf16.gmra.mrb[0].mxu0 %v2810
  %v2846 = vpop.f32.mrb[0].mxu0
  %v2847 = vadd.f32 0.0, %v2846
  %v2848 = vpop.f32.mrb[0].mxu0
  %v2849 = vpop.f32.mrb[0].mxu0
  %v2850 = vadd.f32 0.0, %v2849
  %v2851 = vpop.f32.mrb[0].mxu0
  %2852 = vdwg.mxu0
  %v2853 = vadd.f32 %v2673, %v2847
  %v2854 = vadd.f32 %v2674, %v2850
  %v2855 = vmul.f32 %v2853, %v2853
  %v2856 = vmul.f32 %v2854, %v2854
  %v2857 = vsel %vm96, %v2855, 0.0
  %2858 = vadd.xlane.f32.xlu0 %v2857
  %v2859 = vpop.xlane.xlu0 %2858
  %v2860 = vsel %vm96, %v2856, 0.0
  %2861 = vadd.xlane.f32.xlu0 %v2860
  %v2862 = vpop.xlane.xlu0 %2861
  %v2863 = vmul.f32 %v2859, %v103
  %v2864 = vmul.f32 %v2862, %v103
  %v2865 = vadd.f32 %v2863, 1e-06
  %v2866 = vadd.f32 %v2864, 1e-06
  %v2867 = vrsqrt.pop %v2865
  %v2868 = vrsqrt.pop %v2866
  %v2869 = vmul.f32 %v2853, %v2867
  %v2870 = vmul.f32 %v2854, %v2868
  %v2871 = vlaneseq
  %v2872 = vshrl.u32 %v2871, 7
  %v2873 = vsub.s32 4, %v2872
  %v2874 = vrot.slane %v80, %v2873
  %v2875 = vmul.f32 %v2869, %v2874
  %v2876 = vmul.f32 %v2870, %v2874
  %v2877 = vpack.c.bf16 %v2876, %v2875
  %v2882 = vunpack.c.l.b16 %v70
  %v2883 = vunpack.c.l.b16 %v72
  %v2884 = vunpack.c.l.b16 %v74
  %v2885 = vunpack.c.l.b16 %v76
  %v2886 = vpack.c.b16 %v2883, %v2882
  %v2887 = vpack.c.b16 %v2885, %v2884
  %v2891 = vsel %vm96, %v2877, 0
  %2893 = vmatprep.subr.bf16.mxu0 0
  %2894 = vmatpush1.bf16.msra.mxu0 %v2886
  %2895 = vmatprep.subr.bf16.mxu0 0
  %2896 = vmatpush1.bf16.msra.mxu0 %v2887
  %2897 = vmatprep.subr.bf16.mxu0 0
  %2898 = vmatpush1.bf16.msra.mxu0 0
  %2899 = vmatprep.subr.bf16.mxu0 0
  %2900 = vmatpush1.bf16.msra.mxu0 0
  %2901 = vmatprep.subr.bf16.mxu0 0
  %2902 = vmatpush1.bf16.msra.mxu0 0
  %2903 = vmatprep.subr.bf16.mxu0 0
  %2904 = vmatpush1.bf16.msra.mxu0 0
  %2905 = vmatprep.subr.bf16.mxu0 0
  %2906 = vmatpush1.bf16.msra.mxu0 0
  %2907 = vmatprep.subr.bf16.mxu0 0
  %2908 = vmatpush1.bf16.msra.mxu0 0
  %2909 = vmatprep.subr.bf16.mxu0 0
  %2910 = vmatpush1.bf16.msra.mxu0 0
  %2911 = vmatprep.subr.bf16.mxu0 0
  %2912 = vmatpush1.bf16.msra.mxu0 0
  %2913 = vmatprep.subr.bf16.mxu0 0
  %2914 = vmatpush1.bf16.msra.mxu0 0
  %2915 = vmatprep.subr.bf16.mxu0 0
  %2916 = vmatpush1.bf16.msra.mxu0 0
  %2917 = vmatprep.subr.bf16.mxu0 0
  %2918 = vmatpush1.bf16.msra.mxu0 0
  %2919 = vmatprep.subr.bf16.mxu0 0
  %2920 = vmatpush1.bf16.msra.mxu0 0
  %2921 = vmatprep.subr.bf16.mxu0 0
  %2922 = vmatpush1.bf16.msra.mxu0 0
  %2923 = vmatprep.subr.bf16.mxu0 0
  %2924 = vmatpush1.bf16.msra.mxu0 0
  %2925 = vmatprep.mubr.bf16.mxu0 0
  %2926 = vmatmul.mubr.bf16.gmra.mrb[0].mxu0 %v2891
  %v2927 = vpop.f32.mrb[0].mxu0
  %v2928 = vadd.f32 0.0, %v2927
  %v2929 = vpop.f32.mrb[0].mxu0
  %v2930 = vpop.f32.mrb[0].mxu0
  %v2931 = vadd.f32 0.0, %v2930
  %v2932 = vpop.f32.mrb[0].mxu0
  %2933 = vdwg.mxu0
  %2934 = vst [vmem:[%s14] sm:$0xff] %v2928
  %2935 = vst [vmem:[%s14 + $0x8] sm:$0xff] %v2931
  %v2936 = vunpack.c.h.b16 %v70
  %v2937 = vunpack.c.h.b16 %v72
  %v2938 = vunpack.c.h.b16 %v74
  %v2939 = vunpack.c.h.b16 %v76
  %v2940 = vpack.c.b16 %v2937, %v2936
  %v2941 = vpack.c.b16 %v2939, %v2938
  %2944 = vmatprep.subr.bf16.mxu0 0
  %2945 = vmatpush1.bf16.msra.mxu0 %v2940
  %2946 = vmatprep.subr.bf16.mxu0 0
  %2947 = vmatpush1.bf16.msra.mxu0 %v2941
  %2948 = vmatprep.subr.bf16.mxu0 0
  %2949 = vmatpush1.bf16.msra.mxu0 0
  %2950 = vmatprep.subr.bf16.mxu0 0
  %2951 = vmatpush1.bf16.msra.mxu0 0
  %2952 = vmatprep.subr.bf16.mxu0 0
  %2953 = vmatpush1.bf16.msra.mxu0 0
  %2954 = vmatprep.subr.bf16.mxu0 0
  %2955 = vmatpush1.bf16.msra.mxu0 0
  %2956 = vmatprep.subr.bf16.mxu0 0
  %2957 = vmatpush1.bf16.msra.mxu0 0
  %2958 = vmatprep.subr.bf16.mxu0 0
  %2959 = vmatpush1.bf16.msra.mxu0 0
  %2960 = vmatprep.subr.bf16.mxu0 0
  %2961 = vmatpush1.bf16.msra.mxu0 0
  %2962 = vmatprep.subr.bf16.mxu0 0
  %2963 = vmatpush1.bf16.msra.mxu0 0
  %2964 = vmatprep.subr.bf16.mxu0 0
  %2965 = vmatpush1.bf16.msra.mxu0 0
  %2966 = vmatprep.subr.bf16.mxu0 0
  %2967 = vmatpush1.bf16.msra.mxu0 0
  %2968 = vmatprep.subr.bf16.mxu0 0
  %2969 = vmatpush1.bf16.msra.mxu0 0
  %2970 = vmatprep.subr.bf16.mxu0 0
  %2971 = vmatpush1.bf16.msra.mxu0 0
  %2972 = vmatprep.subr.bf16.mxu0 0
  %2973 = vmatpush1.bf16.msra.mxu0 0
  %2974 = vmatprep.subr.bf16.mxu0 0
  %2975 = vmatpush1.bf16.msra.mxu0 0
  %2976 = vmatprep.mubr.bf16.mxu0 0
  %2977 = vmatmul.mubr.bf16.gmra.mrb[0].mxu0 %v2891
  %v2978 = vpop.f32.mrb[0].mxu0
  %v2979 = vadd.f32 0.0, %v2978
  %v2980 = vpop.f32.mrb[0].mxu0
  %v2981 = vpop.f32.mrb[0].mxu0
  %v2982 = vadd.f32 0.0, %v2981
  %v2983 = vpop.f32.mrb[0].mxu0
  %2984 = vdwg.mxu0
  %v2985 = vld [vmem:[%s12] sm:$0x1f]
  %v2986 = vld [vmem:[%s9] sm:$0xff]
  %v2987 = vld [vmem:[%s9 + $0x8] sm:$0xff]
  %v2988 = vld [vmem:[%s9 + $0x10] sm:$0xff]
  %v2989 = vld [vmem:[%s9 + $0x18] sm:$0xff]
  %v2990 = vld [vmem:[%s10] sm:$0xf]
  %v2991 = vld [vmem:[%s11] sm:$0xf]
  %v2992 = vld [vmem:[%s11 + $0x4] sm:$0xf]
  %v2993 = vld [vmem:[%s11 + $0x8] sm:$0xf]
  %v2994 = vld [vmem:[%s11 + $0xc] sm:$0xf]
  %v2995 = vld [vmem:[%s11 + $0x10] sm:$0xf]
  %v2996 = vld [vmem:[%s11 + $0x14] sm:$0xf]
  %v2997 = vld [vmem:[%s11 + $0x18] sm:$0xf]
  %v2998 = vld [vmem:[%s11 + $0x1c] sm:$0xf]
  %v2999 = vmul.f32 %v2979, %v2979
  %v3000 = vmul.f32 %v2982, %v2982
  %v3001 = vsel %vm96, %v2999, 0.0
  %3002 = vadd.xlane.f32.xlu0 %v3001
  %v3003 = vpop.xlane.xlu0 %3002
  %v3004 = vsel %vm96, %v3000, 0.0
  %3005 = vadd.xlane.f32.xlu0 %v3004
  %v3006 = vpop.xlane.xlu0 %3005
  %v3007 = vmul.f32 %v3003, %v103
  %v3008 = vmul.f32 %v3006, %v103
  %v3009 = vadd.f32 %v3007, 1e-06
  %v3010 = vadd.f32 %v3008, 1e-06
  %v3011 = vrsqrt.pop %v3009
  %v3012 = vrsqrt.pop %v3010
  %v3013 = vmul.f32 %v2979, %v3011
  %v3014 = vmul.f32 %v2982, %v3012
  %v3015 = vlaneseq
  %v3016 = vshrl.u32 %v3015, 7
  %v3017 = vsub.s32 0, %v3016
  %v3018 = vrot.slane %v2985, %v3017
  %v3019 = vmul.f32 %v3013, %v3018
  %v3020 = vmul.f32 %v3014, %v3018
  %v3021 = vpack.c.bf16 %v3020, %v3019
  %v3026 = vunpack.c.l.b16 %v2986
  %v3027 = vunpack.c.l.b16 %v2987
  %v3028 = vunpack.c.l.b16 %v2988
  %v3029 = vunpack.c.l.b16 %v2989
  %v3030 = vpack.c.b16 %v3027, %v3026
  %v3031 = vpack.c.b16 %v3029, %v3028
  %v3035 = vsel %vm96, %v3021, 0
  %3037 = vmatprep.subr.bf16.mxu0 0
  %3038 = vmatpush1.bf16.msra.mxu0 %v3030
  %3039 = vmatprep.subr.bf16.mxu0 0
  %3040 = vmatpush1.bf16.msra.mxu0 %v3031
  %3041 = vmatprep.subr.bf16.mxu0 0
  %3042 = vmatpush1.bf16.msra.mxu0 0
  %3043 = vmatprep.subr.bf16.mxu0 0
  %3044 = vmatpush1.bf16.msra.mxu0 0
  %3045 = vmatprep.subr.bf16.mxu0 0
  %3046 = vmatpush1.bf16.msra.mxu0 0
  %3047 = vmatprep.subr.bf16.mxu0 0
  %3048 = vmatpush1.bf16.msra.mxu0 0
  %3049 = vmatprep.subr.bf16.mxu0 0
  %3050 = vmatpush1.bf16.msra.mxu0 0
  %3051 = vmatprep.subr.bf16.mxu0 0
  %3052 = vmatpush1.bf16.msra.mxu0 0
  %3053 = vmatprep.subr.bf16.mxu0 0
  %3054 = vmatpush1.bf16.msra.mxu0 0
  %3055 = vmatprep.subr.bf16.mxu0 0
  %3056 = vmatpush1.bf16.msra.mxu0 0
  %3057 = vmatprep.subr.bf16.mxu0 0
  %3058 = vmatpush1.bf16.msra.mxu0 0
  %3059 = vmatprep.subr.bf16.mxu0 0
  %3060 = vmatpush1.bf16.msra.mxu0 0
  %3061 = vmatprep.subr.bf16.mxu0 0
  %3062 = vmatpush1.bf16.msra.mxu0 0
  %3063 = vmatprep.subr.bf16.mxu0 0
  %3064 = vmatpush1.bf16.msra.mxu0 0
  %3065 = vmatprep.subr.bf16.mxu0 0
  %3066 = vmatpush1.bf16.msra.mxu0 0
  %3067 = vmatprep.subr.bf16.mxu0 0
  %3068 = vmatpush1.bf16.msra.mxu0 0
  %3069 = vmatprep.mubr.bf16.mxu0 0
  %3070 = vmatmul.mubr.bf16.gmra.mrb[0].mxu0 %v3035
  %v3071 = vpop.f32.mrb[0].mxu0
  %v3072 = vadd.f32 0.0, %v3071
  %v3073 = vpop.f32.mrb[0].mxu0
  %v3074 = vpop.f32.mrb[0].mxu0
  %v3075 = vadd.f32 0.0, %v3074
  %v3076 = vpop.f32.mrb[0].mxu0
  %3077 = vdwg.mxu0
  %v3078 = vmul.f32 %v3072, %v58
  %v3079 = vmul.f32 %v3075, %v59
  %v3081 = vsel %vm177, %v3072, 0
  %v3084 = vsel %vm177, %v3075, 0
  %3086 = vmatprep.subr.mxu0 0.0
  %3087 = vmatpush1.msra.mxu0 %v62
  %3088 = vmatprep.subr.mxu0 0.0
  %3089 = vmatpush1.msra.mxu0 %v63
  %3090 = vmatprep.subr.mxu0 0.0
  %3091 = vmatpush1.msra.mxu0 %v64
  %3092 = vmatprep.subr.mxu0 0.0
  %3093 = vmatpush1.msra.mxu0 %v65
  %3094 = vmatprep.subr.mxu0 0.0
  %3095 = vmatpush1.msra.mxu0 %v66
  %3096 = vmatprep.subr.mxu0 0.0
  %3097 = vmatpush1.msra.mxu0 %v67
  %3098 = vmatprep.subr.mxu0 0.0
  %3099 = vmatpush1.msra.mxu0 %v68
  %3100 = vmatprep.subr.mxu0 0.0
  %3101 = vmatpush1.msra.mxu0 %v69
  %3102 = vmatprep.subr.mxu0 0.0
  %3103 = vmatpush1.msra.mxu0 0.0
  %3104 = vmatprep.subr.mxu0 0.0
  %3105 = vmatpush1.msra.mxu0 0.0
  %3106 = vmatprep.subr.mxu0 0.0
  %3107 = vmatpush1.msra.mxu0 0.0
  %3108 = vmatprep.subr.mxu0 0.0
  %3109 = vmatpush1.msra.mxu0 0.0
  %3110 = vmatprep.subr.mxu0 0.0
  %3111 = vmatpush1.msra.mxu0 0.0
  %3112 = vmatprep.subr.mxu0 0.0
  %3113 = vmatpush1.msra.mxu0 0.0
  %3114 = vmatprep.subr.mxu0 0.0
  %3115 = vmatpush1.msra.mxu0 0.0
  %3116 = vmatprep.subr.mxu0 0.0
  %3117 = vmatpush1.msra.mxu0 0.0
  %3118 = vmatprep.subr.mxu0 0.0
  %3119 = vmatpush1.msra.mxu0 0.0
  %3120 = vmatprep.subr.mxu0 0.0
  %3121 = vmatpush1.msra.mxu0 0.0
  %3122 = vmatprep.subr.mxu0 0.0
  %3123 = vmatpush1.msra.mxu0 0.0
  %3124 = vmatprep.subr.mxu0 0.0
  %3125 = vmatpush1.msra.mxu0 0.0
  %3126 = vmatprep.subr.mxu0 0.0
  %3127 = vmatpush1.msra.mxu0 0.0
  %3128 = vmatprep.subr.mxu0 0.0
  %3129 = vmatpush1.msra.mxu0 0.0
  %3130 = vmatprep.subr.mxu0 0.0
  %3131 = vmatpush1.msra.mxu0 0.0
  %3132 = vmatprep.subr.mxu0 0.0
  %3133 = vmatpush1.msra.mxu0 0.0
  %3134 = vmatprep.subr.mxu0 0.0
  %3135 = vmatpush1.msra.mxu0 0.0
  %3136 = vmatprep.subr.mxu0 0.0
  %3137 = vmatpush1.msra.mxu0 0.0
  %3138 = vmatprep.subr.mxu0 0.0
  %3139 = vmatpush1.msra.mxu0 0.0
  %3140 = vmatprep.subr.mxu0 0.0
  %3141 = vmatpush1.msra.mxu0 0.0
  %3142 = vmatprep.subr.mxu0 0.0
  %3143 = vmatpush1.msra.mxu0 0.0
  %3144 = vmatprep.subr.mxu0 0.0
  %3145 = vmatpush1.msra.mxu0 0.0
  %3146 = vmatprep.subr.mxu0 0.0
  %3147 = vmatpush1.msra.mxu0 0.0
  %3148 = vmatprep.subr.mxu0 0.0
  %3149 = vmatpush1.msra.mxu0 0.0
  %3150 = vmatprep.mubr.f32.mxu0 0.0
  %3151 = vmatmul.mubr.f32.gmra.mrb[0].mxu0 %v3081
  %v3152 = vpop.f32.mrb[0].mxu0
  %v3153 = vadd.f32 0.0, %v3152
  %v3154 = vpop.f32.mrb[0].mxu0
  %3155 = vmatprep.mubr.f32.mxu0 0.0
  %3156 = vmatmul.mubr.f32.gmra.mrb[0].mxu0 %v3084
  %v3157 = vpop.f32.mrb[0].mxu0
  %v3158 = vadd.f32 0.0, %v3157
  %v3159 = vpop.f32.mrb[0].mxu0
  %3160 = vdwg.mxu0
  %v3161 = vmul.f32 %v3153, %v60
  %v3162 = vmul.f32 %v3158, %v61
  %v3163 = vadd.f32 %v3078, %v3161
  %v3164 = vadd.f32 %v3079, %v3162
  %3167 = vrot.lane.b32.xlu0 %v3163, 96
  %v3168 = vpop.permute.xlu0 %3167
  %3169 = vrot.lane.b32.xlu0 %v3164, 96
  %v3170 = vpop.permute.xlu0 %3169
  %v3171 = vsel %vm269, %v3163, 0
  %v3173 = vsel %vm269, %v3164, 0
  %v3175 = vsel %vm269, %v3168, 0
  %v3177 = vsel %vm269, %v3170, 0
  %3179 = vmatprep.subr.mxu0 0.0
  %3180 = vmatpush1.xpose.msra.mxu0 %v3175
  %3181 = vmatprep.subr.mxu0 0.0
  %3182 = vmatpush1.xpose.msra.mxu0 %v3177
  %3183 = vmatprep.subr.mxu0 0.0
  %3184 = vmatpush1.xpose.msra.mxu0 0.0
  %3185 = vmatprep.subr.mxu0 0.0
  %3186 = vmatpush1.xpose.msra.mxu0 0.0
  %3187 = vmatprep.subr.mxu0 0.0
  %3188 = vmatpush1.xpose.msra.mxu0 0.0
  %3189 = vmatprep.subr.mxu0 0.0
  %3190 = vmatpush1.xpose.msra.mxu0 0.0
  %3191 = vmatprep.subr.mxu0 0.0
  %3192 = vmatpush1.xpose.msra.mxu0 0.0
  %3193 = vmatprep.subr.mxu0 0.0
  %3194 = vmatpush1.xpose.msra.mxu0 0.0
  %3195 = vmatprep.subr.mxu0 0.0
  %3196 = vmatpush1.xpose.msra.mxu0 0.0
  %3197 = vmatprep.subr.mxu0 0.0
  %3198 = vmatpush1.xpose.msra.mxu0 0.0
  %3199 = vmatprep.subr.mxu0 0.0
  %3200 = vmatpush1.xpose.msra.mxu0 0.0
  %3201 = vmatprep.subr.mxu0 0.0
  %3202 = vmatpush1.xpose.msra.mxu0 0.0
  %3203 = vmatprep.subr.mxu0 0.0
  %3204 = vmatpush1.xpose.msra.mxu0 0.0
  %3205 = vmatprep.subr.mxu0 0.0
  %3206 = vmatpush1.xpose.msra.mxu0 0.0
  %3207 = vmatprep.subr.mxu0 0.0
  %3208 = vmatpush1.xpose.msra.mxu0 0.0
  %3209 = vmatprep.subr.mxu0 0.0
  %3210 = vmatpush1.xpose.msra.mxu0 0.0
  %3211 = vmatprep.subr.mxu0 0.0
  %3212 = vmatpush1.xpose.msra.mxu0 0.0
  %3213 = vmatprep.subr.mxu0 0.0
  %3214 = vmatpush1.xpose.msra.mxu0 0.0
  %3215 = vmatprep.subr.mxu0 0.0
  %3216 = vmatpush1.xpose.msra.mxu0 0.0
  %3217 = vmatprep.subr.mxu0 0.0
  %3218 = vmatpush1.xpose.msra.mxu0 0.0
  %3219 = vmatprep.subr.mxu0 0.0
  %3220 = vmatpush1.xpose.msra.mxu0 0.0
  %3221 = vmatprep.subr.mxu0 0.0
  %3222 = vmatpush1.xpose.msra.mxu0 0.0
  %3223 = vmatprep.subr.mxu0 0.0
  %3224 = vmatpush1.xpose.msra.mxu0 0.0
  %3225 = vmatprep.subr.mxu0 0.0
  %3226 = vmatpush1.xpose.msra.mxu0 0.0
  %3227 = vmatprep.subr.mxu0 0.0
  %3228 = vmatpush1.xpose.msra.mxu0 0.0
  %3229 = vmatprep.subr.mxu0 0.0
  %3230 = vmatpush1.xpose.msra.mxu0 0.0
  %3231 = vmatprep.subr.mxu0 0.0
  %3232 = vmatpush1.xpose.msra.mxu0 0.0
  %3233 = vmatprep.subr.mxu0 0.0
  %3234 = vmatpush1.xpose.msra.mxu0 0.0
  %3235 = vmatprep.subr.mxu0 0.0
  %3236 = vmatpush1.xpose.msra.mxu0 0.0
  %3237 = vmatprep.subr.mxu0 0.0
  %3238 = vmatpush1.xpose.msra.mxu0 0.0
  %3239 = vmatprep.subr.mxu0 0.0
  %3240 = vmatpush1.xpose.msra.mxu0 0.0
  %3241 = vmatprep.subr.mxu0 0.0
  %3242 = vmatpush1.xpose.msra.mxu0 0.0
  %3243 = vmatprep.mubr.f32.mxu0 0.0
  %3244 = vmatmul.mubr.f32.gmra.mrb[0].mxu0 %v3171
  %v3245 = vpop.f32.mrb[0].mxu0
  %v3246 = vadd.f32 0.0, %v3245
  %v3247 = vpop.f32.mrb[0].mxu0
  %3248 = vmatprep.mubr.f32.mxu0 0.0
  %3249 = vmatmul.mubr.f32.gmra.mrb[0].mxu0 %v3173
  %v3250 = vpop.f32.mrb[0].mxu0
  %v3251 = vadd.f32 0.0, %v3250
  %v3252 = vpop.f32.mrb[0].mxu0
  %3253 = vdwg.mxu0
  %3254 = vrot.lane.b32.xlu0 %v3163, 120
  %v3255 = vpop.permute.xlu0 %3254
  %3256 = vrot.lane.b32.xlu0 %v3164, 120
  %v3257 = vpop.permute.xlu0 %3256
  %3258 = vrot.lane.b32.xlu0 %v3163, 88
  %v3259 = vpop.permute.xlu0 %3258
  %3260 = vrot.lane.b32.xlu0 %v3164, 88
  %v3261 = vpop.permute.xlu0 %3260
  %v3262 = vsel %vm269, %v3255, 0
  %v3264 = vsel %vm269, %v3257, 0
  %v3266 = vsel %vm269, %v3259, 0
  %v3268 = vsel %vm269, %v3261, 0
  %3270 = vmatprep.subr.mxu0 0.0
  %3271 = vmatpush1.xpose.msra.mxu0 %v3266
  %3272 = vmatprep.subr.mxu0 0.0
  %3273 = vmatpush1.xpose.msra.mxu0 %v3268
  %3274 = vmatprep.subr.mxu0 0.0
  %3275 = vmatpush1.xpose.msra.mxu0 0.0
  %3276 = vmatprep.subr.mxu0 0.0
  %3277 = vmatpush1.xpose.msra.mxu0 0.0
  %3278 = vmatprep.subr.mxu0 0.0
  %3279 = vmatpush1.xpose.msra.mxu0 0.0
  %3280 = vmatprep.subr.mxu0 0.0
  %3281 = vmatpush1.xpose.msra.mxu0 0.0
  %3282 = vmatprep.subr.mxu0 0.0
  %3283 = vmatpush1.xpose.msra.mxu0 0.0
  %3284 = vmatprep.subr.mxu0 0.0
  %3285 = vmatpush1.xpose.msra.mxu0 0.0
  %3286 = vmatprep.subr.mxu0 0.0
  %3287 = vmatpush1.xpose.msra.mxu0 0.0
  %3288 = vmatprep.subr.mxu0 0.0
  %3289 = vmatpush1.xpose.msra.mxu0 0.0
  %3290 = vmatprep.subr.mxu0 0.0
  %3291 = vmatpush1.xpose.msra.mxu0 0.0
  %3292 = vmatprep.subr.mxu0 0.0
  %3293 = vmatpush1.xpose.msra.mxu0 0.0
  %3294 = vmatprep.subr.mxu0 0.0
  %3295 = vmatpush1.xpose.msra.mxu0 0.0
  %3296 = vmatprep.subr.mxu0 0.0
  %3297 = vmatpush1.xpose.msra.mxu0 0.0
  %3298 = vmatprep.subr.mxu0 0.0
  %3299 = vmatpush1.xpose.msra.mxu0 0.0
  %3300 = vmatprep.subr.mxu0 0.0
  %3301 = vmatpush1.xpose.msra.mxu0 0.0
  %3302 = vmatprep.subr.mxu0 0.0
  %3303 = vmatpush1.xpose.msra.mxu0 0.0
  %3304 = vmatprep.subr.mxu0 0.0
  %3305 = vmatpush1.xpose.msra.mxu0 0.0
  %3306 = vmatprep.subr.mxu0 0.0
  %3307 = vmatpush1.xpose.msra.mxu0 0.0
  %3308 = vmatprep.subr.mxu0 0.0
  %3309 = vmatpush1.xpose.msra.mxu0 0.0
  %3310 = vmatprep.subr.mxu0 0.0
  %3311 = vmatpush1.xpose.msra.mxu0 0.0
  %3312 = vmatprep.subr.mxu0 0.0
  %3313 = vmatpush1.xpose.msra.mxu0 0.0
  %3314 = vmatprep.subr.mxu0 0.0
  %3315 = vmatpush1.xpose.msra.mxu0 0.0
  %3316 = vmatprep.subr.mxu0 0.0
  %3317 = vmatpush1.xpose.msra.mxu0 0.0
  %3318 = vmatprep.subr.mxu0 0.0
  %3319 = vmatpush1.xpose.msra.mxu0 0.0
  %3320 = vmatprep.subr.mxu0 0.0
  %3321 = vmatpush1.xpose.msra.mxu0 0.0
  %3322 = vmatprep.subr.mxu0 0.0
  %3323 = vmatpush1.xpose.msra.mxu0 0.0
  %3324 = vmatprep.subr.mxu0 0.0
  %3325 = vmatpush1.xpose.msra.mxu0 0.0
  %3326 = vmatprep.subr.mxu0 0.0
  %3327 = vmatpush1.xpose.msra.mxu0 0.0
  %3328 = vmatprep.subr.mxu0 0.0
  %3329 = vmatpush1.xpose.msra.mxu0 0.0
  %3330 = vmatprep.subr.mxu0 0.0
  %3331 = vmatpush1.xpose.msra.mxu0 0.0
  %3332 = vmatprep.subr.mxu0 0.0
  %3333 = vmatpush1.xpose.msra.mxu0 0.0
  %3334 = vmatprep.mubr.f32.mxu0 0.0
  %3335 = vmatmul.mubr.f32.gmra.mrb[0].mxu0 %v3262
  %v3336 = vpop.f32.mrb[0].mxu0
  %v3337 = vadd.f32 0.0, %v3336
  %v3338 = vpop.f32.mrb[0].mxu0
  %3339 = vmatprep.mubr.f32.mxu0 0.0
  %3340 = vmatmul.mubr.f32.gmra.mrb[0].mxu0 %v3264
  %v3341 = vpop.f32.mrb[0].mxu0
  %v3342 = vadd.f32 0.0, %v3341
  %v3343 = vpop.f32.mrb[0].mxu0
  %3344 = vdwg.mxu0
  %3345 = vrot.lane.b32.xlu0 %v3163, 112
  %v3346 = vpop.permute.xlu0 %3345
  %3347 = vrot.lane.b32.xlu0 %v3164, 112
  %v3348 = vpop.permute.xlu0 %3347
  %3349 = vrot.lane.b32.xlu0 %v3163, 80
  %v3350 = vpop.permute.xlu0 %3349
  %3351 = vrot.lane.b32.xlu0 %v3164, 80
  %v3352 = vpop.permute.xlu0 %3351
  %v3353 = vsel %vm269, %v3346, 0
  %v3355 = vsel %vm269, %v3348, 0
  %v3357 = vsel %vm269, %v3350, 0
  %v3359 = vsel %vm269, %v3352, 0
  %3361 = vmatprep.subr.mxu0 0.0
  %3362 = vmatpush1.xpose.msra.mxu0 %v3357
  %3363 = vmatprep.subr.mxu0 0.0
  %3364 = vmatpush1.xpose.msra.mxu0 %v3359
  %3365 = vmatprep.subr.mxu0 0.0
  %3366 = vmatpush1.xpose.msra.mxu0 0.0
  %3367 = vmatprep.subr.mxu0 0.0
  %3368 = vmatpush1.xpose.msra.mxu0 0.0
  %3369 = vmatprep.subr.mxu0 0.0
  %3370 = vmatpush1.xpose.msra.mxu0 0.0
  %3371 = vmatprep.subr.mxu0 0.0
  %3372 = vmatpush1.xpose.msra.mxu0 0.0
  %3373 = vmatprep.subr.mxu0 0.0
  %3374 = vmatpush1.xpose.msra.mxu0 0.0
  %3375 = vmatprep.subr.mxu0 0.0
  %3376 = vmatpush1.xpose.msra.mxu0 0.0
  %3377 = vmatprep.subr.mxu0 0.0
  %3378 = vmatpush1.xpose.msra.mxu0 0.0
  %3379 = vmatprep.subr.mxu0 0.0
  %3380 = vmatpush1.xpose.msra.mxu0 0.0
  %3381 = vmatprep.subr.mxu0 0.0
  %3382 = vmatpush1.xpose.msra.mxu0 0.0
  %3383 = vmatprep.subr.mxu0 0.0
  %3384 = vmatpush1.xpose.msra.mxu0 0.0
  %3385 = vmatprep.subr.mxu0 0.0
  %3386 = vmatpush1.xpose.msra.mxu0 0.0
  %3387 = vmatprep.subr.mxu0 0.0
  %3388 = vmatpush1.xpose.msra.mxu0 0.0
  %3389 = vmatprep.subr.mxu0 0.0
  %3390 = vmatpush1.xpose.msra.mxu0 0.0
  %3391 = vmatprep.subr.mxu0 0.0
  %3392 = vmatpush1.xpose.msra.mxu0 0.0
  %3393 = vmatprep.subr.mxu0 0.0
  %3394 = vmatpush1.xpose.msra.mxu0 0.0
  %3395 = vmatprep.subr.mxu0 0.0
  %3396 = vmatpush1.xpose.msra.mxu0 0.0
  %3397 = vmatprep.subr.mxu0 0.0
  %3398 = vmatpush1.xpose.msra.mxu0 0.0
  %3399 = vmatprep.subr.mxu0 0.0
  %3400 = vmatpush1.xpose.msra.mxu0 0.0
  %3401 = vmatprep.subr.mxu0 0.0
  %3402 = vmatpush1.xpose.msra.mxu0 0.0
  %3403 = vmatprep.subr.mxu0 0.0
  %3404 = vmatpush1.xpose.msra.mxu0 0.0
  %3405 = vmatprep.subr.mxu0 0.0
  %3406 = vmatpush1.xpose.msra.mxu0 0.0
  %3407 = vmatprep.subr.mxu0 0.0
  %3408 = vmatpush1.xpose.msra.mxu0 0.0
  %3409 = vmatprep.subr.mxu0 0.0
  %3410 = vmatpush1.xpose.msra.mxu0 0.0
  %3411 = vmatprep.subr.mxu0 0.0
  %3412 = vmatpush1.xpose.msra.mxu0 0.0
  %3413 = vmatprep.subr.mxu0 0.0
  %3414 = vmatpush1.xpose.msra.mxu0 0.0
  %3415 = vmatprep.subr.mxu0 0.0
  %3416 = vmatpush1.xpose.msra.mxu0 0.0
  %3417 = vmatprep.subr.mxu0 0.0
  %3418 = vmatpush1.xpose.msra.mxu0 0.0
  %3419 = vmatprep.subr.mxu0 0.0
  %3420 = vmatpush1.xpose.msra.mxu0 0.0
  %3421 = vmatprep.subr.mxu0 0.0
  %3422 = vmatpush1.xpose.msra.mxu0 0.0
  %3423 = vmatprep.subr.mxu0 0.0
  %3424 = vmatpush1.xpose.msra.mxu0 0.0
  %3425 = vmatprep.mubr.f32.mxu0 0.0
  %3426 = vmatmul.mubr.f32.gmra.mrb[0].mxu0 %v3353
  %v3427 = vpop.f32.mrb[0].mxu0
  %v3428 = vadd.f32 0.0, %v3427
  %v3429 = vpop.f32.mrb[0].mxu0
  %3430 = vmatprep.mubr.f32.mxu0 0.0
  %3431 = vmatmul.mubr.f32.gmra.mrb[0].mxu0 %v3355
  %v3432 = vpop.f32.mrb[0].mxu0
  %v3433 = vadd.f32 0.0, %v3432
  %v3434 = vpop.f32.mrb[0].mxu0
  %3435 = vdwg.mxu0
  %3436 = vrot.lane.b32.xlu0 %v3163, 104
  %v3437 = vpop.permute.xlu0 %3436
  %3438 = vrot.lane.b32.xlu0 %v3164, 104
  %v3439 = vpop.permute.xlu0 %3438
  %3440 = vrot.lane.b32.xlu0 %v3163, 72
  %v3441 = vpop.permute.xlu0 %3440
  %3442 = vrot.lane.b32.xlu0 %v3164, 72
  %v3443 = vpop.permute.xlu0 %3442
  %v3444 = vsel %vm269, %v3437, 0
  %v3446 = vsel %vm269, %v3439, 0
  %v3448 = vsel %vm269, %v3441, 0
  %v3450 = vsel %vm269, %v3443, 0
  %3452 = vmatprep.subr.mxu0 0.0
  %3453 = vmatpush1.xpose.msra.mxu0 %v3448
  %3454 = vmatprep.subr.mxu0 0.0
  %3455 = vmatpush1.xpose.msra.mxu0 %v3450
  %3456 = vmatprep.subr.mxu0 0.0
  %3457 = vmatpush1.xpose.msra.mxu0 0.0
  %3458 = vmatprep.subr.mxu0 0.0
  %3459 = vmatpush1.xpose.msra.mxu0 0.0
  %3460 = vmatprep.subr.mxu0 0.0
  %3461 = vmatpush1.xpose.msra.mxu0 0.0
  %3462 = vmatprep.subr.mxu0 0.0
  %3463 = vmatpush1.xpose.msra.mxu0 0.0
  %3464 = vmatprep.subr.mxu0 0.0
  %3465 = vmatpush1.xpose.msra.mxu0 0.0
  %3466 = vmatprep.subr.mxu0 0.0
  %3467 = vmatpush1.xpose.msra.mxu0 0.0
  %3468 = vmatprep.subr.mxu0 0.0
  %3469 = vmatpush1.xpose.msra.mxu0 0.0
  %3470 = vmatprep.subr.mxu0 0.0
  %3471 = vmatpush1.xpose.msra.mxu0 0.0
  %3472 = vmatprep.subr.mxu0 0.0
  %3473 = vmatpush1.xpose.msra.mxu0 0.0
  %3474 = vmatprep.subr.mxu0 0.0
  %3475 = vmatpush1.xpose.msra.mxu0 0.0
  %3476 = vmatprep.subr.mxu0 0.0
  %3477 = vmatpush1.xpose.msra.mxu0 0.0
  %3478 = vmatprep.subr.mxu0 0.0
  %3479 = vmatpush1.xpose.msra.mxu0 0.0
  %3480 = vmatprep.subr.mxu0 0.0
  %3481 = vmatpush1.xpose.msra.mxu0 0.0
  %3482 = vmatprep.subr.mxu0 0.0
  %3483 = vmatpush1.xpose.msra.mxu0 0.0
  %3484 = vmatprep.subr.mxu0 0.0
  %3485 = vmatpush1.xpose.msra.mxu0 0.0
  %3486 = vmatprep.subr.mxu0 0.0
  %3487 = vmatpush1.xpose.msra.mxu0 0.0
  %3488 = vmatprep.subr.mxu0 0.0
  %3489 = vmatpush1.xpose.msra.mxu0 0.0
  %3490 = vmatprep.subr.mxu0 0.0
  %3491 = vmatpush1.xpose.msra.mxu0 0.0
  %3492 = vmatprep.subr.mxu0 0.0
  %3493 = vmatpush1.xpose.msra.mxu0 0.0
  %3494 = vmatprep.subr.mxu0 0.0
  %3495 = vmatpush1.xpose.msra.mxu0 0.0
  %3496 = vmatprep.subr.mxu0 0.0
  %3497 = vmatpush1.xpose.msra.mxu0 0.0
  %3498 = vmatprep.subr.mxu0 0.0
  %3499 = vmatpush1.xpose.msra.mxu0 0.0
  %3500 = vmatprep.subr.mxu0 0.0
  %3501 = vmatpush1.xpose.msra.mxu0 0.0
  %3502 = vmatprep.subr.mxu0 0.0
  %3503 = vmatpush1.xpose.msra.mxu0 0.0
  %3504 = vmatprep.subr.mxu0 0.0
  %3505 = vmatpush1.xpose.msra.mxu0 0.0
  %3506 = vmatprep.subr.mxu0 0.0
  %3507 = vmatpush1.xpose.msra.mxu0 0.0
  %3508 = vmatprep.subr.mxu0 0.0
  %3509 = vmatpush1.xpose.msra.mxu0 0.0
  %3510 = vmatprep.subr.mxu0 0.0
  %3511 = vmatpush1.xpose.msra.mxu0 0.0
  %3512 = vmatprep.subr.mxu0 0.0
  %3513 = vmatpush1.xpose.msra.mxu0 0.0
  %3514 = vmatprep.subr.mxu0 0.0
  %3515 = vmatpush1.xpose.msra.mxu0 0.0
  %3516 = vmatprep.mubr.f32.mxu0 0.0
  %3517 = vmatmul.mubr.f32.gmra.mrb[0].mxu0 %v3444
  %v3518 = vpop.f32.mrb[0].mxu0
  %v3519 = vadd.f32 0.0, %v3518
  %v3520 = vpop.f32.mrb[0].mxu0
  %3521 = vmatprep.mubr.f32.mxu0 0.0
  %3522 = vmatmul.mubr.f32.gmra.mrb[0].mxu0 %v3446
  %v3523 = vpop.f32.mrb[0].mxu0
  %v3524 = vadd.f32 0.0, %v3523
  %v3525 = vpop.f32.mrb[0].mxu0
  %3526 = vdwg.mxu0
  %v3527 = vmul.f32 %v3246, 0.35355338
  %v3528 = vmul.f32 %v3251, 0.35355338
  %v3529 = vmul.f32 %v3337, 0.35355338
  %v3530 = vmul.f32 %v3342, 0.35355338
  %v3531 = vmul.f32 %v3428, 0.35355338
  %v3532 = vmul.f32 %v3433, 0.35355338
  %v3533 = vmul.f32 %v3519, 0.35355338
  %v3534 = vmul.f32 %v3524, 0.35355338
  %v3535 = vadd.f32 %v3527, %v50
  %v3536 = vadd.f32 %v3528, %v51
  %v3537 = vadd.f32 %v3529, %v52
  %v3538 = vadd.f32 %v3530, %v53
  %v3539 = vadd.f32 %v3531, %v54
  %v3540 = vadd.f32 %v3532, %v55
  %v3541 = vadd.f32 %v3533, %v56
  %v3542 = vadd.f32 %v3534, %v57
  %v3543 = vsel %vm642, %v3535, -inf
  %3544 = vmax.xlane.f32.xlu0 %v3543
  %v3545 = vpop.xlane.xlu0 %3544
  %v3546 = vsel %vm642, %v3536, -inf
  %3547 = vmax.xlane.f32.xlu0 %v3546
  %v3548 = vpop.xlane.xlu0 %3547
  %v3549 = vsel %vm642, %v3537, -inf
  %3550 = vmax.xlane.f32.xlu0 %v3549
  %v3551 = vpop.xlane.xlu0 %3550
  %v3552 = vsel %vm642, %v3538, -inf
  %3553 = vmax.xlane.f32.xlu0 %v3552
  %v3554 = vpop.xlane.xlu0 %3553
  %v3555 = vsel %vm642, %v3539, -inf
  %3556 = vmax.xlane.f32.xlu0 %v3555
  %v3557 = vpop.xlane.xlu0 %3556
  %v3558 = vsel %vm642, %v3540, -inf
  %3559 = vmax.xlane.f32.xlu0 %v3558
  %v3560 = vpop.xlane.xlu0 %3559
  %v3561 = vsel %vm642, %v3541, -inf
  %3562 = vmax.xlane.f32.xlu0 %v3561
  %v3563 = vpop.xlane.xlu0 %3562
  %v3564 = vsel %vm642, %v3542, -inf
  %3565 = vmax.xlane.f32.xlu0 %v3564
  %v3566 = vpop.xlane.xlu0 %3565
  %v3567 = vsub.f32 %v3535, %v3545
  %v3568 = vsub.f32 %v3536, %v3548
  %v3569 = vsub.f32 %v3537, %v3551
  %v3570 = vsub.f32 %v3538, %v3554
  %v3571 = vsub.f32 %v3539, %v3557
  %v3572 = vsub.f32 %v3540, %v3560
  %v3573 = vsub.f32 %v3541, %v3563
  %v3574 = vsub.f32 %v3542, %v3566
  %v3575 = vmul.f32 %v3567, 1.442695
  %v3576 = vpow.pop %v3575
  %v3577 = vmul.f32 %v3568, 1.442695
  %v3578 = vpow.pop %v3577
  %v3579 = vmul.f32 %v3569, 1.442695
  %v3580 = vpow.pop %v3579
  %v3581 = vmul.f32 %v3570, 1.442695
  %v3582 = vpow.pop %v3581
  %v3583 = vmul.f32 %v3571, 1.442695
  %v3584 = vpow.pop %v3583
  %v3585 = vmul.f32 %v3572, 1.442695
  %v3586 = vpow.pop %v3585
  %v3587 = vmul.f32 %v3573, 1.442695
  %v3588 = vpow.pop %v3587
  %v3589 = vmul.f32 %v3574, 1.442695
  %v3590 = vpow.pop %v3589
  %v3591 = vsel %vm642, %v3576, 0.0
  %3592 = vadd.xlane.f32.xlu0 %v3591
  %v3593 = vpop.xlane.xlu0 %3592
  %v3594 = vsel %vm642, %v3578, 0.0
  %3595 = vadd.xlane.f32.xlu0 %v3594
  %v3596 = vpop.xlane.xlu0 %3595
  %v3597 = vsel %vm642, %v3580, 0.0
  %3598 = vadd.xlane.f32.xlu0 %v3597
  %v3599 = vpop.xlane.xlu0 %3598
  %v3600 = vsel %vm642, %v3582, 0.0
  %3601 = vadd.xlane.f32.xlu0 %v3600
  %v3602 = vpop.xlane.xlu0 %3601
  %v3603 = vsel %vm642, %v3584, 0.0
  %3604 = vadd.xlane.f32.xlu0 %v3603
  %v3605 = vpop.xlane.xlu0 %3604
  %v3606 = vsel %vm642, %v3586, 0.0
  %3607 = vadd.xlane.f32.xlu0 %v3606
  %v3608 = vpop.xlane.xlu0 %3607
  %v3609 = vsel %vm642, %v3588, 0.0
  %3610 = vadd.xlane.f32.xlu0 %v3609
  %v3611 = vpop.xlane.xlu0 %3610
  %v3612 = vsel %vm642, %v3590, 0.0
  %3613 = vadd.xlane.f32.xlu0 %v3612
  %v3614 = vpop.xlane.xlu0 %3613
  %v3615 = vrcp.pop %v3593
  %v3616 = vrcp.pop %v3596
  %v3617 = vrcp.pop %v3599
  %v3618 = vrcp.pop %v3602
  %v3619 = vrcp.pop %v3605
  %v3620 = vrcp.pop %v3608
  %v3621 = vrcp.pop %v3611
  %v3622 = vrcp.pop %v3614
  %v3623 = vmul.f32 %v3576, %v3615
  %v3624 = vmul.f32 %v3578, %v3616
  %v3625 = vmul.f32 %v3580, %v3617
  %v3626 = vmul.f32 %v3582, %v3618
  %v3627 = vmul.f32 %v3584, %v3619
  %v3628 = vmul.f32 %v3586, %v3620
  %v3629 = vmul.f32 %v3588, %v3621
  %v3630 = vmul.f32 %v3590, %v3622
  %3631 = vrot.lane.b32.xlu0 %v3072, 64
  %v3632 = vpop.permute.xlu0 %3631
  %3633 = vrot.lane.b32.xlu0 %v3075, 64
  %v3634 = vpop.permute.xlu0 %3633
  %v3638 = vsel %vm642, %v3623, 0
  %v3641 = vsel %vm642, %v3624, 0
  %3643 = vmatprep.subr.mxu0 0.0
  %3644 = vmatpush1.msra.mxu0 %v3632
  %3645 = vmatprep.subr.mxu0 0.0
  %3646 = vmatpush1.msra.mxu0 %v3634
  %3647 = vmatprep.subr.mxu0 0.0
  %3648 = vmatpush1.msra.mxu0 0.0
  %3649 = vmatprep.subr.mxu0 0.0
  %3650 = vmatpush1.msra.mxu0 0.0
  %3651 = vmatprep.subr.mxu0 0.0
  %3652 = vmatpush1.msra.mxu0 0.0
  %3653 = vmatprep.subr.mxu0 0.0
  %3654 = vmatpush1.msra.mxu0 0.0
  %3655 = vmatprep.subr.mxu0 0.0
  %3656 = vmatpush1.msra.mxu0 0.0
  %3657 = vmatprep.subr.mxu0 0.0
  %3658 = vmatpush1.msra.mxu0 0.0
  %3659 = vmatprep.subr.mxu0 0.0
  %3660 = vmatpush1.msra.mxu0 0.0
  %3661 = vmatprep.subr.mxu0 0.0
  %3662 = vmatpush1.msra.mxu0 0.0
  %3663 = vmatprep.subr.mxu0 0.0
  %3664 = vmatpush1.msra.mxu0 0.0
  %3665 = vmatprep.subr.mxu0 0.0
  %3666 = vmatpush1.msra.mxu0 0.0
  %3667 = vmatprep.subr.mxu0 0.0
  %3668 = vmatpush1.msra.mxu0 0.0
  %3669 = vmatprep.subr.mxu0 0.0
  %3670 = vmatpush1.msra.mxu0 0.0
  %3671 = vmatprep.subr.mxu0 0.0
  %3672 = vmatpush1.msra.mxu0 0.0
  %3673 = vmatprep.subr.mxu0 0.0
  %3674 = vmatpush1.msra.mxu0 0.0
  %3675 = vmatprep.subr.mxu0 0.0
  %3676 = vmatpush1.msra.mxu0 0.0
  %3677 = vmatprep.subr.mxu0 0.0
  %3678 = vmatpush1.msra.mxu0 0.0
  %3679 = vmatprep.subr.mxu0 0.0
  %3680 = vmatpush1.msra.mxu0 0.0
  %3681 = vmatprep.subr.mxu0 0.0
  %3682 = vmatpush1.msra.mxu0 0.0
  %3683 = vmatprep.subr.mxu0 0.0
  %3684 = vmatpush1.msra.mxu0 0.0
  %3685 = vmatprep.subr.mxu0 0.0
  %3686 = vmatpush1.msra.mxu0 0.0
  %3687 = vmatprep.subr.mxu0 0.0
  %3688 = vmatpush1.msra.mxu0 0.0
  %3689 = vmatprep.subr.mxu0 0.0
  %3690 = vmatpush1.msra.mxu0 0.0
  %3691 = vmatprep.subr.mxu0 0.0
  %3692 = vmatpush1.msra.mxu0 0.0
  %3693 = vmatprep.subr.mxu0 0.0
  %3694 = vmatpush1.msra.mxu0 0.0
  %3695 = vmatprep.subr.mxu0 0.0
  %3696 = vmatpush1.msra.mxu0 0.0
  %3697 = vmatprep.subr.mxu0 0.0
  %3698 = vmatpush1.msra.mxu0 0.0
  %3699 = vmatprep.subr.mxu0 0.0
  %3700 = vmatpush1.msra.mxu0 0.0
  %3701 = vmatprep.subr.mxu0 0.0
  %3702 = vmatpush1.msra.mxu0 0.0
  %3703 = vmatprep.subr.mxu0 0.0
  %3704 = vmatpush1.msra.mxu0 0.0
  %3705 = vmatprep.subr.mxu0 0.0
  %3706 = vmatpush1.msra.mxu0 0.0
  %3707 = vmatprep.mubr.f32.mxu0 0.0
  %3708 = vmatmul.mubr.f32.gmra.mrb[0].mxu0 %v3638
  %v3709 = vpop.f32.mrb[0].mxu0
  %v3710 = vadd.f32 0.0, %v3709
  %v3711 = vpop.f32.mrb[0].mxu0
  %3712 = vmatprep.mubr.f32.mxu0 0.0
  %3713 = vmatmul.mubr.f32.gmra.mrb[0].mxu0 %v3641
  %v3714 = vpop.f32.mrb[0].mxu0
  %v3715 = vadd.f32 0.0, %v3714
  %v3716 = vpop.f32.mrb[0].mxu0
  %3717 = vdwg.mxu0
  %v3718 = vpack.c.bf16 %v3715, %v3710
  %v3720 = vsel %vm269, %v3718, 0
  %v3723 = vsel %vm822, %v2990, 0
  %3725 = vmatprep.subr.bf16.mxu0 0
  %3726 = vmatpush1.bf16.msra.mxu0 %v3723
  %3727 = vmatprep.subr.bf16.mxu0 0
  %3728 = vmatpush1.bf16.msra.mxu0 0
  %3729 = vmatprep.subr.bf16.mxu0 0
  %3730 = vmatpush1.bf16.msra.mxu0 0
  %3731 = vmatprep.subr.bf16.mxu0 0
  %3732 = vmatpush1.bf16.msra.mxu0 0
  %3733 = vmatprep.subr.bf16.mxu0 0
  %3734 = vmatpush1.bf16.msra.mxu0 0
  %3735 = vmatprep.subr.bf16.mxu0 0
  %3736 = vmatpush1.bf16.msra.mxu0 0
  %3737 = vmatprep.subr.bf16.mxu0 0
  %3738 = vmatpush1.bf16.msra.mxu0 0
  %3739 = vmatprep.subr.bf16.mxu0 0
  %3740 = vmatpush1.bf16.msra.mxu0 0
  %3741 = vmatprep.subr.bf16.mxu0 0
  %3742 = vmatpush1.bf16.msra.mxu0 0
  %3743 = vmatprep.subr.bf16.mxu0 0
  %3744 = vmatpush1.bf16.msra.mxu0 0
  %3745 = vmatprep.subr.bf16.mxu0 0
  %3746 = vmatpush1.bf16.msra.mxu0 0
  %3747 = vmatprep.subr.bf16.mxu0 0
  %3748 = vmatpush1.bf16.msra.mxu0 0
  %3749 = vmatprep.subr.bf16.mxu0 0
  %3750 = vmatpush1.bf16.msra.mxu0 0
  %3751 = vmatprep.subr.bf16.mxu0 0
  %3752 = vmatpush1.bf16.msra.mxu0 0
  %3753 = vmatprep.subr.bf16.mxu0 0
  %3754 = vmatpush1.bf16.msra.mxu0 0
  %3755 = vmatprep.subr.bf16.mxu0 0
  %3756 = vmatpush1.bf16.msra.mxu0 0
  %3757 = vmatprep.mubr.bf16.mxu0 0
  %3758 = vmatmul.mubr.bf16.gmra.mrb[0].mxu0 %v3720
  %v3759 = vpop.f32.mrb[0].mxu0
  %v3760 = vadd.f32 0.0, %v3759
  %v3761 = vpop.f32.mrb[0].mxu0
  %v3762 = vpop.f32.mrb[0].mxu0
  %v3763 = vadd.f32 0.0, %v3762
  %v3764 = vpop.f32.mrb[0].mxu0
  %3765 = vdwg.mxu0
  %v3766 = vadd.f32 %v2979, %v3760
  %v3767 = vadd.f32 %v2982, %v3763
  %3768 = vrot.lane.b32.xlu0 %v3072, 56
  %v3769 = vpop.permute.xlu0 %3768
  %3770 = vrot.lane.b32.xlu0 %v3075, 56
  %v3771 = vpop.permute.xlu0 %3770
  %v3775 = vsel %vm642, %v3625, 0
  %v3778 = vsel %vm642, %v3626, 0
  %3780 = vmatprep.subr.mxu0 0.0
  %3781 = vmatpush1.msra.mxu0 %v3769
  %3782 = vmatprep.subr.mxu0 0.0
  %3783 = vmatpush1.msra.mxu0 %v3771
  %3784 = vmatprep.subr.mxu0 0.0
  %3785 = vmatpush1.msra.mxu0 0.0
  %3786 = vmatprep.subr.mxu0 0.0
  %3787 = vmatpush1.msra.mxu0 0.0
  %3788 = vmatprep.subr.mxu0 0.0
  %3789 = vmatpush1.msra.mxu0 0.0
  %3790 = vmatprep.subr.mxu0 0.0
  %3791 = vmatpush1.msra.mxu0 0.0
  %3792 = vmatprep.subr.mxu0 0.0
  %3793 = vmatpush1.msra.mxu0 0.0
  %3794 = vmatprep.subr.mxu0 0.0
  %3795 = vmatpush1.msra.mxu0 0.0
  %3796 = vmatprep.subr.mxu0 0.0
  %3797 = vmatpush1.msra.mxu0 0.0
  %3798 = vmatprep.subr.mxu0 0.0
  %3799 = vmatpush1.msra.mxu0 0.0
  %3800 = vmatprep.subr.mxu0 0.0
  %3801 = vmatpush1.msra.mxu0 0.0
  %3802 = vmatprep.subr.mxu0 0.0
  %3803 = vmatpush1.msra.mxu0 0.0
  %3804 = vmatprep.subr.mxu0 0.0
  %3805 = vmatpush1.msra.mxu0 0.0
  %3806 = vmatprep.subr.mxu0 0.0
  %3807 = vmatpush1.msra.mxu0 0.0
  %3808 = vmatprep.subr.mxu0 0.0
  %3809 = vmatpush1.msra.mxu0 0.0
  %3810 = vmatprep.subr.mxu0 0.0
  %3811 = vmatpush1.msra.mxu0 0.0
  %3812 = vmatprep.subr.mxu0 0.0
  %3813 = vmatpush1.msra.mxu0 0.0
  %3814 = vmatprep.subr.mxu0 0.0
  %3815 = vmatpush1.msra.mxu0 0.0
  %3816 = vmatprep.subr.mxu0 0.0
  %3817 = vmatpush1.msra.mxu0 0.0
  %3818 = vmatprep.subr.mxu0 0.0
  %3819 = vmatpush1.msra.mxu0 0.0
  %3820 = vmatprep.subr.mxu0 0.0
  %3821 = vmatpush1.msra.mxu0 0.0
  %3822 = vmatprep.subr.mxu0 0.0
  %3823 = vmatpush1.msra.mxu0 0.0
  %3824 = vmatprep.subr.mxu0 0.0
  %3825 = vmatpush1.msra.mxu0 0.0
  %3826 = vmatprep.subr.mxu0 0.0
  %3827 = vmatpush1.msra.mxu0 0.0
  %3828 = vmatprep.subr.mxu0 0.0
  %3829 = vmatpush1.msra.mxu0 0.0
  %3830 = vmatprep.subr.mxu0 0.0
  %3831 = vmatpush1.msra.mxu0 0.0
  %3832 = vmatprep.subr.mxu0 0.0
  %3833 = vmatpush1.msra.mxu0 0.0
  %3834 = vmatprep.subr.mxu0 0.0
  %3835 = vmatpush1.msra.mxu0 0.0
  %3836 = vmatprep.subr.mxu0 0.0
  %3837 = vmatpush1.msra.mxu0 0.0
  %3838 = vmatprep.subr.mxu0 0.0
  %3839 = vmatpush1.msra.mxu0 0.0
  %3840 = vmatprep.subr.mxu0 0.0
  %3841 = vmatpush1.msra.mxu0 0.0
  %3842 = vmatprep.subr.mxu0 0.0
  %3843 = vmatpush1.msra.mxu0 0.0
  %3844 = vmatprep.mubr.f32.mxu0 0.0
  %3845 = vmatmul.mubr.f32.gmra.mrb[0].mxu0 %v3775
  %v3846 = vpop.f32.mrb[0].mxu0
  %v3847 = vadd.f32 0.0, %v3846
  %v3848 = vpop.f32.mrb[0].mxu0
  %3849 = vmatprep.mubr.f32.mxu0 0.0
  %3850 = vmatmul.mubr.f32.gmra.mrb[0].mxu0 %v3778
  %v3851 = vpop.f32.mrb[0].mxu0
  %v3852 = vadd.f32 0.0, %v3851
  %v3853 = vpop.f32.mrb[0].mxu0
  %3854 = vdwg.mxu0
  %v3855 = vpack.c.bf16 %v3852, %v3847
  %v3857 = vunpack.c.l.b16 %v2990
  %v3858 = vpack.c.b16 %v3857, %v3857
  %3859 = vrot.lane.b32.xlu0 %v3858, 96
  %v3860 = vpop.permute.xlu0 %3859
  %v3862 = vsel %vm269, %v3855, 0
  %v3865 = vsel %vm822, %v3860, 0
  %3867 = vmatprep.subr.bf16.mxu0 0
  %3868 = vmatpush1.bf16.msra.mxu0 %v3865
  %3869 = vmatprep.subr.bf16.mxu0 0
  %3870 = vmatpush1.bf16.msra.mxu0 0
  %3871 = vmatprep.subr.bf16.mxu0 0
  %3872 = vmatpush1.bf16.msra.mxu0 0
  %3873 = vmatprep.subr.bf16.mxu0 0
  %3874 = vmatpush1.bf16.msra.mxu0 0
  %3875 = vmatprep.subr.bf16.mxu0 0
  %3876 = vmatpush1.bf16.msra.mxu0 0
  %3877 = vmatprep.subr.bf16.mxu0 0
  %3878 = vmatpush1.bf16.msra.mxu0 0
  %3879 = vmatprep.subr.bf16.mxu0 0
  %3880 = vmatpush1.bf16.msra.mxu0 0
  %3881 = vmatprep.subr.bf16.mxu0 0
  %3882 = vmatpush1.bf16.msra.mxu0 0
  %3883 = vmatprep.subr.bf16.mxu0 0
  %3884 = vmatpush1.bf16.msra.mxu0 0
  %3885 = vmatprep.subr.bf16.mxu0 0
  %3886 = vmatpush1.bf16.msra.mxu0 0
  %3887 = vmatprep.subr.bf16.mxu0 0
  %3888 = vmatpush1.bf16.msra.mxu0 0
  %3889 = vmatprep.subr.bf16.mxu0 0
  %3890 = vmatpush1.bf16.msra.mxu0 0
  %3891 = vmatprep.subr.bf16.mxu0 0
  %3892 = vmatpush1.bf16.msra.mxu0 0
  %3893 = vmatprep.subr.bf16.mxu0 0
  %3894 = vmatpush1.bf16.msra.mxu0 0
  %3895 = vmatprep.subr.bf16.mxu0 0
  %3896 = vmatpush1.bf16.msra.mxu0 0
  %3897 = vmatprep.subr.bf16.mxu0 0
  %3898 = vmatpush1.bf16.msra.mxu0 0
  %3899 = vmatprep.mubr.bf16.mxu0 0
  %3900 = vmatmul.mubr.bf16.gmra.mrb[0].mxu0 %v3862
  %v3901 = vpop.f32.mrb[0].mxu0
  %v3902 = vadd.f32 0.0, %v3901
  %v3903 = vpop.f32.mrb[0].mxu0
  %v3904 = vpop.f32.mrb[0].mxu0
  %v3905 = vadd.f32 0.0, %v3904
  %v3906 = vpop.f32.mrb[0].mxu0
  %3907 = vdwg.mxu0
  %v3908 = vadd.f32 %v3766, %v3902
  %v3909 = vadd.f32 %v3767, %v3905
  %3910 = vrot.lane.b32.xlu0 %v3072, 48
  %v3911 = vpop.permute.xlu0 %3910
  %3912 = vrot.lane.b32.xlu0 %v3075, 48
  %v3913 = vpop.permute.xlu0 %3912
  %v3917 = vsel %vm642, %v3627, 0
  %v3920 = vsel %vm642, %v3628, 0
  %3922 = vmatprep.subr.mxu0 0.0
  %3923 = vmatpush1.msra.mxu0 %v3911
  %3924 = vmatprep.subr.mxu0 0.0
  %3925 = vmatpush1.msra.mxu0 %v3913
  %3926 = vmatprep.subr.mxu0 0.0
  %3927 = vmatpush1.msra.mxu0 0.0
  %3928 = vmatprep.subr.mxu0 0.0
  %3929 = vmatpush1.msra.mxu0 0.0
  %3930 = vmatprep.subr.mxu0 0.0
  %3931 = vmatpush1.msra.mxu0 0.0
  %3932 = vmatprep.subr.mxu0 0.0
  %3933 = vmatpush1.msra.mxu0 0.0
  %3934 = vmatprep.subr.mxu0 0.0
  %3935 = vmatpush1.msra.mxu0 0.0
  %3936 = vmatprep.subr.mxu0 0.0
  %3937 = vmatpush1.msra.mxu0 0.0
  %3938 = vmatprep.subr.mxu0 0.0
  %3939 = vmatpush1.msra.mxu0 0.0
  %3940 = vmatprep.subr.mxu0 0.0
  %3941 = vmatpush1.msra.mxu0 0.0
  %3942 = vmatprep.subr.mxu0 0.0
  %3943 = vmatpush1.msra.mxu0 0.0
  %3944 = vmatprep.subr.mxu0 0.0
  %3945 = vmatpush1.msra.mxu0 0.0
  %3946 = vmatprep.subr.mxu0 0.0
  %3947 = vmatpush1.msra.mxu0 0.0
  %3948 = vmatprep.subr.mxu0 0.0
  %3949 = vmatpush1.msra.mxu0 0.0
  %3950 = vmatprep.subr.mxu0 0.0
  %3951 = vmatpush1.msra.mxu0 0.0
  %3952 = vmatprep.subr.mxu0 0.0
  %3953 = vmatpush1.msra.mxu0 0.0
  %3954 = vmatprep.subr.mxu0 0.0
  %3955 = vmatpush1.msra.mxu0 0.0
  %3956 = vmatprep.subr.mxu0 0.0
  %3957 = vmatpush1.msra.mxu0 0.0
  %3958 = vmatprep.subr.mxu0 0.0
  %3959 = vmatpush1.msra.mxu0 0.0
  %3960 = vmatprep.subr.mxu0 0.0
  %3961 = vmatpush1.msra.mxu0 0.0
  %3962 = vmatprep.subr.mxu0 0.0
  %3963 = vmatpush1.msra.mxu0 0.0
  %3964 = vmatprep.subr.mxu0 0.0
  %3965 = vmatpush1.msra.mxu0 0.0
  %3966 = vmatprep.subr.mxu0 0.0
  %3967 = vmatpush1.msra.mxu0 0.0
  %3968 = vmatprep.subr.mxu0 0.0
  %3969 = vmatpush1.msra.mxu0 0.0
  %3970 = vmatprep.subr.mxu0 0.0
  %3971 = vmatpush1.msra.mxu0 0.0
  %3972 = vmatprep.subr.mxu0 0.0
  %3973 = vmatpush1.msra.mxu0 0.0
  %3974 = vmatprep.subr.mxu0 0.0
  %3975 = vmatpush1.msra.mxu0 0.0
  %3976 = vmatprep.subr.mxu0 0.0
  %3977 = vmatpush1.msra.mxu0 0.0
  %3978 = vmatprep.subr.mxu0 0.0
  %3979 = vmatpush1.msra.mxu0 0.0
  %3980 = vmatprep.subr.mxu0 0.0
  %3981 = vmatpush1.msra.mxu0 0.0
  %3982 = vmatprep.subr.mxu0 0.0
  %3983 = vmatpush1.msra.mxu0 0.0
  %3984 = vmatprep.subr.mxu0 0.0
  %3985 = vmatpush1.msra.mxu0 0.0
  %3986 = vmatprep.mubr.f32.mxu0 0.0
  %3987 = vmatmul.mubr.f32.gmra.mrb[0].mxu0 %v3917
  %v3988 = vpop.f32.mrb[0].mxu0
  %v3989 = vadd.f32 0.0, %v3988
  %v3990 = vpop.f32.mrb[0].mxu0
  %3991 = vmatprep.mubr.f32.mxu0 0.0
  %3992 = vmatmul.mubr.f32.gmra.mrb[0].mxu0 %v3920
  %v3993 = vpop.f32.mrb[0].mxu0
  %v3994 = vadd.f32 0.0, %v3993
  %v3995 = vpop.f32.mrb[0].mxu0
  %3996 = vdwg.mxu0
  %v3997 = vpack.c.bf16 %v3994, %v3989
  %3998 = vrot.lane.b32.xlu0 %v3858, 64
  %v3999 = vpop.permute.xlu0 %3998
  %v4001 = vsel %vm269, %v3997, 0
  %v4004 = vsel %vm822, %v3999, 0
  %4006 = vmatprep.subr.bf16.mxu0 0
  %4007 = vmatpush1.bf16.msra.mxu0 %v4004
  %4008 = vmatprep.subr.bf16.mxu0 0
  %4009 = vmatpush1.bf16.msra.mxu0 0
  %4010 = vmatprep.subr.bf16.mxu0 0
  %4011 = vmatpush1.bf16.msra.mxu0 0
  %4012 = vmatprep.subr.bf16.mxu0 0
  %4013 = vmatpush1.bf16.msra.mxu0 0
  %4014 = vmatprep.subr.bf16.mxu0 0
  %4015 = vmatpush1.bf16.msra.mxu0 0
  %4016 = vmatprep.subr.bf16.mxu0 0
  %4017 = vmatpush1.bf16.msra.mxu0 0
  %4018 = vmatprep.subr.bf16.mxu0 0
  %4019 = vmatpush1.bf16.msra.mxu0 0
  %4020 = vmatprep.subr.bf16.mxu0 0
  %4021 = vmatpush1.bf16.msra.mxu0 0
  %4022 = vmatprep.subr.bf16.mxu0 0
  %4023 = vmatpush1.bf16.msra.mxu0 0
  %4024 = vmatprep.subr.bf16.mxu0 0
  %4025 = vmatpush1.bf16.msra.mxu0 0
  %4026 = vmatprep.subr.bf16.mxu0 0
  %4027 = vmatpush1.bf16.msra.mxu0 0
  %4028 = vmatprep.subr.bf16.mxu0 0
  %4029 = vmatpush1.bf16.msra.mxu0 0
  %4030 = vmatprep.subr.bf16.mxu0 0
  %4031 = vmatpush1.bf16.msra.mxu0 0
  %4032 = vmatprep.subr.bf16.mxu0 0
  %4033 = vmatpush1.bf16.msra.mxu0 0
  %4034 = vmatprep.subr.bf16.mxu0 0
  %4035 = vmatpush1.bf16.msra.mxu0 0
  %4036 = vmatprep.subr.bf16.mxu0 0
  %4037 = vmatpush1.bf16.msra.mxu0 0
  %4038 = vmatprep.mubr.bf16.mxu0 0
  %4039 = vmatmul.mubr.bf16.gmra.mrb[0].mxu0 %v4001
  %v4040 = vpop.f32.mrb[0].mxu0
  %v4041 = vadd.f32 0.0, %v4040
  %v4042 = vpop.f32.mrb[0].mxu0
  %v4043 = vpop.f32.mrb[0].mxu0
  %v4044 = vadd.f32 0.0, %v4043
  %v4045 = vpop.f32.mrb[0].mxu0
  %4046 = vdwg.mxu0
  %v4047 = vadd.f32 %v3908, %v4041
  %v4048 = vadd.f32 %v3909, %v4044
  %4049 = vrot.lane.b32.xlu0 %v3072, 40
  %v4050 = vpop.permute.xlu0 %4049
  %4051 = vrot.lane.b32.xlu0 %v3075, 40
  %v4052 = vpop.permute.xlu0 %4051
  %v4056 = vsel %vm642, %v3629, 0
  %v4059 = vsel %vm642, %v3630, 0
  %4061 = vmatprep.subr.mxu0 0.0
  %4062 = vmatpush1.msra.mxu0 %v4050
  %4063 = vmatprep.subr.mxu0 0.0
  %4064 = vmatpush1.msra.mxu0 %v4052
  %4065 = vmatprep.subr.mxu0 0.0
  %4066 = vmatpush1.msra.mxu0 0.0
  %4067 = vmatprep.subr.mxu0 0.0
  %4068 = vmatpush1.msra.mxu0 0.0
  %4069 = vmatprep.subr.mxu0 0.0
  %4070 = vmatpush1.msra.mxu0 0.0
  %4071 = vmatprep.subr.mxu0 0.0
  %4072 = vmatpush1.msra.mxu0 0.0
  %4073 = vmatprep.subr.mxu0 0.0
  %4074 = vmatpush1.msra.mxu0 0.0
  %4075 = vmatprep.subr.mxu0 0.0
  %4076 = vmatpush1.msra.mxu0 0.0
  %4077 = vmatprep.subr.mxu0 0.0
  %4078 = vmatpush1.msra.mxu0 0.0
  %4079 = vmatprep.subr.mxu0 0.0
  %4080 = vmatpush1.msra.mxu0 0.0
  %4081 = vmatprep.subr.mxu0 0.0
  %4082 = vmatpush1.msra.mxu0 0.0
  %4083 = vmatprep.subr.mxu0 0.0
  %4084 = vmatpush1.msra.mxu0 0.0
  %4085 = vmatprep.subr.mxu0 0.0
  %4086 = vmatpush1.msra.mxu0 0.0
  %4087 = vmatprep.subr.mxu0 0.0
  %4088 = vmatpush1.msra.mxu0 0.0
  %4089 = vmatprep.subr.mxu0 0.0
  %4090 = vmatpush1.msra.mxu0 0.0
  %4091 = vmatprep.subr.mxu0 0.0
  %4092 = vmatpush1.msra.mxu0 0.0
  %4093 = vmatprep.subr.mxu0 0.0
  %4094 = vmatpush1.msra.mxu0 0.0
  %4095 = vmatprep.subr.mxu0 0.0
  %4096 = vmatpush1.msra.mxu0 0.0
  %4097 = vmatprep.subr.mxu0 0.0
  %4098 = vmatpush1.msra.mxu0 0.0
  %4099 = vmatprep.subr.mxu0 0.0
  %4100 = vmatpush1.msra.mxu0 0.0
  %4101 = vmatprep.subr.mxu0 0.0
  %4102 = vmatpush1.msra.mxu0 0.0
  %4103 = vmatprep.subr.mxu0 0.0
  %4104 = vmatpush1.msra.mxu0 0.0
  %4105 = vmatprep.subr.mxu0 0.0
  %4106 = vmatpush1.msra.mxu0 0.0
  %4107 = vmatprep.subr.mxu0 0.0
  %4108 = vmatpush1.msra.mxu0 0.0
  %4109 = vmatprep.subr.mxu0 0.0
  %4110 = vmatpush1.msra.mxu0 0.0
  %4111 = vmatprep.subr.mxu0 0.0
  %4112 = vmatpush1.msra.mxu0 0.0
  %4113 = vmatprep.subr.mxu0 0.0
  %4114 = vmatpush1.msra.mxu0 0.0
  %4115 = vmatprep.subr.mxu0 0.0
  %4116 = vmatpush1.msra.mxu0 0.0
  %4117 = vmatprep.subr.mxu0 0.0
  %4118 = vmatpush1.msra.mxu0 0.0
  %4119 = vmatprep.subr.mxu0 0.0
  %4120 = vmatpush1.msra.mxu0 0.0
  %4121 = vmatprep.subr.mxu0 0.0
  %4122 = vmatpush1.msra.mxu0 0.0
  %4123 = vmatprep.subr.mxu0 0.0
  %4124 = vmatpush1.msra.mxu0 0.0
  %4125 = vmatprep.mubr.f32.mxu0 0.0
  %4126 = vmatmul.mubr.f32.gmra.mrb[0].mxu0 %v4056
  %v4127 = vpop.f32.mrb[0].mxu0
  %v4128 = vadd.f32 0.0, %v4127
  %v4129 = vpop.f32.mrb[0].mxu0
  %4130 = vmatprep.mubr.f32.mxu0 0.0
  %4131 = vmatmul.mubr.f32.gmra.mrb[0].mxu0 %v4059
  %v4132 = vpop.f32.mrb[0].mxu0
  %v4133 = vadd.f32 0.0, %v4132
  %v4134 = vpop.f32.mrb[0].mxu0
  %4135 = vdwg.mxu0
  %v4136 = vpack.c.bf16 %v4133, %v4128
  %4137 = vrot.lane.b32.xlu0 %v3858, 32
  %v4138 = vpop.permute.xlu0 %4137
  %v4140 = vsel %vm269, %v4136, 0
  %v4143 = vsel %vm822, %v4138, 0
  %4145 = vmatprep.subr.bf16.mxu0 0
  %4146 = vmatpush1.bf16.msra.mxu0 %v4143
  %4147 = vmatprep.subr.bf16.mxu0 0
  %4148 = vmatpush1.bf16.msra.mxu0 0
  %4149 = vmatprep.subr.bf16.mxu0 0
  %4150 = vmatpush1.bf16.msra.mxu0 0
  %4151 = vmatprep.subr.bf16.mxu0 0
  %4152 = vmatpush1.bf16.msra.mxu0 0
  %4153 = vmatprep.subr.bf16.mxu0 0
  %4154 = vmatpush1.bf16.msra.mxu0 0
  %4155 = vmatprep.subr.bf16.mxu0 0
  %4156 = vmatpush1.bf16.msra.mxu0 0
  %4157 = vmatprep.subr.bf16.mxu0 0
  %4158 = vmatpush1.bf16.msra.mxu0 0
  %4159 = vmatprep.subr.bf16.mxu0 0
  %4160 = vmatpush1.bf16.msra.mxu0 0
  %4161 = vmatprep.subr.bf16.mxu0 0
  %4162 = vmatpush1.bf16.msra.mxu0 0
  %4163 = vmatprep.subr.bf16.mxu0 0
  %4164 = vmatpush1.bf16.msra.mxu0 0
  %4165 = vmatprep.subr.bf16.mxu0 0
  %4166 = vmatpush1.bf16.msra.mxu0 0
  %4167 = vmatprep.subr.bf16.mxu0 0
  %4168 = vmatpush1.bf16.msra.mxu0 0
  %4169 = vmatprep.subr.bf16.mxu0 0
  %4170 = vmatpush1.bf16.msra.mxu0 0
  %4171 = vmatprep.subr.bf16.mxu0 0
  %4172 = vmatpush1.bf16.msra.mxu0 0
  %4173 = vmatprep.subr.bf16.mxu0 0
  %4174 = vmatpush1.bf16.msra.mxu0 0
  %4175 = vmatprep.subr.bf16.mxu0 0
  %4176 = vmatpush1.bf16.msra.mxu0 0
  %4177 = vmatprep.mubr.bf16.mxu0 0
  %4178 = vmatmul.mubr.bf16.gmra.mrb[0].mxu0 %v4140
  %v4179 = vpop.f32.mrb[0].mxu0
  %v4180 = vadd.f32 0.0, %v4179
  %v4181 = vpop.f32.mrb[0].mxu0
  %v4182 = vpop.f32.mrb[0].mxu0
  %v4183 = vadd.f32 0.0, %v4182
  %v4184 = vpop.f32.mrb[0].mxu0
  %4185 = vdwg.mxu0
  %v4186 = vadd.f32 %v4047, %v4180
  %v4187 = vadd.f32 %v4048, %v4183
  %v4188 = vmul.f32 %v4186, %v4186
  %v4189 = vmul.f32 %v4187, %v4187
  %v4190 = vsel %vm96, %v4188, 0.0
  %4191 = vadd.xlane.f32.xlu0 %v4190
  %v4192 = vpop.xlane.xlu0 %4191
  %v4193 = vsel %vm96, %v4189, 0.0
  %4194 = vadd.xlane.f32.xlu0 %v4193
  %v4195 = vpop.xlane.xlu0 %4194
  %v4196 = vmul.f32 %v4192, %v103
  %v4197 = vmul.f32 %v4195, %v103
  %v4198 = vadd.f32 %v4196, 1e-06
  %v4199 = vadd.f32 %v4197, 1e-06
  %v4200 = vrsqrt.pop %v4198
  %v4201 = vrsqrt.pop %v4199
  %v4202 = vmul.f32 %v4186, %v4200
  %v4203 = vmul.f32 %v4187, %v4201
  %v4204 = vlaneseq
  %v4205 = vshrl.u32 %v4204, 7
  %v4206 = vsub.s32 1, %v4205
  %v4207 = vrot.slane %v2985, %v4206
  %v4208 = vmul.f32 %v4202, %v4207
  %v4209 = vmul.f32 %v4203, %v4207
  %v4210 = vpack.c.bf16 %v4209, %v4208
  %v4211 = vunpack.c.h.b16 %v2986
  %v4212 = vunpack.c.h.b16 %v2987
  %v4213 = vunpack.c.h.b16 %v2988
  %v4214 = vunpack.c.h.b16 %v2989
  %v4215 = vpack.c.b16 %v4212, %v4211
  %v4216 = vpack.c.b16 %v4214, %v4213
  %4217 = vrot.lane.b32.xlu0 %v3030, 32
  %v4218 = vpop.permute.xlu0 %4217
  %4219 = vrot.lane.b32.xlu0 %v4215, 32
  %v4220 = vpop.permute.xlu0 %4219
  %4221 = vrot.lane.b32.xlu0 %v3031, 32
  %v4222 = vpop.permute.xlu0 %4221
  %4223 = vrot.lane.b32.xlu0 %v4216, 32
  %v4224 = vpop.permute.xlu0 %4223
  %v4225 = vsel %vm1326, %v4218, %v4220
  %v4226 = vsel %vm1326, %v4222, %v4224
  %v4230 = vsel %vm96, %v4210, 0
  %4232 = vmatprep.subr.bf16.mxu0 0
  %4233 = vmatpush1.bf16.msra.mxu0 %v4225
  %4234 = vmatprep.subr.bf16.mxu0 0
  %4235 = vmatpush1.bf16.msra.mxu0 %v4226
  %4236 = vmatprep.subr.bf16.mxu0 0
  %4237 = vmatpush1.bf16.msra.mxu0 0
  %4238 = vmatprep.subr.bf16.mxu0 0
  %4239 = vmatpush1.bf16.msra.mxu0 0
  %4240 = vmatprep.subr.bf16.mxu0 0
  %4241 = vmatpush1.bf16.msra.mxu0 0
  %4242 = vmatprep.subr.bf16.mxu0 0
  %4243 = vmatpush1.bf16.msra.mxu0 0
  %4244 = vmatprep.subr.bf16.mxu0 0
  %4245 = vmatpush1.bf16.msra.mxu0 0
  %4246 = vmatprep.subr.bf16.mxu0 0
  %4247 = vmatpush1.bf16.msra.mxu0 0
  %4248 = vmatprep.subr.bf16.mxu0 0
  %4249 = vmatpush1.bf16.msra.mxu0 0
  %4250 = vmatprep.subr.bf16.mxu0 0
  %4251 = vmatpush1.bf16.msra.mxu0 0
  %4252 = vmatprep.subr.bf16.mxu0 0
  %4253 = vmatpush1.bf16.msra.mxu0 0
  %4254 = vmatprep.subr.bf16.mxu0 0
  %4255 = vmatpush1.bf16.msra.mxu0 0
  %4256 = vmatprep.subr.bf16.mxu0 0
  %4257 = vmatpush1.bf16.msra.mxu0 0
  %4258 = vmatprep.subr.bf16.mxu0 0
  %4259 = vmatpush1.bf16.msra.mxu0 0
  %4260 = vmatprep.subr.bf16.mxu0 0
  %4261 = vmatpush1.bf16.msra.mxu0 0
  %4262 = vmatprep.subr.bf16.mxu0 0
  %4263 = vmatpush1.bf16.msra.mxu0 0
  %4264 = vmatprep.mubr.bf16.mxu0 0
  %4265 = vmatmul.mubr.bf16.gmra.mrb[0].mxu0 %v4230
  %v4266 = vpop.f32.mrb[0].mxu0
  %v4267 = vadd.f32 0.0, %v4266
  %v4268 = vpop.f32.mrb[0].mxu0
  %v4269 = vpop.f32.mrb[0].mxu0
  %v4270 = vadd.f32 0.0, %v4269
  %v4271 = vpop.f32.mrb[0].mxu0
  %4272 = vdwg.mxu0
  %v4273 = vxor.u32 %v4267, 2147483648
  %v4274 = vxor.u32 %v4270, 2147483648
  %v4275 = vmul.f32 %v4273, 1.442695
  %v4276 = vpow.pop %v4275
  %v4277 = vmul.f32 %v4274, 1.442695
  %v4278 = vpow.pop %v4277
  %v4279 = vadd.f32 %v4276, 1.0
  %v4280 = vadd.f32 %v4278, 1.0
  %v4281 = vrcp.pop %v4279
  %v4282 = vmul.f32 1.0, %v4281
  %v4283 = vrcp.pop %v4280
  %v4284 = vmul.f32 1.0, %v4283
  %v4285 = vmul.f32 %v4267, %v4282
  %v4286 = vmul.f32 %v4270, %v4284
  %4289 = vrot.lane.b32.xlu0 %v4267, 64
  %v4290 = vpop.permute.xlu0 %4289
  %4291 = vrot.lane.b32.xlu0 %v4270, 64
  %v4292 = vpop.permute.xlu0 %4291
  %v4295 = vmul.f32 %v4285, %v4290
  %v4296 = vmul.f32 %v4286, %v4292
  %v4297 = vpack.c.bf16 %v4296, %v4295
  %v4306 = vunpack.c.l.b16 %v2991
  %v4307 = vunpack.c.l.b16 %v2992
  %v4308 = vunpack.c.l.b16 %v2993
  %v4309 = vunpack.c.l.b16 %v2994
  %v4310 = vunpack.c.l.b16 %v2995
  %v4311 = vunpack.c.l.b16 %v2996
  %v4312 = vunpack.c.l.b16 %v2997
  %v4313 = vunpack.c.l.b16 %v2998
  %v4314 = vpack.c.b16 %v4307, %v4306
  %v4315 = vpack.c.b16 %v4309, %v4308
  %v4316 = vpack.c.b16 %v4311, %v4310
  %v4317 = vpack.c.b16 %v4313, %v4312
  %v4323 = vsel %vm177, %v4297, 0
  %4325 = vmatprep.subr.bf16.mxu0 0
  %4326 = vmatpush1.bf16.msra.mxu0 %v4314
  %4327 = vmatprep.subr.bf16.mxu0 0
  %4328 = vmatpush1.bf16.msra.mxu0 %v4315
  %4329 = vmatprep.subr.bf16.mxu0 0
  %4330 = vmatpush1.bf16.msra.mxu0 %v4316
  %4331 = vmatprep.subr.bf16.mxu0 0
  %4332 = vmatpush1.bf16.msra.mxu0 %v4317
  %4333 = vmatprep.subr.bf16.mxu0 0
  %4334 = vmatpush1.bf16.msra.mxu0 0
  %4335 = vmatprep.subr.bf16.mxu0 0
  %4336 = vmatpush1.bf16.msra.mxu0 0
  %4337 = vmatprep.subr.bf16.mxu0 0
  %4338 = vmatpush1.bf16.msra.mxu0 0
  %4339 = vmatprep.subr.bf16.mxu0 0
  %4340 = vmatpush1.bf16.msra.mxu0 0
  %4341 = vmatprep.subr.bf16.mxu0 0
  %4342 = vmatpush1.bf16.msra.mxu0 0
  %4343 = vmatprep.subr.bf16.mxu0 0
  %4344 = vmatpush1.bf16.msra.mxu0 0
  %4345 = vmatprep.subr.bf16.mxu0 0
  %4346 = vmatpush1.bf16.msra.mxu0 0
  %4347 = vmatprep.subr.bf16.mxu0 0
  %4348 = vmatpush1.bf16.msra.mxu0 0
  %4349 = vmatprep.subr.bf16.mxu0 0
  %4350 = vmatpush1.bf16.msra.mxu0 0
  %4351 = vmatprep.subr.bf16.mxu0 0
  %4352 = vmatpush1.bf16.msra.mxu0 0
  %4353 = vmatprep.subr.bf16.mxu0 0
  %4354 = vmatpush1.bf16.msra.mxu0 0
  %4355 = vmatprep.subr.bf16.mxu0 0
  %4356 = vmatpush1.bf16.msra.mxu0 0
  %4357 = vmatprep.mubr.bf16.mxu0 0
  %4358 = vmatmul.mubr.bf16.gmra.mrb[0].mxu0 %v4323
  %v4359 = vpop.f32.mrb[0].mxu0
  %v4360 = vadd.f32 0.0, %v4359
  %v4361 = vpop.f32.mrb[0].mxu0
  %v4362 = vpop.f32.mrb[0].mxu0
  %v4363 = vadd.f32 0.0, %v4362
  %v4364 = vpop.f32.mrb[0].mxu0
  %4365 = vdwg.mxu0
  %v4366 = vadd.f32 %v4186, %v4360
  %v4367 = vadd.f32 %v4187, %v4363
  %s4368 = scalar_lea.vmem %s9, 32
  %v4369 = vld [vmem:[%s4368] sm:$0xff]
  %v4370 = vld [vmem:[%s4368 + $0x8] sm:$0xff]
  %v4371 = vld [vmem:[%s4368 + $0x10] sm:$0xff]
  %v4372 = vld [vmem:[%s4368 + $0x18] sm:$0xff]
  %s4373 = scalar_lea.vmem %s10, 4
  %v4374 = vld [vmem:[%s4373] sm:$0xf]
  %s4375 = scalar_lea.vmem %s11, 32
  %v4376 = vld [vmem:[%s4375] sm:$0xf]
  %v4377 = vld [vmem:[%s4375 + $0x4] sm:$0xf]
  %v4378 = vld [vmem:[%s4375 + $0x8] sm:$0xf]
  %v4379 = vld [vmem:[%s4375 + $0xc] sm:$0xf]
  %v4380 = vld [vmem:[%s4375 + $0x10] sm:$0xf]
  %v4381 = vld [vmem:[%s4375 + $0x14] sm:$0xf]
  %v4382 = vld [vmem:[%s4375 + $0x18] sm:$0xf]
  %v4383 = vld [vmem:[%s4375 + $0x1c] sm:$0xf]
  %v4384 = vmul.f32 %v4366, %v4366
  %v4385 = vmul.f32 %v4367, %v4367
  %v4386 = vsel %vm96, %v4384, 0.0
  %4387 = vadd.xlane.f32.xlu0 %v4386
  %v4388 = vpop.xlane.xlu0 %4387
  %v4389 = vsel %vm96, %v4385, 0.0
  %4390 = vadd.xlane.f32.xlu0 %v4389
  %v4391 = vpop.xlane.xlu0 %4390
  %v4392 = vmul.f32 %v4388, %v103
  %v4393 = vmul.f32 %v4391, %v103
  %v4394 = vadd.f32 %v4392, 1e-06
  %v4395 = vadd.f32 %v4393, 1e-06
  %v4396 = vrsqrt.pop %v4394
  %v4397 = vrsqrt.pop %v4395
  %v4398 = vmul.f32 %v4366, %v4396
  %v4399 = vmul.f32 %v4367, %v4397
  %v4400 = vlaneseq
  %v4401 = vshrl.u32 %v4400, 7
  %v4402 = vsub.s32 2, %v4401
  %v4403 = vrot.slane %v2985, %v4402
  %v4404 = vmul.f32 %v4398, %v4403
  %v4405 = vmul.f32 %v4399, %v4403
  %v4406 = vpack.c.bf16 %v4405, %v4404
  %v4411 = vunpack.c.l.b16 %v4369
  %v4412 = vunpack.c.l.b16 %v4370
  %v4413 = vunpack.c.l.b16 %v4371
  %v4414 = vunpack.c.l.b16 %v4372
  %v4415 = vpack.c.b16 %v4412, %v4411
  %v4416 = vpack.c.b16 %v4414, %v4413
  %v4420 = vsel %vm96, %v4406, 0
  %4422 = vmatprep.subr.bf16.mxu0 0
  %4423 = vmatpush1.bf16.msra.mxu0 %v4415
  %4424 = vmatprep.subr.bf16.mxu0 0
  %4425 = vmatpush1.bf16.msra.mxu0 %v4416
  %4426 = vmatprep.subr.bf16.mxu0 0
  %4427 = vmatpush1.bf16.msra.mxu0 0
  %4428 = vmatprep.subr.bf16.mxu0 0
  %4429 = vmatpush1.bf16.msra.mxu0 0
  %4430 = vmatprep.subr.bf16.mxu0 0
  %4431 = vmatpush1.bf16.msra.mxu0 0
  %4432 = vmatprep.subr.bf16.mxu0 0
  %4433 = vmatpush1.bf16.msra.mxu0 0
  %4434 = vmatprep.subr.bf16.mxu0 0
  %4435 = vmatpush1.bf16.msra.mxu0 0
  %4436 = vmatprep.subr.bf16.mxu0 0
  %4437 = vmatpush1.bf16.msra.mxu0 0
  %4438 = vmatprep.subr.bf16.mxu0 0
  %4439 = vmatpush1.bf16.msra.mxu0 0
  %4440 = vmatprep.subr.bf16.mxu0 0
  %4441 = vmatpush1.bf16.msra.mxu0 0
  %4442 = vmatprep.subr.bf16.mxu0 0
  %4443 = vmatpush1.bf16.msra.mxu0 0
  %4444 = vmatprep.subr.bf16.mxu0 0
  %4445 = vmatpush1.bf16.msra.mxu0 0
  %4446 = vmatprep.subr.bf16.mxu0 0
  %4447 = vmatpush1.bf16.msra.mxu0 0
  %4448 = vmatprep.subr.bf16.mxu0 0
  %4449 = vmatpush1.bf16.msra.mxu0 0
  %4450 = vmatprep.subr.bf16.mxu0 0
  %4451 = vmatpush1.bf16.msra.mxu0 0
  %4452 = vmatprep.subr.bf16.mxu0 0
  %4453 = vmatpush1.bf16.msra.mxu0 0
  %4454 = vmatprep.mubr.bf16.mxu0 0
  %4455 = vmatmul.mubr.bf16.gmra.mrb[0].mxu0 %v4420
  %v4456 = vpop.f32.mrb[0].mxu0
  %v4457 = vadd.f32 0.0, %v4456
  %v4458 = vpop.f32.mrb[0].mxu0
  %v4459 = vpop.f32.mrb[0].mxu0
  %v4460 = vadd.f32 0.0, %v4459
  %v4461 = vpop.f32.mrb[0].mxu0
  %4462 = vdwg.mxu0
  %v4463 = vmul.f32 %v4457, %v58
  %v4464 = vmul.f32 %v4460, %v59
  %v4466 = vsel %vm177, %v4457, 0
  %v4469 = vsel %vm177, %v4460, 0
  %4471 = vmatprep.subr.mxu0 0.0
  %4472 = vmatpush1.msra.mxu0 %v62
  %4473 = vmatprep.subr.mxu0 0.0
  %4474 = vmatpush1.msra.mxu0 %v63
  %4475 = vmatprep.subr.mxu0 0.0
  %4476 = vmatpush1.msra.mxu0 %v64
  %4477 = vmatprep.subr.mxu0 0.0
  %4478 = vmatpush1.msra.mxu0 %v65
  %4479 = vmatprep.subr.mxu0 0.0
  %4480 = vmatpush1.msra.mxu0 %v66
  %4481 = vmatprep.subr.mxu0 0.0
  %4482 = vmatpush1.msra.mxu0 %v67
  %4483 = vmatprep.subr.mxu0 0.0
  %4484 = vmatpush1.msra.mxu0 %v68
  %4485 = vmatprep.subr.mxu0 0.0
  %4486 = vmatpush1.msra.mxu0 %v69
  %4487 = vmatprep.subr.mxu0 0.0
  %4488 = vmatpush1.msra.mxu0 0.0
  %4489 = vmatprep.subr.mxu0 0.0
  %4490 = vmatpush1.msra.mxu0 0.0
  %4491 = vmatprep.subr.mxu0 0.0
  %4492 = vmatpush1.msra.mxu0 0.0
  %4493 = vmatprep.subr.mxu0 0.0
  %4494 = vmatpush1.msra.mxu0 0.0
  %4495 = vmatprep.subr.mxu0 0.0
  %4496 = vmatpush1.msra.mxu0 0.0
  %4497 = vmatprep.subr.mxu0 0.0
  %4498 = vmatpush1.msra.mxu0 0.0
  %4499 = vmatprep.subr.mxu0 0.0
  %4500 = vmatpush1.msra.mxu0 0.0
  %4501 = vmatprep.subr.mxu0 0.0
  %4502 = vmatpush1.msra.mxu0 0.0
  %4503 = vmatprep.subr.mxu0 0.0
  %4504 = vmatpush1.msra.mxu0 0.0
  %4505 = vmatprep.subr.mxu0 0.0
  %4506 = vmatpush1.msra.mxu0 0.0
  %4507 = vmatprep.subr.mxu0 0.0
  %4508 = vmatpush1.msra.mxu0 0.0
  %4509 = vmatprep.subr.mxu0 0.0
  %4510 = vmatpush1.msra.mxu0 0.0
  %4511 = vmatprep.subr.mxu0 0.0
  %4512 = vmatpush1.msra.mxu0 0.0
  %4513 = vmatprep.subr.mxu0 0.0
  %4514 = vmatpush1.msra.mxu0 0.0
  %4515 = vmatprep.subr.mxu0 0.0
  %4516 = vmatpush1.msra.mxu0 0.0
  %4517 = vmatprep.subr.mxu0 0.0
  %4518 = vmatpush1.msra.mxu0 0.0
  %4519 = vmatprep.subr.mxu0 0.0
  %4520 = vmatpush1.msra.mxu0 0.0
  %4521 = vmatprep.subr.mxu0 0.0
  %4522 = vmatpush1.msra.mxu0 0.0
  %4523 = vmatprep.subr.mxu0 0.0
  %4524 = vmatpush1.msra.mxu0 0.0
  %4525 = vmatprep.subr.mxu0 0.0
  %4526 = vmatpush1.msra.mxu0 0.0
  %4527 = vmatprep.subr.mxu0 0.0
  %4528 = vmatpush1.msra.mxu0 0.0
  %4529 = vmatprep.subr.mxu0 0.0
  %4530 = vmatpush1.msra.mxu0 0.0
  %4531 = vmatprep.subr.mxu0 0.0
  %4532 = vmatpush1.msra.mxu0 0.0
  %4533 = vmatprep.subr.mxu0 0.0
  %4534 = vmatpush1.msra.mxu0 0.0
  %4535 = vmatprep.mubr.f32.mxu0 0.0
  %4536 = vmatmul.mubr.f32.gmra.mrb[0].mxu0 %v4466
  %v4537 = vpop.f32.mrb[0].mxu0
  %v4538 = vadd.f32 0.0, %v4537
  %v4539 = vpop.f32.mrb[0].mxu0
  %4540 = vmatprep.mubr.f32.mxu0 0.0
  %4541 = vmatmul.mubr.f32.gmra.mrb[0].mxu0 %v4469
  %v4542 = vpop.f32.mrb[0].mxu0
  %v4543 = vadd.f32 0.0, %v4542
  %v4544 = vpop.f32.mrb[0].mxu0
  %4545 = vdwg.mxu0
  %v4546 = vmul.f32 %v4538, %v60
  %v4547 = vmul.f32 %v4543, %v61
  %v4548 = vadd.f32 %v4463, %v4546
  %v4549 = vadd.f32 %v4464, %v4547
  %4552 = vrot.lane.b32.xlu0 %v4548, 96
  %v4553 = vpop.permute.xlu0 %4552
  %4554 = vrot.lane.b32.xlu0 %v4549, 96
  %v4555 = vpop.permute.xlu0 %4554
  %v4556 = vsel %vm269, %v4548, 0
  %v4558 = vsel %vm269, %v4549, 0
  %v4560 = vsel %vm269, %v4553, 0
  %v4562 = vsel %vm269, %v4555, 0
  %4564 = vmatprep.subr.mxu0 0.0
  %4565 = vmatpush1.xpose.msra.mxu0 %v4560
  %4566 = vmatprep.subr.mxu0 0.0
  %4567 = vmatpush1.xpose.msra.mxu0 %v4562
  %4568 = vmatprep.subr.mxu0 0.0
  %4569 = vmatpush1.xpose.msra.mxu0 0.0
  %4570 = vmatprep.subr.mxu0 0.0
  %4571 = vmatpush1.xpose.msra.mxu0 0.0
  %4572 = vmatprep.subr.mxu0 0.0
  %4573 = vmatpush1.xpose.msra.mxu0 0.0
  %4574 = vmatprep.subr.mxu0 0.0
  %4575 = vmatpush1.xpose.msra.mxu0 0.0
  %4576 = vmatprep.subr.mxu0 0.0
  %4577 = vmatpush1.xpose.msra.mxu0 0.0
  %4578 = vmatprep.subr.mxu0 0.0
  %4579 = vmatpush1.xpose.msra.mxu0 0.0
  %4580 = vmatprep.subr.mxu0 0.0
  %4581 = vmatpush1.xpose.msra.mxu0 0.0
  %4582 = vmatprep.subr.mxu0 0.0
  %4583 = vmatpush1.xpose.msra.mxu0 0.0
  %4584 = vmatprep.subr.mxu0 0.0
  %4585 = vmatpush1.xpose.msra.mxu0 0.0
  %4586 = vmatprep.subr.mxu0 0.0
  %4587 = vmatpush1.xpose.msra.mxu0 0.0
  %4588 = vmatprep.subr.mxu0 0.0
  %4589 = vmatpush1.xpose.msra.mxu0 0.0
  %4590 = vmatprep.subr.mxu0 0.0
  %4591 = vmatpush1.xpose.msra.mxu0 0.0
  %4592 = vmatprep.subr.mxu0 0.0
  %4593 = vmatpush1.xpose.msra.mxu0 0.0
  %4594 = vmatprep.subr.mxu0 0.0
  %4595 = vmatpush1.xpose.msra.mxu0 0.0
  %4596 = vmatprep.subr.mxu0 0.0
  %4597 = vmatpush1.xpose.msra.mxu0 0.0
  %4598 = vmatprep.subr.mxu0 0.0
  %4599 = vmatpush1.xpose.msra.mxu0 0.0
  %4600 = vmatprep.subr.mxu0 0.0
  %4601 = vmatpush1.xpose.msra.mxu0 0.0
  %4602 = vmatprep.subr.mxu0 0.0
  %4603 = vmatpush1.xpose.msra.mxu0 0.0
  %4604 = vmatprep.subr.mxu0 0.0
  %4605 = vmatpush1.xpose.msra.mxu0 0.0
  %4606 = vmatprep.subr.mxu0 0.0
  %4607 = vmatpush1.xpose.msra.mxu0 0.0
  %4608 = vmatprep.subr.mxu0 0.0
  %4609 = vmatpush1.xpose.msra.mxu0 0.0
  %4610 = vmatprep.subr.mxu0 0.0
  %4611 = vmatpush1.xpose.msra.mxu0 0.0
  %4612 = vmatprep.subr.mxu0 0.0
  %4613 = vmatpush1.xpose.msra.mxu0 0.0
  %4614 = vmatprep.subr.mxu0 0.0
  %4615 = vmatpush1.xpose.msra.mxu0 0.0
  %4616 = vmatprep.subr.mxu0 0.0
  %4617 = vmatpush1.xpose.msra.mxu0 0.0
  %4618 = vmatprep.subr.mxu0 0.0
  %4619 = vmatpush1.xpose.msra.mxu0 0.0
  %4620 = vmatprep.subr.mxu0 0.0
  %4621 = vmatpush1.xpose.msra.mxu0 0.0
  %4622 = vmatprep.subr.mxu0 0.0
  %4623 = vmatpush1.xpose.msra.mxu0 0.0
  %4624 = vmatprep.subr.mxu0 0.0
  %4625 = vmatpush1.xpose.msra.mxu0 0.0
  %4626 = vmatprep.subr.mxu0 0.0
  %4627 = vmatpush1.xpose.msra.mxu0 0.0
  %4628 = vmatprep.mubr.f32.mxu0 0.0
  %4629 = vmatmul.mubr.f32.gmra.mrb[0].mxu0 %v4556
  %v4630 = vpop.f32.mrb[0].mxu0
  %v4631 = vadd.f32 0.0, %v4630
  %v4632 = vpop.f32.mrb[0].mxu0
  %4633 = vmatprep.mubr.f32.mxu0 0.0
  %4634 = vmatmul.mubr.f32.gmra.mrb[0].mxu0 %v4558
  %v4635 = vpop.f32.mrb[0].mxu0
  %v4636 = vadd.f32 0.0, %v4635
  %v4637 = vpop.f32.mrb[0].mxu0
  %4638 = vdwg.mxu0
  %4639 = vrot.lane.b32.xlu0 %v4548, 120
  %v4640 = vpop.permute.xlu0 %4639
  %4641 = vrot.lane.b32.xlu0 %v4549, 120
  %v4642 = vpop.permute.xlu0 %4641
  %4643 = vrot.lane.b32.xlu0 %v4548, 88
  %v4644 = vpop.permute.xlu0 %4643
  %4645 = vrot.lane.b32.xlu0 %v4549, 88
  %v4646 = vpop.permute.xlu0 %4645
  %v4647 = vsel %vm269, %v4640, 0
  %v4649 = vsel %vm269, %v4642, 0
  %v4651 = vsel %vm269, %v4644, 0
  %v4653 = vsel %vm269, %v4646, 0
  %4655 = vmatprep.subr.mxu0 0.0
  %4656 = vmatpush1.xpose.msra.mxu0 %v4651
  %4657 = vmatprep.subr.mxu0 0.0
  %4658 = vmatpush1.xpose.msra.mxu0 %v4653
  %4659 = vmatprep.subr.mxu0 0.0
  %4660 = vmatpush1.xpose.msra.mxu0 0.0
  %4661 = vmatprep.subr.mxu0 0.0
  %4662 = vmatpush1.xpose.msra.mxu0 0.0
  %4663 = vmatprep.subr.mxu0 0.0
  %4664 = vmatpush1.xpose.msra.mxu0 0.0
  %4665 = vmatprep.subr.mxu0 0.0
  %4666 = vmatpush1.xpose.msra.mxu0 0.0
  %4667 = vmatprep.subr.mxu0 0.0
  %4668 = vmatpush1.xpose.msra.mxu0 0.0
  %4669 = vmatprep.subr.mxu0 0.0
  %4670 = vmatpush1.xpose.msra.mxu0 0.0
  %4671 = vmatprep.subr.mxu0 0.0
  %4672 = vmatpush1.xpose.msra.mxu0 0.0
  %4673 = vmatprep.subr.mxu0 0.0
  %4674 = vmatpush1.xpose.msra.mxu0 0.0
  %4675 = vmatprep.subr.mxu0 0.0
  %4676 = vmatpush1.xpose.msra.mxu0 0.0
  %4677 = vmatprep.subr.mxu0 0.0
  %4678 = vmatpush1.xpose.msra.mxu0 0.0
  %4679 = vmatprep.subr.mxu0 0.0
  %4680 = vmatpush1.xpose.msra.mxu0 0.0
  %4681 = vmatprep.subr.mxu0 0.0
  %4682 = vmatpush1.xpose.msra.mxu0 0.0
  %4683 = vmatprep.subr.mxu0 0.0
  %4684 = vmatpush1.xpose.msra.mxu0 0.0
  %4685 = vmatprep.subr.mxu0 0.0
  %4686 = vmatpush1.xpose.msra.mxu0 0.0
  %4687 = vmatprep.subr.mxu0 0.0
  %4688 = vmatpush1.xpose.msra.mxu0 0.0
  %4689 = vmatprep.subr.mxu0 0.0
  %4690 = vmatpush1.xpose.msra.mxu0 0.0
  %4691 = vmatprep.subr.mxu0 0.0
  %4692 = vmatpush1.xpose.msra.mxu0 0.0
  %4693 = vmatprep.subr.mxu0 0.0
  %4694 = vmatpush1.xpose.msra.mxu0 0.0
  %4695 = vmatprep.subr.mxu0 0.0
  %4696 = vmatpush1.xpose.msra.mxu0 0.0
  %4697 = vmatprep.subr.mxu0 0.0
  %4698 = vmatpush1.xpose.msra.mxu0 0.0
  %4699 = vmatprep.subr.mxu0 0.0
  %4700 = vmatpush1.xpose.msra.mxu0 0.0
  %4701 = vmatprep.subr.mxu0 0.0
  %4702 = vmatpush1.xpose.msra.mxu0 0.0
  %4703 = vmatprep.subr.mxu0 0.0
  %4704 = vmatpush1.xpose.msra.mxu0 0.0
  %4705 = vmatprep.subr.mxu0 0.0
  %4706 = vmatpush1.xpose.msra.mxu0 0.0
  %4707 = vmatprep.subr.mxu0 0.0
  %4708 = vmatpush1.xpose.msra.mxu0 0.0
  %4709 = vmatprep.subr.mxu0 0.0
  %4710 = vmatpush1.xpose.msra.mxu0 0.0
  %4711 = vmatprep.subr.mxu0 0.0
  %4712 = vmatpush1.xpose.msra.mxu0 0.0
  %4713 = vmatprep.subr.mxu0 0.0
  %4714 = vmatpush1.xpose.msra.mxu0 0.0
  %4715 = vmatprep.subr.mxu0 0.0
  %4716 = vmatpush1.xpose.msra.mxu0 0.0
  %4717 = vmatprep.subr.mxu0 0.0
  %4718 = vmatpush1.xpose.msra.mxu0 0.0
  %4719 = vmatprep.mubr.f32.mxu0 0.0
  %4720 = vmatmul.mubr.f32.gmra.mrb[0].mxu0 %v4647
  %v4721 = vpop.f32.mrb[0].mxu0
  %v4722 = vadd.f32 0.0, %v4721
  %v4723 = vpop.f32.mrb[0].mxu0
  %4724 = vmatprep.mubr.f32.mxu0 0.0
  %4725 = vmatmul.mubr.f32.gmra.mrb[0].mxu0 %v4649
  %v4726 = vpop.f32.mrb[0].mxu0
  %v4727 = vadd.f32 0.0, %v4726
  %v4728 = vpop.f32.mrb[0].mxu0
  %4729 = vdwg.mxu0
  %4730 = vrot.lane.b32.xlu0 %v4548, 112
  %v4731 = vpop.permute.xlu0 %4730
  %4732 = vrot.lane.b32.xlu0 %v4549, 112
  %v4733 = vpop.permute.xlu0 %4732
  %4734 = vrot.lane.b32.xlu0 %v4548, 80
  %v4735 = vpop.permute.xlu0 %4734
  %4736 = vrot.lane.b32.xlu0 %v4549, 80
  %v4737 = vpop.permute.xlu0 %4736
  %v4738 = vsel %vm269, %v4731, 0
  %v4740 = vsel %vm269, %v4733, 0
  %v4742 = vsel %vm269, %v4735, 0
  %v4744 = vsel %vm269, %v4737, 0
  %4746 = vmatprep.subr.mxu0 0.0
  %4747 = vmatpush1.xpose.msra.mxu0 %v4742
  %4748 = vmatprep.subr.mxu0 0.0
  %4749 = vmatpush1.xpose.msra.mxu0 %v4744
  %4750 = vmatprep.subr.mxu0 0.0
  %4751 = vmatpush1.xpose.msra.mxu0 0.0
  %4752 = vmatprep.subr.mxu0 0.0
  %4753 = vmatpush1.xpose.msra.mxu0 0.0
  %4754 = vmatprep.subr.mxu0 0.0
  %4755 = vmatpush1.xpose.msra.mxu0 0.0
  %4756 = vmatprep.subr.mxu0 0.0
  %4757 = vmatpush1.xpose.msra.mxu0 0.0
  %4758 = vmatprep.subr.mxu0 0.0
  %4759 = vmatpush1.xpose.msra.mxu0 0.0
  %4760 = vmatprep.subr.mxu0 0.0
  %4761 = vmatpush1.xpose.msra.mxu0 0.0
  %4762 = vmatprep.subr.mxu0 0.0
  %4763 = vmatpush1.xpose.msra.mxu0 0.0
  %4764 = vmatprep.subr.mxu0 0.0
  %4765 = vmatpush1.xpose.msra.mxu0 0.0
  %4766 = vmatprep.subr.mxu0 0.0
  %4767 = vmatpush1.xpose.msra.mxu0 0.0
  %4768 = vmatprep.subr.mxu0 0.0
  %4769 = vmatpush1.xpose.msra.mxu0 0.0
  %4770 = vmatprep.subr.mxu0 0.0
  %4771 = vmatpush1.xpose.msra.mxu0 0.0
  %4772 = vmatprep.subr.mxu0 0.0
  %4773 = vmatpush1.xpose.msra.mxu0 0.0
  %4774 = vmatprep.subr.mxu0 0.0
  %4775 = vmatpush1.xpose.msra.mxu0 0.0
  %4776 = vmatprep.subr.mxu0 0.0
  %4777 = vmatpush1.xpose.msra.mxu0 0.0
  %4778 = vmatprep.subr.mxu0 0.0
  %4779 = vmatpush1.xpose.msra.mxu0 0.0
  %4780 = vmatprep.subr.mxu0 0.0
  %4781 = vmatpush1.xpose.msra.mxu0 0.0
  %4782 = vmatprep.subr.mxu0 0.0
  %4783 = vmatpush1.xpose.msra.mxu0 0.0
  %4784 = vmatprep.subr.mxu0 0.0
  %4785 = vmatpush1.xpose.msra.mxu0 0.0
  %4786 = vmatprep.subr.mxu0 0.0
  %4787 = vmatpush1.xpose.msra.mxu0 0.0
  %4788 = vmatprep.subr.mxu0 0.0
  %4789 = vmatpush1.xpose.msra.mxu0 0.0
  %4790 = vmatprep.subr.mxu0 0.0
  %4791 = vmatpush1.xpose.msra.mxu0 0.0
  %4792 = vmatprep.subr.mxu0 0.0
  %4793 = vmatpush1.xpose.msra.mxu0 0.0
  %4794 = vmatprep.subr.mxu0 0.0
  %4795 = vmatpush1.xpose.msra.mxu0 0.0
  %4796 = vmatprep.subr.mxu0 0.0
  %4797 = vmatpush1.xpose.msra.mxu0 0.0
  %4798 = vmatprep.subr.mxu0 0.0
  %4799 = vmatpush1.xpose.msra.mxu0 0.0
  %4800 = vmatprep.subr.mxu0 0.0
  %4801 = vmatpush1.xpose.msra.mxu0 0.0
  %4802 = vmatprep.subr.mxu0 0.0
  %4803 = vmatpush1.xpose.msra.mxu0 0.0
  %4804 = vmatprep.subr.mxu0 0.0
  %4805 = vmatpush1.xpose.msra.mxu0 0.0
  %4806 = vmatprep.subr.mxu0 0.0
  %4807 = vmatpush1.xpose.msra.mxu0 0.0
  %4808 = vmatprep.subr.mxu0 0.0
  %4809 = vmatpush1.xpose.msra.mxu0 0.0
  %4810 = vmatprep.mubr.f32.mxu0 0.0
  %4811 = vmatmul.mubr.f32.gmra.mrb[0].mxu0 %v4738
  %v4812 = vpop.f32.mrb[0].mxu0
  %v4813 = vadd.f32 0.0, %v4812
  %v4814 = vpop.f32.mrb[0].mxu0
  %4815 = vmatprep.mubr.f32.mxu0 0.0
  %4816 = vmatmul.mubr.f32.gmra.mrb[0].mxu0 %v4740
  %v4817 = vpop.f32.mrb[0].mxu0
  %v4818 = vadd.f32 0.0, %v4817
  %v4819 = vpop.f32.mrb[0].mxu0
  %4820 = vdwg.mxu0
  %4821 = vrot.lane.b32.xlu0 %v4548, 104
  %v4822 = vpop.permute.xlu0 %4821
  %4823 = vrot.lane.b32.xlu0 %v4549, 104
  %v4824 = vpop.permute.xlu0 %4823
  %4825 = vrot.lane.b32.xlu0 %v4548, 72
  %v4826 = vpop.permute.xlu0 %4825
  %4827 = vrot.lane.b32.xlu0 %v4549, 72
  %v4828 = vpop.permute.xlu0 %4827
  %v4829 = vsel %vm269, %v4822, 0
  %v4831 = vsel %vm269, %v4824, 0
  %v4833 = vsel %vm269, %v4826, 0
  %v4835 = vsel %vm269, %v4828, 0
  %4837 = vmatprep.subr.mxu0 0.0
  %4838 = vmatpush1.xpose.msra.mxu0 %v4833
  %4839 = vmatprep.subr.mxu0 0.0
  %4840 = vmatpush1.xpose.msra.mxu0 %v4835
  %4841 = vmatprep.subr.mxu0 0.0
  %4842 = vmatpush1.xpose.msra.mxu0 0.0
  %4843 = vmatprep.subr.mxu0 0.0
  %4844 = vmatpush1.xpose.msra.mxu0 0.0
  %4845 = vmatprep.subr.mxu0 0.0
  %4846 = vmatpush1.xpose.msra.mxu0 0.0
  %4847 = vmatprep.subr.mxu0 0.0
  %4848 = vmatpush1.xpose.msra.mxu0 0.0
  %4849 = vmatprep.subr.mxu0 0.0
  %4850 = vmatpush1.xpose.msra.mxu0 0.0
  %4851 = vmatprep.subr.mxu0 0.0
  %4852 = vmatpush1.xpose.msra.mxu0 0.0
  %4853 = vmatprep.subr.mxu0 0.0
  %4854 = vmatpush1.xpose.msra.mxu0 0.0
  %4855 = vmatprep.subr.mxu0 0.0
  %4856 = vmatpush1.xpose.msra.mxu0 0.0
  %4857 = vmatprep.subr.mxu0 0.0
  %4858 = vmatpush1.xpose.msra.mxu0 0.0
  %4859 = vmatprep.subr.mxu0 0.0
  %4860 = vmatpush1.xpose.msra.mxu0 0.0
  %4861 = vmatprep.subr.mxu0 0.0
  %4862 = vmatpush1.xpose.msra.mxu0 0.0
  %4863 = vmatprep.subr.mxu0 0.0
  %4864 = vmatpush1.xpose.msra.mxu0 0.0
  %4865 = vmatprep.subr.mxu0 0.0
  %4866 = vmatpush1.xpose.msra.mxu0 0.0
  %4867 = vmatprep.subr.mxu0 0.0
  %4868 = vmatpush1.xpose.msra.mxu0 0.0
  %4869 = vmatprep.subr.mxu0 0.0
  %4870 = vmatpush1.xpose.msra.mxu0 0.0
  %4871 = vmatprep.subr.mxu0 0.0
  %4872 = vmatpush1.xpose.msra.mxu0 0.0
  %4873 = vmatprep.subr.mxu0 0.0
  %4874 = vmatpush1.xpose.msra.mxu0 0.0
  %4875 = vmatprep.subr.mxu0 0.0
  %4876 = vmatpush1.xpose.msra.mxu0 0.0
  %4877 = vmatprep.subr.mxu0 0.0
  %4878 = vmatpush1.xpose.msra.mxu0 0.0
  %4879 = vmatprep.subr.mxu0 0.0
  %4880 = vmatpush1.xpose.msra.mxu0 0.0
  %4881 = vmatprep.subr.mxu0 0.0
  %4882 = vmatpush1.xpose.msra.mxu0 0.0
  %4883 = vmatprep.subr.mxu0 0.0
  %4884 = vmatpush1.xpose.msra.mxu0 0.0
  %4885 = vmatprep.subr.mxu0 0.0
  %4886 = vmatpush1.xpose.msra.mxu0 0.0
  %4887 = vmatprep.subr.mxu0 0.0
  %4888 = vmatpush1.xpose.msra.mxu0 0.0
  %4889 = vmatprep.subr.mxu0 0.0
  %4890 = vmatpush1.xpose.msra.mxu0 0.0
  %4891 = vmatprep.subr.mxu0 0.0
  %4892 = vmatpush1.xpose.msra.mxu0 0.0
  %4893 = vmatprep.subr.mxu0 0.0
  %4894 = vmatpush1.xpose.msra.mxu0 0.0
  %4895 = vmatprep.subr.mxu0 0.0
  %4896 = vmatpush1.xpose.msra.mxu0 0.0
  %4897 = vmatprep.subr.mxu0 0.0
  %4898 = vmatpush1.xpose.msra.mxu0 0.0
  %4899 = vmatprep.subr.mxu0 0.0
  %4900 = vmatpush1.xpose.msra.mxu0 0.0
  %4901 = vmatprep.mubr.f32.mxu0 0.0
  %4902 = vmatmul.mubr.f32.gmra.mrb[0].mxu0 %v4829
  %v4903 = vpop.f32.mrb[0].mxu0
  %v4904 = vadd.f32 0.0, %v4903
  %v4905 = vpop.f32.mrb[0].mxu0
  %4906 = vmatprep.mubr.f32.mxu0 0.0
  %4907 = vmatmul.mubr.f32.gmra.mrb[0].mxu0 %v4831
  %v4908 = vpop.f32.mrb[0].mxu0
  %v4909 = vadd.f32 0.0, %v4908
  %v4910 = vpop.f32.mrb[0].mxu0
  %4911 = vdwg.mxu0
  %v4912 = vmul.f32 %v4631, 0.35355338
  %v4913 = vmul.f32 %v4636, 0.35355338
  %v4914 = vmul.f32 %v4722, 0.35355338
  %v4915 = vmul.f32 %v4727, 0.35355338
  %v4916 = vmul.f32 %v4813, 0.35355338
  %v4917 = vmul.f32 %v4818, 0.35355338
  %v4918 = vmul.f32 %v4904, 0.35355338
  %v4919 = vmul.f32 %v4909, 0.35355338
  %v4920 = vadd.f32 %v4912, %v50
  %v4921 = vadd.f32 %v4913, %v51
  %v4922 = vadd.f32 %v4914, %v52
  %v4923 = vadd.f32 %v4915, %v53
  %v4924 = vadd.f32 %v4916, %v54
  %v4925 = vadd.f32 %v4917, %v55
  %v4926 = vadd.f32 %v4918, %v56
  %v4927 = vadd.f32 %v4919, %v57
  %v4928 = vsel %vm642, %v4920, -inf
  %4929 = vmax.xlane.f32.xlu0 %v4928
  %v4930 = vpop.xlane.xlu0 %4929
  %v4931 = vsel %vm642, %v4921, -inf
  %4932 = vmax.xlane.f32.xlu0 %v4931
  %v4933 = vpop.xlane.xlu0 %4932
  %v4934 = vsel %vm642, %v4922, -inf
  %4935 = vmax.xlane.f32.xlu0 %v4934
  %v4936 = vpop.xlane.xlu0 %4935
  %v4937 = vsel %vm642, %v4923, -inf
  %4938 = vmax.xlane.f32.xlu0 %v4937
  %v4939 = vpop.xlane.xlu0 %4938
  %v4940 = vsel %vm642, %v4924, -inf
  %4941 = vmax.xlane.f32.xlu0 %v4940
  %v4942 = vpop.xlane.xlu0 %4941
  %v4943 = vsel %vm642, %v4925, -inf
  %4944 = vmax.xlane.f32.xlu0 %v4943
  %v4945 = vpop.xlane.xlu0 %4944
  %v4946 = vsel %vm642, %v4926, -inf
  %4947 = vmax.xlane.f32.xlu0 %v4946
  %v4948 = vpop.xlane.xlu0 %4947
  %v4949 = vsel %vm642, %v4927, -inf
  %4950 = vmax.xlane.f32.xlu0 %v4949
  %v4951 = vpop.xlane.xlu0 %4950
  %v4952 = vsub.f32 %v4920, %v4930
  %v4953 = vsub.f32 %v4921, %v4933
  %v4954 = vsub.f32 %v4922, %v4936
  %v4955 = vsub.f32 %v4923, %v4939
  %v4956 = vsub.f32 %v4924, %v4942
  %v4957 = vsub.f32 %v4925, %v4945
  %v4958 = vsub.f32 %v4926, %v4948
  %v4959 = vsub.f32 %v4927, %v4951
  %v4960 = vmul.f32 %v4952, 1.442695
  %v4961 = vpow.pop %v4960
  %v4962 = vmul.f32 %v4953, 1.442695
  %v4963 = vpow.pop %v4962
  %v4964 = vmul.f32 %v4954, 1.442695
  %v4965 = vpow.pop %v4964
  %v4966 = vmul.f32 %v4955, 1.442695
  %v4967 = vpow.pop %v4966
  %v4968 = vmul.f32 %v4956, 1.442695
  %v4969 = vpow.pop %v4968
  %v4970 = vmul.f32 %v4957, 1.442695
  %v4971 = vpow.pop %v4970
  %v4972 = vmul.f32 %v4958, 1.442695
  %v4973 = vpow.pop %v4972
  %v4974 = vmul.f32 %v4959, 1.442695
  %v4975 = vpow.pop %v4974
  %v4976 = vsel %vm642, %v4961, 0.0
  %4977 = vadd.xlane.f32.xlu0 %v4976
  %v4978 = vpop.xlane.xlu0 %4977
  %v4979 = vsel %vm642, %v4963, 0.0
  %4980 = vadd.xlane.f32.xlu0 %v4979
  %v4981 = vpop.xlane.xlu0 %4980
  %v4982 = vsel %vm642, %v4965, 0.0
  %4983 = vadd.xlane.f32.xlu0 %v4982
  %v4984 = vpop.xlane.xlu0 %4983
  %v4985 = vsel %vm642, %v4967, 0.0
  %4986 = vadd.xlane.f32.xlu0 %v4985
  %v4987 = vpop.xlane.xlu0 %4986
  %v4988 = vsel %vm642, %v4969, 0.0
  %4989 = vadd.xlane.f32.xlu0 %v4988
  %v4990 = vpop.xlane.xlu0 %4989
  %v4991 = vsel %vm642, %v4971, 0.0
  %4992 = vadd.xlane.f32.xlu0 %v4991
  %v4993 = vpop.xlane.xlu0 %4992
  %v4994 = vsel %vm642, %v4973, 0.0
  %4995 = vadd.xlane.f32.xlu0 %v4994
  %v4996 = vpop.xlane.xlu0 %4995
  %v4997 = vsel %vm642, %v4975, 0.0
  %4998 = vadd.xlane.f32.xlu0 %v4997
  %v4999 = vpop.xlane.xlu0 %4998
  %v5000 = vrcp.pop %v4978
  %v5001 = vrcp.pop %v4981
  %v5002 = vrcp.pop %v4984
  %v5003 = vrcp.pop %v4987
  %v5004 = vrcp.pop %v4990
  %v5005 = vrcp.pop %v4993
  %v5006 = vrcp.pop %v4996
  %v5007 = vrcp.pop %v4999
  %v5008 = vmul.f32 %v4961, %v5000
  %v5009 = vmul.f32 %v4963, %v5001
  %v5010 = vmul.f32 %v4965, %v5002
  %v5011 = vmul.f32 %v4967, %v5003
  %v5012 = vmul.f32 %v4969, %v5004
  %v5013 = vmul.f32 %v4971, %v5005
  %v5014 = vmul.f32 %v4973, %v5006
  %v5015 = vmul.f32 %v4975, %v5007
  %5016 = vrot.lane.b32.xlu0 %v4457, 64
  %v5017 = vpop.permute.xlu0 %5016
  %5018 = vrot.lane.b32.xlu0 %v4460, 64
  %v5019 = vpop.permute.xlu0 %5018
  %v5023 = vsel %vm642, %v5008, 0
  %v5026 = vsel %vm642, %v5009, 0
  %5028 = vmatprep.subr.mxu0 0.0
  %5029 = vmatpush1.msra.mxu0 %v5017
  %5030 = vmatprep.subr.mxu0 0.0
  %5031 = vmatpush1.msra.mxu0 %v5019
  %5032 = vmatprep.subr.mxu0 0.0
  %5033 = vmatpush1.msra.mxu0 0.0
  %5034 = vmatprep.subr.mxu0 0.0
  %5035 = vmatpush1.msra.mxu0 0.0
  %5036 = vmatprep.subr.mxu0 0.0
  %5037 = vmatpush1.msra.mxu0 0.0
  %5038 = vmatprep.subr.mxu0 0.0
  %5039 = vmatpush1.msra.mxu0 0.0
  %5040 = vmatprep.subr.mxu0 0.0
  %5041 = vmatpush1.msra.mxu0 0.0
  %5042 = vmatprep.subr.mxu0 0.0
  %5043 = vmatpush1.msra.mxu0 0.0
  %5044 = vmatprep.subr.mxu0 0.0
  %5045 = vmatpush1.msra.mxu0 0.0
  %5046 = vmatprep.subr.mxu0 0.0
  %5047 = vmatpush1.msra.mxu0 0.0
  %5048 = vmatprep.subr.mxu0 0.0
  %5049 = vmatpush1.msra.mxu0 0.0
  %5050 = vmatprep.subr.mxu0 0.0
  %5051 = vmatpush1.msra.mxu0 0.0
  %5052 = vmatprep.subr.mxu0 0.0
  %5053 = vmatpush1.msra.mxu0 0.0
  %5054 = vmatprep.subr.mxu0 0.0
  %5055 = vmatpush1.msra.mxu0 0.0
  %5056 = vmatprep.subr.mxu0 0.0
  %5057 = vmatpush1.msra.mxu0 0.0
  %5058 = vmatprep.subr.mxu0 0.0
  %5059 = vmatpush1.msra.mxu0 0.0
  %5060 = vmatprep.subr.mxu0 0.0
  %5061 = vmatpush1.msra.mxu0 0.0
  %5062 = vmatprep.subr.mxu0 0.0
  %5063 = vmatpush1.msra.mxu0 0.0
  %5064 = vmatprep.subr.mxu0 0.0
  %5065 = vmatpush1.msra.mxu0 0.0
  %5066 = vmatprep.subr.mxu0 0.0
  %5067 = vmatpush1.msra.mxu0 0.0
  %5068 = vmatprep.subr.mxu0 0.0
  %5069 = vmatpush1.msra.mxu0 0.0
  %5070 = vmatprep.subr.mxu0 0.0
  %5071 = vmatpush1.msra.mxu0 0.0
  %5072 = vmatprep.subr.mxu0 0.0
  %5073 = vmatpush1.msra.mxu0 0.0
  %5074 = vmatprep.subr.mxu0 0.0
  %5075 = vmatpush1.msra.mxu0 0.0
  %5076 = vmatprep.subr.mxu0 0.0
  %5077 = vmatpush1.msra.mxu0 0.0
  %5078 = vmatprep.subr.mxu0 0.0
  %5079 = vmatpush1.msra.mxu0 0.0
  %5080 = vmatprep.subr.mxu0 0.0
  %5081 = vmatpush1.msra.mxu0 0.0
  %5082 = vmatprep.subr.mxu0 0.0
  %5083 = vmatpush1.msra.mxu0 0.0
  %5084 = vmatprep.subr.mxu0 0.0
  %5085 = vmatpush1.msra.mxu0 0.0
  %5086 = vmatprep.subr.mxu0 0.0
  %5087 = vmatpush1.msra.mxu0 0.0
  %5088 = vmatprep.subr.mxu0 0.0
  %5089 = vmatpush1.msra.mxu0 0.0
  %5090 = vmatprep.subr.mxu0 0.0
  %5091 = vmatpush1.msra.mxu0 0.0
  %5092 = vmatprep.mubr.f32.mxu0 0.0
  %5093 = vmatmul.mubr.f32.gmra.mrb[0].mxu0 %v5023
  %v5094 = vpop.f32.mrb[0].mxu0
  %v5095 = vadd.f32 0.0, %v5094
  %v5096 = vpop.f32.mrb[0].mxu0
  %5097 = vmatprep.mubr.f32.mxu0 0.0
  %5098 = vmatmul.mubr.f32.gmra.mrb[0].mxu0 %v5026
  %v5099 = vpop.f32.mrb[0].mxu0
  %v5100 = vadd.f32 0.0, %v5099
  %v5101 = vpop.f32.mrb[0].mxu0
  %5102 = vdwg.mxu0
  %v5103 = vpack.c.bf16 %v5100, %v5095
  %v5105 = vsel %vm269, %v5103, 0
  %v5108 = vsel %vm822, %v4374, 0
  %5110 = vmatprep.subr.bf16.mxu0 0
  %5111 = vmatpush1.bf16.msra.mxu0 %v5108
  %5112 = vmatprep.subr.bf16.mxu0 0
  %5113 = vmatpush1.bf16.msra.mxu0 0
  %5114 = vmatprep.subr.bf16.mxu0 0
  %5115 = vmatpush1.bf16.msra.mxu0 0
  %5116 = vmatprep.subr.bf16.mxu0 0
  %5117 = vmatpush1.bf16.msra.mxu0 0
  %5118 = vmatprep.subr.bf16.mxu0 0
  %5119 = vmatpush1.bf16.msra.mxu0 0
  %5120 = vmatprep.subr.bf16.mxu0 0
  %5121 = vmatpush1.bf16.msra.mxu0 0
  %5122 = vmatprep.subr.bf16.mxu0 0
  %5123 = vmatpush1.bf16.msra.mxu0 0
  %5124 = vmatprep.subr.bf16.mxu0 0
  %5125 = vmatpush1.bf16.msra.mxu0 0
  %5126 = vmatprep.subr.bf16.mxu0 0
  %5127 = vmatpush1.bf16.msra.mxu0 0
  %5128 = vmatprep.subr.bf16.mxu0 0
  %5129 = vmatpush1.bf16.msra.mxu0 0
  %5130 = vmatprep.subr.bf16.mxu0 0
  %5131 = vmatpush1.bf16.msra.mxu0 0
  %5132 = vmatprep.subr.bf16.mxu0 0
  %5133 = vmatpush1.bf16.msra.mxu0 0
  %5134 = vmatprep.subr.bf16.mxu0 0
  %5135 = vmatpush1.bf16.msra.mxu0 0
  %5136 = vmatprep.subr.bf16.mxu0 0
  %5137 = vmatpush1.bf16.msra.mxu0 0
  %5138 = vmatprep.subr.bf16.mxu0 0
  %5139 = vmatpush1.bf16.msra.mxu0 0
  %5140 = vmatprep.subr.bf16.mxu0 0
  %5141 = vmatpush1.bf16.msra.mxu0 0
  %5142 = vmatprep.mubr.bf16.mxu0 0
  %5143 = vmatmul.mubr.bf16.gmra.mrb[0].mxu0 %v5105
  %v5144 = vpop.f32.mrb[0].mxu0
  %v5145 = vadd.f32 0.0, %v5144
  %v5146 = vpop.f32.mrb[0].mxu0
  %v5147 = vpop.f32.mrb[0].mxu0
  %v5148 = vadd.f32 0.0, %v5147
  %v5149 = vpop.f32.mrb[0].mxu0
  %5150 = vdwg.mxu0
  %v5151 = vadd.f32 %v4366, %v5145
  %v5152 = vadd.f32 %v4367, %v5148
  %5153 = vrot.lane.b32.xlu0 %v4457, 56
  %v5154 = vpop.permute.xlu0 %5153
  %5155 = vrot.lane.b32.xlu0 %v4460, 56
  %v5156 = vpop.permute.xlu0 %5155
  %v5160 = vsel %vm642, %v5010, 0
  %v5163 = vsel %vm642, %v5011, 0
  %5165 = vmatprep.subr.mxu0 0.0
  %5166 = vmatpush1.msra.mxu0 %v5154
  %5167 = vmatprep.subr.mxu0 0.0
  %5168 = vmatpush1.msra.mxu0 %v5156
  %5169 = vmatprep.subr.mxu0 0.0
  %5170 = vmatpush1.msra.mxu0 0.0
  %5171 = vmatprep.subr.mxu0 0.0
  %5172 = vmatpush1.msra.mxu0 0.0
  %5173 = vmatprep.subr.mxu0 0.0
  %5174 = vmatpush1.msra.mxu0 0.0
  %5175 = vmatprep.subr.mxu0 0.0
  %5176 = vmatpush1.msra.mxu0 0.0
  %5177 = vmatprep.subr.mxu0 0.0
  %5178 = vmatpush1.msra.mxu0 0.0
  %5179 = vmatprep.subr.mxu0 0.0
  %5180 = vmatpush1.msra.mxu0 0.0
  %5181 = vmatprep.subr.mxu0 0.0
  %5182 = vmatpush1.msra.mxu0 0.0
  %5183 = vmatprep.subr.mxu0 0.0
  %5184 = vmatpush1.msra.mxu0 0.0
  %5185 = vmatprep.subr.mxu0 0.0
  %5186 = vmatpush1.msra.mxu0 0.0
  %5187 = vmatprep.subr.mxu0 0.0
  %5188 = vmatpush1.msra.mxu0 0.0
  %5189 = vmatprep.subr.mxu0 0.0
  %5190 = vmatpush1.msra.mxu0 0.0
  %5191 = vmatprep.subr.mxu0 0.0
  %5192 = vmatpush1.msra.mxu0 0.0
  %5193 = vmatprep.subr.mxu0 0.0
  %5194 = vmatpush1.msra.mxu0 0.0
  %5195 = vmatprep.subr.mxu0 0.0
  %5196 = vmatpush1.msra.mxu0 0.0
  %5197 = vmatprep.subr.mxu0 0.0
  %5198 = vmatpush1.msra.mxu0 0.0
  %5199 = vmatprep.subr.mxu0 0.0
  %5200 = vmatpush1.msra.mxu0 0.0
  %5201 = vmatprep.subr.mxu0 0.0
  %5202 = vmatpush1.msra.mxu0 0.0
  %5203 = vmatprep.subr.mxu0 0.0
  %5204 = vmatpush1.msra.mxu0 0.0
  %5205 = vmatprep.subr.mxu0 0.0
  %5206 = vmatpush1.msra.mxu0 0.0
  %5207 = vmatprep.subr.mxu0 0.0
  %5208 = vmatpush1.msra.mxu0 0.0
  %5209 = vmatprep.subr.mxu0 0.0
  %5210 = vmatpush1.msra.mxu0 0.0
  %5211 = vmatprep.subr.mxu0 0.0
  %5212 = vmatpush1.msra.mxu0 0.0
  %5213 = vmatprep.subr.mxu0 0.0
  %5214 = vmatpush1.msra.mxu0 0.0
  %5215 = vmatprep.subr.mxu0 0.0
  %5216 = vmatpush1.msra.mxu0 0.0
  %5217 = vmatprep.subr.mxu0 0.0
  %5218 = vmatpush1.msra.mxu0 0.0
  %5219 = vmatprep.subr.mxu0 0.0
  %5220 = vmatpush1.msra.mxu0 0.0
  %5221 = vmatprep.subr.mxu0 0.0
  %5222 = vmatpush1.msra.mxu0 0.0
  %5223 = vmatprep.subr.mxu0 0.0
  %5224 = vmatpush1.msra.mxu0 0.0
  %5225 = vmatprep.subr.mxu0 0.0
  %5226 = vmatpush1.msra.mxu0 0.0
  %5227 = vmatprep.subr.mxu0 0.0
  %5228 = vmatpush1.msra.mxu0 0.0
  %5229 = vmatprep.mubr.f32.mxu0 0.0
  %5230 = vmatmul.mubr.f32.gmra.mrb[0].mxu0 %v5160
  %v5231 = vpop.f32.mrb[0].mxu0
  %v5232 = vadd.f32 0.0, %v5231
  %v5233 = vpop.f32.mrb[0].mxu0
  %5234 = vmatprep.mubr.f32.mxu0 0.0
  %5235 = vmatmul.mubr.f32.gmra.mrb[0].mxu0 %v5163
  %v5236 = vpop.f32.mrb[0].mxu0
  %v5237 = vadd.f32 0.0, %v5236
  %v5238 = vpop.f32.mrb[0].mxu0
  %5239 = vdwg.mxu0
  %v5240 = vpack.c.bf16 %v5237, %v5232
  %v5242 = vunpack.c.l.b16 %v4374
  %v5243 = vpack.c.b16 %v5242, %v5242
  %5244 = vrot.lane.b32.xlu0 %v5243, 96
  %v5245 = vpop.permute.xlu0 %5244
  %v5247 = vsel %vm269, %v5240, 0
  %v5250 = vsel %vm822, %v5245, 0
  %5252 = vmatprep.subr.bf16.mxu0 0
  %5253 = vmatpush1.bf16.msra.mxu0 %v5250
  %5254 = vmatprep.subr.bf16.mxu0 0
  %5255 = vmatpush1.bf16.msra.mxu0 0
  %5256 = vmatprep.subr.bf16.mxu0 0
  %5257 = vmatpush1.bf16.msra.mxu0 0
  %5258 = vmatprep.subr.bf16.mxu0 0
  %5259 = vmatpush1.bf16.msra.mxu0 0
  %5260 = vmatprep.subr.bf16.mxu0 0
  %5261 = vmatpush1.bf16.msra.mxu0 0
  %5262 = vmatprep.subr.bf16.mxu0 0
  %5263 = vmatpush1.bf16.msra.mxu0 0
  %5264 = vmatprep.subr.bf16.mxu0 0
  %5265 = vmatpush1.bf16.msra.mxu0 0
  %5266 = vmatprep.subr.bf16.mxu0 0
  %5267 = vmatpush1.bf16.msra.mxu0 0
  %5268 = vmatprep.subr.bf16.mxu0 0
  %5269 = vmatpush1.bf16.msra.mxu0 0
  %5270 = vmatprep.subr.bf16.mxu0 0
  %5271 = vmatpush1.bf16.msra.mxu0 0
  %5272 = vmatprep.subr.bf16.mxu0 0
  %5273 = vmatpush1.bf16.msra.mxu0 0
  %5274 = vmatprep.subr.bf16.mxu0 0
  %5275 = vmatpush1.bf16.msra.mxu0 0
  %5276 = vmatprep.subr.bf16.mxu0 0
  %5277 = vmatpush1.bf16.msra.mxu0 0
  %5278 = vmatprep.subr.bf16.mxu0 0
  %5279 = vmatpush1.bf16.msra.mxu0 0
  %5280 = vmatprep.subr.bf16.mxu0 0
  %5281 = vmatpush1.bf16.msra.mxu0 0
  %5282 = vmatprep.subr.bf16.mxu0 0
  %5283 = vmatpush1.bf16.msra.mxu0 0
  %5284 = vmatprep.mubr.bf16.mxu0 0
  %5285 = vmatmul.mubr.bf16.gmra.mrb[0].mxu0 %v5247
  %v5286 = vpop.f32.mrb[0].mxu0
  %v5287 = vadd.f32 0.0, %v5286
  %v5288 = vpop.f32.mrb[0].mxu0
  %v5289 = vpop.f32.mrb[0].mxu0
  %v5290 = vadd.f32 0.0, %v5289
  %v5291 = vpop.f32.mrb[0].mxu0
  %5292 = vdwg.mxu0
  %v5293 = vadd.f32 %v5151, %v5287
  %v5294 = vadd.f32 %v5152, %v5290
  %5295 = vrot.lane.b32.xlu0 %v4457, 48
  %v5296 = vpop.permute.xlu0 %5295
  %5297 = vrot.lane.b32.xlu0 %v4460, 48
  %v5298 = vpop.permute.xlu0 %5297
  %v5302 = vsel %vm642, %v5012, 0
  %v5305 = vsel %vm642, %v5013, 0
  %5307 = vmatprep.subr.mxu0 0.0
  %5308 = vmatpush1.msra.mxu0 %v5296
  %5309 = vmatprep.subr.mxu0 0.0
  %5310 = vmatpush1.msra.mxu0 %v5298
  %5311 = vmatprep.subr.mxu0 0.0
  %5312 = vmatpush1.msra.mxu0 0.0
  %5313 = vmatprep.subr.mxu0 0.0
  %5314 = vmatpush1.msra.mxu0 0.0
  %5315 = vmatprep.subr.mxu0 0.0
  %5316 = vmatpush1.msra.mxu0 0.0
  %5317 = vmatprep.subr.mxu0 0.0
  %5318 = vmatpush1.msra.mxu0 0.0
  %5319 = vmatprep.subr.mxu0 0.0
  %5320 = vmatpush1.msra.mxu0 0.0
  %5321 = vmatprep.subr.mxu0 0.0
  %5322 = vmatpush1.msra.mxu0 0.0
  %5323 = vmatprep.subr.mxu0 0.0
  %5324 = vmatpush1.msra.mxu0 0.0
  %5325 = vmatprep.subr.mxu0 0.0
  %5326 = vmatpush1.msra.mxu0 0.0
  %5327 = vmatprep.subr.mxu0 0.0
  %5328 = vmatpush1.msra.mxu0 0.0
  %5329 = vmatprep.subr.mxu0 0.0
  %5330 = vmatpush1.msra.mxu0 0.0
  %5331 = vmatprep.subr.mxu0 0.0
  %5332 = vmatpush1.msra.mxu0 0.0
  %5333 = vmatprep.subr.mxu0 0.0
  %5334 = vmatpush1.msra.mxu0 0.0
  %5335 = vmatprep.subr.mxu0 0.0
  %5336 = vmatpush1.msra.mxu0 0.0
  %5337 = vmatprep.subr.mxu0 0.0
  %5338 = vmatpush1.msra.mxu0 0.0
  %5339 = vmatprep.subr.mxu0 0.0
  %5340 = vmatpush1.msra.mxu0 0.0
  %5341 = vmatprep.subr.mxu0 0.0
  %5342 = vmatpush1.msra.mxu0 0.0
  %5343 = vmatprep.subr.mxu0 0.0
  %5344 = vmatpush1.msra.mxu0 0.0
  %5345 = vmatprep.subr.mxu0 0.0
  %5346 = vmatpush1.msra.mxu0 0.0
  %5347 = vmatprep.subr.mxu0 0.0
  %5348 = vmatpush1.msra.mxu0 0.0
  %5349 = vmatprep.subr.mxu0 0.0
  %5350 = vmatpush1.msra.mxu0 0.0
  %5351 = vmatprep.subr.mxu0 0.0
  %5352 = vmatpush1.msra.mxu0 0.0
  %5353 = vmatprep.subr.mxu0 0.0
  %5354 = vmatpush1.msra.mxu0 0.0
  %5355 = vmatprep.subr.mxu0 0.0
  %5356 = vmatpush1.msra.mxu0 0.0
  %5357 = vmatprep.subr.mxu0 0.0
  %5358 = vmatpush1.msra.mxu0 0.0
  %5359 = vmatprep.subr.mxu0 0.0
  %5360 = vmatpush1.msra.mxu0 0.0
  %5361 = vmatprep.subr.mxu0 0.0
  %5362 = vmatpush1.msra.mxu0 0.0
  %5363 = vmatprep.subr.mxu0 0.0
  %5364 = vmatpush1.msra.mxu0 0.0
  %5365 = vmatprep.subr.mxu0 0.0
  %5366 = vmatpush1.msra.mxu0 0.0
  %5367 = vmatprep.subr.mxu0 0.0
  %5368 = vmatpush1.msra.mxu0 0.0
  %5369 = vmatprep.subr.mxu0 0.0
  %5370 = vmatpush1.msra.mxu0 0.0
  %5371 = vmatprep.mubr.f32.mxu0 0.0
  %5372 = vmatmul.mubr.f32.gmra.mrb[0].mxu0 %v5302
  %v5373 = vpop.f32.mrb[0].mxu0
  %v5374 = vadd.f32 0.0, %v5373
  %v5375 = vpop.f32.mrb[0].mxu0
  %5376 = vmatprep.mubr.f32.mxu0 0.0
  %5377 = vmatmul.mubr.f32.gmra.mrb[0].mxu0 %v5305
  %v5378 = vpop.f32.mrb[0].mxu0
  %v5379 = vadd.f32 0.0, %v5378
  %v5380 = vpop.f32.mrb[0].mxu0
  %5381 = vdwg.mxu0
  %v5382 = vpack.c.bf16 %v5379, %v5374
  %5383 = vrot.lane.b32.xlu0 %v5243, 64
  %v5384 = vpop.permute.xlu0 %5383
  %v5386 = vsel %vm269, %v5382, 0
  %v5389 = vsel %vm822, %v5384, 0
  %5391 = vmatprep.subr.bf16.mxu0 0
  %5392 = vmatpush1.bf16.msra.mxu0 %v5389
  %5393 = vmatprep.subr.bf16.mxu0 0
  %5394 = vmatpush1.bf16.msra.mxu0 0
  %5395 = vmatprep.subr.bf16.mxu0 0
  %5396 = vmatpush1.bf16.msra.mxu0 0
  %5397 = vmatprep.subr.bf16.mxu0 0
  %5398 = vmatpush1.bf16.msra.mxu0 0
  %5399 = vmatprep.subr.bf16.mxu0 0
  %5400 = vmatpush1.bf16.msra.mxu0 0
  %5401 = vmatprep.subr.bf16.mxu0 0
  %5402 = vmatpush1.bf16.msra.mxu0 0
  %5403 = vmatprep.subr.bf16.mxu0 0
  %5404 = vmatpush1.bf16.msra.mxu0 0
  %5405 = vmatprep.subr.bf16.mxu0 0
  %5406 = vmatpush1.bf16.msra.mxu0 0
  %5407 = vmatprep.subr.bf16.mxu0 0
  %5408 = vmatpush1.bf16.msra.mxu0 0
  %5409 = vmatprep.subr.bf16.mxu0 0
  %5410 = vmatpush1.bf16.msra.mxu0 0
  %5411 = vmatprep.subr.bf16.mxu0 0
  %5412 = vmatpush1.bf16.msra.mxu0 0
  %5413 = vmatprep.subr.bf16.mxu0 0
  %5414 = vmatpush1.bf16.msra.mxu0 0
  %5415 = vmatprep.subr.bf16.mxu0 0
  %5416 = vmatpush1.bf16.msra.mxu0 0
  %5417 = vmatprep.subr.bf16.mxu0 0
  %5418 = vmatpush1.bf16.msra.mxu0 0
  %5419 = vmatprep.subr.bf16.mxu0 0
  %5420 = vmatpush1.bf16.msra.mxu0 0
  %5421 = vmatprep.subr.bf16.mxu0 0
  %5422 = vmatpush1.bf16.msra.mxu0 0
  %5423 = vmatprep.mubr.bf16.mxu0 0
  %5424 = vmatmul.mubr.bf16.gmra.mrb[0].mxu0 %v5386
  %v5425 = vpop.f32.mrb[0].mxu0
  %v5426 = vadd.f32 0.0, %v5425
  %v5427 = vpop.f32.mrb[0].mxu0
  %v5428 = vpop.f32.mrb[0].mxu0
  %v5429 = vadd.f32 0.0, %v5428
  %v5430 = vpop.f32.mrb[0].mxu0
  %5431 = vdwg.mxu0
  %v5432 = vadd.f32 %v5293, %v5426
  %v5433 = vadd.f32 %v5294, %v5429
  %5434 = vrot.lane.b32.xlu0 %v4457, 40
  %v5435 = vpop.permute.xlu0 %5434
  %5436 = vrot.lane.b32.xlu0 %v4460, 40
  %v5437 = vpop.permute.xlu0 %5436
  %v5441 = vsel %vm642, %v5014, 0
  %v5444 = vsel %vm642, %v5015, 0
  %5446 = vmatprep.subr.mxu0 0.0
  %5447 = vmatpush1.msra.mxu0 %v5435
  %5448 = vmatprep.subr.mxu0 0.0
  %5449 = vmatpush1.msra.mxu0 %v5437
  %5450 = vmatprep.subr.mxu0 0.0
  %5451 = vmatpush1.msra.mxu0 0.0
  %5452 = vmatprep.subr.mxu0 0.0
  %5453 = vmatpush1.msra.mxu0 0.0
  %5454 = vmatprep.subr.mxu0 0.0
  %5455 = vmatpush1.msra.mxu0 0.0
  %5456 = vmatprep.subr.mxu0 0.0
  %5457 = vmatpush1.msra.mxu0 0.0
  %5458 = vmatprep.subr.mxu0 0.0
  %5459 = vmatpush1.msra.mxu0 0.0
  %5460 = vmatprep.subr.mxu0 0.0
  %5461 = vmatpush1.msra.mxu0 0.0
  %5462 = vmatprep.subr.mxu0 0.0
  %5463 = vmatpush1.msra.mxu0 0.0
  %5464 = vmatprep.subr.mxu0 0.0
  %5465 = vmatpush1.msra.mxu0 0.0
  %5466 = vmatprep.subr.mxu0 0.0
  %5467 = vmatpush1.msra.mxu0 0.0
  %5468 = vmatprep.subr.mxu0 0.0
  %5469 = vmatpush1.msra.mxu0 0.0
  %5470 = vmatprep.subr.mxu0 0.0
  %5471 = vmatpush1.msra.mxu0 0.0
  %5472 = vmatprep.subr.mxu0 0.0
  %5473 = vmatpush1.msra.mxu0 0.0
  %5474 = vmatprep.subr.mxu0 0.0
  %5475 = vmatpush1.msra.mxu0 0.0
  %5476 = vmatprep.subr.mxu0 0.0
  %5477 = vmatpush1.msra.mxu0 0.0
  %5478 = vmatprep.subr.mxu0 0.0
  %5479 = vmatpush1.msra.mxu0 0.0
  %5480 = vmatprep.subr.mxu0 0.0
  %5481 = vmatpush1.msra.mxu0 0.0
  %5482 = vmatprep.subr.mxu0 0.0
  %5483 = vmatpush1.msra.mxu0 0.0
  %5484 = vmatprep.subr.mxu0 0.0
  %5485 = vmatpush1.msra.mxu0 0.0
  %5486 = vmatprep.subr.mxu0 0.0
  %5487 = vmatpush1.msra.mxu0 0.0
  %5488 = vmatprep.subr.mxu0 0.0
  %5489 = vmatpush1.msra.mxu0 0.0
  %5490 = vmatprep.subr.mxu0 0.0
  %5491 = vmatpush1.msra.mxu0 0.0
  %5492 = vmatprep.subr.mxu0 0.0
  %5493 = vmatpush1.msra.mxu0 0.0
  %5494 = vmatprep.subr.mxu0 0.0
  %5495 = vmatpush1.msra.mxu0 0.0
  %5496 = vmatprep.subr.mxu0 0.0
  %5497 = vmatpush1.msra.mxu0 0.0
  %5498 = vmatprep.subr.mxu0 0.0
  %5499 = vmatpush1.msra.mxu0 0.0
  %5500 = vmatprep.subr.mxu0 0.0
  %5501 = vmatpush1.msra.mxu0 0.0
  %5502 = vmatprep.subr.mxu0 0.0
  %5503 = vmatpush1.msra.mxu0 0.0
  %5504 = vmatprep.subr.mxu0 0.0
  %5505 = vmatpush1.msra.mxu0 0.0
  %5506 = vmatprep.subr.mxu0 0.0
  %5507 = vmatpush1.msra.mxu0 0.0
  %5508 = vmatprep.subr.mxu0 0.0
  %5509 = vmatpush1.msra.mxu0 0.0
  %5510 = vmatprep.mubr.f32.mxu0 0.0
  %5511 = vmatmul.mubr.f32.gmra.mrb[0].mxu0 %v5441
  %v5512 = vpop.f32.mrb[0].mxu0
  %v5513 = vadd.f32 0.0, %v5512
  %v5514 = vpop.f32.mrb[0].mxu0
  %5515 = vmatprep.mubr.f32.mxu0 0.0
  %5516 = vmatmul.mubr.f32.gmra.mrb[0].mxu0 %v5444
  %v5517 = vpop.f32.mrb[0].mxu0
  %v5518 = vadd.f32 0.0, %v5517
  %v5519 = vpop.f32.mrb[0].mxu0
  %5520 = vdwg.mxu0
  %v5521 = vpack.c.bf16 %v5518, %v5513
  %5522 = vrot.lane.b32.xlu0 %v5243, 32
  %v5523 = vpop.permute.xlu0 %5522
  %v5525 = vsel %vm269, %v5521, 0
  %v5528 = vsel %vm822, %v5523, 0
  %5530 = vmatprep.subr.bf16.mxu0 0
  %5531 = vmatpush1.bf16.msra.mxu0 %v5528
  %5532 = vmatprep.subr.bf16.mxu0 0
  %5533 = vmatpush1.bf16.msra.mxu0 0
  %5534 = vmatprep.subr.bf16.mxu0 0
  %5535 = vmatpush1.bf16.msra.mxu0 0
  %5536 = vmatprep.subr.bf16.mxu0 0
  %5537 = vmatpush1.bf16.msra.mxu0 0
  %5538 = vmatprep.subr.bf16.mxu0 0
  %5539 = vmatpush1.bf16.msra.mxu0 0
  %5540 = vmatprep.subr.bf16.mxu0 0
  %5541 = vmatpush1.bf16.msra.mxu0 0
  %5542 = vmatprep.subr.bf16.mxu0 0
  %5543 = vmatpush1.bf16.msra.mxu0 0
  %5544 = vmatprep.subr.bf16.mxu0 0
  %5545 = vmatpush1.bf16.msra.mxu0 0
  %5546 = vmatprep.subr.bf16.mxu0 0
  %5547 = vmatpush1.bf16.msra.mxu0 0
  %5548 = vmatprep.subr.bf16.mxu0 0
  %5549 = vmatpush1.bf16.msra.mxu0 0
  %5550 = vmatprep.subr.bf16.mxu0 0
  %5551 = vmatpush1.bf16.msra.mxu0 0
  %5552 = vmatprep.subr.bf16.mxu0 0
  %5553 = vmatpush1.bf16.msra.mxu0 0
  %5554 = vmatprep.subr.bf16.mxu0 0
  %5555 = vmatpush1.bf16.msra.mxu0 0
  %5556 = vmatprep.subr.bf16.mxu0 0
  %5557 = vmatpush1.bf16.msra.mxu0 0
  %5558 = vmatprep.subr.bf16.mxu0 0
  %5559 = vmatpush1.bf16.msra.mxu0 0
  %5560 = vmatprep.subr.bf16.mxu0 0
  %5561 = vmatpush1.bf16.msra.mxu0 0
  %5562 = vmatprep.mubr.bf16.mxu0 0
  %5563 = vmatmul.mubr.bf16.gmra.mrb[0].mxu0 %v5525
  %v5564 = vpop.f32.mrb[0].mxu0
  %v5565 = vadd.f32 0.0, %v5564
  %v5566 = vpop.f32.mrb[0].mxu0
  %v5567 = vpop.f32.mrb[0].mxu0
  %v5568 = vadd.f32 0.0, %v5567
  %v5569 = vpop.f32.mrb[0].mxu0
  %5570 = vdwg.mxu0
  %v5571 = vadd.f32 %v5432, %v5565
  %v5572 = vadd.f32 %v5433, %v5568
  %v5573 = vmul.f32 %v5571, %v5571
  %v5574 = vmul.f32 %v5572, %v5572
  %v5575 = vsel %vm96, %v5573, 0.0
  %5576 = vadd.xlane.f32.xlu0 %v5575
  %v5577 = vpop.xlane.xlu0 %5576
  %v5578 = vsel %vm96, %v5574, 0.0
  %5579 = vadd.xlane.f32.xlu0 %v5578
  %v5580 = vpop.xlane.xlu0 %5579
  %v5581 = vmul.f32 %v5577, %v103
  %v5582 = vmul.f32 %v5580, %v103
  %v5583 = vadd.f32 %v5581, 1e-06
  %v5584 = vadd.f32 %v5582, 1e-06
  %v5585 = vrsqrt.pop %v5583
  %v5586 = vrsqrt.pop %v5584
  %v5587 = vmul.f32 %v5571, %v5585
  %v5588 = vmul.f32 %v5572, %v5586
  %v5589 = vlaneseq
  %v5590 = vshrl.u32 %v5589, 7
  %v5591 = vsub.s32 3, %v5590
  %v5592 = vrot.slane %v2985, %v5591
  %v5593 = vmul.f32 %v5587, %v5592
  %v5594 = vmul.f32 %v5588, %v5592
  %v5595 = vpack.c.bf16 %v5594, %v5593
  %v5596 = vunpack.c.h.b16 %v4369
  %v5597 = vunpack.c.h.b16 %v4370
  %v5598 = vunpack.c.h.b16 %v4371
  %v5599 = vunpack.c.h.b16 %v4372
  %v5600 = vpack.c.b16 %v5597, %v5596
  %v5601 = vpack.c.b16 %v5599, %v5598
  %5602 = vrot.lane.b32.xlu0 %v4415, 32
  %v5603 = vpop.permute.xlu0 %5602
  %5604 = vrot.lane.b32.xlu0 %v5600, 32
  %v5605 = vpop.permute.xlu0 %5604
  %5606 = vrot.lane.b32.xlu0 %v4416, 32
  %v5607 = vpop.permute.xlu0 %5606
  %5608 = vrot.lane.b32.xlu0 %v5601, 32
  %v5609 = vpop.permute.xlu0 %5608
  %v5610 = vsel %vm1326, %v5603, %v5605
  %v5611 = vsel %vm1326, %v5607, %v5609
  %v5615 = vsel %vm96, %v5595, 0
  %5617 = vmatprep.subr.bf16.mxu0 0
  %5618 = vmatpush1.bf16.msra.mxu0 %v5610
  %5619 = vmatprep.subr.bf16.mxu0 0
  %5620 = vmatpush1.bf16.msra.mxu0 %v5611
  %5621 = vmatprep.subr.bf16.mxu0 0
  %5622 = vmatpush1.bf16.msra.mxu0 0
  %5623 = vmatprep.subr.bf16.mxu0 0
  %5624 = vmatpush1.bf16.msra.mxu0 0
  %5625 = vmatprep.subr.bf16.mxu0 0
  %5626 = vmatpush1.bf16.msra.mxu0 0
  %5627 = vmatprep.subr.bf16.mxu0 0
  %5628 = vmatpush1.bf16.msra.mxu0 0
  %5629 = vmatprep.subr.bf16.mxu0 0
  %5630 = vmatpush1.bf16.msra.mxu0 0
  %5631 = vmatprep.subr.bf16.mxu0 0
  %5632 = vmatpush1.bf16.msra.mxu0 0
  %5633 = vmatprep.subr.bf16.mxu0 0
  %5634 = vmatpush1.bf16.msra.mxu0 0
  %5635 = vmatprep.subr.bf16.mxu0 0
  %5636 = vmatpush1.bf16.msra.mxu0 0
  %5637 = vmatprep.subr.bf16.mxu0 0
  %5638 = vmatpush1.bf16.msra.mxu0 0
  %5639 = vmatprep.subr.bf16.mxu0 0
  %5640 = vmatpush1.bf16.msra.mxu0 0
  %5641 = vmatprep.subr.bf16.mxu0 0
  %5642 = vmatpush1.bf16.msra.mxu0 0
  %5643 = vmatprep.subr.bf16.mxu0 0
  %5644 = vmatpush1.bf16.msra.mxu0 0
  %5645 = vmatprep.subr.bf16.mxu0 0
  %5646 = vmatpush1.bf16.msra.mxu0 0
  %5647 = vmatprep.subr.bf16.mxu0 0
  %5648 = vmatpush1.bf16.msra.mxu0 0
  %5649 = vmatprep.mubr.bf16.mxu0 0
  %5650 = vmatmul.mubr.bf16.gmra.mrb[0].mxu0 %v5615
  %v5651 = vpop.f32.mrb[0].mxu0
  %v5652 = vadd.f32 0.0, %v5651
  %v5653 = vpop.f32.mrb[0].mxu0
  %v5654 = vpop.f32.mrb[0].mxu0
  %v5655 = vadd.f32 0.0, %v5654
  %v5656 = vpop.f32.mrb[0].mxu0
  %5657 = vdwg.mxu0
  %v5658 = vxor.u32 %v5652, 2147483648
  %v5659 = vxor.u32 %v5655, 2147483648
  %v5660 = vmul.f32 %v5658, 1.442695
  %v5661 = vpow.pop %v5660
  %v5662 = vmul.f32 %v5659, 1.442695
  %v5663 = vpow.pop %v5662
  %v5664 = vadd.f32 %v5661, 1.0
  %v5665 = vadd.f32 %v5663, 1.0
  %v5666 = vrcp.pop %v5664
  %v5667 = vmul.f32 1.0, %v5666
  %v5668 = vrcp.pop %v5665
  %v5669 = vmul.f32 1.0, %v5668
  %v5670 = vmul.f32 %v5652, %v5667
  %v5671 = vmul.f32 %v5655, %v5669
  %5674 = vrot.lane.b32.xlu0 %v5652, 64
  %v5675 = vpop.permute.xlu0 %5674
  %5676 = vrot.lane.b32.xlu0 %v5655, 64
  %v5677 = vpop.permute.xlu0 %5676
  %v5680 = vmul.f32 %v5670, %v5675
  %v5681 = vmul.f32 %v5671, %v5677
  %v5682 = vpack.c.bf16 %v5681, %v5680
  %v5691 = vunpack.c.l.b16 %v4376
  %v5692 = vunpack.c.l.b16 %v4377
  %v5693 = vunpack.c.l.b16 %v4378
  %v5694 = vunpack.c.l.b16 %v4379
  %v5695 = vunpack.c.l.b16 %v4380
  %v5696 = vunpack.c.l.b16 %v4381
  %v5697 = vunpack.c.l.b16 %v4382
  %v5698 = vunpack.c.l.b16 %v4383
  %v5699 = vpack.c.b16 %v5692, %v5691
  %v5700 = vpack.c.b16 %v5694, %v5693
  %v5701 = vpack.c.b16 %v5696, %v5695
  %v5702 = vpack.c.b16 %v5698, %v5697
  %v5708 = vsel %vm177, %v5682, 0
  %5710 = vmatprep.subr.bf16.mxu0 0
  %5711 = vmatpush1.bf16.msra.mxu0 %v5699
  %5712 = vmatprep.subr.bf16.mxu0 0
  %5713 = vmatpush1.bf16.msra.mxu0 %v5700
  %5714 = vmatprep.subr.bf16.mxu0 0
  %5715 = vmatpush1.bf16.msra.mxu0 %v5701
  %5716 = vmatprep.subr.bf16.mxu0 0
  %5717 = vmatpush1.bf16.msra.mxu0 %v5702
  %5718 = vmatprep.subr.bf16.mxu0 0
  %5719 = vmatpush1.bf16.msra.mxu0 0
  %5720 = vmatprep.subr.bf16.mxu0 0
  %5721 = vmatpush1.bf16.msra.mxu0 0
  %5722 = vmatprep.subr.bf16.mxu0 0
  %5723 = vmatpush1.bf16.msra.mxu0 0
  %5724 = vmatprep.subr.bf16.mxu0 0
  %5725 = vmatpush1.bf16.msra.mxu0 0
  %5726 = vmatprep.subr.bf16.mxu0 0
  %5727 = vmatpush1.bf16.msra.mxu0 0
  %5728 = vmatprep.subr.bf16.mxu0 0
  %5729 = vmatpush1.bf16.msra.mxu0 0
  %5730 = vmatprep.subr.bf16.mxu0 0
  %5731 = vmatpush1.bf16.msra.mxu0 0
  %5732 = vmatprep.subr.bf16.mxu0 0
  %5733 = vmatpush1.bf16.msra.mxu0 0
  %5734 = vmatprep.subr.bf16.mxu0 0
  %5735 = vmatpush1.bf16.msra.mxu0 0
  %5736 = vmatprep.subr.bf16.mxu0 0
  %5737 = vmatpush1.bf16.msra.mxu0 0
  %5738 = vmatprep.subr.bf16.mxu0 0
  %5739 = vmatpush1.bf16.msra.mxu0 0
  %5740 = vmatprep.subr.bf16.mxu0 0
  %5741 = vmatpush1.bf16.msra.mxu0 0
  %5742 = vmatprep.mubr.bf16.mxu0 0
  %5743 = vmatmul.mubr.bf16.gmra.mrb[0].mxu0 %v5708
  %v5744 = vpop.f32.mrb[0].mxu0
  %v5745 = vadd.f32 0.0, %v5744
  %v5746 = vpop.f32.mrb[0].mxu0
  %v5747 = vpop.f32.mrb[0].mxu0
  %v5748 = vadd.f32 0.0, %v5747
  %v5749 = vpop.f32.mrb[0].mxu0
  %5750 = vdwg.mxu0
  %v5751 = vadd.f32 %v5571, %v5745
  %v5752 = vadd.f32 %v5572, %v5748
  %v5753 = vmul.f32 %v5751, %v5751
  %v5754 = vmul.f32 %v5752, %v5752
  %v5755 = vsel %vm96, %v5753, 0.0
  %5756 = vadd.xlane.f32.xlu0 %v5755
  %v5757 = vpop.xlane.xlu0 %5756
  %v5758 = vsel %vm96, %v5754, 0.0
  %5759 = vadd.xlane.f32.xlu0 %v5758
  %v5760 = vpop.xlane.xlu0 %5759
  %v5761 = vmul.f32 %v5757, %v103
  %v5762 = vmul.f32 %v5760, %v103
  %v5763 = vadd.f32 %v5761, 1e-06
  %v5764 = vadd.f32 %v5762, 1e-06
  %v5765 = vrsqrt.pop %v5763
  %v5766 = vrsqrt.pop %v5764
  %v5767 = vmul.f32 %v5751, %v5765
  %v5768 = vmul.f32 %v5752, %v5766
  %v5769 = vlaneseq
  %v5770 = vshrl.u32 %v5769, 7
  %v5771 = vsub.s32 4, %v5770
  %v5772 = vrot.slane %v2985, %v5771
  %v5773 = vmul.f32 %v5767, %v5772
  %v5774 = vmul.f32 %v5768, %v5772
  %v5775 = vpack.c.bf16 %v5774, %v5773
  %v5780 = vunpack.c.l.b16 %v71
  %v5781 = vunpack.c.l.b16 %v73
  %v5782 = vunpack.c.l.b16 %v75
  %v5783 = vunpack.c.l.b16 %v77
  %v5784 = vpack.c.b16 %v5781, %v5780
  %v5785 = vpack.c.b16 %v5783, %v5782
  %5786 = vrot.lane.b32.xlu0 %v2940, 96
  %v5787 = vpop.permute.xlu0 %5786
  %5788 = vrot.lane.b32.xlu0 %v5784, 96
  %v5789 = vpop.permute.xlu0 %5788
  %5790 = vrot.lane.b32.xlu0 %v2941, 96
  %v5791 = vpop.permute.xlu0 %5790
  %5792 = vrot.lane.b32.xlu0 %v5785, 96
  %v5793 = vpop.permute.xlu0 %5792
  %vm5794 = vcmask 785408
  %v5795 = vsel %vm5794, %v5787, %v5789
  %v5796 = vsel %vm5794, %v5791, %v5793
  %v5800 = vsel %vm96, %v5775, 0
  %5802 = vmatprep.subr.bf16.mxu0 0
  %5803 = vmatpush1.bf16.msra.mxu0 %v5795
  %5804 = vmatprep.subr.bf16.mxu0 0
  %5805 = vmatpush1.bf16.msra.mxu0 %v5796
  %5806 = vmatprep.subr.bf16.mxu0 0
  %5807 = vmatpush1.bf16.msra.mxu0 0
  %5808 = vmatprep.subr.bf16.mxu0 0
  %5809 = vmatpush1.bf16.msra.mxu0 0
  %5810 = vmatprep.subr.bf16.mxu0 0
  %5811 = vmatpush1.bf16.msra.mxu0 0
  %5812 = vmatprep.subr.bf16.mxu0 0
  %5813 = vmatpush1.bf16.msra.mxu0 0
  %5814 = vmatprep.subr.bf16.mxu0 0
  %5815 = vmatpush1.bf16.msra.mxu0 0
  %5816 = vmatprep.subr.bf16.mxu0 0
  %5817 = vmatpush1.bf16.msra.mxu0 0
  %5818 = vmatprep.subr.bf16.mxu0 0
  %5819 = vmatpush1.bf16.msra.mxu0 0
  %5820 = vmatprep.subr.bf16.mxu0 0
  %5821 = vmatpush1.bf16.msra.mxu0 0
  %5822 = vmatprep.subr.bf16.mxu0 0
  %5823 = vmatpush1.bf16.msra.mxu0 0
  %5824 = vmatprep.subr.bf16.mxu0 0
  %5825 = vmatpush1.bf16.msra.mxu0 0
  %5826 = vmatprep.subr.bf16.mxu0 0
  %5827 = vmatpush1.bf16.msra.mxu0 0
  %5828 = vmatprep.subr.bf16.mxu0 0
  %5829 = vmatpush1.bf16.msra.mxu0 0
  %5830 = vmatprep.subr.bf16.mxu0 0
  %5831 = vmatpush1.bf16.msra.mxu0 0
  %5832 = vmatprep.subr.bf16.mxu0 0
  %5833 = vmatpush1.bf16.msra.mxu0 0
  %5834 = vmatprep.mubr.bf16.mxu0 0
  %5835 = vmatmul.mubr.bf16.gmra.mrb[0].mxu0 %v5800
  %v5836 = vpop.f32.mrb[0].mxu0
  %v5837 = vadd.f32 0.0, %v5836
  %v5838 = vpop.f32.mrb[0].mxu0
  %v5839 = vpop.f32.mrb[0].mxu0
  %v5840 = vadd.f32 0.0, %v5839
  %v5841 = vpop.f32.mrb[0].mxu0
  %5842 = vdwg.mxu0
  %5843 = vst [vmem:[%s15] sm:$0xff] %v5837
  %5844 = vst [vmem:[%s15 + $0x8] sm:$0xff] %v5840
  // Predicated region
  $region58: #{code2code_forward.1} parent=0 // pred_check
    _
  $region59: #{code2code_forward.1} parent=0 // pred_check_branch
    %5846 = sbr.rel (0) target = $region61
  $region60: #{code2code_forward.1} parent=0 // pred_region
    _
  $region61: #{code2code_forward.1} parent=0 // pred_fallthru
    _
  // Predicated region
  $region62: #{code2code_forward.1} parent=0 // pred_check
    _
  $region63: #{code2code_forward.1} parent=0 // pred_check_branch
    %5848 = sbr.rel (0) target = $region65
  $region64: #{code2code_forward.1} parent=0 // pred_region
    _
  $region65: #{code2code_forward.1} parent=0 // pred_fallthru
    _
  // Predicated region
  $region66: #{code2code_forward.1} parent=0 // pred_check
    _
  $region67: #{code2code_forward.1} parent=0 // pred_check_branch
    %5850 = sbr.rel (0) target = $region69
  $region68: #{code2code_forward.1} parent=0 // pred_region
    _
  $region69: #{code2code_forward.1} parent=0 // pred_fallthru
    _
  // Predicated region
  $region70: #{code2code_forward.1} parent=0 // pred_check
    _
  $region71: #{code2code_forward.1} parent=0 // pred_check_branch
    %5852 = sbr.rel (0) target = $region73
  $region72: #{code2code_forward.1} parent=0 // pred_region
    _
  $region73: #{code2code_forward.1} parent=0 // pred_fallthru
    _

</llo_original>
